<compile_context>
chip_gen: v6e
topology: v6e:2x2x1
jax: 0.10.0
libtpu: 0.0.40
codegen_flags: <defaults>
</compile_context>

<pallas_src>
import functools

import jax
import jax.numpy as jnp
from jax.experimental import pallas as pl
from jax.experimental.pallas import tpu as pltpu

DTYPE = jnp.float32
F32 = jnp.float32


def _vmem_spec():
    return pl.BlockSpec(memory_space=pltpu.MemorySpace.VMEM)


# ----------------------------------------------------------------------------
# Fused forward kernel: pre-MLP -> n_gcn x (NNConv + ReLU + GRU) -> Set2Set ->
# post-MLP, everything resident in VMEM, single program (grid=()).
# ----------------------------------------------------------------------------
def _mpnn_fused_kernel(x_ref, ea_ref, s_ref, am_ref, mask_ref, expand_ref,
                       reduce_ref, we1be1_ref, wedge_ref, wdd_ref, bdd_ref,
                       out_ref, *, n_pre, n_gcn, n_post, D, Hg, s2s_steps):
    def W(i):            # (D, D) weight block, leading-index slice (free)
        return wdd_ref[i]

    def bia(i):          # (1, D) bias block
        return bdd_ref[i]

    def dot(a, w):
        return jnp.dot(a, w, preferred_element_type=F32)

    def relu(v):
        return jnp.maximum(v, 0.0)

    # ---- pre-GCN MLP: (Linear + ReLU) * n_pre (layer-0 input zero-padded to D) --
    x = x_ref[...].astype(F32)
    for i in range(n_pre):
        x = relu(dot(x, W(i)) + bia(i))

    # ---- edge NN, hoisted for ALL layers (off the GRU recurrence critical path) --
    # h1_all = [relu(ea*we1_l + be1_l)]_l ; wflat_all via ONE block-diag matmul.
    ea = ea_ref[...].astype(F32)                                   # (E, 1)
    h1 = relu(ea * we1be1_ref[0] + we1be1_ref[1])                  # (E, n_gcn*Hg)
    DD = D * D
    HgT = n_gcn * Hg
    wflat_all = dot(h1, wedge_ref[0:HgT, :]) + wedge_ref[HgT:HgT + 1, :]  # (E, n_gcn*D*D)

    # graph structure (loaded once, reused every layer)
    S = s_ref[...]           # (E, N) one-hot src  (gather)
    Am = am_ref[...]         # (N, E) scatter matrix pre-divided by max(deg,1)
    expm = expand_ref[...]   # (D, D*D)
    redm = reduce_ref[...]   # (D*D, D)

    # ---- message passing: NNConv(aggr='mean') + ReLU, then GRU (per-gate dots) --
    for l in range(n_gcn):
        h_prev = x
        wflat = wflat_all[:, l * DD:(l + 1) * DD]                  # 1024-lane aligned slice

        x_src = dot(S, x)                                          # (E, D) gather
        # per-edge matvec msg[e,o] = sum_d x_src[e,d]*wflat[e,d*D+o]
        x_rep = dot(x_src, expm)                                   # (E, D*D)
        msg = dot(x_rep * wflat, redm)                             # (E, D)
        agg = dot(Am, msg)                                         # (N, D) scatter-mean

        wi = n_pre + 7 * l     # [root, xr, xz, xn, hr, hz, hn]
        bi = n_pre + 5 * l     # [broot, b_r, b_z, b_in, b_hn]
        x_conv = relu(dot(x, W(wi)) + bia(bi) + agg)               # NNConv + ReLU

        # GRU cell (seq_len=1): per-gate (D,D) blocks, accumulating dots,
        # no concat and no sub-128-lane gate slicing.
        r = jax.nn.sigmoid(dot(x_conv, W(wi + 1)) + dot(h_prev, W(wi + 4)) + bia(bi + 1))
        z = jax.nn.sigmoid(dot(x_conv, W(wi + 2)) + dot(h_prev, W(wi + 5)) + bia(bi + 2))
        n = jnp.tanh(dot(x_conv, W(wi + 3)) + bia(bi + 3)
                     + r * (dot(h_prev, W(wi + 6)) + bia(bi + 4)))
        x = (1.0 - z) * n + z * h_prev                             # (N, D)

    # ---- Set2Set pooling (3 LSTM + attention steps), register-resident state ----
    lw = n_pre + 7 * n_gcn          # LSTM weight-block base: per gate [Wq, Wr, Wh]
    lb = n_pre + 5 * n_gcn          # LSTM bias base: [b_i, b_f, b_g, b_o]
    mask_add = mask_ref[...]        # (B, N) additive mask: 0 in-graph, -1e30 otherwise
    B = mask_add.shape[0]
    qp = jnp.zeros((B, D), F32)     # previous q   (q_star = [qp | rp])
    rp = jnp.zeros((B, D), F32)     # previous r
    h = jnp.zeros((B, D), F32)      # LSTM hidden
    c = jnp.zeros((B, D), F32)      # LSTM cell

    for step in range(s2s_steps):
        def gate(g):
            acc = bia(lb + g)
            if step > 0:            # q_star and h are exactly zero at step 0
                acc = (acc + dot(qp, W(lw + 3 * g))
                       + dot(rp, W(lw + 3 * g + 1))
                       + dot(h, W(lw + 3 * g + 2)))
            return acc

        i_g = jax.nn.sigmoid(gate(0))
        f_g = jax.nn.sigmoid(gate(1))
        g_g = jnp.tanh(gate(2))
        o_g = jax.nn.sigmoid(gate(3))
        c = f_g * c + i_g * g_g
        h = o_g * jnp.tanh(c)
        q = h                        # single-layer LSTM: output == hidden

        # attention of each node against its own graph's query; softmax over the
        # lane (node) axis of a (B, N) score matrix, additive mask fused in.
        e = jax.lax.dot_general(q, x, (((1,), (1,)), ((), ())),
                                preferred_element_type=F32)        # (B, N)
        e = e + mask_add
        e_max = jnp.max(e, axis=1, keepdims=True)
        ex = jnp.exp(e - e_max)                                    # masked lanes -> 0
        denom = jnp.maximum(jnp.sum(ex, axis=1, keepdims=True), 1e-20)
        a = ex / denom                                             # (B, N)
        rp = dot(a, x)                                             # (B, D) readout
        qp = q

    # ---- post-GCN MLP: layer0 consumes q_star = [q | r] via two accumulating dots
    pw = lw + 12
    pb = lb + 4
    y = relu(dot(qp, W(pw)) + dot(rp, W(pw + 1)) + bia(pb))
    for i in range(1, n_post):
        y = relu(dot(y, W(pw + 1 + i)) + bia(pb + i))
    # final Linear(., 1): weight/bias zero-padded to D lanes; column 0 is the result
    y = dot(y, W(pw + 1 + n_post)) + bia(pb + n_post)
    out_ref[...] = y.astype(out_ref.dtype)


# ----------------------------------------------------------------------------
# Parameter construction (deterministic, synthetic) in natural per-layer layout.
# ----------------------------------------------------------------------------
def init_params(key, n_features, pre_hidden, post_hidden, gcn_hidden,
                n_pre, n_post, n_gcn):
    def nrm(k, shape, scale=0.1):
        return (scale * jax.random.normal(k, shape)).astype(DTYPE)

    keys = iter(jax.random.split(key, 512))
    D = pre_hidden                      # gc_dim
    assert post_hidden == D, "packed (D,D)-block layout assumes post_hidden == pre_hidden"

    pre = []
    in_size = n_features
    for _ in range(n_pre):
        pre.append((nrm(next(keys), (in_size, D)), nrm(next(keys), (1, D))))
        in_size = D

    gcn = []
    for _ in range(n_gcn):
        layer = {
            "we1": nrm(next(keys), (1, gcn_hidden)),
            "be1": nrm(next(keys), (1, gcn_hidden)),
            "we2": nrm(next(keys), (gcn_hidden, D * D)),
            "be2": nrm(next(keys), (1, D * D)),
            "wroot": nrm(next(keys), (D, D)),
            "broot": nrm(next(keys), (1, D)),
        }
        for nm in ("wx_r", "wx_z", "wx_n", "wh_r", "wh_z", "wh_n"):
            layer[nm] = nrm(next(keys), (D, D))
        for nm in ("b_ir", "b_iz", "b_in", "b_hr", "b_hz", "b_hn"):
            layer[nm] = nrm(next(keys), (1, D))
        gcn.append(layer)

    # Set2Set LSTM: input = 2D (q_star = [q | r]), hidden = D; per-gate blocks.
    s2s = {}
    for g in ("i", "f", "g", "o"):
        s2s["wq_" + g] = nrm(next(keys), (D, D))
        s2s["wr_" + g] = nrm(next(keys), (D, D))
        s2s["wh_" + g] = nrm(next(keys), (D, D))
        s2s["b_" + g] = nrm(next(keys), (1, D))     # b_ih + b_hh folded

    post = []
    in_size = 2 * D                                  # set2set doubles the feature dim
    for _ in range(n_post):
        post.append((nrm(next(keys), (in_size, post_hidden)),
                     nrm(next(keys), (1, post_hidden))))
        in_size = post_hidden
    post.append((nrm(next(keys), (in_size, 1)), nrm(next(keys), (1, 1))))

    return {"pre": pre, "gcn": gcn, "set2set": s2s, "post": post,
            "D": D, "Hg": gcn_hidden, "n_pre": n_pre, "n_post": n_post, "n_gcn": n_gcn}


# ----------------------------------------------------------------------------
# Pack all weights/biases into a handful of stacked operands (done ONCE, offline).
# ----------------------------------------------------------------------------
def pack_params(p):
    D, Hg = p["D"], p["Hg"]
    n_pre, n_gcn, n_post = p["n_pre"], p["n_gcn"], p["n_post"]
    DD = D * D

    blocks, biases = [], []
    # pre-MLP: pad layer-0 input dim (n_features -> D) with zero rows
    for (w, b) in p["pre"]:
        wpad = jnp.zeros((D, D), DTYPE).at[: w.shape[0], :].set(w)
        blocks.append(wpad)
        biases.append(b)
    # GCN layers: [root, xr, xz, xn, hr, hz, hn] / [broot, b_r, b_z, b_in, b_hn]
    for g in p["gcn"]:
        blocks += [g["wroot"], g["wx_r"], g["wx_z"], g["wx_n"],
                   g["wh_r"], g["wh_z"], g["wh_n"]]
        biases += [g["broot"], g["b_ir"] + g["b_hr"], g["b_iz"] + g["b_hz"],
                   g["b_in"], g["b_hn"]]
    # Set2Set LSTM: per gate [Wq, Wr, Wh] and fused bias
    s = p["set2set"]
    for gate in ("i", "f", "g", "o"):
        blocks += [s["wq_" + gate], s["wr_" + gate], s["wh_" + gate]]
    biases += [s["b_" + gate] for gate in ("i", "f", "g", "o")]
    # post-MLP: layer0 split into q/r halves; final Linear(.,1) padded to D lanes
    w0, b0 = p["post"][0]
    blocks += [w0[:D, :], w0[D:, :]]
    biases.append(b0)
    for (w, b) in p["post"][1:-1]:
        blocks.append(w)
        biases.append(b)
    wf, bf = p["post"][-1]
    blocks.append(jnp.zeros((D, D), DTYPE).at[:, :1].set(wf))
    biases.append(jnp.zeros((1, D), DTYPE).at[:, :1].set(bf))

    w_dd = jnp.stack(blocks)                 # (n_pre + 7*n_gcn + 12 + n_post+2, D, D)
    b_dd = jnp.stack(biases)                 # (n_pre + 5*n_gcn + 4 + n_post+1, 1, D)

    # edge-NN first layer (Linear(1, Hg)) weights/biases for all layers
    we1_all = jnp.concatenate([g["we1"] for g in p["gcn"]], axis=1)   # (1, n_gcn*Hg)
    be1_all = jnp.concatenate([g["be1"] for g in p["gcn"]], axis=1)
    we1be1 = jnp.stack([we1_all, be1_all])                            # (2, 1, n_gcn*Hg)

    # edge-NN second layer as ONE block-diagonal matrix + bias row (last row)
    wedge = jnp.zeros((n_gcn * Hg + 1, n_gcn * DD), DTYPE)
    for l, g in enumerate(p["gcn"]):
        wedge = wedge.at[l * Hg:(l + 1) * Hg, l * DD:(l + 1) * DD].set(g["we2"])
        wedge = wedge.at[n_gcn * Hg, l * DD:(l + 1) * DD].set(g["be2"][0])

    # constants for the per-edge matvec trick
    eyeD = jnp.eye(D, dtype=DTYPE)
    expand_mat = jnp.repeat(eyeD, D, axis=1)                          # (D, D*D)
    reduce_mat = jnp.tile(eyeD, (D, 1))                               # (D*D, D)

    return {"w_dd": w_dd, "b_dd": b_dd, "we1be1": we1be1, "wedge": wedge,
            "expand": expand_mat, "reduce": reduce_mat,
            "D": D, "Hg": Hg, "n_pre": n_pre, "n_gcn": n_gcn, "n_post": n_post}


# ----------------------------------------------------------------------------
# Forward: build graph-structure constants once, launch ONE fused Pallas kernel.
# ----------------------------------------------------------------------------
def mpnn_forward(pp, X, edge_index, edge_attr, batch_map, num_graphs):
    X = X.astype(DTYPE)
    N = X.shape[0]
    D, Hg = pp["D"], pp["Hg"]
    n_pre, n_gcn, n_post = pp["n_pre"], pp["n_gcn"], pp["n_post"]
    B = num_graphs

    src, dst = edge_index[0], edge_index[1]
    S = jax.nn.one_hot(src, N, dtype=DTYPE)                    # (E, N) gather
    A = jax.nn.one_hot(dst, N, dtype=DTYPE).T                  # (N, E) scatter
    deg = jnp.sum(A, axis=1, keepdims=True)
    A_mean = A / jnp.maximum(deg, 1.0)                         # scatter-mean, built once
    M = jax.nn.one_hot(batch_map, B, dtype=DTYPE).T            # (B, N)
    mask_add = jnp.where(M > 0, 0.0, -1e30).astype(DTYPE)      # additive attention mask
    ea = edge_attr.reshape(-1, 1).astype(DTYPE)                # edge_attr.view(-1, 1)
    X_pad = jnp.zeros((N, D), DTYPE).at[:, : X.shape[1]].set(X)

    operands = [X_pad, ea, S, A_mean, mask_add,
                pp["expand"], pp["reduce"], pp["we1be1"], pp["wedge"],
                pp["w_dd"], pp["b_dd"]]

    kernel = functools.partial(_mpnn_fused_kernel, n_pre=n_pre, n_gcn=n_gcn,
                               n_post=n_post, D=D, Hg=Hg, s2s_steps=3)
    out = pl.pallas_call(
        kernel,
        out_shape=jax.ShapeDtypeStruct((B, D), DTYPE),
        in_specs=[_vmem_spec() for _ in operands],
        out_specs=_vmem_spec(),
        compiler_params=pltpu.CompilerParams(vmem_limit_bytes=32 * 1024 * 1024),
    )(*operands)
    return out[:, :1]        # final Linear(., 1): only column 0 is meaningful


# ----------------------------------------------------------------------------
if __name__ == "__main__":
    # Model config
    n_features = 8
    n_edge_features = 1          # forward uses edge_attr.view(-1, 1)
    num_graphs = 2               # number of graphs in the batch
    pre_hidden = post_hidden = gcn_hidden = 32
    n_pre = n_post = n_gcn = 3

    key = jax.random.PRNGKey(0)
    k_params, k_x, k_ea = jax.random.split(key, 3)

    params = init_params(k_params, n_features, pre_hidden, post_hidden,
                         gcn_hidden, n_pre, n_post, n_gcn)
    packed = pack_params(params)

    # Synthetic graph batch: 2 graphs of 8 nodes each (N = 16), path edges both ways.
    nodes_per_graph = 8
    N = num_graphs * nodes_per_graph
    X = jax.random.normal(k_x, (N, n_features), dtype=DTYPE)

    src_list, dst_list = [], []
    for gidx in range(num_graphs):
        base = gidx * nodes_per_graph
        for i in range(nodes_per_graph - 1):
            src_list += [base + i, base + i + 1]
            dst_list += [base + i + 1, base + i]
    edge_index = jnp.array([src_list, dst_list], dtype=jnp.int32)    # (2, E)
    E = edge_index.shape[1]
    edge_attr = jax.random.normal(k_ea, (E,), dtype=DTYPE)
    batch_map = jnp.array(
        [gidx for gidx in range(num_graphs) for _ in range(nodes_per_graph)],
        dtype=jnp.int32)

    fwd = jax.jit(lambda x, ei, eattr, bm: mpnn_forward(
        packed, x, ei, eattr, bm, num_graphs))
    out = jax.block_until_ready(fwd(X, edge_index, edge_attr, batch_map))

    assert out.shape == (num_graphs, 1), out.shape
    assert bool(jnp.all(jnp.isfinite(out)))
    print("KERNEL_OK")
</pallas_src>

<mosaic_0001>
module attributes {stable_mosaic.version = 11 : i64} {
  func.func @_mpnn_fused_kernel(%arg0: memref<16x32xf32, #tpu.memory_space<vmem>>, %arg1: memref<28x1xf32, #tpu.memory_space<vmem>>, %arg2: memref<28x16xf32, #tpu.memory_space<vmem>>, %arg3: memref<16x28xf32, #tpu.memory_space<vmem>>, %arg4: memref<2x16xf32, #tpu.memory_space<vmem>>, %arg5: memref<32x1024xf32, #tpu.memory_space<vmem>>, %arg6: memref<1024x32xf32, #tpu.memory_space<vmem>>, %arg7: memref<2x1x96xf32, #tpu.memory_space<vmem>>, %arg8: memref<97x3072xf32, #tpu.memory_space<vmem>>, %arg9: memref<41x32x32xf32, #tpu.memory_space<vmem>>, %arg10: memref<26x1x32xf32, #tpu.memory_space<vmem>>, %arg11: memref<2x32xf32, #tpu.memory_space<vmem>>) attributes {dimension_semantics = [], scalar_prefetch = 0 : i64, scratch_operands = 0 : i64, tpu.core_type = #tpu.core_type<tc>} {
    %c0 = arith.constant 0 : index
    %c0_0 = arith.constant 0 : index
    %0 = vector.load %arg0[%c0, %c0_0] : memref<16x32xf32, #tpu.memory_space<vmem>>, vector<16x32xf32>
    %c0_1 = arith.constant 0 : index
    %c0_2 = arith.constant 0 : index
    %c0_3 = arith.constant 0 : index
    %1 = vector.load %arg9[%c0_1, %c0_2, %c0_3] : memref<41x32x32xf32, #tpu.memory_space<vmem>>, vector<1x32x32xf32>
    %2 = vector.shape_cast %1 : vector<1x32x32xf32> to vector<32x32xf32>
    %cst = arith.constant dense<0.000000e+00> : vector<16x32xf32>
    %3 = tpu.matmul %0, %2, %cst {dimension_numbers = #tpu.dot_dimension_numbers<[1], [0], [0], [1], [0, 0, 1, 1], [], []>} : vector<16x32xf32>, vector<32x32xf32>, vector<16x32xf32> -> vector<16x32xf32>
    %c0_4 = arith.constant 0 : index
    %c0_5 = arith.constant 0 : index
    %c0_6 = arith.constant 0 : index
    %4 = vector.load %arg10[%c0_4, %c0_5, %c0_6] : memref<26x1x32xf32, #tpu.memory_space<vmem>>, vector<1x1x32xf32>
    %5 = vector.shape_cast %4 : vector<1x1x32xf32> to vector<1x32xf32>
    %6 = vector.broadcast %5 : vector<1x32xf32> to vector<16x32xf32>
    %7 = arith.addf %3, %6 : vector<16x32xf32>
    %cst_7 = arith.constant 0.000000e+00 : f32
    %8 = vector.broadcast %cst_7 : f32 to vector<16x32xf32>
    %9 = arith.maximumf %7, %8 : vector<16x32xf32>
    %c1 = arith.constant 1 : index
    %c0_8 = arith.constant 0 : index
    %c0_9 = arith.constant 0 : index
    %10 = vector.load %arg9[%c1, %c0_8, %c0_9] : memref<41x32x32xf32, #tpu.memory_space<vmem>>, vector<1x32x32xf32>
    %11 = vector.shape_cast %10 : vector<1x32x32xf32> to vector<32x32xf32>
    %cst_10 = arith.constant dense<0.000000e+00> : vector<16x32xf32>
    %12 = tpu.matmul %9, %11, %cst_10 {dimension_numbers = #tpu.dot_dimension_numbers<[1], [0], [0], [1], [0, 0, 1, 1], [], []>} : vector<16x32xf32>, vector<32x32xf32>, vector<16x32xf32> -> vector<16x32xf32>
    %c1_11 = arith.constant 1 : index
    %c0_12 = arith.constant 0 : index
    %c0_13 = arith.constant 0 : index
    %13 = vector.load %arg10[%c1_11, %c0_12, %c0_13] : memref<26x1x32xf32, #tpu.memory_space<vmem>>, vector<1x1x32xf32>
    %14 = vector.shape_cast %13 : vector<1x1x32xf32> to vector<1x32xf32>
    %15 = vector.broadcast %14 : vector<1x32xf32> to vector<16x32xf32>
    %16 = arith.addf %12, %15 : vector<16x32xf32>
    %cst_14 = arith.constant 0.000000e+00 : f32
    %17 = vector.broadcast %cst_14 : f32 to vector<16x32xf32>
    %18 = arith.maximumf %16, %17 : vector<16x32xf32>
    %c2 = arith.constant 2 : index
    %c0_15 = arith.constant 0 : index
    %c0_16 = arith.constant 0 : index
    %19 = vector.load %arg9[%c2, %c0_15, %c0_16] : memref<41x32x32xf32, #tpu.memory_space<vmem>>, vector<1x32x32xf32>
    %20 = vector.shape_cast %19 : vector<1x32x32xf32> to vector<32x32xf32>
    %cst_17 = arith.constant dense<0.000000e+00> : vector<16x32xf32>
    %21 = tpu.matmul %18, %20, %cst_17 {dimension_numbers = #tpu.dot_dimension_numbers<[1], [0], [0], [1], [0, 0, 1, 1], [], []>} : vector<16x32xf32>, vector<32x32xf32>, vector<16x32xf32> -> vector<16x32xf32>
    %c2_18 = arith.constant 2 : index
    %c0_19 = arith.constant 0 : index
    %c0_20 = arith.constant 0 : index
    %22 = vector.load %arg10[%c2_18, %c0_19, %c0_20] : memref<26x1x32xf32, #tpu.memory_space<vmem>>, vector<1x1x32xf32>
    %23 = vector.shape_cast %22 : vector<1x1x32xf32> to vector<1x32xf32>
    %24 = vector.broadcast %23 : vector<1x32xf32> to vector<16x32xf32>
    %25 = arith.addf %21, %24 : vector<16x32xf32>
    %cst_21 = arith.constant 0.000000e+00 : f32
    %26 = vector.broadcast %cst_21 : f32 to vector<16x32xf32>
    %27 = arith.maximumf %25, %26 : vector<16x32xf32>
    %c0_22 = arith.constant 0 : index
    %c0_23 = arith.constant 0 : index
    %28 = vector.load %arg1[%c0_22, %c0_23] : memref<28x1xf32, #tpu.memory_space<vmem>>, vector<28x1xf32>
    %c0_24 = arith.constant 0 : index
    %c0_25 = arith.constant 0 : index
    %c0_26 = arith.constant 0 : index
    %29 = vector.load %arg7[%c0_24, %c0_25, %c0_26] : memref<2x1x96xf32, #tpu.memory_space<vmem>>, vector<1x1x96xf32>
    %30 = vector.shape_cast %29 : vector<1x1x96xf32> to vector<1x96xf32>
    %31 = vector.broadcast %28 : vector<28x1xf32> to vector<28x96xf32>
    %32 = vector.broadcast %30 : vector<1x96xf32> to vector<28x96xf32>
    %33 = arith.mulf %31, %32 : vector<28x96xf32>
    %c1_27 = arith.constant 1 : index
    %c0_28 = arith.constant 0 : index
    %c0_29 = arith.constant 0 : index
    %34 = vector.load %arg7[%c1_27, %c0_28, %c0_29] : memref<2x1x96xf32, #tpu.memory_space<vmem>>, vector<1x1x96xf32>
    %35 = vector.shape_cast %34 : vector<1x1x96xf32> to vector<1x96xf32>
    %36 = vector.broadcast %35 : vector<1x96xf32> to vector<28x96xf32>
    %37 = arith.addf %33, %36 : vector<28x96xf32>
    %cst_30 = arith.constant 0.000000e+00 : f32
    %38 = vector.broadcast %cst_30 : f32 to vector<28x96xf32>
    %39 = arith.maximumf %37, %38 : vector<28x96xf32>
    %c0_31 = arith.constant 0 : index
    %c0_32 = arith.constant 0 : index
    %40 = vector.load %arg8[%c0_31, %c0_32] : memref<97x3072xf32, #tpu.memory_space<vmem>>, vector<96x3072xf32>
    %cst_33 = arith.constant dense<0.000000e+00> : vector<28x3072xf32>
    %41 = tpu.matmul %39, %40, %cst_33 {dimension_numbers = #tpu.dot_dimension_numbers<[1], [0], [0], [1], [0, 0, 1, 1], [], []>} : vector<28x96xf32>, vector<96x3072xf32>, vector<28x3072xf32> -> vector<28x3072xf32>
    %c96 = arith.constant 96 : index
    %c0_34 = arith.constant 0 : index
    %42 = vector.load %arg8[%c96, %c0_34] : memref<97x3072xf32, #tpu.memory_space<vmem>>, vector<1x3072xf32>
    %43 = vector.broadcast %42 : vector<1x3072xf32> to vector<28x3072xf32>
    %44 = arith.addf %41, %43 : vector<28x3072xf32>
    %c0_35 = arith.constant 0 : index
    %c0_36 = arith.constant 0 : index
    %45 = vector.load %arg2[%c0_35, %c0_36] : memref<28x16xf32, #tpu.memory_space<vmem>>, vector<28x16xf32>
    %c0_37 = arith.constant 0 : index
    %c0_38 = arith.constant 0 : index
    %46 = vector.load %arg3[%c0_37, %c0_38] : memref<16x28xf32, #tpu.memory_space<vmem>>, vector<16x28xf32>
    %c0_39 = arith.constant 0 : index
    %c0_40 = arith.constant 0 : index
    %47 = vector.load %arg5[%c0_39, %c0_40] : memref<32x1024xf32, #tpu.memory_space<vmem>>, vector<32x1024xf32>
    %c0_41 = arith.constant 0 : index
    %c0_42 = arith.constant 0 : index
    %48 = vector.load %arg6[%c0_41, %c0_42] : memref<1024x32xf32, #tpu.memory_space<vmem>>, vector<1024x32xf32>
    %49 = vector.extract_strided_slice %44 {offsets = [0, 0], sizes = [28, 1024], strides = [1, 1]} : vector<28x3072xf32> to vector<28x1024xf32>
    %cst_43 = arith.constant dense<0.000000e+00> : vector<28x32xf32>
    %50 = tpu.matmul %45, %27, %cst_43 {dimension_numbers = #tpu.dot_dimension_numbers<[1], [0], [0], [1], [0, 0, 1, 1], [], []>} : vector<28x16xf32>, vector<16x32xf32>, vector<28x32xf32> -> vector<28x32xf32>
    %cst_44 = arith.constant dense<0.000000e+00> : vector<28x1024xf32>
    %51 = tpu.matmul %50, %47, %cst_44 {dimension_numbers = #tpu.dot_dimension_numbers<[1], [0], [0], [1], [0, 0, 1, 1], [], []>} : vector<28x32xf32>, vector<32x1024xf32>, vector<28x1024xf32> -> vector<28x1024xf32>
    %52 = arith.mulf %51, %49 : vector<28x1024xf32>
    %cst_45 = arith.constant dense<0.000000e+00> : vector<28x32xf32>
    %53 = tpu.matmul %52, %48, %cst_45 {dimension_numbers = #tpu.dot_dimension_numbers<[1], [0], [0], [1], [0, 0, 1, 1], [], []>} : vector<28x1024xf32>, vector<1024x32xf32>, vector<28x32xf32> -> vector<28x32xf32>
    %cst_46 = arith.constant dense<0.000000e+00> : vector<16x32xf32>
    %54 = tpu.matmul %46, %53, %cst_46 {dimension_numbers = #tpu.dot_dimension_numbers<[1], [0], [0], [1], [0, 0, 1, 1], [], []>} : vector<16x28xf32>, vector<28x32xf32>, vector<16x32xf32> -> vector<16x32xf32>
    %c3 = arith.constant 3 : index
    %c0_47 = arith.constant 0 : index
    %c0_48 = arith.constant 0 : index
    %55 = vector.load %arg9[%c3, %c0_47, %c0_48] : memref<41x32x32xf32, #tpu.memory_space<vmem>>, vector<1x32x32xf32>
    %56 = vector.shape_cast %55 : vector<1x32x32xf32> to vector<32x32xf32>
    %cst_49 = arith.constant dense<0.000000e+00> : vector<16x32xf32>
    %57 = tpu.matmul %27, %56, %cst_49 {dimension_numbers = #tpu.dot_dimension_numbers<[1], [0], [0], [1], [0, 0, 1, 1], [], []>} : vector<16x32xf32>, vector<32x32xf32>, vector<16x32xf32> -> vector<16x32xf32>
    %c3_50 = arith.constant 3 : index
    %c0_51 = arith.constant 0 : index
    %c0_52 = arith.constant 0 : index
    %58 = vector.load %arg10[%c3_50, %c0_51, %c0_52] : memref<26x1x32xf32, #tpu.memory_space<vmem>>, vector<1x1x32xf32>
    %59 = vector.shape_cast %58 : vector<1x1x32xf32> to vector<1x32xf32>
    %60 = vector.broadcast %59 : vector<1x32xf32> to vector<16x32xf32>
    %61 = arith.addf %57, %60 : vector<16x32xf32>
    %62 = arith.addf %61, %54 : vector<16x32xf32>
    %cst_53 = arith.constant 0.000000e+00 : f32
    %63 = vector.broadcast %cst_53 : f32 to vector<16x32xf32>
    %64 = arith.maximumf %62, %63 : vector<16x32xf32>
    %c4 = arith.constant 4 : index
    %c0_54 = arith.constant 0 : index
    %c0_55 = arith.constant 0 : index
    %65 = vector.load %arg9[%c4, %c0_54, %c0_55] : memref<41x32x32xf32, #tpu.memory_space<vmem>>, vector<1x32x32xf32>
    %66 = vector.shape_cast %65 : vector<1x32x32xf32> to vector<32x32xf32>
    %cst_56 = arith.constant dense<0.000000e+00> : vector<16x32xf32>
    %67 = tpu.matmul %64, %66, %cst_56 {dimension_numbers = #tpu.dot_dimension_numbers<[1], [0], [0], [1], [0, 0, 1, 1], [], []>} : vector<16x32xf32>, vector<32x32xf32>, vector<16x32xf32> -> vector<16x32xf32>
    %c7 = arith.constant 7 : index
    %c0_57 = arith.constant 0 : index
    %c0_58 = arith.constant 0 : index
    %68 = vector.load %arg9[%c7, %c0_57, %c0_58] : memref<41x32x32xf32, #tpu.memory_space<vmem>>, vector<1x32x32xf32>
    %69 = vector.shape_cast %68 : vector<1x32x32xf32> to vector<32x32xf32>
    %cst_59 = arith.constant dense<0.000000e+00> : vector<16x32xf32>
    %70 = tpu.matmul %27, %69, %cst_59 {dimension_numbers = #tpu.dot_dimension_numbers<[1], [0], [0], [1], [0, 0, 1, 1], [], []>} : vector<16x32xf32>, vector<32x32xf32>, vector<16x32xf32> -> vector<16x32xf32>
    %71 = arith.addf %67, %70 : vector<16x32xf32>
    %c4_60 = arith.constant 4 : index
    %c0_61 = arith.constant 0 : index
    %c0_62 = arith.constant 0 : index
    %72 = vector.load %arg10[%c4_60, %c0_61, %c0_62] : memref<26x1x32xf32, #tpu.memory_space<vmem>>, vector<1x1x32xf32>
    %73 = vector.shape_cast %72 : vector<1x1x32xf32> to vector<1x32xf32>
    %74 = vector.broadcast %73 : vector<1x32xf32> to vector<16x32xf32>
    %75 = arith.addf %71, %74 : vector<16x32xf32>
    %76 = arith.negf %75 : vector<16x32xf32>
    %77 = math.exp %76 : vector<16x32xf32>
    %cst_63 = arith.constant 1.000000e+00 : f32
    %78 = vector.broadcast %cst_63 : f32 to vector<16x32xf32>
    %79 = arith.addf %78, %77 : vector<16x32xf32>
    %80 = arith.divf %78, %79 : vector<16x32xf32>
    %c5 = arith.constant 5 : index
    %c0_64 = arith.constant 0 : index
    %c0_65 = arith.constant 0 : index
    %81 = vector.load %arg9[%c5, %c0_64, %c0_65] : memref<41x32x32xf32, #tpu.memory_space<vmem>>, vector<1x32x32xf32>
    %82 = vector.shape_cast %81 : vector<1x32x32xf32> to vector<32x32xf32>
    %cst_66 = arith.constant dense<0.000000e+00> : vector<16x32xf32>
    %83 = tpu.matmul %64, %82, %cst_66 {dimension_numbers = #tpu.dot_dimension_numbers<[1], [0], [0], [1], [0, 0, 1, 1], [], []>} : vector<16x32xf32>, vector<32x32xf32>, vector<16x32xf32> -> vector<16x32xf32>
    %c8 = arith.constant 8 : index
    %c0_67 = arith.constant 0 : index
    %c0_68 = arith.constant 0 : index
    %84 = vector.load %arg9[%c8, %c0_67, %c0_68] : memref<41x32x32xf32, #tpu.memory_space<vmem>>, vector<1x32x32xf32>
    %85 = vector.shape_cast %84 : vector<1x32x32xf32> to vector<32x32xf32>
    %cst_69 = arith.constant dense<0.000000e+00> : vector<16x32xf32>
    %86 = tpu.matmul %27, %85, %cst_69 {dimension_numbers = #tpu.dot_dimension_numbers<[1], [0], [0], [1], [0, 0, 1, 1], [], []>} : vector<16x32xf32>, vector<32x32xf32>, vector<16x32xf32> -> vector<16x32xf32>
    %87 = arith.addf %83, %86 : vector<16x32xf32>
    %c5_70 = arith.constant 5 : index
    %c0_71 = arith.constant 0 : index
    %c0_72 = arith.constant 0 : index
    %88 = vector.load %arg10[%c5_70, %c0_71, %c0_72] : memref<26x1x32xf32, #tpu.memory_space<vmem>>, vector<1x1x32xf32>
    %89 = vector.shape_cast %88 : vector<1x1x32xf32> to vector<1x32xf32>
    %90 = vector.broadcast %89 : vector<1x32xf32> to vector<16x32xf32>
    %91 = arith.addf %87, %90 : vector<16x32xf32>
    %92 = arith.negf %91 : vector<16x32xf32>
    %93 = math.exp %92 : vector<16x32xf32>
    %cst_73 = arith.constant 1.000000e+00 : f32
    %94 = vector.broadcast %cst_73 : f32 to vector<16x32xf32>
    %95 = arith.addf %94, %93 : vector<16x32xf32>
    %96 = arith.divf %94, %95 : vector<16x32xf32>
    %c6 = arith.constant 6 : index
    %c0_74 = arith.constant 0 : index
    %c0_75 = arith.constant 0 : index
    %97 = vector.load %arg9[%c6, %c0_74, %c0_75] : memref<41x32x32xf32, #tpu.memory_space<vmem>>, vector<1x32x32xf32>
    %98 = vector.shape_cast %97 : vector<1x32x32xf32> to vector<32x32xf32>
    %cst_76 = arith.constant dense<0.000000e+00> : vector<16x32xf32>
    %99 = tpu.matmul %64, %98, %cst_76 {dimension_numbers = #tpu.dot_dimension_numbers<[1], [0], [0], [1], [0, 0, 1, 1], [], []>} : vector<16x32xf32>, vector<32x32xf32>, vector<16x32xf32> -> vector<16x32xf32>
    %c6_77 = arith.constant 6 : index
    %c0_78 = arith.constant 0 : index
    %c0_79 = arith.constant 0 : index
    %100 = vector.load %arg10[%c6_77, %c0_78, %c0_79] : memref<26x1x32xf32, #tpu.memory_space<vmem>>, vector<1x1x32xf32>
    %101 = vector.shape_cast %100 : vector<1x1x32xf32> to vector<1x32xf32>
    %102 = vector.broadcast %101 : vector<1x32xf32> to vector<16x32xf32>
    %103 = arith.addf %99, %102 : vector<16x32xf32>
    %c9 = arith.constant 9 : index
    %c0_80 = arith.constant 0 : index
    %c0_81 = arith.constant 0 : index
    %104 = vector.load %arg9[%c9, %c0_80, %c0_81] : memref<41x32x32xf32, #tpu.memory_space<vmem>>, vector<1x32x32xf32>
    %105 = vector.shape_cast %104 : vector<1x32x32xf32> to vector<32x32xf32>
    %cst_82 = arith.constant dense<0.000000e+00> : vector<16x32xf32>
    %106 = tpu.matmul %27, %105, %cst_82 {dimension_numbers = #tpu.dot_dimension_numbers<[1], [0], [0], [1], [0, 0, 1, 1], [], []>} : vector<16x32xf32>, vector<32x32xf32>, vector<16x32xf32> -> vector<16x32xf32>
    %c7_83 = arith.constant 7 : index
    %c0_84 = arith.constant 0 : index
    %c0_85 = arith.constant 0 : index
    %107 = vector.load %arg10[%c7_83, %c0_84, %c0_85] : memref<26x1x32xf32, #tpu.memory_space<vmem>>, vector<1x1x32xf32>
    %108 = vector.shape_cast %107 : vector<1x1x32xf32> to vector<1x32xf32>
    %109 = vector.broadcast %108 : vector<1x32xf32> to vector<16x32xf32>
    %110 = arith.addf %106, %109 : vector<16x32xf32>
    %111 = arith.mulf %80, %110 : vector<16x32xf32>
    %112 = arith.addf %103, %111 : vector<16x32xf32>
    %113 = math.tanh %112 : vector<16x32xf32>
    %cst_86 = arith.constant 1.000000e+00 : f32
    %114 = vector.broadcast %cst_86 : f32 to vector<16x32xf32>
    %115 = arith.subf %114, %96 : vector<16x32xf32>
    %116 = arith.mulf %115, %113 : vector<16x32xf32>
    %117 = arith.mulf %96, %27 : vector<16x32xf32>
    %118 = arith.addf %116, %117 : vector<16x32xf32>
    %119 = vector.extract_strided_slice %44 {offsets = [0, 1024], sizes = [28, 1024], strides = [1, 1]} : vector<28x3072xf32> to vector<28x1024xf32>
    %cst_87 = arith.constant dense<0.000000e+00> : vector<28x32xf32>
    %120 = tpu.matmul %45, %118, %cst_87 {dimension_numbers = #tpu.dot_dimension_numbers<[1], [0], [0], [1], [0, 0, 1, 1], [], []>} : vector<28x16xf32>, vector<16x32xf32>, vector<28x32xf32> -> vector<28x32xf32>
    %cst_88 = arith.constant dense<0.000000e+00> : vector<28x1024xf32>
    %121 = tpu.matmul %120, %47, %cst_88 {dimension_numbers = #tpu.dot_dimension_numbers<[1], [0], [0], [1], [0, 0, 1, 1], [], []>} : vector<28x32xf32>, vector<32x1024xf32>, vector<28x1024xf32> -> vector<28x1024xf32>
    %122 = arith.mulf %121, %119 : vector<28x1024xf32>
    %cst_89 = arith.constant dense<0.000000e+00> : vector<28x32xf32>
    %123 = tpu.matmul %122, %48, %cst_89 {dimension_numbers = #tpu.dot_dimension_numbers<[1], [0], [0], [1], [0, 0, 1, 1], [], []>} : vector<28x1024xf32>, vector<1024x32xf32>, vector<28x32xf32> -> vector<28x32xf32>
    %cst_90 = arith.constant dense<0.000000e+00> : vector<16x32xf32>
    %124 = tpu.matmul %46, %123, %cst_90 {dimension_numbers = #tpu.dot_dimension_numbers<[1], [0], [0], [1], [0, 0, 1, 1], [], []>} : vector<16x28xf32>, vector<28x32xf32>, vector<16x32xf32> -> vector<16x32xf32>
    %c10 = arith.constant 10 : index
    %c0_91 = arith.constant 0 : index
    %c0_92 = arith.constant 0 : index
    %125 = vector.load %arg9[%c10, %c0_91, %c0_92] : memref<41x32x32xf32, #tpu.memory_space<vmem>>, vector<1x32x32xf32>
    %126 = vector.shape_cast %125 : vector<1x32x32xf32> to vector<32x32xf32>
    %cst_93 = arith.constant dense<0.000000e+00> : vector<16x32xf32>
    %127 = tpu.matmul %118, %126, %cst_93 {dimension_numbers = #tpu.dot_dimension_numbers<[1], [0], [0], [1], [0, 0, 1, 1], [], []>} : vector<16x32xf32>, vector<32x32xf32>, vector<16x32xf32> -> vector<16x32xf32>
    %c8_94 = arith.constant 8 : index
    %c0_95 = arith.constant 0 : index
    %c0_96 = arith.constant 0 : index
    %128 = vector.load %arg10[%c8_94, %c0_95, %c0_96] : memref<26x1x32xf32, #tpu.memory_space<vmem>>, vector<1x1x32xf32>
    %129 = vector.shape_cast %128 : vector<1x1x32xf32> to vector<1x32xf32>
    %130 = vector.broadcast %129 : vector<1x32xf32> to vector<16x32xf32>
    %131 = arith.addf %127, %130 : vector<16x32xf32>
    %132 = arith.addf %131, %124 : vector<16x32xf32>
    %cst_97 = arith.constant 0.000000e+00 : f32
    %133 = vector.broadcast %cst_97 : f32 to vector<16x32xf32>
    %134 = arith.maximumf %132, %133 : vector<16x32xf32>
    %c11 = arith.constant 11 : index
    %c0_98 = arith.constant 0 : index
    %c0_99 = arith.constant 0 : index
    %135 = vector.load %arg9[%c11, %c0_98, %c0_99] : memref<41x32x32xf32, #tpu.memory_space<vmem>>, vector<1x32x32xf32>
    %136 = vector.shape_cast %135 : vector<1x32x32xf32> to vector<32x32xf32>
    %cst_100 = arith.constant dense<0.000000e+00> : vector<16x32xf32>
    %137 = tpu.matmul %134, %136, %cst_100 {dimension_numbers = #tpu.dot_dimension_numbers<[1], [0], [0], [1], [0, 0, 1, 1], [], []>} : vector<16x32xf32>, vector<32x32xf32>, vector<16x32xf32> -> vector<16x32xf32>
    %c14 = arith.constant 14 : index
    %c0_101 = arith.constant 0 : index
    %c0_102 = arith.constant 0 : index
    %138 = vector.load %arg9[%c14, %c0_101, %c0_102] : memref<41x32x32xf32, #tpu.memory_space<vmem>>, vector<1x32x32xf32>
    %139 = vector.shape_cast %138 : vector<1x32x32xf32> to vector<32x32xf32>
    %cst_103 = arith.constant dense<0.000000e+00> : vector<16x32xf32>
    %140 = tpu.matmul %118, %139, %cst_103 {dimension_numbers = #tpu.dot_dimension_numbers<[1], [0], [0], [1], [0, 0, 1, 1], [], []>} : vector<16x32xf32>, vector<32x32xf32>, vector<16x32xf32> -> vector<16x32xf32>
    %141 = arith.addf %137, %140 : vector<16x32xf32>
    %c9_104 = arith.constant 9 : index
    %c0_105 = arith.constant 0 : index
    %c0_106 = arith.constant 0 : index
    %142 = vector.load %arg10[%c9_104, %c0_105, %c0_106] : memref<26x1x32xf32, #tpu.memory_space<vmem>>, vector<1x1x32xf32>
    %143 = vector.shape_cast %142 : vector<1x1x32xf32> to vector<1x32xf32>
    %144 = vector.broadcast %143 : vector<1x32xf32> to vector<16x32xf32>
    %145 = arith.addf %141, %144 : vector<16x32xf32>
    %146 = arith.negf %145 : vector<16x32xf32>
    %147 = math.exp %146 : vector<16x32xf32>
    %cst_107 = arith.constant 1.000000e+00 : f32
    %148 = vector.broadcast %cst_107 : f32 to vector<16x32xf32>
    %149 = arith.addf %148, %147 : vector<16x32xf32>
    %150 = arith.divf %148, %149 : vector<16x32xf32>
    %c12 = arith.constant 12 : index
    %c0_108 = arith.constant 0 : index
    %c0_109 = arith.constant 0 : index
    %151 = vector.load %arg9[%c12, %c0_108, %c0_109] : memref<41x32x32xf32, #tpu.memory_space<vmem>>, vector<1x32x32xf32>
    %152 = vector.shape_cast %151 : vector<1x32x32xf32> to vector<32x32xf32>
    %cst_110 = arith.constant dense<0.000000e+00> : vector<16x32xf32>
    %153 = tpu.matmul %134, %152, %cst_110 {dimension_numbers = #tpu.dot_dimension_numbers<[1], [0], [0], [1], [0, 0, 1, 1], [], []>} : vector<16x32xf32>, vector<32x32xf32>, vector<16x32xf32> -> vector<16x32xf32>
    %c15 = arith.constant 15 : index
    %c0_111 = arith.constant 0 : index
    %c0_112 = arith.constant 0 : index
    %154 = vector.load %arg9[%c15, %c0_111, %c0_112] : memref<41x32x32xf32, #tpu.memory_space<vmem>>, vector<1x32x32xf32>
    %155 = vector.shape_cast %154 : vector<1x32x32xf32> to vector<32x32xf32>
    %cst_113 = arith.constant dense<0.000000e+00> : vector<16x32xf32>
    %156 = tpu.matmul %118, %155, %cst_113 {dimension_numbers = #tpu.dot_dimension_numbers<[1], [0], [0], [1], [0, 0, 1, 1], [], []>} : vector<16x32xf32>, vector<32x32xf32>, vector<16x32xf32> -> vector<16x32xf32>
    %157 = arith.addf %153, %156 : vector<16x32xf32>
    %c10_114 = arith.constant 10 : index
    %c0_115 = arith.constant 0 : index
    %c0_116 = arith.constant 0 : index
    %158 = vector.load %arg10[%c10_114, %c0_115, %c0_116] : memref<26x1x32xf32, #tpu.memory_space<vmem>>, vector<1x1x32xf32>
    %159 = vector.shape_cast %158 : vector<1x1x32xf32> to vector<1x32xf32>
    %160 = vector.broadcast %159 : vector<1x32xf32> to vector<16x32xf32>
    %161 = arith.addf %157, %160 : vector<16x32xf32>
    %162 = arith.negf %161 : vector<16x32xf32>
    %163 = math.exp %162 : vector<16x32xf32>
    %cst_117 = arith.constant 1.000000e+00 : f32
    %164 = vector.broadcast %cst_117 : f32 to vector<16x32xf32>
    %165 = arith.addf %164, %163 : vector<16x32xf32>
    %166 = arith.divf %164, %165 : vector<16x32xf32>
    %c13 = arith.constant 13 : index
    %c0_118 = arith.constant 0 : index
    %c0_119 = arith.constant 0 : index
    %167 = vector.load %arg9[%c13, %c0_118, %c0_119] : memref<41x32x32xf32, #tpu.memory_space<vmem>>, vector<1x32x32xf32>
    %168 = vector.shape_cast %167 : vector<1x32x32xf32> to vector<32x32xf32>
    %cst_120 = arith.constant dense<0.000000e+00> : vector<16x32xf32>
    %169 = tpu.matmul %134, %168, %cst_120 {dimension_numbers = #tpu.dot_dimension_numbers<[1], [0], [0], [1], [0, 0, 1, 1], [], []>} : vector<16x32xf32>, vector<32x32xf32>, vector<16x32xf32> -> vector<16x32xf32>
    %c11_121 = arith.constant 11 : index
    %c0_122 = arith.constant 0 : index
    %c0_123 = arith.constant 0 : index
    %170 = vector.load %arg10[%c11_121, %c0_122, %c0_123] : memref<26x1x32xf32, #tpu.memory_space<vmem>>, vector<1x1x32xf32>
    %171 = vector.shape_cast %170 : vector<1x1x32xf32> to vector<1x32xf32>
    %172 = vector.broadcast %171 : vector<1x32xf32> to vector<16x32xf32>
    %173 = arith.addf %169, %172 : vector<16x32xf32>
    %c16 = arith.constant 16 : index
    %c0_124 = arith.constant 0 : index
    %c0_125 = arith.constant 0 : index
    %174 = vector.load %arg9[%c16, %c0_124, %c0_125] : memref<41x32x32xf32, #tpu.memory_space<vmem>>, vector<1x32x32xf32>
    %175 = vector.shape_cast %174 : vector<1x32x32xf32> to vector<32x32xf32>
    %cst_126 = arith.constant dense<0.000000e+00> : vector<16x32xf32>
    %176 = tpu.matmul %118, %175, %cst_126 {dimension_numbers = #tpu.dot_dimension_numbers<[1], [0], [0], [1], [0, 0, 1, 1], [], []>} : vector<16x32xf32>, vector<32x32xf32>, vector<16x32xf32> -> vector<16x32xf32>
    %c12_127 = arith.constant 12 : index
    %c0_128 = arith.constant 0 : index
    %c0_129 = arith.constant 0 : index
    %177 = vector.load %arg10[%c12_127, %c0_128, %c0_129] : memref<26x1x32xf32, #tpu.memory_space<vmem>>, vector<1x1x32xf32>
    %178 = vector.shape_cast %177 : vector<1x1x32xf32> to vector<1x32xf32>
    %179 = vector.broadcast %178 : vector<1x32xf32> to vector<16x32xf32>
    %180 = arith.addf %176, %179 : vector<16x32xf32>
    %181 = arith.mulf %150, %180 : vector<16x32xf32>
    %182 = arith.addf %173, %181 : vector<16x32xf32>
    %183 = math.tanh %182 : vector<16x32xf32>
    %cst_130 = arith.constant 1.000000e+00 : f32
    %184 = vector.broadcast %cst_130 : f32 to vector<16x32xf32>
    %185 = arith.subf %184, %166 : vector<16x32xf32>
    %186 = arith.mulf %185, %183 : vector<16x32xf32>
    %187 = arith.mulf %166, %118 : vector<16x32xf32>
    %188 = arith.addf %186, %187 : vector<16x32xf32>
    %189 = vector.extract_strided_slice %44 {offsets = [0, 2048], sizes = [28, 1024], strides = [1, 1]} : vector<28x3072xf32> to vector<28x1024xf32>
    %cst_131 = arith.constant dense<0.000000e+00> : vector<28x32xf32>
    %190 = tpu.matmul %45, %188, %cst_131 {dimension_numbers = #tpu.dot_dimension_numbers<[1], [0], [0], [1], [0, 0, 1, 1], [], []>} : vector<28x16xf32>, vector<16x32xf32>, vector<28x32xf32> -> vector<28x32xf32>
    %cst_132 = arith.constant dense<0.000000e+00> : vector<28x1024xf32>
    %191 = tpu.matmul %190, %47, %cst_132 {dimension_numbers = #tpu.dot_dimension_numbers<[1], [0], [0], [1], [0, 0, 1, 1], [], []>} : vector<28x32xf32>, vector<32x1024xf32>, vector<28x1024xf32> -> vector<28x1024xf32>
    %192 = arith.mulf %191, %189 : vector<28x1024xf32>
    %cst_133 = arith.constant dense<0.000000e+00> : vector<28x32xf32>
    %193 = tpu.matmul %192, %48, %cst_133 {dimension_numbers = #tpu.dot_dimension_numbers<[1], [0], [0], [1], [0, 0, 1, 1], [], []>} : vector<28x1024xf32>, vector<1024x32xf32>, vector<28x32xf32> -> vector<28x32xf32>
    %cst_134 = arith.constant dense<0.000000e+00> : vector<16x32xf32>
    %194 = tpu.matmul %46, %193, %cst_134 {dimension_numbers = #tpu.dot_dimension_numbers<[1], [0], [0], [1], [0, 0, 1, 1], [], []>} : vector<16x28xf32>, vector<28x32xf32>, vector<16x32xf32> -> vector<16x32xf32>
    %c17 = arith.constant 17 : index
    %c0_135 = arith.constant 0 : index
    %c0_136 = arith.constant 0 : index
    %195 = vector.load %arg9[%c17, %c0_135, %c0_136] : memref<41x32x32xf32, #tpu.memory_space<vmem>>, vector<1x32x32xf32>
    %196 = vector.shape_cast %195 : vector<1x32x32xf32> to vector<32x32xf32>
    %cst_137 = arith.constant dense<0.000000e+00> : vector<16x32xf32>
    %197 = tpu.matmul %188, %196, %cst_137 {dimension_numbers = #tpu.dot_dimension_numbers<[1], [0], [0], [1], [0, 0, 1, 1], [], []>} : vector<16x32xf32>, vector<32x32xf32>, vector<16x32xf32> -> vector<16x32xf32>
    %c13_138 = arith.constant 13 : index
    %c0_139 = arith.constant 0 : index
    %c0_140 = arith.constant 0 : index
    %198 = vector.load %arg10[%c13_138, %c0_139, %c0_140] : memref<26x1x32xf32, #tpu.memory_space<vmem>>, vector<1x1x32xf32>
    %199 = vector.shape_cast %198 : vector<1x1x32xf32> to vector<1x32xf32>
    %200 = vector.broadcast %199 : vector<1x32xf32> to vector<16x32xf32>
    %201 = arith.addf %197, %200 : vector<16x32xf32>
    %202 = arith.addf %201, %194 : vector<16x32xf32>
    %cst_141 = arith.constant 0.000000e+00 : f32
    %203 = vector.broadcast %cst_141 : f32 to vector<16x32xf32>
    %204 = arith.maximumf %202, %203 : vector<16x32xf32>
    %c18 = arith.constant 18 : index
    %c0_142 = arith.constant 0 : index
    %c0_143 = arith.constant 0 : index
    %205 = vector.load %arg9[%c18, %c0_142, %c0_143] : memref<41x32x32xf32, #tpu.memory_space<vmem>>, vector<1x32x32xf32>
    %206 = vector.shape_cast %205 : vector<1x32x32xf32> to vector<32x32xf32>
    %cst_144 = arith.constant dense<0.000000e+00> : vector<16x32xf32>
    %207 = tpu.matmul %204, %206, %cst_144 {dimension_numbers = #tpu.dot_dimension_numbers<[1], [0], [0], [1], [0, 0, 1, 1], [], []>} : vector<16x32xf32>, vector<32x32xf32>, vector<16x32xf32> -> vector<16x32xf32>
    %c21 = arith.constant 21 : index
    %c0_145 = arith.constant 0 : index
    %c0_146 = arith.constant 0 : index
    %208 = vector.load %arg9[%c21, %c0_145, %c0_146] : memref<41x32x32xf32, #tpu.memory_space<vmem>>, vector<1x32x32xf32>
    %209 = vector.shape_cast %208 : vector<1x32x32xf32> to vector<32x32xf32>
    %cst_147 = arith.constant dense<0.000000e+00> : vector<16x32xf32>
    %210 = tpu.matmul %188, %209, %cst_147 {dimension_numbers = #tpu.dot_dimension_numbers<[1], [0], [0], [1], [0, 0, 1, 1], [], []>} : vector<16x32xf32>, vector<32x32xf32>, vector<16x32xf32> -> vector<16x32xf32>
    %211 = arith.addf %207, %210 : vector<16x32xf32>
    %c14_148 = arith.constant 14 : index
    %c0_149 = arith.constant 0 : index
    %c0_150 = arith.constant 0 : index
    %212 = vector.load %arg10[%c14_148, %c0_149, %c0_150] : memref<26x1x32xf32, #tpu.memory_space<vmem>>, vector<1x1x32xf32>
    %213 = vector.shape_cast %212 : vector<1x1x32xf32> to vector<1x32xf32>
    %214 = vector.broadcast %213 : vector<1x32xf32> to vector<16x32xf32>
    %215 = arith.addf %211, %214 : vector<16x32xf32>
    %216 = arith.negf %215 : vector<16x32xf32>
    %217 = math.exp %216 : vector<16x32xf32>
    %cst_151 = arith.constant 1.000000e+00 : f32
    %218 = vector.broadcast %cst_151 : f32 to vector<16x32xf32>
    %219 = arith.addf %218, %217 : vector<16x32xf32>
    %220 = arith.divf %218, %219 : vector<16x32xf32>
    %c19 = arith.constant 19 : index
    %c0_152 = arith.constant 0 : index
    %c0_153 = arith.constant 0 : index
    %221 = vector.load %arg9[%c19, %c0_152, %c0_153] : memref<41x32x32xf32, #tpu.memory_space<vmem>>, vector<1x32x32xf32>
    %222 = vector.shape_cast %221 : vector<1x32x32xf32> to vector<32x32xf32>
    %cst_154 = arith.constant dense<0.000000e+00> : vector<16x32xf32>
    %223 = tpu.matmul %204, %222, %cst_154 {dimension_numbers = #tpu.dot_dimension_numbers<[1], [0], [0], [1], [0, 0, 1, 1], [], []>} : vector<16x32xf32>, vector<32x32xf32>, vector<16x32xf32> -> vector<16x32xf32>
    %c22 = arith.constant 22 : index
    %c0_155 = arith.constant 0 : index
    %c0_156 = arith.constant 0 : index
    %224 = vector.load %arg9[%c22, %c0_155, %c0_156] : memref<41x32x32xf32, #tpu.memory_space<vmem>>, vector<1x32x32xf32>
    %225 = vector.shape_cast %224 : vector<1x32x32xf32> to vector<32x32xf32>
    %cst_157 = arith.constant dense<0.000000e+00> : vector<16x32xf32>
    %226 = tpu.matmul %188, %225, %cst_157 {dimension_numbers = #tpu.dot_dimension_numbers<[1], [0], [0], [1], [0, 0, 1, 1], [], []>} : vector<16x32xf32>, vector<32x32xf32>, vector<16x32xf32> -> vector<16x32xf32>
    %227 = arith.addf %223, %226 : vector<16x32xf32>
    %c15_158 = arith.constant 15 : index
    %c0_159 = arith.constant 0 : index
    %c0_160 = arith.constant 0 : index
    %228 = vector.load %arg10[%c15_158, %c0_159, %c0_160] : memref<26x1x32xf32, #tpu.memory_space<vmem>>, vector<1x1x32xf32>
    %229 = vector.shape_cast %228 : vector<1x1x32xf32> to vector<1x32xf32>
    %230 = vector.broadcast %229 : vector<1x32xf32> to vector<16x32xf32>
    %231 = arith.addf %227, %230 : vector<16x32xf32>
    %232 = arith.negf %231 : vector<16x32xf32>
    %233 = math.exp %232 : vector<16x32xf32>
    %cst_161 = arith.constant 1.000000e+00 : f32
    %234 = vector.broadcast %cst_161 : f32 to vector<16x32xf32>
    %235 = arith.addf %234, %233 : vector<16x32xf32>
    %236 = arith.divf %234, %235 : vector<16x32xf32>
    %c20 = arith.constant 20 : index
    %c0_162 = arith.constant 0 : index
    %c0_163 = arith.constant 0 : index
    %237 = vector.load %arg9[%c20, %c0_162, %c0_163] : memref<41x32x32xf32, #tpu.memory_space<vmem>>, vector<1x32x32xf32>
    %238 = vector.shape_cast %237 : vector<1x32x32xf32> to vector<32x32xf32>
    %cst_164 = arith.constant dense<0.000000e+00> : vector<16x32xf32>
    %239 = tpu.matmul %204, %238, %cst_164 {dimension_numbers = #tpu.dot_dimension_numbers<[1], [0], [0], [1], [0, 0, 1, 1], [], []>} : vector<16x32xf32>, vector<32x32xf32>, vector<16x32xf32> -> vector<16x32xf32>
    %c16_165 = arith.constant 16 : index
    %c0_166 = arith.constant 0 : index
    %c0_167 = arith.constant 0 : index
    %240 = vector.load %arg10[%c16_165, %c0_166, %c0_167] : memref<26x1x32xf32, #tpu.memory_space<vmem>>, vector<1x1x32xf32>
    %241 = vector.shape_cast %240 : vector<1x1x32xf32> to vector<1x32xf32>
    %242 = vector.broadcast %241 : vector<1x32xf32> to vector<16x32xf32>
    %243 = arith.addf %239, %242 : vector<16x32xf32>
    %c23 = arith.constant 23 : index
    %c0_168 = arith.constant 0 : index
    %c0_169 = arith.constant 0 : index
    %244 = vector.load %arg9[%c23, %c0_168, %c0_169] : memref<41x32x32xf32, #tpu.memory_space<vmem>>, vector<1x32x32xf32>
    %245 = vector.shape_cast %244 : vector<1x32x32xf32> to vector<32x32xf32>
    %cst_170 = arith.constant dense<0.000000e+00> : vector<16x32xf32>
    %246 = tpu.matmul %188, %245, %cst_170 {dimension_numbers = #tpu.dot_dimension_numbers<[1], [0], [0], [1], [0, 0, 1, 1], [], []>} : vector<16x32xf32>, vector<32x32xf32>, vector<16x32xf32> -> vector<16x32xf32>
    %c17_171 = arith.constant 17 : index
    %c0_172 = arith.constant 0 : index
    %c0_173 = arith.constant 0 : index
    %247 = vector.load %arg10[%c17_171, %c0_172, %c0_173] : memref<26x1x32xf32, #tpu.memory_space<vmem>>, vector<1x1x32xf32>
    %248 = vector.shape_cast %247 : vector<1x1x32xf32> to vector<1x32xf32>
    %249 = vector.broadcast %248 : vector<1x32xf32> to vector<16x32xf32>
    %250 = arith.addf %246, %249 : vector<16x32xf32>
    %251 = arith.mulf %220, %250 : vector<16x32xf32>
    %252 = arith.addf %243, %251 : vector<16x32xf32>
    %253 = math.tanh %252 : vector<16x32xf32>
    %cst_174 = arith.constant 1.000000e+00 : f32
    %254 = vector.broadcast %cst_174 : f32 to vector<16x32xf32>
    %255 = arith.subf %254, %236 : vector<16x32xf32>
    %256 = arith.mulf %255, %253 : vector<16x32xf32>
    %257 = arith.mulf %236, %188 : vector<16x32xf32>
    %258 = arith.addf %256, %257 : vector<16x32xf32>
    %c0_175 = arith.constant 0 : index
    %c0_176 = arith.constant 0 : index
    %259 = vector.load %arg4[%c0_175, %c0_176] : memref<2x16xf32, #tpu.memory_space<vmem>>, vector<2x16xf32>
    %cst_177 = arith.constant 0.000000e+00 : f32
    %260 = vector.broadcast %cst_177 : f32 to vector<2x32xf32>
    %c18_178 = arith.constant 18 : index
    %c0_179 = arith.constant 0 : index
    %c0_180 = arith.constant 0 : index
    %261 = vector.load %arg10[%c18_178, %c0_179, %c0_180] : memref<26x1x32xf32, #tpu.memory_space<vmem>>, vector<1x1x32xf32>
    %262 = vector.shape_cast %261 : vector<1x1x32xf32> to vector<1x32xf32>
    %263 = arith.negf %262 : vector<1x32xf32>
    %264 = math.exp %263 : vector<1x32xf32>
    %cst_181 = arith.constant 1.000000e+00 : f32
    %265 = vector.broadcast %cst_181 : f32 to vector<1x32xf32>
    %266 = arith.addf %265, %264 : vector<1x32xf32>
    %267 = arith.divf %265, %266 : vector<1x32xf32>
    %c19_182 = arith.constant 19 : index
    %c0_183 = arith.constant 0 : index
    %c0_184 = arith.constant 0 : index
    %268 = vector.load %arg10[%c19_182, %c0_183, %c0_184] : memref<26x1x32xf32, #tpu.memory_space<vmem>>, vector<1x1x32xf32>
    %269 = vector.shape_cast %268 : vector<1x1x32xf32> to vector<1x32xf32>
    %270 = arith.negf %269 : vector<1x32xf32>
    %271 = math.exp %270 : vector<1x32xf32>
    %cst_185 = arith.constant 1.000000e+00 : f32
    %272 = vector.broadcast %cst_185 : f32 to vector<1x32xf32>
    %273 = arith.addf %272, %271 : vector<1x32xf32>
    %274 = arith.divf %272, %273 : vector<1x32xf32>
    %c20_186 = arith.constant 20 : index
    %c0_187 = arith.constant 0 : index
    %c0_188 = arith.constant 0 : index
    %275 = vector.load %arg10[%c20_186, %c0_187, %c0_188] : memref<26x1x32xf32, #tpu.memory_space<vmem>>, vector<1x1x32xf32>
    %276 = vector.shape_cast %275 : vector<1x1x32xf32> to vector<1x32xf32>
    %277 = math.tanh %276 : vector<1x32xf32>
    %c21_189 = arith.constant 21 : index
    %c0_190 = arith.constant 0 : index
    %c0_191 = arith.constant 0 : index
    %278 = vector.load %arg10[%c21_189, %c0_190, %c0_191] : memref<26x1x32xf32, #tpu.memory_space<vmem>>, vector<1x1x32xf32>
    %279 = vector.shape_cast %278 : vector<1x1x32xf32> to vector<1x32xf32>
    %280 = arith.negf %279 : vector<1x32xf32>
    %281 = math.exp %280 : vector<1x32xf32>
    %cst_192 = arith.constant 1.000000e+00 : f32
    %282 = vector.broadcast %cst_192 : f32 to vector<1x32xf32>
    %283 = arith.addf %282, %281 : vector<1x32xf32>
    %284 = arith.divf %282, %283 : vector<1x32xf32>
    %285 = vector.broadcast %274 : vector<1x32xf32> to vector<2x32xf32>
    %286 = arith.mulf %285, %260 : vector<2x32xf32>
    %287 = arith.mulf %267, %277 : vector<1x32xf32>
    %288 = vector.broadcast %287 : vector<1x32xf32> to vector<2x32xf32>
    %289 = arith.addf %286, %288 : vector<2x32xf32>
    %290 = math.tanh %289 : vector<2x32xf32>
    %291 = vector.broadcast %284 : vector<1x32xf32> to vector<2x32xf32>
    %292 = arith.mulf %291, %290 : vector<2x32xf32>
    %cst_193 = arith.constant dense<0.000000e+00> : vector<2x16xf32>
    %293 = tpu.matmul %292, %258, %cst_193 {dimension_numbers = #tpu.dot_dimension_numbers<[1], [1], [0], [0], [0, 0, 1, 0], [], []>} : vector<2x32xf32>, vector<16x32xf32>, vector<2x16xf32> -> vector<2x16xf32>
    %294 = arith.addf %293, %259 : vector<2x16xf32>
    %cst_194 = arith.constant dense<0xFF800000> : vector<2xf32>
    %295 = vector.multi_reduction <maximumf>, %294, %cst_194 [1] : vector<2x16xf32> to vector<2xf32>
    %296 = vector.shape_cast %295 : vector<2xf32> to vector<2x1xf32>
    %297 = vector.broadcast %296 : vector<2x1xf32> to vector<2x16xf32>
    %298 = arith.subf %294, %297 : vector<2x16xf32>
    %299 = math.exp %298 : vector<2x16xf32>
    %cst_195 = arith.constant dense<0.000000e+00> : vector<2xf32>
    %300 = vector.multi_reduction <add>, %299, %cst_195 [1] : vector<2x16xf32> to vector<2xf32>
    %301 = vector.shape_cast %300 : vector<2xf32> to vector<2x1xf32>
    %cst_196 = arith.constant 9.99999968E-21 : f32
    %302 = vector.broadcast %cst_196 : f32 to vector<2x1xf32>
    %303 = arith.maximumf %301, %302 : vector<2x1xf32>
    %304 = vector.broadcast %303 : vector<2x1xf32> to vector<2x16xf32>
    %305 = arith.divf %299, %304 : vector<2x16xf32>
    %cst_197 = arith.constant dense<0.000000e+00> : vector<2x32xf32>
    %306 = tpu.matmul %305, %258, %cst_197 {dimension_numbers = #tpu.dot_dimension_numbers<[1], [0], [0], [1], [0, 0, 1, 1], [], []>} : vector<2x16xf32>, vector<16x32xf32>, vector<2x32xf32> -> vector<2x32xf32>
    %c18_198 = arith.constant 18 : index
    %c0_199 = arith.constant 0 : index
    %c0_200 = arith.constant 0 : index
    %307 = vector.load %arg10[%c18_198, %c0_199, %c0_200] : memref<26x1x32xf32, #tpu.memory_space<vmem>>, vector<1x1x32xf32>
    %308 = vector.shape_cast %307 : vector<1x1x32xf32> to vector<1x32xf32>
    %c24 = arith.constant 24 : index
    %c0_201 = arith.constant 0 : index
    %c0_202 = arith.constant 0 : index
    %309 = vector.load %arg9[%c24, %c0_201, %c0_202] : memref<41x32x32xf32, #tpu.memory_space<vmem>>, vector<1x32x32xf32>
    %310 = vector.shape_cast %309 : vector<1x32x32xf32> to vector<32x32xf32>
    %cst_203 = arith.constant dense<0.000000e+00> : vector<2x32xf32>
    %311 = tpu.matmul %292, %310, %cst_203 {dimension_numbers = #tpu.dot_dimension_numbers<[1], [0], [0], [1], [0, 0, 1, 1], [], []>} : vector<2x32xf32>, vector<32x32xf32>, vector<2x32xf32> -> vector<2x32xf32>
    %312 = vector.broadcast %308 : vector<1x32xf32> to vector<2x32xf32>
    %313 = arith.addf %312, %311 : vector<2x32xf32>
    %c25 = arith.constant 25 : index
    %c0_204 = arith.constant 0 : index
    %c0_205 = arith.constant 0 : index
    %314 = vector.load %arg9[%c25, %c0_204, %c0_205] : memref<41x32x32xf32, #tpu.memory_space<vmem>>, vector<1x32x32xf32>
    %315 = vector.shape_cast %314 : vector<1x32x32xf32> to vector<32x32xf32>
    %cst_206 = arith.constant dense<0.000000e+00> : vector<2x32xf32>
    %316 = tpu.matmul %306, %315, %cst_206 {dimension_numbers = #tpu.dot_dimension_numbers<[1], [0], [0], [1], [0, 0, 1, 1], [], []>} : vector<2x32xf32>, vector<32x32xf32>, vector<2x32xf32> -> vector<2x32xf32>
    %317 = arith.addf %313, %316 : vector<2x32xf32>
    %c26 = arith.constant 26 : index
    %c0_207 = arith.constant 0 : index
    %c0_208 = arith.constant 0 : index
    %318 = vector.load %arg9[%c26, %c0_207, %c0_208] : memref<41x32x32xf32, #tpu.memory_space<vmem>>, vector<1x32x32xf32>
    %319 = vector.shape_cast %318 : vector<1x32x32xf32> to vector<32x32xf32>
    %cst_209 = arith.constant dense<0.000000e+00> : vector<2x32xf32>
    %320 = tpu.matmul %292, %319, %cst_209 {dimension_numbers = #tpu.dot_dimension_numbers<[1], [0], [0], [1], [0, 0, 1, 1], [], []>} : vector<2x32xf32>, vector<32x32xf32>, vector<2x32xf32> -> vector<2x32xf32>
    %321 = arith.addf %317, %320 : vector<2x32xf32>
    %322 = arith.negf %321 : vector<2x32xf32>
    %323 = math.exp %322 : vector<2x32xf32>
    %cst_210 = arith.constant 1.000000e+00 : f32
    %324 = vector.broadcast %cst_210 : f32 to vector<2x32xf32>
    %325 = arith.addf %324, %323 : vector<2x32xf32>
    %326 = arith.divf %324, %325 : vector<2x32xf32>
    %c19_211 = arith.constant 19 : index
    %c0_212 = arith.constant 0 : index
    %c0_213 = arith.constant 0 : index
    %327 = vector.load %arg10[%c19_211, %c0_212, %c0_213] : memref<26x1x32xf32, #tpu.memory_space<vmem>>, vector<1x1x32xf32>
    %328 = vector.shape_cast %327 : vector<1x1x32xf32> to vector<1x32xf32>
    %c27 = arith.constant 27 : index
    %c0_214 = arith.constant 0 : index
    %c0_215 = arith.constant 0 : index
    %329 = vector.load %arg9[%c27, %c0_214, %c0_215] : memref<41x32x32xf32, #tpu.memory_space<vmem>>, vector<1x32x32xf32>
    %330 = vector.shape_cast %329 : vector<1x32x32xf32> to vector<32x32xf32>
    %cst_216 = arith.constant dense<0.000000e+00> : vector<2x32xf32>
    %331 = tpu.matmul %292, %330, %cst_216 {dimension_numbers = #tpu.dot_dimension_numbers<[1], [0], [0], [1], [0, 0, 1, 1], [], []>} : vector<2x32xf32>, vector<32x32xf32>, vector<2x32xf32> -> vector<2x32xf32>
    %332 = vector.broadcast %328 : vector<1x32xf32> to vector<2x32xf32>
    %333 = arith.addf %332, %331 : vector<2x32xf32>
    %c28 = arith.constant 28 : index
    %c0_217 = arith.constant 0 : index
    %c0_218 = arith.constant 0 : index
    %334 = vector.load %arg9[%c28, %c0_217, %c0_218] : memref<41x32x32xf32, #tpu.memory_space<vmem>>, vector<1x32x32xf32>
    %335 = vector.shape_cast %334 : vector<1x32x32xf32> to vector<32x32xf32>
    %cst_219 = arith.constant dense<0.000000e+00> : vector<2x32xf32>
    %336 = tpu.matmul %306, %335, %cst_219 {dimension_numbers = #tpu.dot_dimension_numbers<[1], [0], [0], [1], [0, 0, 1, 1], [], []>} : vector<2x32xf32>, vector<32x32xf32>, vector<2x32xf32> -> vector<2x32xf32>
    %337 = arith.addf %333, %336 : vector<2x32xf32>
    %c29 = arith.constant 29 : index
    %c0_220 = arith.constant 0 : index
    %c0_221 = arith.constant 0 : index
    %338 = vector.load %arg9[%c29, %c0_220, %c0_221] : memref<41x32x32xf32, #tpu.memory_space<vmem>>, vector<1x32x32xf32>
    %339 = vector.shape_cast %338 : vector<1x32x32xf32> to vector<32x32xf32>
    %cst_222 = arith.constant dense<0.000000e+00> : vector<2x32xf32>
    %340 = tpu.matmul %292, %339, %cst_222 {dimension_numbers = #tpu.dot_dimension_numbers<[1], [0], [0], [1], [0, 0, 1, 1], [], []>} : vector<2x32xf32>, vector<32x32xf32>, vector<2x32xf32> -> vector<2x32xf32>
    %341 = arith.addf %337, %340 : vector<2x32xf32>
    %342 = arith.negf %341 : vector<2x32xf32>
    %343 = math.exp %342 : vector<2x32xf32>
    %cst_223 = arith.constant 1.000000e+00 : f32
    %344 = vector.broadcast %cst_223 : f32 to vector<2x32xf32>
    %345 = arith.addf %344, %343 : vector<2x32xf32>
    %346 = arith.divf %344, %345 : vector<2x32xf32>
    %c20_224 = arith.constant 20 : index
    %c0_225 = arith.constant 0 : index
    %c0_226 = arith.constant 0 : index
    %347 = vector.load %arg10[%c20_224, %c0_225, %c0_226] : memref<26x1x32xf32, #tpu.memory_space<vmem>>, vector<1x1x32xf32>
    %348 = vector.shape_cast %347 : vector<1x1x32xf32> to vector<1x32xf32>
    %c30 = arith.constant 30 : index
    %c0_227 = arith.constant 0 : index
    %c0_228 = arith.constant 0 : index
    %349 = vector.load %arg9[%c30, %c0_227, %c0_228] : memref<41x32x32xf32, #tpu.memory_space<vmem>>, vector<1x32x32xf32>
    %350 = vector.shape_cast %349 : vector<1x32x32xf32> to vector<32x32xf32>
    %cst_229 = arith.constant dense<0.000000e+00> : vector<2x32xf32>
    %351 = tpu.matmul %292, %350, %cst_229 {dimension_numbers = #tpu.dot_dimension_numbers<[1], [0], [0], [1], [0, 0, 1, 1], [], []>} : vector<2x32xf32>, vector<32x32xf32>, vector<2x32xf32> -> vector<2x32xf32>
    %352 = vector.broadcast %348 : vector<1x32xf32> to vector<2x32xf32>
    %353 = arith.addf %352, %351 : vector<2x32xf32>
    %c31 = arith.constant 31 : index
    %c0_230 = arith.constant 0 : index
    %c0_231 = arith.constant 0 : index
    %354 = vector.load %arg9[%c31, %c0_230, %c0_231] : memref<41x32x32xf32, #tpu.memory_space<vmem>>, vector<1x32x32xf32>
    %355 = vector.shape_cast %354 : vector<1x32x32xf32> to vector<32x32xf32>
    %cst_232 = arith.constant dense<0.000000e+00> : vector<2x32xf32>
    %356 = tpu.matmul %306, %355, %cst_232 {dimension_numbers = #tpu.dot_dimension_numbers<[1], [0], [0], [1], [0, 0, 1, 1], [], []>} : vector<2x32xf32>, vector<32x32xf32>, vector<2x32xf32> -> vector<2x32xf32>
    %357 = arith.addf %353, %356 : vector<2x32xf32>
    %c32 = arith.constant 32 : index
    %c0_233 = arith.constant 0 : index
    %c0_234 = arith.constant 0 : index
    %358 = vector.load %arg9[%c32, %c0_233, %c0_234] : memref<41x32x32xf32, #tpu.memory_space<vmem>>, vector<1x32x32xf32>
    %359 = vector.shape_cast %358 : vector<1x32x32xf32> to vector<32x32xf32>
    %cst_235 = arith.constant dense<0.000000e+00> : vector<2x32xf32>
    %360 = tpu.matmul %292, %359, %cst_235 {dimension_numbers = #tpu.dot_dimension_numbers<[1], [0], [0], [1], [0, 0, 1, 1], [], []>} : vector<2x32xf32>, vector<32x32xf32>, vector<2x32xf32> -> vector<2x32xf32>
    %361 = arith.addf %357, %360 : vector<2x32xf32>
    %362 = math.tanh %361 : vector<2x32xf32>
    %c21_236 = arith.constant 21 : index
    %c0_237 = arith.constant 0 : index
    %c0_238 = arith.constant 0 : index
    %363 = vector.load %arg10[%c21_236, %c0_237, %c0_238] : memref<26x1x32xf32, #tpu.memory_space<vmem>>, vector<1x1x32xf32>
    %364 = vector.shape_cast %363 : vector<1x1x32xf32> to vector<1x32xf32>
    %c33 = arith.constant 33 : index
    %c0_239 = arith.constant 0 : index
    %c0_240 = arith.constant 0 : index
    %365 = vector.load %arg9[%c33, %c0_239, %c0_240] : memref<41x32x32xf32, #tpu.memory_space<vmem>>, vector<1x32x32xf32>
    %366 = vector.shape_cast %365 : vector<1x32x32xf32> to vector<32x32xf32>
    %cst_241 = arith.constant dense<0.000000e+00> : vector<2x32xf32>
    %367 = tpu.matmul %292, %366, %cst_241 {dimension_numbers = #tpu.dot_dimension_numbers<[1], [0], [0], [1], [0, 0, 1, 1], [], []>} : vector<2x32xf32>, vector<32x32xf32>, vector<2x32xf32> -> vector<2x32xf32>
    %368 = vector.broadcast %364 : vector<1x32xf32> to vector<2x32xf32>
    %369 = arith.addf %368, %367 : vector<2x32xf32>
    %c34 = arith.constant 34 : index
    %c0_242 = arith.constant 0 : index
    %c0_243 = arith.constant 0 : index
    %370 = vector.load %arg9[%c34, %c0_242, %c0_243] : memref<41x32x32xf32, #tpu.memory_space<vmem>>, vector<1x32x32xf32>
    %371 = vector.shape_cast %370 : vector<1x32x32xf32> to vector<32x32xf32>
    %cst_244 = arith.constant dense<0.000000e+00> : vector<2x32xf32>
    %372 = tpu.matmul %306, %371, %cst_244 {dimension_numbers = #tpu.dot_dimension_numbers<[1], [0], [0], [1], [0, 0, 1, 1], [], []>} : vector<2x32xf32>, vector<32x32xf32>, vector<2x32xf32> -> vector<2x32xf32>
    %373 = arith.addf %369, %372 : vector<2x32xf32>
    %c35 = arith.constant 35 : index
    %c0_245 = arith.constant 0 : index
    %c0_246 = arith.constant 0 : index
    %374 = vector.load %arg9[%c35, %c0_245, %c0_246] : memref<41x32x32xf32, #tpu.memory_space<vmem>>, vector<1x32x32xf32>
    %375 = vector.shape_cast %374 : vector<1x32x32xf32> to vector<32x32xf32>
    %cst_247 = arith.constant dense<0.000000e+00> : vector<2x32xf32>
    %376 = tpu.matmul %292, %375, %cst_247 {dimension_numbers = #tpu.dot_dimension_numbers<[1], [0], [0], [1], [0, 0, 1, 1], [], []>} : vector<2x32xf32>, vector<32x32xf32>, vector<2x32xf32> -> vector<2x32xf32>
    %377 = arith.addf %373, %376 : vector<2x32xf32>
    %378 = arith.negf %377 : vector<2x32xf32>
    %379 = math.exp %378 : vector<2x32xf32>
    %cst_248 = arith.constant 1.000000e+00 : f32
    %380 = vector.broadcast %cst_248 : f32 to vector<2x32xf32>
    %381 = arith.addf %380, %379 : vector<2x32xf32>
    %382 = arith.divf %380, %381 : vector<2x32xf32>
    %383 = arith.mulf %346, %289 : vector<2x32xf32>
    %384 = arith.mulf %326, %362 : vector<2x32xf32>
    %385 = arith.addf %383, %384 : vector<2x32xf32>
    %386 = math.tanh %385 : vector<2x32xf32>
    %387 = arith.mulf %382, %386 : vector<2x32xf32>
    %cst_249 = arith.constant dense<0.000000e+00> : vector<2x16xf32>
    %388 = tpu.matmul %387, %258, %cst_249 {dimension_numbers = #tpu.dot_dimension_numbers<[1], [1], [0], [0], [0, 0, 1, 0], [], []>} : vector<2x32xf32>, vector<16x32xf32>, vector<2x16xf32> -> vector<2x16xf32>
    %389 = arith.addf %388, %259 : vector<2x16xf32>
    %cst_250 = arith.constant dense<0xFF800000> : vector<2xf32>
    %390 = vector.multi_reduction <maximumf>, %389, %cst_250 [1] : vector<2x16xf32> to vector<2xf32>
    %391 = vector.shape_cast %390 : vector<2xf32> to vector<2x1xf32>
    %392 = vector.broadcast %391 : vector<2x1xf32> to vector<2x16xf32>
    %393 = arith.subf %389, %392 : vector<2x16xf32>
    %394 = math.exp %393 : vector<2x16xf32>
    %cst_251 = arith.constant dense<0.000000e+00> : vector<2xf32>
    %395 = vector.multi_reduction <add>, %394, %cst_251 [1] : vector<2x16xf32> to vector<2xf32>
    %396 = vector.shape_cast %395 : vector<2xf32> to vector<2x1xf32>
    %cst_252 = arith.constant 9.99999968E-21 : f32
    %397 = vector.broadcast %cst_252 : f32 to vector<2x1xf32>
    %398 = arith.maximumf %396, %397 : vector<2x1xf32>
    %399 = vector.broadcast %398 : vector<2x1xf32> to vector<2x16xf32>
    %400 = arith.divf %394, %399 : vector<2x16xf32>
    %cst_253 = arith.constant dense<0.000000e+00> : vector<2x32xf32>
    %401 = tpu.matmul %400, %258, %cst_253 {dimension_numbers = #tpu.dot_dimension_numbers<[1], [0], [0], [1], [0, 0, 1, 1], [], []>} : vector<2x16xf32>, vector<16x32xf32>, vector<2x32xf32> -> vector<2x32xf32>
    %c18_254 = arith.constant 18 : index
    %c0_255 = arith.constant 0 : index
    %c0_256 = arith.constant 0 : index
    %402 = vector.load %arg10[%c18_254, %c0_255, %c0_256] : memref<26x1x32xf32, #tpu.memory_space<vmem>>, vector<1x1x32xf32>
    %403 = vector.shape_cast %402 : vector<1x1x32xf32> to vector<1x32xf32>
    %c24_257 = arith.constant 24 : index
    %c0_258 = arith.constant 0 : index
    %c0_259 = arith.constant 0 : index
    %404 = vector.load %arg9[%c24_257, %c0_258, %c0_259] : memref<41x32x32xf32, #tpu.memory_space<vmem>>, vector<1x32x32xf32>
    %405 = vector.shape_cast %404 : vector<1x32x32xf32> to vector<32x32xf32>
    %cst_260 = arith.constant dense<0.000000e+00> : vector<2x32xf32>
    %406 = tpu.matmul %387, %405, %cst_260 {dimension_numbers = #tpu.dot_dimension_numbers<[1], [0], [0], [1], [0, 0, 1, 1], [], []>} : vector<2x32xf32>, vector<32x32xf32>, vector<2x32xf32> -> vector<2x32xf32>
    %407 = vector.broadcast %403 : vector<1x32xf32> to vector<2x32xf32>
    %408 = arith.addf %407, %406 : vector<2x32xf32>
    %c25_261 = arith.constant 25 : index
    %c0_262 = arith.constant 0 : index
    %c0_263 = arith.constant 0 : index
    %409 = vector.load %arg9[%c25_261, %c0_262, %c0_263] : memref<41x32x32xf32, #tpu.memory_space<vmem>>, vector<1x32x32xf32>
    %410 = vector.shape_cast %409 : vector<1x32x32xf32> to vector<32x32xf32>
    %cst_264 = arith.constant dense<0.000000e+00> : vector<2x32xf32>
    %411 = tpu.matmul %401, %410, %cst_264 {dimension_numbers = #tpu.dot_dimension_numbers<[1], [0], [0], [1], [0, 0, 1, 1], [], []>} : vector<2x32xf32>, vector<32x32xf32>, vector<2x32xf32> -> vector<2x32xf32>
    %412 = arith.addf %408, %411 : vector<2x32xf32>
    %c26_265 = arith.constant 26 : index
    %c0_266 = arith.constant 0 : index
    %c0_267 = arith.constant 0 : index
    %413 = vector.load %arg9[%c26_265, %c0_266, %c0_267] : memref<41x32x32xf32, #tpu.memory_space<vmem>>, vector<1x32x32xf32>
    %414 = vector.shape_cast %413 : vector<1x32x32xf32> to vector<32x32xf32>
    %cst_268 = arith.constant dense<0.000000e+00> : vector<2x32xf32>
    %415 = tpu.matmul %387, %414, %cst_268 {dimension_numbers = #tpu.dot_dimension_numbers<[1], [0], [0], [1], [0, 0, 1, 1], [], []>} : vector<2x32xf32>, vector<32x32xf32>, vector<2x32xf32> -> vector<2x32xf32>
    %416 = arith.addf %412, %415 : vector<2x32xf32>
    %417 = arith.negf %416 : vector<2x32xf32>
    %418 = math.exp %417 : vector<2x32xf32>
    %cst_269 = arith.constant 1.000000e+00 : f32
    %419 = vector.broadcast %cst_269 : f32 to vector<2x32xf32>
    %420 = arith.addf %419, %418 : vector<2x32xf32>
    %421 = arith.divf %419, %420 : vector<2x32xf32>
    %c19_270 = arith.constant 19 : index
    %c0_271 = arith.constant 0 : index
    %c0_272 = arith.constant 0 : index
    %422 = vector.load %arg10[%c19_270, %c0_271, %c0_272] : memref<26x1x32xf32, #tpu.memory_space<vmem>>, vector<1x1x32xf32>
    %423 = vector.shape_cast %422 : vector<1x1x32xf32> to vector<1x32xf32>
    %c27_273 = arith.constant 27 : index
    %c0_274 = arith.constant 0 : index
    %c0_275 = arith.constant 0 : index
    %424 = vector.load %arg9[%c27_273, %c0_274, %c0_275] : memref<41x32x32xf32, #tpu.memory_space<vmem>>, vector<1x32x32xf32>
    %425 = vector.shape_cast %424 : vector<1x32x32xf32> to vector<32x32xf32>
    %cst_276 = arith.constant dense<0.000000e+00> : vector<2x32xf32>
    %426 = tpu.matmul %387, %425, %cst_276 {dimension_numbers = #tpu.dot_dimension_numbers<[1], [0], [0], [1], [0, 0, 1, 1], [], []>} : vector<2x32xf32>, vector<32x32xf32>, vector<2x32xf32> -> vector<2x32xf32>
    %427 = vector.broadcast %423 : vector<1x32xf32> to vector<2x32xf32>
    %428 = arith.addf %427, %426 : vector<2x32xf32>
    %c28_277 = arith.constant 28 : index
    %c0_278 = arith.constant 0 : index
    %c0_279 = arith.constant 0 : index
    %429 = vector.load %arg9[%c28_277, %c0_278, %c0_279] : memref<41x32x32xf32, #tpu.memory_space<vmem>>, vector<1x32x32xf32>
    %430 = vector.shape_cast %429 : vector<1x32x32xf32> to vector<32x32xf32>
    %cst_280 = arith.constant dense<0.000000e+00> : vector<2x32xf32>
    %431 = tpu.matmul %401, %430, %cst_280 {dimension_numbers = #tpu.dot_dimension_numbers<[1], [0], [0], [1], [0, 0, 1, 1], [], []>} : vector<2x32xf32>, vector<32x32xf32>, vector<2x32xf32> -> vector<2x32xf32>
    %432 = arith.addf %428, %431 : vector<2x32xf32>
    %c29_281 = arith.constant 29 : index
    %c0_282 = arith.constant 0 : index
    %c0_283 = arith.constant 0 : index
    %433 = vector.load %arg9[%c29_281, %c0_282, %c0_283] : memref<41x32x32xf32, #tpu.memory_space<vmem>>, vector<1x32x32xf32>
    %434 = vector.shape_cast %433 : vector<1x32x32xf32> to vector<32x32xf32>
    %cst_284 = arith.constant dense<0.000000e+00> : vector<2x32xf32>
    %435 = tpu.matmul %387, %434, %cst_284 {dimension_numbers = #tpu.dot_dimension_numbers<[1], [0], [0], [1], [0, 0, 1, 1], [], []>} : vector<2x32xf32>, vector<32x32xf32>, vector<2x32xf32> -> vector<2x32xf32>
    %436 = arith.addf %432, %435 : vector<2x32xf32>
    %437 = arith.negf %436 : vector<2x32xf32>
    %438 = math.exp %437 : vector<2x32xf32>
    %cst_285 = arith.constant 1.000000e+00 : f32
    %439 = vector.broadcast %cst_285 : f32 to vector<2x32xf32>
    %440 = arith.addf %439, %438 : vector<2x32xf32>
    %441 = arith.divf %439, %440 : vector<2x32xf32>
    %c20_286 = arith.constant 20 : index
    %c0_287 = arith.constant 0 : index
    %c0_288 = arith.constant 0 : index
    %442 = vector.load %arg10[%c20_286, %c0_287, %c0_288] : memref<26x1x32xf32, #tpu.memory_space<vmem>>, vector<1x1x32xf32>
    %443 = vector.shape_cast %442 : vector<1x1x32xf32> to vector<1x32xf32>
    %c30_289 = arith.constant 30 : index
    %c0_290 = arith.constant 0 : index
    %c0_291 = arith.constant 0 : index
    %444 = vector.load %arg9[%c30_289, %c0_290, %c0_291] : memref<41x32x32xf32, #tpu.memory_space<vmem>>, vector<1x32x32xf32>
    %445 = vector.shape_cast %444 : vector<1x32x32xf32> to vector<32x32xf32>
    %cst_292 = arith.constant dense<0.000000e+00> : vector<2x32xf32>
    %446 = tpu.matmul %387, %445, %cst_292 {dimension_numbers = #tpu.dot_dimension_numbers<[1], [0], [0], [1], [0, 0, 1, 1], [], []>} : vector<2x32xf32>, vector<32x32xf32>, vector<2x32xf32> -> vector<2x32xf32>
    %447 = vector.broadcast %443 : vector<1x32xf32> to vector<2x32xf32>
    %448 = arith.addf %447, %446 : vector<2x32xf32>
    %c31_293 = arith.constant 31 : index
    %c0_294 = arith.constant 0 : index
    %c0_295 = arith.constant 0 : index
    %449 = vector.load %arg9[%c31_293, %c0_294, %c0_295] : memref<41x32x32xf32, #tpu.memory_space<vmem>>, vector<1x32x32xf32>
    %450 = vector.shape_cast %449 : vector<1x32x32xf32> to vector<32x32xf32>
    %cst_296 = arith.constant dense<0.000000e+00> : vector<2x32xf32>
    %451 = tpu.matmul %401, %450, %cst_296 {dimension_numbers = #tpu.dot_dimension_numbers<[1], [0], [0], [1], [0, 0, 1, 1], [], []>} : vector<2x32xf32>, vector<32x32xf32>, vector<2x32xf32> -> vector<2x32xf32>
    %452 = arith.addf %448, %451 : vector<2x32xf32>
    %c32_297 = arith.constant 32 : index
    %c0_298 = arith.constant 0 : index
    %c0_299 = arith.constant 0 : index
    %453 = vector.load %arg9[%c32_297, %c0_298, %c0_299] : memref<41x32x32xf32, #tpu.memory_space<vmem>>, vector<1x32x32xf32>
    %454 = vector.shape_cast %453 : vector<1x32x32xf32> to vector<32x32xf32>
    %cst_300 = arith.constant dense<0.000000e+00> : vector<2x32xf32>
    %455 = tpu.matmul %387, %454, %cst_300 {dimension_numbers = #tpu.dot_dimension_numbers<[1], [0], [0], [1], [0, 0, 1, 1], [], []>} : vector<2x32xf32>, vector<32x32xf32>, vector<2x32xf32> -> vector<2x32xf32>
    %456 = arith.addf %452, %455 : vector<2x32xf32>
    %457 = math.tanh %456 : vector<2x32xf32>
    %c21_301 = arith.constant 21 : index
    %c0_302 = arith.constant 0 : index
    %c0_303 = arith.constant 0 : index
    %458 = vector.load %arg10[%c21_301, %c0_302, %c0_303] : memref<26x1x32xf32, #tpu.memory_space<vmem>>, vector<1x1x32xf32>
    %459 = vector.shape_cast %458 : vector<1x1x32xf32> to vector<1x32xf32>
    %c33_304 = arith.constant 33 : index
    %c0_305 = arith.constant 0 : index
    %c0_306 = arith.constant 0 : index
    %460 = vector.load %arg9[%c33_304, %c0_305, %c0_306] : memref<41x32x32xf32, #tpu.memory_space<vmem>>, vector<1x32x32xf32>
    %461 = vector.shape_cast %460 : vector<1x32x32xf32> to vector<32x32xf32>
    %cst_307 = arith.constant dense<0.000000e+00> : vector<2x32xf32>
    %462 = tpu.matmul %387, %461, %cst_307 {dimension_numbers = #tpu.dot_dimension_numbers<[1], [0], [0], [1], [0, 0, 1, 1], [], []>} : vector<2x32xf32>, vector<32x32xf32>, vector<2x32xf32> -> vector<2x32xf32>
    %463 = vector.broadcast %459 : vector<1x32xf32> to vector<2x32xf32>
    %464 = arith.addf %463, %462 : vector<2x32xf32>
    %c34_308 = arith.constant 34 : index
    %c0_309 = arith.constant 0 : index
    %c0_310 = arith.constant 0 : index
    %465 = vector.load %arg9[%c34_308, %c0_309, %c0_310] : memref<41x32x32xf32, #tpu.memory_space<vmem>>, vector<1x32x32xf32>
    %466 = vector.shape_cast %465 : vector<1x32x32xf32> to vector<32x32xf32>
    %cst_311 = arith.constant dense<0.000000e+00> : vector<2x32xf32>
    %467 = tpu.matmul %401, %466, %cst_311 {dimension_numbers = #tpu.dot_dimension_numbers<[1], [0], [0], [1], [0, 0, 1, 1], [], []>} : vector<2x32xf32>, vector<32x32xf32>, vector<2x32xf32> -> vector<2x32xf32>
    %468 = arith.addf %464, %467 : vector<2x32xf32>
    %c35_312 = arith.constant 35 : index
    %c0_313 = arith.constant 0 : index
    %c0_314 = arith.constant 0 : index
    %469 = vector.load %arg9[%c35_312, %c0_313, %c0_314] : memref<41x32x32xf32, #tpu.memory_space<vmem>>, vector<1x32x32xf32>
    %470 = vector.shape_cast %469 : vector<1x32x32xf32> to vector<32x32xf32>
    %cst_315 = arith.constant dense<0.000000e+00> : vector<2x32xf32>
    %471 = tpu.matmul %387, %470, %cst_315 {dimension_numbers = #tpu.dot_dimension_numbers<[1], [0], [0], [1], [0, 0, 1, 1], [], []>} : vector<2x32xf32>, vector<32x32xf32>, vector<2x32xf32> -> vector<2x32xf32>
    %472 = arith.addf %468, %471 : vector<2x32xf32>
    %473 = arith.negf %472 : vector<2x32xf32>
    %474 = math.exp %473 : vector<2x32xf32>
    %cst_316 = arith.constant 1.000000e+00 : f32
    %475 = vector.broadcast %cst_316 : f32 to vector<2x32xf32>
    %476 = arith.addf %475, %474 : vector<2x32xf32>
    %477 = arith.divf %475, %476 : vector<2x32xf32>
    %478 = arith.mulf %441, %385 : vector<2x32xf32>
    %479 = arith.mulf %421, %457 : vector<2x32xf32>
    %480 = arith.addf %478, %479 : vector<2x32xf32>
    %481 = math.tanh %480 : vector<2x32xf32>
    %482 = arith.mulf %477, %481 : vector<2x32xf32>
    %cst_317 = arith.constant dense<0.000000e+00> : vector<2x16xf32>
    %483 = tpu.matmul %482, %258, %cst_317 {dimension_numbers = #tpu.dot_dimension_numbers<[1], [1], [0], [0], [0, 0, 1, 0], [], []>} : vector<2x32xf32>, vector<16x32xf32>, vector<2x16xf32> -> vector<2x16xf32>
    %484 = arith.addf %483, %259 : vector<2x16xf32>
    %cst_318 = arith.constant dense<0xFF800000> : vector<2xf32>
    %485 = vector.multi_reduction <maximumf>, %484, %cst_318 [1] : vector<2x16xf32> to vector<2xf32>
    %486 = vector.shape_cast %485 : vector<2xf32> to vector<2x1xf32>
    %487 = vector.broadcast %486 : vector<2x1xf32> to vector<2x16xf32>
    %488 = arith.subf %484, %487 : vector<2x16xf32>
    %489 = math.exp %488 : vector<2x16xf32>
    %cst_319 = arith.constant dense<0.000000e+00> : vector<2xf32>
    %490 = vector.multi_reduction <add>, %489, %cst_319 [1] : vector<2x16xf32> to vector<2xf32>
    %491 = vector.shape_cast %490 : vector<2xf32> to vector<2x1xf32>
    %cst_320 = arith.constant 9.99999968E-21 : f32
    %492 = vector.broadcast %cst_320 : f32 to vector<2x1xf32>
    %493 = arith.maximumf %491, %492 : vector<2x1xf32>
    %494 = vector.broadcast %493 : vector<2x1xf32> to vector<2x16xf32>
    %495 = arith.divf %489, %494 : vector<2x16xf32>
    %cst_321 = arith.constant dense<0.000000e+00> : vector<2x32xf32>
    %496 = tpu.matmul %495, %258, %cst_321 {dimension_numbers = #tpu.dot_dimension_numbers<[1], [0], [0], [1], [0, 0, 1, 1], [], []>} : vector<2x16xf32>, vector<16x32xf32>, vector<2x32xf32> -> vector<2x32xf32>
    %c36 = arith.constant 36 : index
    %c0_322 = arith.constant 0 : index
    %c0_323 = arith.constant 0 : index
    %497 = vector.load %arg9[%c36, %c0_322, %c0_323] : memref<41x32x32xf32, #tpu.memory_space<vmem>>, vector<1x32x32xf32>
    %498 = vector.shape_cast %497 : vector<1x32x32xf32> to vector<32x32xf32>
    %cst_324 = arith.constant dense<0.000000e+00> : vector<2x32xf32>
    %499 = tpu.matmul %482, %498, %cst_324 {dimension_numbers = #tpu.dot_dimension_numbers<[1], [0], [0], [1], [0, 0, 1, 1], [], []>} : vector<2x32xf32>, vector<32x32xf32>, vector<2x32xf32> -> vector<2x32xf32>
    %c37 = arith.constant 37 : index
    %c0_325 = arith.constant 0 : index
    %c0_326 = arith.constant 0 : index
    %500 = vector.load %arg9[%c37, %c0_325, %c0_326] : memref<41x32x32xf32, #tpu.memory_space<vmem>>, vector<1x32x32xf32>
    %501 = vector.shape_cast %500 : vector<1x32x32xf32> to vector<32x32xf32>
    %cst_327 = arith.constant dense<0.000000e+00> : vector<2x32xf32>
    %502 = tpu.matmul %496, %501, %cst_327 {dimension_numbers = #tpu.dot_dimension_numbers<[1], [0], [0], [1], [0, 0, 1, 1], [], []>} : vector<2x32xf32>, vector<32x32xf32>, vector<2x32xf32> -> vector<2x32xf32>
    %503 = arith.addf %499, %502 : vector<2x32xf32>
    %c22_328 = arith.constant 22 : index
    %c0_329 = arith.constant 0 : index
    %c0_330 = arith.constant 0 : index
    %504 = vector.load %arg10[%c22_328, %c0_329, %c0_330] : memref<26x1x32xf32, #tpu.memory_space<vmem>>, vector<1x1x32xf32>
    %505 = vector.shape_cast %504 : vector<1x1x32xf32> to vector<1x32xf32>
    %506 = vector.broadcast %505 : vector<1x32xf32> to vector<2x32xf32>
    %507 = arith.addf %503, %506 : vector<2x32xf32>
    %cst_331 = arith.constant 0.000000e+00 : f32
    %508 = vector.broadcast %cst_331 : f32 to vector<2x32xf32>
    %509 = arith.maximumf %507, %508 : vector<2x32xf32>
    %c38 = arith.constant 38 : index
    %c0_332 = arith.constant 0 : index
    %c0_333 = arith.constant 0 : index
    %510 = vector.load %arg9[%c38, %c0_332, %c0_333] : memref<41x32x32xf32, #tpu.memory_space<vmem>>, vector<1x32x32xf32>
    %511 = vector.shape_cast %510 : vector<1x32x32xf32> to vector<32x32xf32>
    %cst_334 = arith.constant dense<0.000000e+00> : vector<2x32xf32>
    %512 = tpu.matmul %509, %511, %cst_334 {dimension_numbers = #tpu.dot_dimension_numbers<[1], [0], [0], [1], [0, 0, 1, 1], [], []>} : vector<2x32xf32>, vector<32x32xf32>, vector<2x32xf32> -> vector<2x32xf32>
    %c23_335 = arith.constant 23 : index
    %c0_336 = arith.constant 0 : index
    %c0_337 = arith.constant 0 : index
    %513 = vector.load %arg10[%c23_335, %c0_336, %c0_337] : memref<26x1x32xf32, #tpu.memory_space<vmem>>, vector<1x1x32xf32>
    %514 = vector.shape_cast %513 : vector<1x1x32xf32> to vector<1x32xf32>
    %515 = vector.broadcast %514 : vector<1x32xf32> to vector<2x32xf32>
    %516 = arith.addf %512, %515 : vector<2x32xf32>
    %cst_338 = arith.constant 0.000000e+00 : f32
    %517 = vector.broadcast %cst_338 : f32 to vector<2x32xf32>
    %518 = arith.maximumf %516, %517 : vector<2x32xf32>
    %c39 = arith.constant 39 : index
    %c0_339 = arith.constant 0 : index
    %c0_340 = arith.constant 0 : index
    %519 = vector.load %arg9[%c39, %c0_339, %c0_340] : memref<41x32x32xf32, #tpu.memory_space<vmem>>, vector<1x32x32xf32>
    %520 = vector.shape_cast %519 : vector<1x32x32xf32> to vector<32x32xf32>
    %cst_341 = arith.constant dense<0.000000e+00> : vector<2x32xf32>
    %521 = tpu.matmul %518, %520, %cst_341 {dimension_numbers = #tpu.dot_dimension_numbers<[1], [0], [0], [1], [0, 0, 1, 1], [], []>} : vector<2x32xf32>, vector<32x32xf32>, vector<2x32xf32> -> vector<2x32xf32>
    %c24_342 = arith.constant 24 : index
    %c0_343 = arith.constant 0 : index
    %c0_344 = arith.constant 0 : index
    %522 = vector.load %arg10[%c24_342, %c0_343, %c0_344] : memref<26x1x32xf32, #tpu.memory_space<vmem>>, vector<1x1x32xf32>
    %523 = vector.shape_cast %522 : vector<1x1x32xf32> to vector<1x32xf32>
    %524 = vector.broadcast %523 : vector<1x32xf32> to vector<2x32xf32>
    %525 = arith.addf %521, %524 : vector<2x32xf32>
    %cst_345 = arith.constant 0.000000e+00 : f32
    %526 = vector.broadcast %cst_345 : f32 to vector<2x32xf32>
    %527 = arith.maximumf %525, %526 : vector<2x32xf32>
    %c40 = arith.constant 40 : index
    %c0_346 = arith.constant 0 : index
    %c0_347 = arith.constant 0 : index
    %528 = vector.load %arg9[%c40, %c0_346, %c0_347] : memref<41x32x32xf32, #tpu.memory_space<vmem>>, vector<1x32x32xf32>
    %529 = vector.shape_cast %528 : vector<1x32x32xf32> to vector<32x32xf32>
    %cst_348 = arith.constant dense<0.000000e+00> : vector<2x32xf32>
    %530 = tpu.matmul %527, %529, %cst_348 {dimension_numbers = #tpu.dot_dimension_numbers<[1], [0], [0], [1], [0, 0, 1, 1], [], []>} : vector<2x32xf32>, vector<32x32xf32>, vector<2x32xf32> -> vector<2x32xf32>
    %c25_349 = arith.constant 25 : index
    %c0_350 = arith.constant 0 : index
    %c0_351 = arith.constant 0 : index
    %531 = vector.load %arg10[%c25_349, %c0_350, %c0_351] : memref<26x1x32xf32, #tpu.memory_space<vmem>>, vector<1x1x32xf32>
    %532 = vector.shape_cast %531 : vector<1x1x32xf32> to vector<1x32xf32>
    %533 = vector.broadcast %532 : vector<1x32xf32> to vector<2x32xf32>
    %534 = arith.addf %530, %533 : vector<2x32xf32>
    %c0_352 = arith.constant 0 : index
    %c0_353 = arith.constant 0 : index
    %535 = vector.load %arg11[%c0_352, %c0_353] : memref<2x32xf32, #tpu.memory_space<vmem>>, vector<2x32xf32>
    tpu.vector_store %arg11[%c0_352, %c0_353], %534 {strides = array<i32>} : memref<2x32xf32, #tpu.memory_space<vmem>>, vector<2x32xf32>,
    return
  }
}

</mosaic_0001>

<llo_original>
// kernel: _lambda_.1
$region0: #{_lambda_.1}
  #allocation0 [shape = 'u32[]', space=smem, size = 0x4, offset = 0x4, fixed_abs, tag = 'smem constant byte address 0x4 - core index']
  #allocation1 [shape = 'u32[144,128]{1,0:T(1,128)}', space=vmem, size = 0x12000, scoped, tag = 'internal scratch']
  %s0 = inlined_call_operand.vmem [shape: f32[16,32], index: 0, kind: input, shape index: {}]
  %s1 = inlined_call_operand.vmem [shape: f32[28,1], index: 1, kind: input, shape index: {}]
  %s2 = inlined_call_operand.vmem [shape: f32[28,16], index: 2, kind: input, shape index: {}]
  %s3 = inlined_call_operand.vmem [shape: f32[16,28], index: 3, kind: input, shape index: {}]
  %s4 = inlined_call_operand.vmem [shape: f32[2,16], index: 4, kind: input, shape index: {}]
  %s5 = inlined_call_operand.hbm [shape: f32[32,1024], index: 5, kind: input, shape index: {}]
  %s6 = inlined_call_operand.hbm [shape: f32[1024,32], index: 6, kind: input, shape index: {}]
  %s7 = inlined_call_operand.hbm [shape: f32[2,1,96], index: 7, kind: input, shape index: {}]
  %s8 = inlined_call_operand.hbm [shape: f32[97,3072], index: 8, kind: input, shape index: {}]
  %s9 = inlined_call_operand.hbm [shape: f32[41,32,32], index: 9, kind: input, shape index: {}]
  %s10 = inlined_call_operand.hbm [shape: f32[26,1,32], index: 10, kind: input, shape index: {}]
  %s11 = inlined_call_operand.vmem [shape: f32[2,32], index: 11, kind: output, shape index: {}]
  %s12 = sld [smem:[#allocation0]]
  $region78: #{_lambda_.1} parent=0
    _
  %s14 = ssub.s32 1, %s12
  %s15 = scalar_select 0, %s14, %s12
  $region1: #{_lambda_.1} parent=0
    #allocation2 [shape = 'u8[131072]{0}', space=vmem, size = 0x20000, scoped, tag = 'input window, operand 5, single buffered']
    #allocation3 [shape = 's32[1]{0}', space=sflag, size = 0x4, scoped, tag = 'scoped memory for _lambda_.1']
    #allocation4 [shape = 'u8[524288]{0}', space=vmem, size = 0x80000, scoped, tag = 'input window, operand 6, single buffered']
    #allocation5 [shape = 's32[1]{0}', space=sflag, size = 0x4, scoped, tag = 'scoped memory for _lambda_.1']
    #allocation6 [shape = 'u8[1024]{0}', space=vmem, size = 0x400, scoped, tag = 'input window, operand 7, single buffered']
    #allocation7 [shape = 'u8[1277952]{0}', space=vmem, size = 0x138000, scoped, tag = 'input window, operand 8, single buffered']
    #allocation8 [shape = 's32[1]{0}', space=sflag, size = 0x4, scoped, tag = 'scoped memory for _lambda_.1']
    #allocation9 [shape = 'u8[671744]{0}', space=vmem, size = 0xa4000, scoped, tag = 'input window, operand 9, single buffered']
    #allocation10 [shape = 'u8[13312]{0}', space=vmem, size = 0x3400, scoped, tag = 'input window, operand 10, single buffered']
    #allocation11 [shape = 's32[1]{0}', space=sflag, size = 0x4, scoped, tag = 'scoped memory for _lambda_.1']
    %16 = vsyncpa [#allocation3], 0
    %17 = vsyncpa [#allocation5], 0
    %18 = vsyncpa [#allocation8], 0
    %19 = vsyncpa [#allocation11], 0
    // Predicated region
    $region2: #{_lambda_.1} parent=1 // pred_check
      _
    $region3: #{_lambda_.1} parent=1 // pred_check_branch
      %21 = sbr.rel (0) target = $region5
    $region4: #{_lambda_.1} parent=1 // pred_region
      _
    $region5: #{_lambda_.1} parent=1 // pred_fallthru
      _
    // Predicated region
    $region6: #{_lambda_.1} parent=1 // pred_check
      _
    $region7: #{_lambda_.1} parent=1 // pred_check_branch
      %23 = sbr.rel (0) target = $region9
    $region8: #{_lambda_.1} parent=1 // pred_region
      _
    $region9: #{_lambda_.1} parent=1 // pred_fallthru
      _
    // Predicated region
    $region10: #{_lambda_.1} parent=1 // pred_check
      _
    $region11: #{_lambda_.1} parent=1 // pred_check_branch
      %25 = sbr.rel (0) target = $region13
    $region12: #{_lambda_.1} parent=1 // pred_region
      _
    $region13: #{_lambda_.1} parent=1 // pred_fallthru
      _
    // Predicated region
    $region14: #{_lambda_.1} parent=1 // pred_check
      _
    $region15: #{_lambda_.1} parent=1 // pred_check_branch
      %27 = sbr.rel (0) target = $region17
    $region16: #{_lambda_.1} parent=1 // pred_region
      _
    $region17: #{_lambda_.1} parent=1 // pred_fallthru
      _
    // Predicated region
    $region18: #{_lambda_.1} parent=1 // pred_check
      _
    $region19: #{_lambda_.1} parent=1 // pred_check_branch
      %29 = sbr.rel (0) target = $region21
    $region20: #{_lambda_.1} parent=1 // pred_region
      _
    $region21: #{_lambda_.1} parent=1 // pred_fallthru
      _
    // Predicated region
    $region22: #{_lambda_.1} parent=1 // pred_check
      _
    $region23: #{_lambda_.1} parent=1 // pred_check_branch
      %31 = sbr.rel (0) target = $region25
    $region24: #{_lambda_.1} parent=1 // pred_region
      %s33 = ssub.s32 4096, 4096
      %34 = vsyncadd [#allocation3], %s33
      %s35 = sshll.u32 [#allocation2], 4
      %s36 = int_to_ptr.vmem [resolvable:$true] %s35
      %41 = dma.hbm_to_vmem [thread:$0]  %s5, 4096, %s36, [#allocation3], 1024, 1024, 64
    $region25: #{_lambda_.1} parent=1 // pred_fallthru
      _
    // Predicated region
    $region26: #{_lambda_.1} parent=1 // pred_check
      _
    $region27: #{_lambda_.1} parent=1 // pred_check_branch
      %43 = sbr.rel (0) target = $region29
    $region28: #{_lambda_.1} parent=1 // pred_region
      %s45 = ssub.s32 16384, 16384
      %46 = vsyncadd [#allocation5], %s45
      %s47 = sshll.u32 [#allocation4], 4
      %s48 = int_to_ptr.vmem [resolvable:$true] %s47
      %53 = dma.hbm_to_vmem [thread:$0]  %s6, 16384, %s48, [#allocation5], 128, 128, 8
    $region29: #{_lambda_.1} parent=1 // pred_fallthru
      _
    // Predicated region
    $region30: #{_lambda_.1} parent=1 // pred_check
      _
    $region31: #{_lambda_.1} parent=1 // pred_check_branch
      %55 = sbr.rel (0) target = $region33
    $region32: #{_lambda_.1} parent=1 // pred_region
      %s57 = ssub.s32 32, 32
      %58 = vsyncadd [#allocation5], %s57
      %s59 = sshll.u32 [#allocation6], 4
      %s60 = int_to_ptr.vmem [resolvable:$true] %s59
      %65 = dma.hbm_to_vmem [thread:$0]  %s7, 32, %s60, [#allocation5], 16, 16, 1
    $region33: #{_lambda_.1} parent=1 // pred_fallthru
      _
    // Predicated region
    $region34: #{_lambda_.1} parent=1 // pred_check
      _
    $region35: #{_lambda_.1} parent=1 // pred_check_branch
      %67 = sbr.rel (0) target = $region37
    $region36: #{_lambda_.1} parent=1 // pred_region
      %s69 = ssub.s32 39936, 39936
      %70 = vsyncadd [#allocation8], %s69
      %s71 = sshll.u32 [#allocation7], 4
      %s72 = int_to_ptr.vmem [resolvable:$true] %s71
      %77 = dma.hbm_to_vmem [thread:$0]  %s8, 39936, %s72, [#allocation8], 3072, 3072, 192
    $region37: #{_lambda_.1} parent=1 // pred_fallthru
      _
    // Predicated region
    $region38: #{_lambda_.1} parent=1 // pred_check
      _
    $region39: #{_lambda_.1} parent=1 // pred_check_branch
      %79 = sbr.rel (0) target = $region41
    $region40: #{_lambda_.1} parent=1 // pred_region
      %s81 = ssub.s32 20992, 20992
      %82 = vsyncadd [#allocation8], %s81
      %s83 = sshll.u32 [#allocation9], 4
      %s84 = int_to_ptr.vmem [resolvable:$true] %s83
      %89 = dma.hbm_to_vmem [thread:$0]  %s9, 20992, %s84, [#allocation8], 128, 128, 8
    $region41: #{_lambda_.1} parent=1 // pred_fallthru
      _
    // Predicated region
    $region42: #{_lambda_.1} parent=1 // pred_check
      _
    $region43: #{_lambda_.1} parent=1 // pred_check_branch
      %91 = sbr.rel (0) target = $region45
    $region44: #{_lambda_.1} parent=1 // pred_region
      %s93 = ssub.s32 416, 416
      %94 = vsyncadd [#allocation11], %s93
      %s95 = sshll.u32 [#allocation10], 4
      %s96 = int_to_ptr.vmem [resolvable:$true] %s95
      %101 = dma.hbm_to_vmem [thread:$0]  %s10, 416, %s96, [#allocation11], 16, 16, 1
    $region45: #{_lambda_.1} parent=1 // pred_fallthru
      _
    // Predicated region
    $region46: #{_lambda_.1} parent=1 // pred_check
      _
    $region47: #{_lambda_.1} parent=1 // pred_check_branch
      %103 = sbr.rel (0) target = $region49
    $region48: #{_lambda_.1} parent=1 // pred_region
      %104 = dma.done [#allocation3], 4096
    $region49: #{_lambda_.1} parent=1 // pred_fallthru
      _
    // Predicated region
    $region50: #{_lambda_.1} parent=1 // pred_check
      _
    $region51: #{_lambda_.1} parent=1 // pred_check_branch
      %106 = sbr.rel (0) target = $region53
    $region52: #{_lambda_.1} parent=1 // pred_region
      %107 = dma.done [#allocation5], 16384
    $region53: #{_lambda_.1} parent=1 // pred_fallthru
      _
    // Predicated region
    $region54: #{_lambda_.1} parent=1 // pred_check
      _
    $region55: #{_lambda_.1} parent=1 // pred_check_branch
      %109 = sbr.rel (0) target = $region57
    $region56: #{_lambda_.1} parent=1 // pred_region
      %110 = dma.done [#allocation5], 32
    $region57: #{_lambda_.1} parent=1 // pred_fallthru
      _
    // Predicated region
    $region58: #{_lambda_.1} parent=1 // pred_check
      _
    $region59: #{_lambda_.1} parent=1 // pred_check_branch
      %112 = sbr.rel (0) target = $region61
    $region60: #{_lambda_.1} parent=1 // pred_region
      %113 = dma.done [#allocation8], 39936
    $region61: #{_lambda_.1} parent=1 // pred_fallthru
      _
    // Predicated region
    $region62: #{_lambda_.1} parent=1 // pred_check
      _
    $region63: #{_lambda_.1} parent=1 // pred_check_branch
      %115 = sbr.rel (0) target = $region65
    $region64: #{_lambda_.1} parent=1 // pred_region
      %116 = dma.done [#allocation8], 20992
    $region65: #{_lambda_.1} parent=1 // pred_fallthru
      _
    // Predicated region
    $region66: #{_lambda_.1} parent=1 // pred_check
      _
    $region67: #{_lambda_.1} parent=1 // pred_check_branch
      %118 = sbr.rel (0) target = $region69
    $region68: #{_lambda_.1} parent=1 // pred_region
      %119 = dma.done [#allocation11], 416
    $region69: #{_lambda_.1} parent=1 // pred_fallthru
      _
    %v120 = vld [vmem:[%s0] sm:$0xff]
    %v121 = vld [vmem:[%s0 + $0x8] sm:$0xff]
    %v122 = vld [vmem:[#allocation9] sm:$0xff]
    %v123 = vld [vmem:[#allocation9 + $0x8] sm:$0xff]
    %v124 = vld [vmem:[#allocation9 + $0x10] sm:$0xff]
    %v125 = vld [vmem:[#allocation9 + $0x18] sm:$0xff]
    %v126 = vld [vmem:[#allocation10] sm:$0x1]
    %v128 = vlaneseq
    %v129 = vshrl.u32 %v128, 7
    %v130 = vsub.s32 0, %v129
    %v131 = vrot.slane %v126, %v130
    %vm133 = vcmask 261120
    %v135 = vsel %vm133, %v120, 0
    %v138 = vsel %vm133, %v121, 0
    %140 = vmatprep.subr.mxu0 0.0
    %141 = vmatpush1.msra.mxu0 0.0
    %142 = vmatprep.subr.mxu0 0.0
    %143 = vmatpush1.msra.mxu0 0.0
    %144 = vmatprep.subr.mxu0 0.0
    %145 = vmatpush1.msra.mxu0 0.0
    %146 = vmatprep.subr.mxu0 0.0
    %147 = vmatpush1.msra.mxu0 0.0
    %148 = vmatprep.subr.mxu0 0.0
    %149 = vmatpush1.msra.mxu0 0.0
    %150 = vmatprep.subr.mxu0 0.0
    %151 = vmatpush1.msra.mxu0 0.0
    %152 = vmatprep.subr.mxu0 0.0
    %153 = vmatpush1.msra.mxu0 0.0
    %154 = vmatprep.subr.mxu0 0.0
    %155 = vmatpush1.msra.mxu0 0.0
    %156 = vmatprep.subr.mxu0 0.0
    %157 = vmatpush1.msra.mxu0 0.0
    %158 = vmatprep.subr.mxu0 0.0
    %159 = vmatpush1.msra.mxu0 0.0
    %160 = vmatprep.subr.mxu0 0.0
    %161 = vmatpush1.msra.mxu0 0.0
    %162 = vmatprep.subr.mxu0 0.0
    %163 = vmatpush1.msra.mxu0 0.0
    %164 = vmatprep.subr.mxu0 0.0
    %165 = vmatpush1.msra.mxu0 %v125
    %166 = vmatprep.subr.mxu0 0.0
    %167 = vmatpush1.msra.mxu0 %v124
    %168 = vmatprep.subr.mxu0 0.0
    %169 = vmatpush1.msra.mxu0 %v123
    %170 = vmatprep.subr.mxu0 0.0
    %171 = vmatpush1.msra.mxu0 %v122
    %172 = vmatprep.subr.mxu0 0.0
    %173 = vmatpush2.msra.mxu0 0.0
    %174 = vmatprep.subr.mxu0 0.0
    %175 = vmatpush2.msra.mxu0 0.0
    %176 = vmatprep.subr.mxu0 0.0
    %177 = vmatpush2.msra.mxu0 0.0
    %178 = vmatprep.subr.mxu0 0.0
    %179 = vmatpush2.msra.mxu0 0.0
    %180 = vmatprep.subr.mxu0 0.0
    %181 = vmatpush2.msra.mxu0 0.0
    %182 = vmatprep.subr.mxu0 0.0
    %183 = vmatpush2.msra.mxu0 0.0
    %184 = vmatprep.subr.mxu0 0.0
    %185 = vmatpush2.msra.mxu0 0.0
    %186 = vmatprep.subr.mxu0 0.0
    %187 = vmatpush2.msra.mxu0 0.0
    %188 = vmatprep.subr.mxu0 0.0
    %189 = vmatpush2.msra.mxu0 0.0
    %190 = vmatprep.subr.mxu0 0.0
    %191 = vmatpush2.msra.mxu0 0.0
    %192 = vmatprep.subr.mxu0 0.0
    %193 = vmatpush2.msra.mxu0 0.0
    %194 = vmatprep.subr.mxu0 0.0
    %195 = vmatpush2.msra.mxu0 0.0
    %196 = vmatprep.subr.mxu0 0.0
    %197 = vmatpush2.msra.mxu0 0.0
    %198 = vmatprep.subr.mxu0 0.0
    %199 = vmatpush2.msra.mxu0 0.0
    %200 = vmatprep.subr.mxu0 0.0
    %201 = vmatpush2.msra.mxu0 0.0
    %202 = vmatprep.subr.mxu0 0.0
    %203 = vmatpush2.msra.mxu0 0.0
    %204 = vmatprep.mubr.f32.mxu0 0.0
    %205 = vmatmul.mubr.f32.gmra.mxu0 %v135
    %v206 = vpop.f32.mrf.mxu0
    %v207 = vadd.f32 %v131, %v206
    %v208 = vpop.f32.mrf.mxu0
    %209 = vmatprep.mubr.f32.mxu0 0.0
    %210 = vmatmul.mubr.f32.gmra.mxu0 %v138
    %v211 = vpop.f32.mrf.mxu0
    %v212 = vadd.f32 %v131, %v211
    %v213 = vpop.f32.mrf.mxu0
    %214 = vdwg.mxu0
    %v215 = vmax.f32 %v207, 0.0
    %v216 = vmax.f32 %v212, 0.0
    %s217 = scalar_lea.vmem [#allocation9], 32
    %v218 = vld [vmem:[%s217] sm:$0xff]
    %v219 = vld [vmem:[%s217 + $0x8] sm:$0xff]
    %v220 = vld [vmem:[%s217 + $0x10] sm:$0xff]
    %v221 = vld [vmem:[%s217 + $0x18] sm:$0xff]
    %s222 = scalar_lea.vmem [#allocation10], 1
    %v223 = vld [vmem:[%s222] sm:$0x1]
    %v225 = vlaneseq
    %v226 = vshrl.u32 %v225, 7
    %v227 = vsub.s32 0, %v226
    %v228 = vrot.slane %v223, %v227
    %v231 = vsel %vm133, %v215, 0
    %v234 = vsel %vm133, %v216, 0
    %236 = vmatprep.subr.mxu0 0.0
    %237 = vmatpush1.msra.mxu0 0.0
    %238 = vmatprep.subr.mxu0 0.0
    %239 = vmatpush1.msra.mxu0 0.0
    %240 = vmatprep.subr.mxu0 0.0
    %241 = vmatpush1.msra.mxu0 0.0
    %242 = vmatprep.subr.mxu0 0.0
    %243 = vmatpush1.msra.mxu0 0.0
    %244 = vmatprep.subr.mxu0 0.0
    %245 = vmatpush1.msra.mxu0 0.0
    %246 = vmatprep.subr.mxu0 0.0
    %247 = vmatpush1.msra.mxu0 0.0
    %248 = vmatprep.subr.mxu0 0.0
    %249 = vmatpush1.msra.mxu0 0.0
    %250 = vmatprep.subr.mxu0 0.0
    %251 = vmatpush1.msra.mxu0 0.0
    %252 = vmatprep.subr.mxu0 0.0
    %253 = vmatpush1.msra.mxu0 0.0
    %254 = vmatprep.subr.mxu0 0.0
    %255 = vmatpush1.msra.mxu0 0.0
    %256 = vmatprep.subr.mxu0 0.0
    %257 = vmatpush1.msra.mxu0 0.0
    %258 = vmatprep.subr.mxu0 0.0
    %259 = vmatpush1.msra.mxu0 0.0
    %260 = vmatprep.subr.mxu0 0.0
    %261 = vmatpush1.msra.mxu0 %v221
    %262 = vmatprep.subr.mxu0 0.0
    %263 = vmatpush1.msra.mxu0 %v220
    %264 = vmatprep.subr.mxu0 0.0
    %265 = vmatpush1.msra.mxu0 %v219
    %266 = vmatprep.subr.mxu0 0.0
    %267 = vmatpush1.msra.mxu0 %v218
    %268 = vmatprep.subr.mxu0 0.0
    %269 = vmatpush2.msra.mxu0 0.0
    %270 = vmatprep.subr.mxu0 0.0
    %271 = vmatpush2.msra.mxu0 0.0
    %272 = vmatprep.subr.mxu0 0.0
    %273 = vmatpush2.msra.mxu0 0.0
    %274 = vmatprep.subr.mxu0 0.0
    %275 = vmatpush2.msra.mxu0 0.0
    %276 = vmatprep.subr.mxu0 0.0
    %277 = vmatpush2.msra.mxu0 0.0
    %278 = vmatprep.subr.mxu0 0.0
    %279 = vmatpush2.msra.mxu0 0.0
    %280 = vmatprep.subr.mxu0 0.0
    %281 = vmatpush2.msra.mxu0 0.0
    %282 = vmatprep.subr.mxu0 0.0
    %283 = vmatpush2.msra.mxu0 0.0
    %284 = vmatprep.subr.mxu0 0.0
    %285 = vmatpush2.msra.mxu0 0.0
    %286 = vmatprep.subr.mxu0 0.0
    %287 = vmatpush2.msra.mxu0 0.0
    %288 = vmatprep.subr.mxu0 0.0
    %289 = vmatpush2.msra.mxu0 0.0
    %290 = vmatprep.subr.mxu0 0.0
    %291 = vmatpush2.msra.mxu0 0.0
    %292 = vmatprep.subr.mxu0 0.0
    %293 = vmatpush2.msra.mxu0 0.0
    %294 = vmatprep.subr.mxu0 0.0
    %295 = vmatpush2.msra.mxu0 0.0
    %296 = vmatprep.subr.mxu0 0.0
    %297 = vmatpush2.msra.mxu0 0.0
    %298 = vmatprep.subr.mxu0 0.0
    %299 = vmatpush2.msra.mxu0 0.0
    %300 = vmatprep.mubr.f32.mxu0 0.0
    %301 = vmatmul.mubr.f32.gmra.mxu0 %v231
    %v302 = vpop.f32.mrf.mxu0
    %v303 = vadd.f32 %v228, %v302
    %v304 = vpop.f32.mrf.mxu0
    %305 = vmatprep.mubr.f32.mxu0 0.0
    %306 = vmatmul.mubr.f32.gmra.mxu0 %v234
    %v307 = vpop.f32.mrf.mxu0
    %v308 = vadd.f32 %v228, %v307
    %v309 = vpop.f32.mrf.mxu0
    %310 = vdwg.mxu0
    %v311 = vmax.f32 %v303, 0.0
    %v312 = vmax.f32 %v308, 0.0
    %s313 = scalar_lea.vmem [#allocation9], 64
    %v314 = vld [vmem:[%s313] sm:$0xff]
    %v315 = vld [vmem:[%s313 + $0x8] sm:$0xff]
    %v316 = vld [vmem:[%s313 + $0x10] sm:$0xff]
    %v317 = vld [vmem:[%s313 + $0x18] sm:$0xff]
    %s318 = scalar_lea.vmem [#allocation10], 2
    %v319 = vld [vmem:[%s318] sm:$0x1]
    %v321 = vlaneseq
    %v322 = vshrl.u32 %v321, 7
    %v323 = vsub.s32 0, %v322
    %v324 = vrot.slane %v319, %v323
    %v327 = vsel %vm133, %v311, 0
    %v330 = vsel %vm133, %v312, 0
    %332 = vmatprep.subr.mxu0 0.0
    %333 = vmatpush1.msra.mxu0 0.0
    %334 = vmatprep.subr.mxu0 0.0
    %335 = vmatpush1.msra.mxu0 0.0
    %336 = vmatprep.subr.mxu0 0.0
    %337 = vmatpush1.msra.mxu0 0.0
    %338 = vmatprep.subr.mxu0 0.0
    %339 = vmatpush1.msra.mxu0 0.0
    %340 = vmatprep.subr.mxu0 0.0
    %341 = vmatpush1.msra.mxu0 0.0
    %342 = vmatprep.subr.mxu0 0.0
    %343 = vmatpush1.msra.mxu0 0.0
    %344 = vmatprep.subr.mxu0 0.0
    %345 = vmatpush1.msra.mxu0 0.0
    %346 = vmatprep.subr.mxu0 0.0
    %347 = vmatpush1.msra.mxu0 0.0
    %348 = vmatprep.subr.mxu0 0.0
    %349 = vmatpush1.msra.mxu0 0.0
    %350 = vmatprep.subr.mxu0 0.0
    %351 = vmatpush1.msra.mxu0 0.0
    %352 = vmatprep.subr.mxu0 0.0
    %353 = vmatpush1.msra.mxu0 0.0
    %354 = vmatprep.subr.mxu0 0.0
    %355 = vmatpush1.msra.mxu0 0.0
    %356 = vmatprep.subr.mxu0 0.0
    %357 = vmatpush1.msra.mxu0 %v317
    %358 = vmatprep.subr.mxu0 0.0
    %359 = vmatpush1.msra.mxu0 %v316
    %360 = vmatprep.subr.mxu0 0.0
    %361 = vmatpush1.msra.mxu0 %v315
    %362 = vmatprep.subr.mxu0 0.0
    %363 = vmatpush1.msra.mxu0 %v314
    %364 = vmatprep.subr.mxu0 0.0
    %365 = vmatpush2.msra.mxu0 0.0
    %366 = vmatprep.subr.mxu0 0.0
    %367 = vmatpush2.msra.mxu0 0.0
    %368 = vmatprep.subr.mxu0 0.0
    %369 = vmatpush2.msra.mxu0 0.0
    %370 = vmatprep.subr.mxu0 0.0
    %371 = vmatpush2.msra.mxu0 0.0
    %372 = vmatprep.subr.mxu0 0.0
    %373 = vmatpush2.msra.mxu0 0.0
    %374 = vmatprep.subr.mxu0 0.0
    %375 = vmatpush2.msra.mxu0 0.0
    %376 = vmatprep.subr.mxu0 0.0
    %377 = vmatpush2.msra.mxu0 0.0
    %378 = vmatprep.subr.mxu0 0.0
    %379 = vmatpush2.msra.mxu0 0.0
    %380 = vmatprep.subr.mxu0 0.0
    %381 = vmatpush2.msra.mxu0 0.0
    %382 = vmatprep.subr.mxu0 0.0
    %383 = vmatpush2.msra.mxu0 0.0
    %384 = vmatprep.subr.mxu0 0.0
    %385 = vmatpush2.msra.mxu0 0.0
    %386 = vmatprep.subr.mxu0 0.0
    %387 = vmatpush2.msra.mxu0 0.0
    %388 = vmatprep.subr.mxu0 0.0
    %389 = vmatpush2.msra.mxu0 0.0
    %390 = vmatprep.subr.mxu0 0.0
    %391 = vmatpush2.msra.mxu0 0.0
    %392 = vmatprep.subr.mxu0 0.0
    %393 = vmatpush2.msra.mxu0 0.0
    %394 = vmatprep.subr.mxu0 0.0
    %395 = vmatpush2.msra.mxu0 0.0
    %396 = vmatprep.mubr.f32.mxu0 0.0
    %397 = vmatmul.mubr.f32.gmra.mxu0 %v327
    %v398 = vpop.f32.mrf.mxu0
    %v399 = vadd.f32 %v324, %v398
    %v400 = vpop.f32.mrf.mxu0
    %401 = vmatprep.mubr.f32.mxu0 0.0
    %402 = vmatmul.mubr.f32.gmra.mxu0 %v330
    %v403 = vpop.f32.mrf.mxu0
    %v404 = vadd.f32 %v324, %v403
    %v405 = vpop.f32.mrf.mxu0
    %406 = vdwg.mxu0
    %v407 = vmax.f32 %v399, 0.0
    %v408 = vmax.f32 %v404, 0.0
    %v409 = vld [vmem:[%s1] sm:$0xff]
    %v410 = vld [vmem:[%s1 + $0x8] sm:$0xff]
    %v411 = vld [vmem:[%s1 + $0x10] sm:$0xff]
    %v412 = vld [vmem:[%s1 + $0x18] sm:$0xf]
    %v413 = vld [vmem:[#allocation6] sm:$0x1]
    %415 = vset.pattern.permute.xlu0 0
    %416 = vperm.xlu0 %415, %v409
    %v417 = vpop.permute.xlu0 %416
    %420 = vset.pattern.permute.xlu0 0
    %421 = vperm.xlu0 %420, %v410
    %v422 = vpop.permute.xlu0 %421
    %425 = vset.pattern.permute.xlu0 0
    %426 = vperm.xlu0 %425, %v411
    %v427 = vpop.permute.xlu0 %426
    %430 = vset.pattern.permute.xlu0 0
    %431 = vperm.xlu0 %430, %v412
    %v432 = vpop.permute.xlu0 %431
    %v435 = vlaneseq
    %v436 = vshrl.u32 %v435, 7
    %v437 = vsub.s32 0, %v436
    %v438 = vrot.slane %v413, %v437
    %v440 = vmul.f32 %v417, %v438
    %v441 = vmul.f32 %v422, %v438
    %v442 = vmul.f32 %v427, %v438
    %v443 = vmul.f32 %v432, %v438
    %s444 = scalar_lea.vmem [#allocation6], 1
    %v445 = vld [vmem:[%s444] sm:$0x1]
    %v447 = vlaneseq
    %v448 = vshrl.u32 %v447, 7
    %v449 = vsub.s32 0, %v448
    %v450 = vrot.slane %v445, %v449
    %v452 = vadd.f32 %v440, %v450
    %v453 = vadd.f32 %v441, %v450
    %v454 = vadd.f32 %v442, %v450
    %v455 = vadd.f32 %v443, %v450
    %v456 = vmax.f32 %v452, 0.0
    %v457 = vmax.f32 %v453, 0.0
    %v458 = vmax.f32 %v454, 0.0
    %v459 = vmax.f32 %v455, 0.0
    %v460 = vld [vmem:[#allocation7] sm:$0xff]
    %v461 = vld [vmem:[#allocation7 + $0x8] sm:$0xff]
    %v462 = vld [vmem:[#allocation7 + $0x10] sm:$0xff]
    %v463 = vld [vmem:[#allocation7 + $0x18] sm:$0xff]
    %v464 = vld [vmem:[#allocation7 + $0x20] sm:$0xff]
    %v465 = vld [vmem:[#allocation7 + $0x28] sm:$0xff]
    %v466 = vld [vmem:[#allocation7 + $0x30] sm:$0xff]
    %v467 = vld [vmem:[#allocation7 + $0x38] sm:$0xff]
    %v468 = vld [vmem:[#allocation7 + $0x40] sm:$0xff]
    %v469 = vld [vmem:[#allocation7 + $0x48] sm:$0xff]
    %v470 = vld [vmem:[#allocation7 + $0x50] sm:$0xff]
    %v471 = vld [vmem:[#allocation7 + $0x58] sm:$0xff]
    %v472 = vld [vmem:[#allocation7 + $0x60] sm:$0xff]
    %v473 = vld [vmem:[#allocation7 + $0x68] sm:$0xff]
    %v474 = vld [vmem:[#allocation7 + $0x70] sm:$0xff]
    %v475 = vld [vmem:[#allocation7 + $0x78] sm:$0xff]
    %v476 = vld [vmem:[#allocation7 + $0x80] sm:$0xff]
    %v477 = vld [vmem:[#allocation7 + $0x88] sm:$0xff]
    %v478 = vld [vmem:[#allocation7 + $0x90] sm:$0xff]
    %v479 = vld [vmem:[#allocation7 + $0x98] sm:$0xff]
    %v480 = vld [vmem:[#allocation7 + $0xa0] sm:$0xff]
    %v481 = vld [vmem:[#allocation7 + $0xa8] sm:$0xff]
    %v482 = vld [vmem:[#allocation7 + $0xb0] sm:$0xff]
    %v483 = vld [vmem:[#allocation7 + $0xb8] sm:$0xff]
    %v484 = vld [vmem:[#allocation7 + $0xc0] sm:$0xff]
    %v485 = vld [vmem:[#allocation7 + $0xc8] sm:$0xff]
    %v486 = vld [vmem:[#allocation7 + $0xd0] sm:$0xff]
    %v487 = vld [vmem:[#allocation7 + $0xd8] sm:$0xff]
    %v488 = vld [vmem:[#allocation7 + $0xe0] sm:$0xff]
    %v489 = vld [vmem:[#allocation7 + $0xe8] sm:$0xff]
    %v490 = vld [vmem:[#allocation7 + $0xf0] sm:$0xff]
    %v491 = vld [vmem:[#allocation7 + $0xf8] sm:$0xff]
    %v492 = vld [vmem:[#allocation7 + $0x100] sm:$0xff]
    %v493 = vld [vmem:[#allocation7 + $0x108] sm:$0xff]
    %v494 = vld [vmem:[#allocation7 + $0x110] sm:$0xff]
    %v495 = vld [vmem:[#allocation7 + $0x118] sm:$0xff]
    %v496 = vld [vmem:[#allocation7 + $0x120] sm:$0xff]
    %v497 = vld [vmem:[#allocation7 + $0x128] sm:$0xff]
    %v498 = vld [vmem:[#allocation7 + $0x130] sm:$0xff]
    %v499 = vld [vmem:[#allocation7 + $0x138] sm:$0xff]
    %v500 = vld [vmem:[#allocation7 + $0x140] sm:$0xff]
    %v501 = vld [vmem:[#allocation7 + $0x148] sm:$0xff]
    %v502 = vld [vmem:[#allocation7 + $0x150] sm:$0xff]
    %v503 = vld [vmem:[#allocation7 + $0x158] sm:$0xff]
    %v504 = vld [vmem:[#allocation7 + $0x160] sm:$0xff]
    %v505 = vld [vmem:[#allocation7 + $0x168] sm:$0xff]
    %v506 = vld [vmem:[#allocation7 + $0x170] sm:$0xff]
    %v507 = vld [vmem:[#allocation7 + $0x178] sm:$0xff]
    %v508 = vld [vmem:[#allocation7 + $0x180] sm:$0xff]
    %v509 = vld [vmem:[#allocation7 + $0x188] sm:$0xff]
    %v510 = vld [vmem:[#allocation7 + $0x190] sm:$0xff]
    %v511 = vld [vmem:[#allocation7 + $0x198] sm:$0xff]
    %v512 = vld [vmem:[#allocation7 + $0x1a0] sm:$0xff]
    %v513 = vld [vmem:[#allocation7 + $0x1a8] sm:$0xff]
    %v514 = vld [vmem:[#allocation7 + $0x1b0] sm:$0xff]
    %v515 = vld [vmem:[#allocation7 + $0x1b8] sm:$0xff]
    %v516 = vld [vmem:[#allocation7 + $0x1c0] sm:$0xff]
    %v517 = vld [vmem:[#allocation7 + $0x1c8] sm:$0xff]
    %v518 = vld [vmem:[#allocation7 + $0x1d0] sm:$0xff]
    %v519 = vld [vmem:[#allocation7 + $0x1d8] sm:$0xff]
    %v520 = vld [vmem:[#allocation7 + $0x1e0] sm:$0xff]
    %v521 = vld [vmem:[#allocation7 + $0x1e8] sm:$0xff]
    %v522 = vld [vmem:[#allocation7 + $0x1f0] sm:$0xff]
    %v523 = vld [vmem:[#allocation7 + $0x1f8] sm:$0xff]
    %v524 = vld [vmem:[#allocation7 + $0x200] sm:$0xff]
    %v525 = vld [vmem:[#allocation7 + $0x208] sm:$0xff]
    %v526 = vld [vmem:[#allocation7 + $0x210] sm:$0xff]
    %v527 = vld [vmem:[#allocation7 + $0x218] sm:$0xff]
    %v528 = vld [vmem:[#allocation7 + $0x220] sm:$0xff]
    %v529 = vld [vmem:[#allocation7 + $0x228] sm:$0xff]
    %v530 = vld [vmem:[#allocation7 + $0x230] sm:$0xff]
    %v531 = vld [vmem:[#allocation7 + $0x238] sm:$0xff]
    %v532 = vld [vmem:[#allocation7 + $0x240] sm:$0xff]
    %v533 = vld [vmem:[#allocation7 + $0x248] sm:$0xff]
    %v534 = vld [vmem:[#allocation7 + $0x250] sm:$0xff]
    %v535 = vld [vmem:[#allocation7 + $0x258] sm:$0xff]
    %v536 = vld [vmem:[#allocation7 + $0x260] sm:$0xff]
    %v537 = vld [vmem:[#allocation7 + $0x268] sm:$0xff]
    %v538 = vld [vmem:[#allocation7 + $0x270] sm:$0xff]
    %v539 = vld [vmem:[#allocation7 + $0x278] sm:$0xff]
    %v540 = vld [vmem:[#allocation7 + $0x280] sm:$0xff]
    %v541 = vld [vmem:[#allocation7 + $0x288] sm:$0xff]
    %v542 = vld [vmem:[#allocation7 + $0x290] sm:$0xff]
    %v543 = vld [vmem:[#allocation7 + $0x298] sm:$0xff]
    %v544 = vld [vmem:[#allocation7 + $0x2a0] sm:$0xff]
    %v545 = vld [vmem:[#allocation7 + $0x2a8] sm:$0xff]
    %v546 = vld [vmem:[#allocation7 + $0x2b0] sm:$0xff]
    %v547 = vld [vmem:[#allocation7 + $0x2b8] sm:$0xff]
    %v548 = vld [vmem:[#allocation7 + $0x2c0] sm:$0xff]
    %v549 = vld [vmem:[#allocation7 + $0x2c8] sm:$0xff]
    %v550 = vld [vmem:[#allocation7 + $0x2d0] sm:$0xff]
    %v551 = vld [vmem:[#allocation7 + $0x2d8] sm:$0xff]
    %v552 = vld [vmem:[#allocation7 + $0x2e0] sm:$0xff]
    %v553 = vld [vmem:[#allocation7 + $0x2e8] sm:$0xff]
    %v554 = vld [vmem:[#allocation7 + $0x2f0] sm:$0xff]
    %v555 = vld [vmem:[#allocation7 + $0x2f8] sm:$0xff]
    %v556 = vld [vmem:[#allocation7 + $0x300] sm:$0xff]
    %v557 = vld [vmem:[#allocation7 + $0x308] sm:$0xff]
    %v558 = vld [vmem:[#allocation7 + $0x310] sm:$0xff]
    %v559 = vld [vmem:[#allocation7 + $0x318] sm:$0xff]
    %v560 = vld [vmem:[#allocation7 + $0x320] sm:$0xff]
    %v561 = vld [vmem:[#allocation7 + $0x328] sm:$0xff]
    %v562 = vld [vmem:[#allocation7 + $0x330] sm:$0xff]
    %v563 = vld [vmem:[#allocation7 + $0x338] sm:$0xff]
    %v564 = vld [vmem:[#allocation7 + $0x340] sm:$0xff]
    %v565 = vld [vmem:[#allocation7 + $0x348] sm:$0xff]
    %v566 = vld [vmem:[#allocation7 + $0x350] sm:$0xff]
    %v567 = vld [vmem:[#allocation7 + $0x358] sm:$0xff]
    %v568 = vld [vmem:[#allocation7 + $0x360] sm:$0xff]
    %v569 = vld [vmem:[#allocation7 + $0x368] sm:$0xff]
    %v570 = vld [vmem:[#allocation7 + $0x370] sm:$0xff]
    %v571 = vld [vmem:[#allocation7 + $0x378] sm:$0xff]
    %v572 = vld [vmem:[#allocation7 + $0x380] sm:$0xff]
    %v573 = vld [vmem:[#allocation7 + $0x388] sm:$0xff]
    %v574 = vld [vmem:[#allocation7 + $0x390] sm:$0xff]
    %v575 = vld [vmem:[#allocation7 + $0x398] sm:$0xff]
    %v576 = vld [vmem:[#allocation7 + $0x3a0] sm:$0xff]
    %v577 = vld [vmem:[#allocation7 + $0x3a8] sm:$0xff]
    %v578 = vld [vmem:[#allocation7 + $0x3b0] sm:$0xff]
    %v579 = vld [vmem:[#allocation7 + $0x3b8] sm:$0xff]
    %v580 = vld [vmem:[#allocation7 + $0x3c0] sm:$0xff]
    %v581 = vld [vmem:[#allocation7 + $0x3c8] sm:$0xff]
    %v582 = vld [vmem:[#allocation7 + $0x3d0] sm:$0xff]
    %v583 = vld [vmem:[#allocation7 + $0x3d8] sm:$0xff]
    %v584 = vld [vmem:[#allocation7 + $0x3e0] sm:$0xff]
    %v585 = vld [vmem:[#allocation7 + $0x3e8] sm:$0xff]
    %v586 = vld [vmem:[#allocation7 + $0x3f0] sm:$0xff]
    %v587 = vld [vmem:[#allocation7 + $0x3f8] sm:$0xff]
    %v588 = vld [vmem:[#allocation7 + $0x400] sm:$0xff]
    %v589 = vld [vmem:[#allocation7 + $0x408] sm:$0xff]
    %v590 = vld [vmem:[#allocation7 + $0x410] sm:$0xff]
    %v591 = vld [vmem:[#allocation7 + $0x418] sm:$0xff]
    %v592 = vld [vmem:[#allocation7 + $0x420] sm:$0xff]
    %v593 = vld [vmem:[#allocation7 + $0x428] sm:$0xff]
    %v594 = vld [vmem:[#allocation7 + $0x430] sm:$0xff]
    %v595 = vld [vmem:[#allocation7 + $0x438] sm:$0xff]
    %v596 = vld [vmem:[#allocation7 + $0x440] sm:$0xff]
    %v597 = vld [vmem:[#allocation7 + $0x448] sm:$0xff]
    %v598 = vld [vmem:[#allocation7 + $0x450] sm:$0xff]
    %v599 = vld [vmem:[#allocation7 + $0x458] sm:$0xff]
    %v600 = vld [vmem:[#allocation7 + $0x460] sm:$0xff]
    %v601 = vld [vmem:[#allocation7 + $0x468] sm:$0xff]
    %v602 = vld [vmem:[#allocation7 + $0x470] sm:$0xff]
    %v603 = vld [vmem:[#allocation7 + $0x478] sm:$0xff]
    %v604 = vld [vmem:[#allocation7 + $0x480] sm:$0xff]
    %v605 = vld [vmem:[#allocation7 + $0x488] sm:$0xff]
    %v606 = vld [vmem:[#allocation7 + $0x490] sm:$0xff]
    %v607 = vld [vmem:[#allocation7 + $0x498] sm:$0xff]
    %v608 = vld [vmem:[#allocation7 + $0x4a0] sm:$0xff]
    %v609 = vld [vmem:[#allocation7 + $0x4a8] sm:$0xff]
    %v610 = vld [vmem:[#allocation7 + $0x4b0] sm:$0xff]
    %v611 = vld [vmem:[#allocation7 + $0x4b8] sm:$0xff]
    %v612 = vld [vmem:[#allocation7 + $0x4c0] sm:$0xff]
    %v613 = vld [vmem:[#allocation7 + $0x4c8] sm:$0xff]
    %v614 = vld [vmem:[#allocation7 + $0x4d0] sm:$0xff]
    %v615 = vld [vmem:[#allocation7 + $0x4d8] sm:$0xff]
    %v616 = vld [vmem:[#allocation7 + $0x4e0] sm:$0xff]
    %v617 = vld [vmem:[#allocation7 + $0x4e8] sm:$0xff]
    %v618 = vld [vmem:[#allocation7 + $0x4f0] sm:$0xff]
    %v619 = vld [vmem:[#allocation7 + $0x4f8] sm:$0xff]
    %v620 = vld [vmem:[#allocation7 + $0x500] sm:$0xff]
    %v621 = vld [vmem:[#allocation7 + $0x508] sm:$0xff]
    %v622 = vld [vmem:[#allocation7 + $0x510] sm:$0xff]
    %v623 = vld [vmem:[#allocation7 + $0x518] sm:$0xff]
    %v624 = vld [vmem:[#allocation7 + $0x520] sm:$0xff]
    %v625 = vld [vmem:[#allocation7 + $0x528] sm:$0xff]
    %v626 = vld [vmem:[#allocation7 + $0x530] sm:$0xff]
    %v627 = vld [vmem:[#allocation7 + $0x538] sm:$0xff]
    %v628 = vld [vmem:[#allocation7 + $0x540] sm:$0xff]
    %v629 = vld [vmem:[#allocation7 + $0x548] sm:$0xff]
    %v630 = vld [vmem:[#allocation7 + $0x550] sm:$0xff]
    %v631 = vld [vmem:[#allocation7 + $0x558] sm:$0xff]
    %v632 = vld [vmem:[#allocation7 + $0x560] sm:$0xff]
    %v633 = vld [vmem:[#allocation7 + $0x568] sm:$0xff]
    %v634 = vld [vmem:[#allocation7 + $0x570] sm:$0xff]
    %v635 = vld [vmem:[#allocation7 + $0x578] sm:$0xff]
    %v636 = vld [vmem:[#allocation7 + $0x580] sm:$0xff]
    %v637 = vld [vmem:[#allocation7 + $0x588] sm:$0xff]
    %v638 = vld [vmem:[#allocation7 + $0x590] sm:$0xff]
    %v639 = vld [vmem:[#allocation7 + $0x598] sm:$0xff]
    %v640 = vld [vmem:[#allocation7 + $0x5a0] sm:$0xff]
    %v641 = vld [vmem:[#allocation7 + $0x5a8] sm:$0xff]
    %v642 = vld [vmem:[#allocation7 + $0x5b0] sm:$0xff]
    %v643 = vld [vmem:[#allocation7 + $0x5b8] sm:$0xff]
    %v644 = vld [vmem:[#allocation7 + $0x5c0] sm:$0xff]
    %v645 = vld [vmem:[#allocation7 + $0x5c8] sm:$0xff]
    %v646 = vld [vmem:[#allocation7 + $0x5d0] sm:$0xff]
    %v647 = vld [vmem:[#allocation7 + $0x5d8] sm:$0xff]
    %v648 = vld [vmem:[#allocation7 + $0x5e0] sm:$0xff]
    %v649 = vld [vmem:[#allocation7 + $0x5e8] sm:$0xff]
    %v650 = vld [vmem:[#allocation7 + $0x5f0] sm:$0xff]
    %v651 = vld [vmem:[#allocation7 + $0x5f8] sm:$0xff]
    %v652 = vld [vmem:[#allocation7 + $0x600] sm:$0xff]
    %v653 = vld [vmem:[#allocation7 + $0x608] sm:$0xff]
    %v654 = vld [vmem:[#allocation7 + $0x610] sm:$0xff]
    %v655 = vld [vmem:[#allocation7 + $0x618] sm:$0xff]
    %v656 = vld [vmem:[#allocation7 + $0x620] sm:$0xff]
    %v657 = vld [vmem:[#allocation7 + $0x628] sm:$0xff]
    %v658 = vld [vmem:[#allocation7 + $0x630] sm:$0xff]
    %v659 = vld [vmem:[#allocation7 + $0x638] sm:$0xff]
    %v660 = vld [vmem:[#allocation7 + $0x640] sm:$0xff]
    %v661 = vld [vmem:[#allocation7 + $0x648] sm:$0xff]
    %v662 = vld [vmem:[#allocation7 + $0x650] sm:$0xff]
    %v663 = vld [vmem:[#allocation7 + $0x658] sm:$0xff]
    %v664 = vld [vmem:[#allocation7 + $0x660] sm:$0xff]
    %v665 = vld [vmem:[#allocation7 + $0x668] sm:$0xff]
    %v666 = vld [vmem:[#allocation7 + $0x670] sm:$0xff]
    %v667 = vld [vmem:[#allocation7 + $0x678] sm:$0xff]
    %v668 = vld [vmem:[#allocation7 + $0x680] sm:$0xff]
    %v669 = vld [vmem:[#allocation7 + $0x688] sm:$0xff]
    %v670 = vld [vmem:[#allocation7 + $0x690] sm:$0xff]
    %v671 = vld [vmem:[#allocation7 + $0x698] sm:$0xff]
    %v672 = vld [vmem:[#allocation7 + $0x6a0] sm:$0xff]
    %v673 = vld [vmem:[#allocation7 + $0x6a8] sm:$0xff]
    %v674 = vld [vmem:[#allocation7 + $0x6b0] sm:$0xff]
    %v675 = vld [vmem:[#allocation7 + $0x6b8] sm:$0xff]
    %v676 = vld [vmem:[#allocation7 + $0x6c0] sm:$0xff]
    %v677 = vld [vmem:[#allocation7 + $0x6c8] sm:$0xff]
    %v678 = vld [vmem:[#allocation7 + $0x6d0] sm:$0xff]
    %v679 = vld [vmem:[#allocation7 + $0x6d8] sm:$0xff]
    %v680 = vld [vmem:[#allocation7 + $0x6e0] sm:$0xff]
    %v681 = vld [vmem:[#allocation7 + $0x6e8] sm:$0xff]
    %v682 = vld [vmem:[#allocation7 + $0x6f0] sm:$0xff]
    %v683 = vld [vmem:[#allocation7 + $0x6f8] sm:$0xff]
    %v684 = vld [vmem:[#allocation7 + $0x700] sm:$0xff]
    %v685 = vld [vmem:[#allocation7 + $0x708] sm:$0xff]
    %v686 = vld [vmem:[#allocation7 + $0x710] sm:$0xff]
    %v687 = vld [vmem:[#allocation7 + $0x718] sm:$0xff]
    %v688 = vld [vmem:[#allocation7 + $0x720] sm:$0xff]
    %v689 = vld [vmem:[#allocation7 + $0x728] sm:$0xff]
    %v690 = vld [vmem:[#allocation7 + $0x730] sm:$0xff]
    %v691 = vld [vmem:[#allocation7 + $0x738] sm:$0xff]
    %v692 = vld [vmem:[#allocation7 + $0x740] sm:$0xff]
    %v693 = vld [vmem:[#allocation7 + $0x748] sm:$0xff]
    %v694 = vld [vmem:[#allocation7 + $0x750] sm:$0xff]
    %v695 = vld [vmem:[#allocation7 + $0x758] sm:$0xff]
    %v696 = vld [vmem:[#allocation7 + $0x760] sm:$0xff]
    %v697 = vld [vmem:[#allocation7 + $0x768] sm:$0xff]
    %v698 = vld [vmem:[#allocation7 + $0x770] sm:$0xff]
    %v699 = vld [vmem:[#allocation7 + $0x778] sm:$0xff]
    %v700 = vld [vmem:[#allocation7 + $0x780] sm:$0xff]
    %v701 = vld [vmem:[#allocation7 + $0x788] sm:$0xff]
    %v702 = vld [vmem:[#allocation7 + $0x790] sm:$0xff]
    %v703 = vld [vmem:[#allocation7 + $0x798] sm:$0xff]
    %v704 = vld [vmem:[#allocation7 + $0x7a0] sm:$0xff]
    %v705 = vld [vmem:[#allocation7 + $0x7a8] sm:$0xff]
    %v706 = vld [vmem:[#allocation7 + $0x7b0] sm:$0xff]
    %v707 = vld [vmem:[#allocation7 + $0x7b8] sm:$0xff]
    %v708 = vld [vmem:[#allocation7 + $0x7c0] sm:$0xff]
    %v709 = vld [vmem:[#allocation7 + $0x7c8] sm:$0xff]
    %v710 = vld [vmem:[#allocation7 + $0x7d0] sm:$0xff]
    %v711 = vld [vmem:[#allocation7 + $0x7d8] sm:$0xff]
    %v712 = vld [vmem:[#allocation7 + $0x7e0] sm:$0xff]
    %v713 = vld [vmem:[#allocation7 + $0x7e8] sm:$0xff]
    %v714 = vld [vmem:[#allocation7 + $0x7f0] sm:$0xff]
    %v715 = vld [vmem:[#allocation7 + $0x7f8] sm:$0xff]
    %v716 = vld [vmem:[#allocation7 + $0x800] sm:$0xff]
    %v717 = vld [vmem:[#allocation7 + $0x808] sm:$0xff]
    %v718 = vld [vmem:[#allocation7 + $0x810] sm:$0xff]
    %v719 = vld [vmem:[#allocation7 + $0x818] sm:$0xff]
    %v720 = vld [vmem:[#allocation7 + $0x820] sm:$0xff]
    %v721 = vld [vmem:[#allocation7 + $0x828] sm:$0xff]
    %v722 = vld [vmem:[#allocation7 + $0x830] sm:$0xff]
    %v723 = vld [vmem:[#allocation7 + $0x838] sm:$0xff]
    %v724 = vld [vmem:[#allocation7 + $0x840] sm:$0xff]
    %v725 = vld [vmem:[#allocation7 + $0x848] sm:$0xff]
    %v726 = vld [vmem:[#allocation7 + $0x850] sm:$0xff]
    %v727 = vld [vmem:[#allocation7 + $0x858] sm:$0xff]
    %v728 = vld [vmem:[#allocation7 + $0x860] sm:$0xff]
    %v729 = vld [vmem:[#allocation7 + $0x868] sm:$0xff]
    %v730 = vld [vmem:[#allocation7 + $0x870] sm:$0xff]
    %v731 = vld [vmem:[#allocation7 + $0x878] sm:$0xff]
    %v732 = vld [vmem:[#allocation7 + $0x880] sm:$0xff]
    %v733 = vld [vmem:[#allocation7 + $0x888] sm:$0xff]
    %v734 = vld [vmem:[#allocation7 + $0x890] sm:$0xff]
    %v735 = vld [vmem:[#allocation7 + $0x898] sm:$0xff]
    %v736 = vld [vmem:[#allocation7 + $0x8a0] sm:$0xff]
    %v737 = vld [vmem:[#allocation7 + $0x8a8] sm:$0xff]
    %v738 = vld [vmem:[#allocation7 + $0x8b0] sm:$0xff]
    %v739 = vld [vmem:[#allocation7 + $0x8b8] sm:$0xff]
    %v740 = vld [vmem:[#allocation7 + $0x8c0] sm:$0xff]
    %v741 = vld [vmem:[#allocation7 + $0x8c8] sm:$0xff]
    %v742 = vld [vmem:[#allocation7 + $0x8d0] sm:$0xff]
    %v743 = vld [vmem:[#allocation7 + $0x8d8] sm:$0xff]
    %v744 = vld [vmem:[#allocation7 + $0x8e0] sm:$0xff]
    %v745 = vld [vmem:[#allocation7 + $0x8e8] sm:$0xff]
    %v746 = vld [vmem:[#allocation7 + $0x8f0] sm:$0xff]
    %v747 = vld [vmem:[#allocation7 + $0x8f8] sm:$0xff]
    %s748 = scalar_lea.vmem [#allocation7], 2304
    %v749 = vld [vmem:[%s748] ss:$8 sm:$0xf]
    %v750 = vld [vmem:[%s748] ss:$8 sm:$0xf0]
    %v751 = vor.u32 %v749, %v750
    %s752 = scalar_lea.vmem [#allocation7], 2368
    %v753 = vld [vmem:[%s752] ss:$8 sm:$0xf]
    %v754 = vld [vmem:[%s752] ss:$8 sm:$0xf0]
    %v755 = vor.u32 %v753, %v754
    %s756 = scalar_lea.vmem [#allocation7], 2432
    %v757 = vld [vmem:[%s756] ss:$8 sm:$0xf]
    %v758 = vld [vmem:[%s756] ss:$8 sm:$0xf0]
    %v759 = vor.u32 %v757, %v758
    %v763 = vlaneseq
    %v764 = vshrl.u32 %v763, 7
    %v765 = vsub.s32 0, %v764
    %v766 = vrot.slane %v751, %v765
    %v767 = vlaneseq
    %v768 = vshrl.u32 %v767, 7
    %v769 = vsub.s32 1, %v768
    %v770 = vrot.slane %v751, %v769
    %v771 = vlaneseq
    %v772 = vshrl.u32 %v771, 7
    %v773 = vsub.s32 2, %v772
    %v774 = vrot.slane %v751, %v773
    %v775 = vlaneseq
    %v776 = vshrl.u32 %v775, 7
    %v777 = vsub.s32 3, %v776
    %v778 = vrot.slane %v751, %v777
    %v779 = vlaneseq
    %v780 = vshrl.u32 %v779, 7
    %v781 = vsub.s32 4, %v780
    %v782 = vrot.slane %v751, %v781
    %v783 = vlaneseq
    %v784 = vshrl.u32 %v783, 7
    %v785 = vsub.s32 5, %v784
    %v786 = vrot.slane %v751, %v785
    %v787 = vlaneseq
    %v788 = vshrl.u32 %v787, 7
    %v789 = vsub.s32 6, %v788
    %v790 = vrot.slane %v751, %v789
    %v791 = vlaneseq
    %v792 = vshrl.u32 %v791, 7
    %v793 = vsub.s32 7, %v792
    %v794 = vrot.slane %v751, %v793
    %v795 = vlaneseq
    %v796 = vshrl.u32 %v795, 7
    %v797 = vsub.s32 0, %v796
    %v798 = vrot.slane %v755, %v797
    %v799 = vlaneseq
    %v800 = vshrl.u32 %v799, 7
    %v801 = vsub.s32 1, %v800
    %v802 = vrot.slane %v755, %v801
    %v803 = vlaneseq
    %v804 = vshrl.u32 %v803, 7
    %v805 = vsub.s32 2, %v804
    %v806 = vrot.slane %v755, %v805
    %v807 = vlaneseq
    %v808 = vshrl.u32 %v807, 7
    %v809 = vsub.s32 3, %v808
    %v810 = vrot.slane %v755, %v809
    %v811 = vlaneseq
    %v812 = vshrl.u32 %v811, 7
    %v813 = vsub.s32 4, %v812
    %v814 = vrot.slane %v755, %v813
    %v815 = vlaneseq
    %v816 = vshrl.u32 %v815, 7
    %v817 = vsub.s32 5, %v816
    %v818 = vrot.slane %v755, %v817
    %v819 = vlaneseq
    %v820 = vshrl.u32 %v819, 7
    %v821 = vsub.s32 6, %v820
    %v822 = vrot.slane %v755, %v821
    %v823 = vlaneseq
    %v824 = vshrl.u32 %v823, 7
    %v825 = vsub.s32 7, %v824
    %v826 = vrot.slane %v755, %v825
    %v827 = vlaneseq
    %v828 = vshrl.u32 %v827, 7
    %v829 = vsub.s32 0, %v828
    %v830 = vrot.slane %v759, %v829
    %v831 = vlaneseq
    %v832 = vshrl.u32 %v831, 7
    %v833 = vsub.s32 1, %v832
    %v834 = vrot.slane %v759, %v833
    %v835 = vlaneseq
    %v836 = vshrl.u32 %v835, 7
    %v837 = vsub.s32 2, %v836
    %v838 = vrot.slane %v759, %v837
    %v839 = vlaneseq
    %v840 = vshrl.u32 %v839, 7
    %v841 = vsub.s32 3, %v840
    %v842 = vrot.slane %v759, %v841
    %v843 = vlaneseq
    %v844 = vshrl.u32 %v843, 7
    %v845 = vsub.s32 4, %v844
    %v846 = vrot.slane %v759, %v845
    %v847 = vlaneseq
    %v848 = vshrl.u32 %v847, 7
    %v849 = vsub.s32 5, %v848
    %v850 = vrot.slane %v759, %v849
    %v851 = vlaneseq
    %v852 = vshrl.u32 %v851, 7
    %v853 = vsub.s32 6, %v852
    %v854 = vrot.slane %v759, %v853
    %v855 = vlaneseq
    %v856 = vshrl.u32 %v855, 7
    %v857 = vsub.s32 7, %v856
    %v858 = vrot.slane %v759, %v857
    %vm883 = vcmask 785408
    %v885 = vsel %vm883, %v456, 0
    %v888 = vsel %vm883, %v457, 0
    %v891 = vsel %vm883, %v458, 0
    %v894 = vsel %vm883, %v459, 0
    %896 = vmatprep.subr.mxu0 0.0
    %897 = vmatpush1.msra.mxu0 0.0
    %898 = vmatprep.subr.mxu0 0.0
    %899 = vmatpush1.msra.mxu0 0.0
    %900 = vmatprep.subr.mxu0 0.0
    %901 = vmatpush1.msra.mxu0 0.0
    %902 = vmatprep.subr.mxu0 0.0
    %903 = vmatpush1.msra.mxu0 0.0
    %904 = vmatprep.subr.mxu0 %v725
    %905 = vmatpush1.msra.mxu0 %v724
    %906 = vmatprep.subr.mxu0 %v701
    %907 = vmatpush1.msra.mxu0 %v700
    %908 = vmatprep.subr.mxu0 %v677
    %909 = vmatpush1.msra.mxu0 %v676
    %910 = vmatprep.subr.mxu0 %v653
    %911 = vmatpush1.msra.mxu0 %v652
    %912 = vmatprep.subr.mxu0 %v629
    %913 = vmatpush1.msra.mxu0 %v628
    %914 = vmatprep.subr.mxu0 %v605
    %915 = vmatpush1.msra.mxu0 %v604
    %916 = vmatprep.subr.mxu0 %v581
    %917 = vmatpush1.msra.mxu0 %v580
    %918 = vmatprep.subr.mxu0 %v557
    %919 = vmatpush1.msra.mxu0 %v556
    %920 = vmatprep.subr.mxu0 %v533
    %921 = vmatpush1.msra.mxu0 %v532
    %922 = vmatprep.subr.mxu0 %v509
    %923 = vmatpush1.msra.mxu0 %v508
    %924 = vmatprep.subr.mxu0 %v485
    %925 = vmatpush1.msra.mxu0 %v484
    %926 = vmatprep.subr.mxu0 %v461
    %927 = vmatpush1.msra.mxu0 %v460
    %928 = vmatprep.subr.mxu0 0.0
    %929 = vmatpush2.msra.mxu0 0.0
    %930 = vmatprep.subr.mxu0 0.0
    %931 = vmatpush2.msra.mxu0 0.0
    %932 = vmatprep.subr.mxu0 0.0
    %933 = vmatpush2.msra.mxu0 0.0
    %934 = vmatprep.subr.mxu0 0.0
    %935 = vmatpush2.msra.mxu0 0.0
    %936 = vmatprep.subr.mxu0 0.0
    %937 = vmatpush2.msra.mxu0 0.0
    %938 = vmatprep.subr.mxu0 0.0
    %939 = vmatpush2.msra.mxu0 0.0
    %940 = vmatprep.subr.mxu0 0.0
    %941 = vmatpush2.msra.mxu0 0.0
    %942 = vmatprep.subr.mxu0 0.0
    %943 = vmatpush2.msra.mxu0 0.0
    %944 = vmatprep.subr.mxu0 0.0
    %945 = vmatpush2.msra.mxu0 0.0
    %946 = vmatprep.subr.mxu0 0.0
    %947 = vmatpush2.msra.mxu0 0.0
    %948 = vmatprep.subr.mxu0 0.0
    %949 = vmatpush2.msra.mxu0 0.0
    %950 = vmatprep.subr.mxu0 0.0
    %951 = vmatpush2.msra.mxu0 0.0
    %952 = vmatprep.subr.mxu0 0.0
    %953 = vmatpush2.msra.mxu0 0.0
    %954 = vmatprep.subr.mxu0 0.0
    %955 = vmatpush2.msra.mxu0 0.0
    %956 = vmatprep.subr.mxu0 0.0
    %957 = vmatpush2.msra.mxu0 0.0
    %958 = vmatprep.subr.mxu0 0.0
    %959 = vmatpush2.msra.mxu0 0.0
    %960 = vmatprep.mubr.f32.mxu0 0.0
    %961 = vmatmul.mubr.f32.gmra.mxu0 %v885
    %v962 = vpop.f32.mrf.mxu0
    %v963 = vadd.f32 %v766, %v962
    %v964 = vpop.f32.mrf.mxu0
    %v965 = vadd.f32 %v770, %v964
    %966 = vmatprep.mubr.f32.mxu0 0.0
    %967 = vmatmul.mubr.f32.gmra.mxu0 %v888
    %v968 = vpop.f32.mrf.mxu0
    %v969 = vadd.f32 %v766, %v968
    %v970 = vpop.f32.mrf.mxu0
    %v971 = vadd.f32 %v770, %v970
    %972 = vmatprep.mubr.f32.mxu0 0.0
    %973 = vmatmul.mubr.f32.gmra.mxu0 %v891
    %v974 = vpop.f32.mrf.mxu0
    %v975 = vadd.f32 %v766, %v974
    %v976 = vpop.f32.mrf.mxu0
    %v977 = vadd.f32 %v770, %v976
    %978 = vmatprep.mubr.f32.mxu0 0.0
    %979 = vmatmul.mubr.f32.gmra.mxu0 %v894
    %v980 = vpop.f32.mrf.mxu0
    %v981 = vadd.f32 %v766, %v980
    %v982 = vpop.f32.mrf.mxu0
    %v983 = vadd.f32 %v770, %v982
    %984 = vdwg.mxu0
    %985 = vmatprep.subr.mxu0 0.0
    %986 = vmatpush1.msra.mxu0 0.0
    %987 = vmatprep.subr.mxu0 0.0
    %988 = vmatpush1.msra.mxu0 0.0
    %989 = vmatprep.subr.mxu0 0.0
    %990 = vmatpush1.msra.mxu0 0.0
    %991 = vmatprep.subr.mxu0 0.0
    %992 = vmatpush1.msra.mxu0 0.0
    %993 = vmatprep.subr.mxu0 %v727
    %994 = vmatpush1.msra.mxu0 %v726
    %995 = vmatprep.subr.mxu0 %v703
    %996 = vmatpush1.msra.mxu0 %v702
    %997 = vmatprep.subr.mxu0 %v679
    %998 = vmatpush1.msra.mxu0 %v678
    %999 = vmatprep.subr.mxu0 %v655
    %1000 = vmatpush1.msra.mxu0 %v654
    %1001 = vmatprep.subr.mxu0 %v631
    %1002 = vmatpush1.msra.mxu0 %v630
    %1003 = vmatprep.subr.mxu0 %v607
    %1004 = vmatpush1.msra.mxu0 %v606
    %1005 = vmatprep.subr.mxu0 %v583
    %1006 = vmatpush1.msra.mxu0 %v582
    %1007 = vmatprep.subr.mxu0 %v559
    %1008 = vmatpush1.msra.mxu0 %v558
    %1009 = vmatprep.subr.mxu0 %v535
    %1010 = vmatpush1.msra.mxu0 %v534
    %1011 = vmatprep.subr.mxu0 %v511
    %1012 = vmatpush1.msra.mxu0 %v510
    %1013 = vmatprep.subr.mxu0 %v487
    %1014 = vmatpush1.msra.mxu0 %v486
    %1015 = vmatprep.subr.mxu0 %v463
    %1016 = vmatpush1.msra.mxu0 %v462
    %1017 = vmatprep.subr.mxu0 0.0
    %1018 = vmatpush2.msra.mxu0 0.0
    %1019 = vmatprep.subr.mxu0 0.0
    %1020 = vmatpush2.msra.mxu0 0.0
    %1021 = vmatprep.subr.mxu0 0.0
    %1022 = vmatpush2.msra.mxu0 0.0
    %1023 = vmatprep.subr.mxu0 0.0
    %1024 = vmatpush2.msra.mxu0 0.0
    %1025 = vmatprep.subr.mxu0 0.0
    %1026 = vmatpush2.msra.mxu0 0.0
    %1027 = vmatprep.subr.mxu0 0.0
    %1028 = vmatpush2.msra.mxu0 0.0
    %1029 = vmatprep.subr.mxu0 0.0
    %1030 = vmatpush2.msra.mxu0 0.0
    %1031 = vmatprep.subr.mxu0 0.0
    %1032 = vmatpush2.msra.mxu0 0.0
    %1033 = vmatprep.subr.mxu0 0.0
    %1034 = vmatpush2.msra.mxu0 0.0
    %1035 = vmatprep.subr.mxu0 0.0
    %1036 = vmatpush2.msra.mxu0 0.0
    %1037 = vmatprep.subr.mxu0 0.0
    %1038 = vmatpush2.msra.mxu0 0.0
    %1039 = vmatprep.subr.mxu0 0.0
    %1040 = vmatpush2.msra.mxu0 0.0
    %1041 = vmatprep.subr.mxu0 0.0
    %1042 = vmatpush2.msra.mxu0 0.0
    %1043 = vmatprep.subr.mxu0 0.0
    %1044 = vmatpush2.msra.mxu0 0.0
    %1045 = vmatprep.subr.mxu0 0.0
    %1046 = vmatpush2.msra.mxu0 0.0
    %1047 = vmatprep.subr.mxu0 0.0
    %1048 = vmatpush2.msra.mxu0 0.0
    %1049 = vmatprep.mubr.f32.mxu0 0.0
    %1050 = vmatmul.mubr.f32.gmra.mxu0 %v885
    %v1051 = vpop.f32.mrf.mxu0
    %v1052 = vadd.f32 %v774, %v1051
    %v1053 = vpop.f32.mrf.mxu0
    %v1054 = vadd.f32 %v778, %v1053
    %1055 = vmatprep.mubr.f32.mxu0 0.0
    %1056 = vmatmul.mubr.f32.gmra.mxu0 %v888
    %v1057 = vpop.f32.mrf.mxu0
    %v1058 = vadd.f32 %v774, %v1057
    %v1059 = vpop.f32.mrf.mxu0
    %v1060 = vadd.f32 %v778, %v1059
    %1061 = vmatprep.mubr.f32.mxu0 0.0
    %1062 = vmatmul.mubr.f32.gmra.mxu0 %v891
    %v1063 = vpop.f32.mrf.mxu0
    %v1064 = vadd.f32 %v774, %v1063
    %v1065 = vpop.f32.mrf.mxu0
    %v1066 = vadd.f32 %v778, %v1065
    %1067 = vmatprep.mubr.f32.mxu0 0.0
    %1068 = vmatmul.mubr.f32.gmra.mxu0 %v894
    %v1069 = vpop.f32.mrf.mxu0
    %v1070 = vadd.f32 %v774, %v1069
    %v1071 = vpop.f32.mrf.mxu0
    %v1072 = vadd.f32 %v778, %v1071
    %1073 = vdwg.mxu0
    %1074 = vmatprep.subr.mxu0 0.0
    %1075 = vmatpush1.msra.mxu0 0.0
    %1076 = vmatprep.subr.mxu0 0.0
    %1077 = vmatpush1.msra.mxu0 0.0
    %1078 = vmatprep.subr.mxu0 0.0
    %1079 = vmatpush1.msra.mxu0 0.0
    %1080 = vmatprep.subr.mxu0 0.0
    %1081 = vmatpush1.msra.mxu0 0.0
    %1082 = vmatprep.subr.mxu0 %v729
    %1083 = vmatpush1.msra.mxu0 %v728
    %1084 = vmatprep.subr.mxu0 %v705
    %1085 = vmatpush1.msra.mxu0 %v704
    %1086 = vmatprep.subr.mxu0 %v681
    %1087 = vmatpush1.msra.mxu0 %v680
    %1088 = vmatprep.subr.mxu0 %v657
    %1089 = vmatpush1.msra.mxu0 %v656
    %1090 = vmatprep.subr.mxu0 %v633
    %1091 = vmatpush1.msra.mxu0 %v632
    %1092 = vmatprep.subr.mxu0 %v609
    %1093 = vmatpush1.msra.mxu0 %v608
    %1094 = vmatprep.subr.mxu0 %v585
    %1095 = vmatpush1.msra.mxu0 %v584
    %1096 = vmatprep.subr.mxu0 %v561
    %1097 = vmatpush1.msra.mxu0 %v560
    %1098 = vmatprep.subr.mxu0 %v537
    %1099 = vmatpush1.msra.mxu0 %v536
    %1100 = vmatprep.subr.mxu0 %v513
    %1101 = vmatpush1.msra.mxu0 %v512
    %1102 = vmatprep.subr.mxu0 %v489
    %1103 = vmatpush1.msra.mxu0 %v488
    %1104 = vmatprep.subr.mxu0 %v465
    %1105 = vmatpush1.msra.mxu0 %v464
    %1106 = vmatprep.subr.mxu0 0.0
    %1107 = vmatpush2.msra.mxu0 0.0
    %1108 = vmatprep.subr.mxu0 0.0
    %1109 = vmatpush2.msra.mxu0 0.0
    %1110 = vmatprep.subr.mxu0 0.0
    %1111 = vmatpush2.msra.mxu0 0.0
    %1112 = vmatprep.subr.mxu0 0.0
    %1113 = vmatpush2.msra.mxu0 0.0
    %1114 = vmatprep.subr.mxu0 0.0
    %1115 = vmatpush2.msra.mxu0 0.0
    %1116 = vmatprep.subr.mxu0 0.0
    %1117 = vmatpush2.msra.mxu0 0.0
    %1118 = vmatprep.subr.mxu0 0.0
    %1119 = vmatpush2.msra.mxu0 0.0
    %1120 = vmatprep.subr.mxu0 0.0
    %1121 = vmatpush2.msra.mxu0 0.0
    %1122 = vmatprep.subr.mxu0 0.0
    %1123 = vmatpush2.msra.mxu0 0.0
    %1124 = vmatprep.subr.mxu0 0.0
    %1125 = vmatpush2.msra.mxu0 0.0
    %1126 = vmatprep.subr.mxu0 0.0
    %1127 = vmatpush2.msra.mxu0 0.0
    %1128 = vmatprep.subr.mxu0 0.0
    %1129 = vmatpush2.msra.mxu0 0.0
    %1130 = vmatprep.subr.mxu0 0.0
    %1131 = vmatpush2.msra.mxu0 0.0
    %1132 = vmatprep.subr.mxu0 0.0
    %1133 = vmatpush2.msra.mxu0 0.0
    %1134 = vmatprep.subr.mxu0 0.0
    %1135 = vmatpush2.msra.mxu0 0.0
    %1136 = vmatprep.subr.mxu0 0.0
    %1137 = vmatpush2.msra.mxu0 0.0
    %1138 = vmatprep.mubr.f32.mxu0 0.0
    %1139 = vmatmul.mubr.f32.gmra.mxu0 %v885
    %v1140 = vpop.f32.mrf.mxu0
    %v1141 = vadd.f32 %v782, %v1140
    %v1142 = vpop.f32.mrf.mxu0
    %v1143 = vadd.f32 %v786, %v1142
    %1144 = vmatprep.mubr.f32.mxu0 0.0
    %1145 = vmatmul.mubr.f32.gmra.mxu0 %v888
    %v1146 = vpop.f32.mrf.mxu0
    %v1147 = vadd.f32 %v782, %v1146
    %v1148 = vpop.f32.mrf.mxu0
    %v1149 = vadd.f32 %v786, %v1148
    %1150 = vmatprep.mubr.f32.mxu0 0.0
    %1151 = vmatmul.mubr.f32.gmra.mxu0 %v891
    %v1152 = vpop.f32.mrf.mxu0
    %v1153 = vadd.f32 %v782, %v1152
    %v1154 = vpop.f32.mrf.mxu0
    %v1155 = vadd.f32 %v786, %v1154
    %1156 = vmatprep.mubr.f32.mxu0 0.0
    %1157 = vmatmul.mubr.f32.gmra.mxu0 %v894
    %v1158 = vpop.f32.mrf.mxu0
    %v1159 = vadd.f32 %v782, %v1158
    %v1160 = vpop.f32.mrf.mxu0
    %v1161 = vadd.f32 %v786, %v1160
    %1162 = vdwg.mxu0
    %1163 = vmatprep.subr.mxu0 0.0
    %1164 = vmatpush1.msra.mxu0 0.0
    %1165 = vmatprep.subr.mxu0 0.0
    %1166 = vmatpush1.msra.mxu0 0.0
    %1167 = vmatprep.subr.mxu0 0.0
    %1168 = vmatpush1.msra.mxu0 0.0
    %1169 = vmatprep.subr.mxu0 0.0
    %1170 = vmatpush1.msra.mxu0 0.0
    %1171 = vmatprep.subr.mxu0 %v731
    %1172 = vmatpush1.msra.mxu0 %v730
    %1173 = vmatprep.subr.mxu0 %v707
    %1174 = vmatpush1.msra.mxu0 %v706
    %1175 = vmatprep.subr.mxu0 %v683
    %1176 = vmatpush1.msra.mxu0 %v682
    %1177 = vmatprep.subr.mxu0 %v659
    %1178 = vmatpush1.msra.mxu0 %v658
    %1179 = vmatprep.subr.mxu0 %v635
    %1180 = vmatpush1.msra.mxu0 %v634
    %1181 = vmatprep.subr.mxu0 %v611
    %1182 = vmatpush1.msra.mxu0 %v610
    %1183 = vmatprep.subr.mxu0 %v587
    %1184 = vmatpush1.msra.mxu0 %v586
    %1185 = vmatprep.subr.mxu0 %v563
    %1186 = vmatpush1.msra.mxu0 %v562
    %1187 = vmatprep.subr.mxu0 %v539
    %1188 = vmatpush1.msra.mxu0 %v538
    %1189 = vmatprep.subr.mxu0 %v515
    %1190 = vmatpush1.msra.mxu0 %v514
    %1191 = vmatprep.subr.mxu0 %v491
    %1192 = vmatpush1.msra.mxu0 %v490
    %1193 = vmatprep.subr.mxu0 %v467
    %1194 = vmatpush1.msra.mxu0 %v466
    %1195 = vmatprep.subr.mxu0 0.0
    %1196 = vmatpush2.msra.mxu0 0.0
    %1197 = vmatprep.subr.mxu0 0.0
    %1198 = vmatpush2.msra.mxu0 0.0
    %1199 = vmatprep.subr.mxu0 0.0
    %1200 = vmatpush2.msra.mxu0 0.0
    %1201 = vmatprep.subr.mxu0 0.0
    %1202 = vmatpush2.msra.mxu0 0.0
    %1203 = vmatprep.subr.mxu0 0.0
    %1204 = vmatpush2.msra.mxu0 0.0
    %1205 = vmatprep.subr.mxu0 0.0
    %1206 = vmatpush2.msra.mxu0 0.0
    %1207 = vmatprep.subr.mxu0 0.0
    %1208 = vmatpush2.msra.mxu0 0.0
    %1209 = vmatprep.subr.mxu0 0.0
    %1210 = vmatpush2.msra.mxu0 0.0
    %1211 = vmatprep.subr.mxu0 0.0
    %1212 = vmatpush2.msra.mxu0 0.0
    %1213 = vmatprep.subr.mxu0 0.0
    %1214 = vmatpush2.msra.mxu0 0.0
    %1215 = vmatprep.subr.mxu0 0.0
    %1216 = vmatpush2.msra.mxu0 0.0
    %1217 = vmatprep.subr.mxu0 0.0
    %1218 = vmatpush2.msra.mxu0 0.0
    %1219 = vmatprep.subr.mxu0 0.0
    %1220 = vmatpush2.msra.mxu0 0.0
    %1221 = vmatprep.subr.mxu0 0.0
    %1222 = vmatpush2.msra.mxu0 0.0
    %1223 = vmatprep.subr.mxu0 0.0
    %1224 = vmatpush2.msra.mxu0 0.0
    %1225 = vmatprep.subr.mxu0 0.0
    %1226 = vmatpush2.msra.mxu0 0.0
    %1227 = vmatprep.mubr.f32.mxu0 0.0
    %1228 = vmatmul.mubr.f32.gmra.mxu0 %v885
    %v1229 = vpop.f32.mrf.mxu0
    %v1230 = vadd.f32 %v790, %v1229
    %v1231 = vpop.f32.mrf.mxu0
    %v1232 = vadd.f32 %v794, %v1231
    %1233 = vmatprep.mubr.f32.mxu0 0.0
    %1234 = vmatmul.mubr.f32.gmra.mxu0 %v888
    %v1235 = vpop.f32.mrf.mxu0
    %v1236 = vadd.f32 %v790, %v1235
    %v1237 = vpop.f32.mrf.mxu0
    %v1238 = vadd.f32 %v794, %v1237
    %1239 = vmatprep.mubr.f32.mxu0 0.0
    %1240 = vmatmul.mubr.f32.gmra.mxu0 %v891
    %v1241 = vpop.f32.mrf.mxu0
    %v1242 = vadd.f32 %v790, %v1241
    %v1243 = vpop.f32.mrf.mxu0
    %v1244 = vadd.f32 %v794, %v1243
    %1245 = vmatprep.mubr.f32.mxu0 0.0
    %1246 = vmatmul.mubr.f32.gmra.mxu0 %v894
    %v1247 = vpop.f32.mrf.mxu0
    %v1248 = vadd.f32 %v790, %v1247
    %v1249 = vpop.f32.mrf.mxu0
    %v1250 = vadd.f32 %v794, %v1249
    %1251 = vdwg.mxu0
    %1252 = vmatprep.subr.mxu0 0.0
    %1253 = vmatpush1.msra.mxu0 0.0
    %1254 = vmatprep.subr.mxu0 0.0
    %1255 = vmatpush1.msra.mxu0 0.0
    %1256 = vmatprep.subr.mxu0 0.0
    %1257 = vmatpush1.msra.mxu0 0.0
    %1258 = vmatprep.subr.mxu0 0.0
    %1259 = vmatpush1.msra.mxu0 0.0
    %1260 = vmatprep.subr.mxu0 %v733
    %1261 = vmatpush1.msra.mxu0 %v732
    %1262 = vmatprep.subr.mxu0 %v709
    %1263 = vmatpush1.msra.mxu0 %v708
    %1264 = vmatprep.subr.mxu0 %v685
    %1265 = vmatpush1.msra.mxu0 %v684
    %1266 = vmatprep.subr.mxu0 %v661
    %1267 = vmatpush1.msra.mxu0 %v660
    %1268 = vmatprep.subr.mxu0 %v637
    %1269 = vmatpush1.msra.mxu0 %v636
    %1270 = vmatprep.subr.mxu0 %v613
    %1271 = vmatpush1.msra.mxu0 %v612
    %1272 = vmatprep.subr.mxu0 %v589
    %1273 = vmatpush1.msra.mxu0 %v588
    %1274 = vmatprep.subr.mxu0 %v565
    %1275 = vmatpush1.msra.mxu0 %v564
    %1276 = vmatprep.subr.mxu0 %v541
    %1277 = vmatpush1.msra.mxu0 %v540
    %1278 = vmatprep.subr.mxu0 %v517
    %1279 = vmatpush1.msra.mxu0 %v516
    %1280 = vmatprep.subr.mxu0 %v493
    %1281 = vmatpush1.msra.mxu0 %v492
    %1282 = vmatprep.subr.mxu0 %v469
    %1283 = vmatpush1.msra.mxu0 %v468
    %1284 = vmatprep.subr.mxu0 0.0
    %1285 = vmatpush2.msra.mxu0 0.0
    %1286 = vmatprep.subr.mxu0 0.0
    %1287 = vmatpush2.msra.mxu0 0.0
    %1288 = vmatprep.subr.mxu0 0.0
    %1289 = vmatpush2.msra.mxu0 0.0
    %1290 = vmatprep.subr.mxu0 0.0
    %1291 = vmatpush2.msra.mxu0 0.0
    %1292 = vmatprep.subr.mxu0 0.0
    %1293 = vmatpush2.msra.mxu0 0.0
    %1294 = vmatprep.subr.mxu0 0.0
    %1295 = vmatpush2.msra.mxu0 0.0
    %1296 = vmatprep.subr.mxu0 0.0
    %1297 = vmatpush2.msra.mxu0 0.0
    %1298 = vmatprep.subr.mxu0 0.0
    %1299 = vmatpush2.msra.mxu0 0.0
    %1300 = vmatprep.subr.mxu0 0.0
    %1301 = vmatpush2.msra.mxu0 0.0
    %1302 = vmatprep.subr.mxu0 0.0
    %1303 = vmatpush2.msra.mxu0 0.0
    %1304 = vmatprep.subr.mxu0 0.0
    %1305 = vmatpush2.msra.mxu0 0.0
    %1306 = vmatprep.subr.mxu0 0.0
    %1307 = vmatpush2.msra.mxu0 0.0
    %1308 = vmatprep.subr.mxu0 0.0
    %1309 = vmatpush2.msra.mxu0 0.0
    %1310 = vmatprep.subr.mxu0 0.0
    %1311 = vmatpush2.msra.mxu0 0.0
    %1312 = vmatprep.subr.mxu0 0.0
    %1313 = vmatpush2.msra.mxu0 0.0
    %1314 = vmatprep.subr.mxu0 0.0
    %1315 = vmatpush2.msra.mxu0 0.0
    %1316 = vmatprep.mubr.f32.mxu0 0.0
    %1317 = vmatmul.mubr.f32.gmra.mxu0 %v885
    %v1318 = vpop.f32.mrf.mxu0
    %v1319 = vadd.f32 %v798, %v1318
    %v1320 = vpop.f32.mrf.mxu0
    %v1321 = vadd.f32 %v802, %v1320
    %1322 = vmatprep.mubr.f32.mxu0 0.0
    %1323 = vmatmul.mubr.f32.gmra.mxu0 %v888
    %v1324 = vpop.f32.mrf.mxu0
    %v1325 = vadd.f32 %v798, %v1324
    %v1326 = vpop.f32.mrf.mxu0
    %v1327 = vadd.f32 %v802, %v1326
    %1328 = vmatprep.mubr.f32.mxu0 0.0
    %1329 = vmatmul.mubr.f32.gmra.mxu0 %v891
    %v1330 = vpop.f32.mrf.mxu0
    %v1331 = vadd.f32 %v798, %v1330
    %v1332 = vpop.f32.mrf.mxu0
    %v1333 = vadd.f32 %v802, %v1332
    %1334 = vmatprep.mubr.f32.mxu0 0.0
    %1335 = vmatmul.mubr.f32.gmra.mxu0 %v894
    %v1336 = vpop.f32.mrf.mxu0
    %v1337 = vadd.f32 %v798, %v1336
    %v1338 = vpop.f32.mrf.mxu0
    %v1339 = vadd.f32 %v802, %v1338
    %1340 = vdwg.mxu0
    %1341 = vmatprep.subr.mxu0 0.0
    %1342 = vmatpush1.msra.mxu0 0.0
    %1343 = vmatprep.subr.mxu0 0.0
    %1344 = vmatpush1.msra.mxu0 0.0
    %1345 = vmatprep.subr.mxu0 0.0
    %1346 = vmatpush1.msra.mxu0 0.0
    %1347 = vmatprep.subr.mxu0 0.0
    %1348 = vmatpush1.msra.mxu0 0.0
    %1349 = vmatprep.subr.mxu0 %v735
    %1350 = vmatpush1.msra.mxu0 %v734
    %1351 = vmatprep.subr.mxu0 %v711
    %1352 = vmatpush1.msra.mxu0 %v710
    %1353 = vmatprep.subr.mxu0 %v687
    %1354 = vmatpush1.msra.mxu0 %v686
    %1355 = vmatprep.subr.mxu0 %v663
    %1356 = vmatpush1.msra.mxu0 %v662
    %1357 = vmatprep.subr.mxu0 %v639
    %1358 = vmatpush1.msra.mxu0 %v638
    %1359 = vmatprep.subr.mxu0 %v615
    %1360 = vmatpush1.msra.mxu0 %v614
    %1361 = vmatprep.subr.mxu0 %v591
    %1362 = vmatpush1.msra.mxu0 %v590
    %1363 = vmatprep.subr.mxu0 %v567
    %1364 = vmatpush1.msra.mxu0 %v566
    %1365 = vmatprep.subr.mxu0 %v543
    %1366 = vmatpush1.msra.mxu0 %v542
    %1367 = vmatprep.subr.mxu0 %v519
    %1368 = vmatpush1.msra.mxu0 %v518
    %1369 = vmatprep.subr.mxu0 %v495
    %1370 = vmatpush1.msra.mxu0 %v494
    %1371 = vmatprep.subr.mxu0 %v471
    %1372 = vmatpush1.msra.mxu0 %v470
    %1373 = vmatprep.subr.mxu0 0.0
    %1374 = vmatpush2.msra.mxu0 0.0
    %1375 = vmatprep.subr.mxu0 0.0
    %1376 = vmatpush2.msra.mxu0 0.0
    %1377 = vmatprep.subr.mxu0 0.0
    %1378 = vmatpush2.msra.mxu0 0.0
    %1379 = vmatprep.subr.mxu0 0.0
    %1380 = vmatpush2.msra.mxu0 0.0
    %1381 = vmatprep.subr.mxu0 0.0
    %1382 = vmatpush2.msra.mxu0 0.0
    %1383 = vmatprep.subr.mxu0 0.0
    %1384 = vmatpush2.msra.mxu0 0.0
    %1385 = vmatprep.subr.mxu0 0.0
    %1386 = vmatpush2.msra.mxu0 0.0
    %1387 = vmatprep.subr.mxu0 0.0
    %1388 = vmatpush2.msra.mxu0 0.0
    %1389 = vmatprep.subr.mxu0 0.0
    %1390 = vmatpush2.msra.mxu0 0.0
    %1391 = vmatprep.subr.mxu0 0.0
    %1392 = vmatpush2.msra.mxu0 0.0
    %1393 = vmatprep.subr.mxu0 0.0
    %1394 = vmatpush2.msra.mxu0 0.0
    %1395 = vmatprep.subr.mxu0 0.0
    %1396 = vmatpush2.msra.mxu0 0.0
    %1397 = vmatprep.subr.mxu0 0.0
    %1398 = vmatpush2.msra.mxu0 0.0
    %1399 = vmatprep.subr.mxu0 0.0
    %1400 = vmatpush2.msra.mxu0 0.0
    %1401 = vmatprep.subr.mxu0 0.0
    %1402 = vmatpush2.msra.mxu0 0.0
    %1403 = vmatprep.subr.mxu0 0.0
    %1404 = vmatpush2.msra.mxu0 0.0
    %1405 = vmatprep.mubr.f32.mxu0 0.0
    %1406 = vmatmul.mubr.f32.gmra.mxu0 %v885
    %v1407 = vpop.f32.mrf.mxu0
    %v1408 = vadd.f32 %v806, %v1407
    %v1409 = vpop.f32.mrf.mxu0
    %v1410 = vadd.f32 %v810, %v1409
    %1411 = vmatprep.mubr.f32.mxu0 0.0
    %1412 = vmatmul.mubr.f32.gmra.mxu0 %v888
    %v1413 = vpop.f32.mrf.mxu0
    %v1414 = vadd.f32 %v806, %v1413
    %v1415 = vpop.f32.mrf.mxu0
    %v1416 = vadd.f32 %v810, %v1415
    %1417 = vmatprep.mubr.f32.mxu0 0.0
    %1418 = vmatmul.mubr.f32.gmra.mxu0 %v891
    %v1419 = vpop.f32.mrf.mxu0
    %v1420 = vadd.f32 %v806, %v1419
    %v1421 = vpop.f32.mrf.mxu0
    %v1422 = vadd.f32 %v810, %v1421
    %1423 = vmatprep.mubr.f32.mxu0 0.0
    %1424 = vmatmul.mubr.f32.gmra.mxu0 %v894
    %v1425 = vpop.f32.mrf.mxu0
    %v1426 = vadd.f32 %v806, %v1425
    %v1427 = vpop.f32.mrf.mxu0
    %v1428 = vadd.f32 %v810, %v1427
    %1429 = vdwg.mxu0
    %1430 = vmatprep.subr.mxu0 0.0
    %1431 = vmatpush1.msra.mxu0 0.0
    %1432 = vmatprep.subr.mxu0 0.0
    %1433 = vmatpush1.msra.mxu0 0.0
    %1434 = vmatprep.subr.mxu0 0.0
    %1435 = vmatpush1.msra.mxu0 0.0
    %1436 = vmatprep.subr.mxu0 0.0
    %1437 = vmatpush1.msra.mxu0 0.0
    %1438 = vmatprep.subr.mxu0 %v737
    %1439 = vmatpush1.msra.mxu0 %v736
    %1440 = vmatprep.subr.mxu0 %v713
    %1441 = vmatpush1.msra.mxu0 %v712
    %1442 = vmatprep.subr.mxu0 %v689
    %1443 = vmatpush1.msra.mxu0 %v688
    %1444 = vmatprep.subr.mxu0 %v665
    %1445 = vmatpush1.msra.mxu0 %v664
    %1446 = vmatprep.subr.mxu0 %v641
    %1447 = vmatpush1.msra.mxu0 %v640
    %1448 = vmatprep.subr.mxu0 %v617
    %1449 = vmatpush1.msra.mxu0 %v616
    %1450 = vmatprep.subr.mxu0 %v593
    %1451 = vmatpush1.msra.mxu0 %v592
    %1452 = vmatprep.subr.mxu0 %v569
    %1453 = vmatpush1.msra.mxu0 %v568
    %1454 = vmatprep.subr.mxu0 %v545
    %1455 = vmatpush1.msra.mxu0 %v544
    %1456 = vmatprep.subr.mxu0 %v521
    %1457 = vmatpush1.msra.mxu0 %v520
    %1458 = vmatprep.subr.mxu0 %v497
    %1459 = vmatpush1.msra.mxu0 %v496
    %1460 = vmatprep.subr.mxu0 %v473
    %1461 = vmatpush1.msra.mxu0 %v472
    %1462 = vmatprep.subr.mxu0 0.0
    %1463 = vmatpush2.msra.mxu0 0.0
    %1464 = vmatprep.subr.mxu0 0.0
    %1465 = vmatpush2.msra.mxu0 0.0
    %1466 = vmatprep.subr.mxu0 0.0
    %1467 = vmatpush2.msra.mxu0 0.0
    %1468 = vmatprep.subr.mxu0 0.0
    %1469 = vmatpush2.msra.mxu0 0.0
    %1470 = vmatprep.subr.mxu0 0.0
    %1471 = vmatpush2.msra.mxu0 0.0
    %1472 = vmatprep.subr.mxu0 0.0
    %1473 = vmatpush2.msra.mxu0 0.0
    %1474 = vmatprep.subr.mxu0 0.0
    %1475 = vmatpush2.msra.mxu0 0.0
    %1476 = vmatprep.subr.mxu0 0.0
    %1477 = vmatpush2.msra.mxu0 0.0
    %1478 = vmatprep.subr.mxu0 0.0
    %1479 = vmatpush2.msra.mxu0 0.0
    %1480 = vmatprep.subr.mxu0 0.0
    %1481 = vmatpush2.msra.mxu0 0.0
    %1482 = vmatprep.subr.mxu0 0.0
    %1483 = vmatpush2.msra.mxu0 0.0
    %1484 = vmatprep.subr.mxu0 0.0
    %1485 = vmatpush2.msra.mxu0 0.0
    %1486 = vmatprep.subr.mxu0 0.0
    %1487 = vmatpush2.msra.mxu0 0.0
    %1488 = vmatprep.subr.mxu0 0.0
    %1489 = vmatpush2.msra.mxu0 0.0
    %1490 = vmatprep.subr.mxu0 0.0
    %1491 = vmatpush2.msra.mxu0 0.0
    %1492 = vmatprep.subr.mxu0 0.0
    %1493 = vmatpush2.msra.mxu0 0.0
    %1494 = vmatprep.mubr.f32.mxu0 0.0
    %1495 = vmatmul.mubr.f32.gmra.mxu0 %v885
    %v1496 = vpop.f32.mrf.mxu0
    %v1497 = vadd.f32 %v814, %v1496
    %v1498 = vpop.f32.mrf.mxu0
    %v1499 = vadd.f32 %v818, %v1498
    %1500 = vmatprep.mubr.f32.mxu0 0.0
    %1501 = vmatmul.mubr.f32.gmra.mxu0 %v888
    %v1502 = vpop.f32.mrf.mxu0
    %v1503 = vadd.f32 %v814, %v1502
    %v1504 = vpop.f32.mrf.mxu0
    %v1505 = vadd.f32 %v818, %v1504
    %1506 = vmatprep.mubr.f32.mxu0 0.0
    %1507 = vmatmul.mubr.f32.gmra.mxu0 %v891
    %v1508 = vpop.f32.mrf.mxu0
    %v1509 = vadd.f32 %v814, %v1508
    %v1510 = vpop.f32.mrf.mxu0
    %v1511 = vadd.f32 %v818, %v1510
    %1512 = vmatprep.mubr.f32.mxu0 0.0
    %1513 = vmatmul.mubr.f32.gmra.mxu0 %v894
    %v1514 = vpop.f32.mrf.mxu0
    %v1515 = vadd.f32 %v814, %v1514
    %v1516 = vpop.f32.mrf.mxu0
    %v1517 = vadd.f32 %v818, %v1516
    %1518 = vdwg.mxu0
    %1519 = vmatprep.subr.mxu0 0.0
    %1520 = vmatpush1.msra.mxu0 0.0
    %1521 = vmatprep.subr.mxu0 0.0
    %1522 = vmatpush1.msra.mxu0 0.0
    %1523 = vmatprep.subr.mxu0 0.0
    %1524 = vmatpush1.msra.mxu0 0.0
    %1525 = vmatprep.subr.mxu0 0.0
    %1526 = vmatpush1.msra.mxu0 0.0
    %1527 = vmatprep.subr.mxu0 %v739
    %1528 = vmatpush1.msra.mxu0 %v738
    %1529 = vmatprep.subr.mxu0 %v715
    %1530 = vmatpush1.msra.mxu0 %v714
    %1531 = vmatprep.subr.mxu0 %v691
    %1532 = vmatpush1.msra.mxu0 %v690
    %1533 = vmatprep.subr.mxu0 %v667
    %1534 = vmatpush1.msra.mxu0 %v666
    %1535 = vmatprep.subr.mxu0 %v643
    %1536 = vmatpush1.msra.mxu0 %v642
    %1537 = vmatprep.subr.mxu0 %v619
    %1538 = vmatpush1.msra.mxu0 %v618
    %1539 = vmatprep.subr.mxu0 %v595
    %1540 = vmatpush1.msra.mxu0 %v594
    %1541 = vmatprep.subr.mxu0 %v571
    %1542 = vmatpush1.msra.mxu0 %v570
    %1543 = vmatprep.subr.mxu0 %v547
    %1544 = vmatpush1.msra.mxu0 %v546
    %1545 = vmatprep.subr.mxu0 %v523
    %1546 = vmatpush1.msra.mxu0 %v522
    %1547 = vmatprep.subr.mxu0 %v499
    %1548 = vmatpush1.msra.mxu0 %v498
    %1549 = vmatprep.subr.mxu0 %v475
    %1550 = vmatpush1.msra.mxu0 %v474
    %1551 = vmatprep.subr.mxu0 0.0
    %1552 = vmatpush2.msra.mxu0 0.0
    %1553 = vmatprep.subr.mxu0 0.0
    %1554 = vmatpush2.msra.mxu0 0.0
    %1555 = vmatprep.subr.mxu0 0.0
    %1556 = vmatpush2.msra.mxu0 0.0
    %1557 = vmatprep.subr.mxu0 0.0
    %1558 = vmatpush2.msra.mxu0 0.0
    %1559 = vmatprep.subr.mxu0 0.0
    %1560 = vmatpush2.msra.mxu0 0.0
    %1561 = vmatprep.subr.mxu0 0.0
    %1562 = vmatpush2.msra.mxu0 0.0
    %1563 = vmatprep.subr.mxu0 0.0
    %1564 = vmatpush2.msra.mxu0 0.0
    %1565 = vmatprep.subr.mxu0 0.0
    %1566 = vmatpush2.msra.mxu0 0.0
    %1567 = vmatprep.subr.mxu0 0.0
    %1568 = vmatpush2.msra.mxu0 0.0
    %1569 = vmatprep.subr.mxu0 0.0
    %1570 = vmatpush2.msra.mxu0 0.0
    %1571 = vmatprep.subr.mxu0 0.0
    %1572 = vmatpush2.msra.mxu0 0.0
    %1573 = vmatprep.subr.mxu0 0.0
    %1574 = vmatpush2.msra.mxu0 0.0
    %1575 = vmatprep.subr.mxu0 0.0
    %1576 = vmatpush2.msra.mxu0 0.0
    %1577 = vmatprep.subr.mxu0 0.0
    %1578 = vmatpush2.msra.mxu0 0.0
    %1579 = vmatprep.subr.mxu0 0.0
    %1580 = vmatpush2.msra.mxu0 0.0
    %1581 = vmatprep.subr.mxu0 0.0
    %1582 = vmatpush2.msra.mxu0 0.0
    %1583 = vmatprep.mubr.f32.mxu0 0.0
    %1584 = vmatmul.mubr.f32.gmra.mxu0 %v885
    %v1585 = vpop.f32.mrf.mxu0
    %v1586 = vadd.f32 %v822, %v1585
    %v1587 = vpop.f32.mrf.mxu0
    %v1588 = vadd.f32 %v826, %v1587
    %1589 = vmatprep.mubr.f32.mxu0 0.0
    %1590 = vmatmul.mubr.f32.gmra.mxu0 %v888
    %v1591 = vpop.f32.mrf.mxu0
    %v1592 = vadd.f32 %v822, %v1591
    %v1593 = vpop.f32.mrf.mxu0
    %v1594 = vadd.f32 %v826, %v1593
    %1595 = vmatprep.mubr.f32.mxu0 0.0
    %1596 = vmatmul.mubr.f32.gmra.mxu0 %v891
    %v1597 = vpop.f32.mrf.mxu0
    %v1598 = vadd.f32 %v822, %v1597
    %v1599 = vpop.f32.mrf.mxu0
    %v1600 = vadd.f32 %v826, %v1599
    %1601 = vmatprep.mubr.f32.mxu0 0.0
    %1602 = vmatmul.mubr.f32.gmra.mxu0 %v894
    %v1603 = vpop.f32.mrf.mxu0
    %v1604 = vadd.f32 %v822, %v1603
    %v1605 = vpop.f32.mrf.mxu0
    %v1606 = vadd.f32 %v826, %v1605
    %1607 = vdwg.mxu0
    %1608 = vmatprep.subr.mxu0 0.0
    %1609 = vmatpush1.msra.mxu0 0.0
    %1610 = vmatprep.subr.mxu0 0.0
    %1611 = vmatpush1.msra.mxu0 0.0
    %1612 = vmatprep.subr.mxu0 0.0
    %1613 = vmatpush1.msra.mxu0 0.0
    %1614 = vmatprep.subr.mxu0 0.0
    %1615 = vmatpush1.msra.mxu0 0.0
    %1616 = vmatprep.subr.mxu0 %v741
    %1617 = vmatpush1.msra.mxu0 %v740
    %1618 = vmatprep.subr.mxu0 %v717
    %1619 = vmatpush1.msra.mxu0 %v716
    %1620 = vmatprep.subr.mxu0 %v693
    %1621 = vmatpush1.msra.mxu0 %v692
    %1622 = vmatprep.subr.mxu0 %v669
    %1623 = vmatpush1.msra.mxu0 %v668
    %1624 = vmatprep.subr.mxu0 %v645
    %1625 = vmatpush1.msra.mxu0 %v644
    %1626 = vmatprep.subr.mxu0 %v621
    %1627 = vmatpush1.msra.mxu0 %v620
    %1628 = vmatprep.subr.mxu0 %v597
    %1629 = vmatpush1.msra.mxu0 %v596
    %1630 = vmatprep.subr.mxu0 %v573
    %1631 = vmatpush1.msra.mxu0 %v572
    %1632 = vmatprep.subr.mxu0 %v549
    %1633 = vmatpush1.msra.mxu0 %v548
    %1634 = vmatprep.subr.mxu0 %v525
    %1635 = vmatpush1.msra.mxu0 %v524
    %1636 = vmatprep.subr.mxu0 %v501
    %1637 = vmatpush1.msra.mxu0 %v500
    %1638 = vmatprep.subr.mxu0 %v477
    %1639 = vmatpush1.msra.mxu0 %v476
    %1640 = vmatprep.subr.mxu0 0.0
    %1641 = vmatpush2.msra.mxu0 0.0
    %1642 = vmatprep.subr.mxu0 0.0
    %1643 = vmatpush2.msra.mxu0 0.0
    %1644 = vmatprep.subr.mxu0 0.0
    %1645 = vmatpush2.msra.mxu0 0.0
    %1646 = vmatprep.subr.mxu0 0.0
    %1647 = vmatpush2.msra.mxu0 0.0
    %1648 = vmatprep.subr.mxu0 0.0
    %1649 = vmatpush2.msra.mxu0 0.0
    %1650 = vmatprep.subr.mxu0 0.0
    %1651 = vmatpush2.msra.mxu0 0.0
    %1652 = vmatprep.subr.mxu0 0.0
    %1653 = vmatpush2.msra.mxu0 0.0
    %1654 = vmatprep.subr.mxu0 0.0
    %1655 = vmatpush2.msra.mxu0 0.0
    %1656 = vmatprep.subr.mxu0 0.0
    %1657 = vmatpush2.msra.mxu0 0.0
    %1658 = vmatprep.subr.mxu0 0.0
    %1659 = vmatpush2.msra.mxu0 0.0
    %1660 = vmatprep.subr.mxu0 0.0
    %1661 = vmatpush2.msra.mxu0 0.0
    %1662 = vmatprep.subr.mxu0 0.0
    %1663 = vmatpush2.msra.mxu0 0.0
    %1664 = vmatprep.subr.mxu0 0.0
    %1665 = vmatpush2.msra.mxu0 0.0
    %1666 = vmatprep.subr.mxu0 0.0
    %1667 = vmatpush2.msra.mxu0 0.0
    %1668 = vmatprep.subr.mxu0 0.0
    %1669 = vmatpush2.msra.mxu0 0.0
    %1670 = vmatprep.subr.mxu0 0.0
    %1671 = vmatpush2.msra.mxu0 0.0
    %1672 = vmatprep.mubr.f32.mxu0 0.0
    %1673 = vmatmul.mubr.f32.gmra.mxu0 %v885
    %v1674 = vpop.f32.mrf.mxu0
    %v1675 = vadd.f32 %v830, %v1674
    %v1676 = vpop.f32.mrf.mxu0
    %v1677 = vadd.f32 %v834, %v1676
    %1678 = vmatprep.mubr.f32.mxu0 0.0
    %1679 = vmatmul.mubr.f32.gmra.mxu0 %v888
    %v1680 = vpop.f32.mrf.mxu0
    %v1681 = vadd.f32 %v830, %v1680
    %v1682 = vpop.f32.mrf.mxu0
    %v1683 = vadd.f32 %v834, %v1682
    %1684 = vmatprep.mubr.f32.mxu0 0.0
    %1685 = vmatmul.mubr.f32.gmra.mxu0 %v891
    %v1686 = vpop.f32.mrf.mxu0
    %v1687 = vadd.f32 %v830, %v1686
    %v1688 = vpop.f32.mrf.mxu0
    %v1689 = vadd.f32 %v834, %v1688
    %1690 = vmatprep.mubr.f32.mxu0 0.0
    %1691 = vmatmul.mubr.f32.gmra.mxu0 %v894
    %v1692 = vpop.f32.mrf.mxu0
    %v1693 = vadd.f32 %v830, %v1692
    %v1694 = vpop.f32.mrf.mxu0
    %v1695 = vadd.f32 %v834, %v1694
    %1696 = vdwg.mxu0
    %1697 = vmatprep.subr.mxu0 0.0
    %1698 = vmatpush1.msra.mxu0 0.0
    %1699 = vmatprep.subr.mxu0 0.0
    %1700 = vmatpush1.msra.mxu0 0.0
    %1701 = vmatprep.subr.mxu0 0.0
    %1702 = vmatpush1.msra.mxu0 0.0
    %1703 = vmatprep.subr.mxu0 0.0
    %1704 = vmatpush1.msra.mxu0 0.0
    %1705 = vmatprep.subr.mxu0 %v743
    %1706 = vmatpush1.msra.mxu0 %v742
    %1707 = vmatprep.subr.mxu0 %v719
    %1708 = vmatpush1.msra.mxu0 %v718
    %1709 = vmatprep.subr.mxu0 %v695
    %1710 = vmatpush1.msra.mxu0 %v694
    %1711 = vmatprep.subr.mxu0 %v671
    %1712 = vmatpush1.msra.mxu0 %v670
    %1713 = vmatprep.subr.mxu0 %v647
    %1714 = vmatpush1.msra.mxu0 %v646
    %1715 = vmatprep.subr.mxu0 %v623
    %1716 = vmatpush1.msra.mxu0 %v622
    %1717 = vmatprep.subr.mxu0 %v599
    %1718 = vmatpush1.msra.mxu0 %v598
    %1719 = vmatprep.subr.mxu0 %v575
    %1720 = vmatpush1.msra.mxu0 %v574
    %1721 = vmatprep.subr.mxu0 %v551
    %1722 = vmatpush1.msra.mxu0 %v550
    %1723 = vmatprep.subr.mxu0 %v527
    %1724 = vmatpush1.msra.mxu0 %v526
    %1725 = vmatprep.subr.mxu0 %v503
    %1726 = vmatpush1.msra.mxu0 %v502
    %1727 = vmatprep.subr.mxu0 %v479
    %1728 = vmatpush1.msra.mxu0 %v478
    %1729 = vmatprep.subr.mxu0 0.0
    %1730 = vmatpush2.msra.mxu0 0.0
    %1731 = vmatprep.subr.mxu0 0.0
    %1732 = vmatpush2.msra.mxu0 0.0
    %1733 = vmatprep.subr.mxu0 0.0
    %1734 = vmatpush2.msra.mxu0 0.0
    %1735 = vmatprep.subr.mxu0 0.0
    %1736 = vmatpush2.msra.mxu0 0.0
    %1737 = vmatprep.subr.mxu0 0.0
    %1738 = vmatpush2.msra.mxu0 0.0
    %1739 = vmatprep.subr.mxu0 0.0
    %1740 = vmatpush2.msra.mxu0 0.0
    %1741 = vmatprep.subr.mxu0 0.0
    %1742 = vmatpush2.msra.mxu0 0.0
    %1743 = vmatprep.subr.mxu0 0.0
    %1744 = vmatpush2.msra.mxu0 0.0
    %1745 = vmatprep.subr.mxu0 0.0
    %1746 = vmatpush2.msra.mxu0 0.0
    %1747 = vmatprep.subr.mxu0 0.0
    %1748 = vmatpush2.msra.mxu0 0.0
    %1749 = vmatprep.subr.mxu0 0.0
    %1750 = vmatpush2.msra.mxu0 0.0
    %1751 = vmatprep.subr.mxu0 0.0
    %1752 = vmatpush2.msra.mxu0 0.0
    %1753 = vmatprep.subr.mxu0 0.0
    %1754 = vmatpush2.msra.mxu0 0.0
    %1755 = vmatprep.subr.mxu0 0.0
    %1756 = vmatpush2.msra.mxu0 0.0
    %1757 = vmatprep.subr.mxu0 0.0
    %1758 = vmatpush2.msra.mxu0 0.0
    %1759 = vmatprep.subr.mxu0 0.0
    %1760 = vmatpush2.msra.mxu0 0.0
    %1761 = vmatprep.mubr.f32.mxu0 0.0
    %1762 = vmatmul.mubr.f32.gmra.mxu0 %v885
    %v1763 = vpop.f32.mrf.mxu0
    %v1764 = vadd.f32 %v838, %v1763
    %v1765 = vpop.f32.mrf.mxu0
    %v1766 = vadd.f32 %v842, %v1765
    %1767 = vmatprep.mubr.f32.mxu0 0.0
    %1768 = vmatmul.mubr.f32.gmra.mxu0 %v888
    %v1769 = vpop.f32.mrf.mxu0
    %v1770 = vadd.f32 %v838, %v1769
    %v1771 = vpop.f32.mrf.mxu0
    %v1772 = vadd.f32 %v842, %v1771
    %1773 = vmatprep.mubr.f32.mxu0 0.0
    %1774 = vmatmul.mubr.f32.gmra.mxu0 %v891
    %v1775 = vpop.f32.mrf.mxu0
    %v1776 = vadd.f32 %v838, %v1775
    %v1777 = vpop.f32.mrf.mxu0
    %v1778 = vadd.f32 %v842, %v1777
    %1779 = vmatprep.mubr.f32.mxu0 0.0
    %1780 = vmatmul.mubr.f32.gmra.mxu0 %v894
    %v1781 = vpop.f32.mrf.mxu0
    %v1782 = vadd.f32 %v838, %v1781
    %v1783 = vpop.f32.mrf.mxu0
    %v1784 = vadd.f32 %v842, %v1783
    %1785 = vdwg.mxu0
    %1786 = vmatprep.subr.mxu0 0.0
    %1787 = vmatpush1.msra.mxu0 0.0
    %1788 = vmatprep.subr.mxu0 0.0
    %1789 = vmatpush1.msra.mxu0 0.0
    %1790 = vmatprep.subr.mxu0 0.0
    %1791 = vmatpush1.msra.mxu0 0.0
    %1792 = vmatprep.subr.mxu0 0.0
    %1793 = vmatpush1.msra.mxu0 0.0
    %1794 = vmatprep.subr.mxu0 %v745
    %1795 = vmatpush1.msra.mxu0 %v744
    %1796 = vmatprep.subr.mxu0 %v721
    %1797 = vmatpush1.msra.mxu0 %v720
    %1798 = vmatprep.subr.mxu0 %v697
    %1799 = vmatpush1.msra.mxu0 %v696
    %1800 = vmatprep.subr.mxu0 %v673
    %1801 = vmatpush1.msra.mxu0 %v672
    %1802 = vmatprep.subr.mxu0 %v649
    %1803 = vmatpush1.msra.mxu0 %v648
    %1804 = vmatprep.subr.mxu0 %v625
    %1805 = vmatpush1.msra.mxu0 %v624
    %1806 = vmatprep.subr.mxu0 %v601
    %1807 = vmatpush1.msra.mxu0 %v600
    %1808 = vmatprep.subr.mxu0 %v577
    %1809 = vmatpush1.msra.mxu0 %v576
    %1810 = vmatprep.subr.mxu0 %v553
    %1811 = vmatpush1.msra.mxu0 %v552
    %1812 = vmatprep.subr.mxu0 %v529
    %1813 = vmatpush1.msra.mxu0 %v528
    %1814 = vmatprep.subr.mxu0 %v505
    %1815 = vmatpush1.msra.mxu0 %v504
    %1816 = vmatprep.subr.mxu0 %v481
    %1817 = vmatpush1.msra.mxu0 %v480
    %1818 = vmatprep.subr.mxu0 0.0
    %1819 = vmatpush2.msra.mxu0 0.0
    %1820 = vmatprep.subr.mxu0 0.0
    %1821 = vmatpush2.msra.mxu0 0.0
    %1822 = vmatprep.subr.mxu0 0.0
    %1823 = vmatpush2.msra.mxu0 0.0
    %1824 = vmatprep.subr.mxu0 0.0
    %1825 = vmatpush2.msra.mxu0 0.0
    %1826 = vmatprep.subr.mxu0 0.0
    %1827 = vmatpush2.msra.mxu0 0.0
    %1828 = vmatprep.subr.mxu0 0.0
    %1829 = vmatpush2.msra.mxu0 0.0
    %1830 = vmatprep.subr.mxu0 0.0
    %1831 = vmatpush2.msra.mxu0 0.0
    %1832 = vmatprep.subr.mxu0 0.0
    %1833 = vmatpush2.msra.mxu0 0.0
    %1834 = vmatprep.subr.mxu0 0.0
    %1835 = vmatpush2.msra.mxu0 0.0
    %1836 = vmatprep.subr.mxu0 0.0
    %1837 = vmatpush2.msra.mxu0 0.0
    %1838 = vmatprep.subr.mxu0 0.0
    %1839 = vmatpush2.msra.mxu0 0.0
    %1840 = vmatprep.subr.mxu0 0.0
    %1841 = vmatpush2.msra.mxu0 0.0
    %1842 = vmatprep.subr.mxu0 0.0
    %1843 = vmatpush2.msra.mxu0 0.0
    %1844 = vmatprep.subr.mxu0 0.0
    %1845 = vmatpush2.msra.mxu0 0.0
    %1846 = vmatprep.subr.mxu0 0.0
    %1847 = vmatpush2.msra.mxu0 0.0
    %1848 = vmatprep.subr.mxu0 0.0
    %1849 = vmatpush2.msra.mxu0 0.0
    %1850 = vmatprep.mubr.f32.mxu0 0.0
    %1851 = vmatmul.mubr.f32.gmra.mxu0 %v885
    %v1852 = vpop.f32.mrf.mxu0
    %v1853 = vadd.f32 %v846, %v1852
    %v1854 = vpop.f32.mrf.mxu0
    %v1855 = vadd.f32 %v850, %v1854
    %1856 = vmatprep.mubr.f32.mxu0 0.0
    %1857 = vmatmul.mubr.f32.gmra.mxu0 %v888
    %v1858 = vpop.f32.mrf.mxu0
    %v1859 = vadd.f32 %v846, %v1858
    %v1860 = vpop.f32.mrf.mxu0
    %v1861 = vadd.f32 %v850, %v1860
    %1862 = vmatprep.mubr.f32.mxu0 0.0
    %1863 = vmatmul.mubr.f32.gmra.mxu0 %v891
    %v1864 = vpop.f32.mrf.mxu0
    %v1865 = vadd.f32 %v846, %v1864
    %v1866 = vpop.f32.mrf.mxu0
    %v1867 = vadd.f32 %v850, %v1866
    %1868 = vmatprep.mubr.f32.mxu0 0.0
    %1869 = vmatmul.mubr.f32.gmra.mxu0 %v894
    %v1870 = vpop.f32.mrf.mxu0
    %v1871 = vadd.f32 %v846, %v1870
    %v1872 = vpop.f32.mrf.mxu0
    %v1873 = vadd.f32 %v850, %v1872
    %1874 = vdwg.mxu0
    %1875 = vmatprep.subr.mxu0 0.0
    %1876 = vmatpush1.msra.mxu0 0.0
    %1877 = vmatprep.subr.mxu0 0.0
    %1878 = vmatpush1.msra.mxu0 0.0
    %1879 = vmatprep.subr.mxu0 0.0
    %1880 = vmatpush1.msra.mxu0 0.0
    %1881 = vmatprep.subr.mxu0 0.0
    %1882 = vmatpush1.msra.mxu0 0.0
    %1883 = vmatprep.subr.mxu0 %v747
    %1884 = vmatpush1.msra.mxu0 %v746
    %1885 = vmatprep.subr.mxu0 %v723
    %1886 = vmatpush1.msra.mxu0 %v722
    %1887 = vmatprep.subr.mxu0 %v699
    %1888 = vmatpush1.msra.mxu0 %v698
    %1889 = vmatprep.subr.mxu0 %v675
    %1890 = vmatpush1.msra.mxu0 %v674
    %1891 = vmatprep.subr.mxu0 %v651
    %1892 = vmatpush1.msra.mxu0 %v650
    %1893 = vmatprep.subr.mxu0 %v627
    %1894 = vmatpush1.msra.mxu0 %v626
    %1895 = vmatprep.subr.mxu0 %v603
    %1896 = vmatpush1.msra.mxu0 %v602
    %1897 = vmatprep.subr.mxu0 %v579
    %1898 = vmatpush1.msra.mxu0 %v578
    %1899 = vmatprep.subr.mxu0 %v555
    %1900 = vmatpush1.msra.mxu0 %v554
    %1901 = vmatprep.subr.mxu0 %v531
    %1902 = vmatpush1.msra.mxu0 %v530
    %1903 = vmatprep.subr.mxu0 %v507
    %1904 = vmatpush1.msra.mxu0 %v506
    %1905 = vmatprep.subr.mxu0 %v483
    %1906 = vmatpush1.msra.mxu0 %v482
    %1907 = vmatprep.subr.mxu0 0.0
    %1908 = vmatpush2.msra.mxu0 0.0
    %1909 = vmatprep.subr.mxu0 0.0
    %1910 = vmatpush2.msra.mxu0 0.0
    %1911 = vmatprep.subr.mxu0 0.0
    %1912 = vmatpush2.msra.mxu0 0.0
    %1913 = vmatprep.subr.mxu0 0.0
    %1914 = vmatpush2.msra.mxu0 0.0
    %1915 = vmatprep.subr.mxu0 0.0
    %1916 = vmatpush2.msra.mxu0 0.0
    %1917 = vmatprep.subr.mxu0 0.0
    %1918 = vmatpush2.msra.mxu0 0.0
    %1919 = vmatprep.subr.mxu0 0.0
    %1920 = vmatpush2.msra.mxu0 0.0
    %1921 = vmatprep.subr.mxu0 0.0
    %1922 = vmatpush2.msra.mxu0 0.0
    %1923 = vmatprep.subr.mxu0 0.0
    %1924 = vmatpush2.msra.mxu0 0.0
    %1925 = vmatprep.subr.mxu0 0.0
    %1926 = vmatpush2.msra.mxu0 0.0
    %1927 = vmatprep.subr.mxu0 0.0
    %1928 = vmatpush2.msra.mxu0 0.0
    %1929 = vmatprep.subr.mxu0 0.0
    %1930 = vmatpush2.msra.mxu0 0.0
    %1931 = vmatprep.subr.mxu0 0.0
    %1932 = vmatpush2.msra.mxu0 0.0
    %1933 = vmatprep.subr.mxu0 0.0
    %1934 = vmatpush2.msra.mxu0 0.0
    %1935 = vmatprep.subr.mxu0 0.0
    %1936 = vmatpush2.msra.mxu0 0.0
    %1937 = vmatprep.subr.mxu0 0.0
    %1938 = vmatpush2.msra.mxu0 0.0
    %1939 = vmatprep.mubr.f32.mxu0 0.0
    %1940 = vmatmul.mubr.f32.gmra.mxu0 %v885
    %v1941 = vpop.f32.mrf.mxu0
    %v1942 = vadd.f32 %v854, %v1941
    %v1943 = vpop.f32.mrf.mxu0
    %v1944 = vadd.f32 %v858, %v1943
    %1945 = vmatprep.mubr.f32.mxu0 0.0
    %1946 = vmatmul.mubr.f32.gmra.mxu0 %v888
    %v1947 = vpop.f32.mrf.mxu0
    %v1948 = vadd.f32 %v854, %v1947
    %v1949 = vpop.f32.mrf.mxu0
    %v1950 = vadd.f32 %v858, %v1949
    %1951 = vmatprep.mubr.f32.mxu0 0.0
    %1952 = vmatmul.mubr.f32.gmra.mxu0 %v891
    %v1953 = vpop.f32.mrf.mxu0
    %v1954 = vadd.f32 %v854, %v1953
    %v1955 = vpop.f32.mrf.mxu0
    %v1956 = vadd.f32 %v858, %v1955
    %1957 = vmatprep.mubr.f32.mxu0 0.0
    %1958 = vmatmul.mubr.f32.gmra.mxu0 %v894
    %v1959 = vpop.f32.mrf.mxu0
    %v1960 = vadd.f32 %v854, %v1959
    %v1961 = vpop.f32.mrf.mxu0
    %v1962 = vadd.f32 %v858, %v1961
    %1963 = vdwg.mxu0
    %v1964 = vld [vmem:[%s2] sm:$0xff]
    %v1965 = vld [vmem:[%s2 + $0x8] sm:$0xff]
    %v1966 = vld [vmem:[%s2 + $0x10] sm:$0xff]
    %v1967 = vld [vmem:[%s2 + $0x18] sm:$0xf]
    %v1968 = vld [vmem:[%s3] sm:$0xff]
    %v1969 = vld [vmem:[%s3 + $0x8] sm:$0xff]
    %v1970 = vld [vmem:[#allocation2] sm:$0xff]
    %v1971 = vld [vmem:[#allocation2 + $0x8] sm:$0xff]
    %v1972 = vld [vmem:[#allocation2 + $0x10] sm:$0xff]
    %v1973 = vld [vmem:[#allocation2 + $0x18] sm:$0xff]
    %v1974 = vld [vmem:[#allocation2 + $0x20] sm:$0xff]
    %v1975 = vld [vmem:[#allocation2 + $0x28] sm:$0xff]
    %v1976 = vld [vmem:[#allocation2 + $0x30] sm:$0xff]
    %v1977 = vld [vmem:[#allocation2 + $0x38] sm:$0xff]
    %v1978 = vld [vmem:[#allocation2 + $0x40] sm:$0xff]
    %v1979 = vld [vmem:[#allocation2 + $0x48] sm:$0xff]
    %v1980 = vld [vmem:[#allocation2 + $0x50] sm:$0xff]
    %v1981 = vld [vmem:[#allocation2 + $0x58] sm:$0xff]
    %v1982 = vld [vmem:[#allocation2 + $0x60] sm:$0xff]
    %v1983 = vld [vmem:[#allocation2 + $0x68] sm:$0xff]
    %v1984 = vld [vmem:[#allocation2 + $0x70] sm:$0xff]
    %v1985 = vld [vmem:[#allocation2 + $0x78] sm:$0xff]
    %v1986 = vld [vmem:[#allocation2 + $0x80] sm:$0xff]
    %v1987 = vld [vmem:[#allocation2 + $0x88] sm:$0xff]
    %v1988 = vld [vmem:[#allocation2 + $0x90] sm:$0xff]
    %v1989 = vld [vmem:[#allocation2 + $0x98] sm:$0xff]
    %v1990 = vld [vmem:[#allocation2 + $0xa0] sm:$0xff]
    %v1991 = vld [vmem:[#allocation2 + $0xa8] sm:$0xff]
    %v1992 = vld [vmem:[#allocation2 + $0xb0] sm:$0xff]
    %v1993 = vld [vmem:[#allocation2 + $0xb8] sm:$0xff]
    %v1994 = vld [vmem:[#allocation2 + $0xc0] sm:$0xff]
    %v1995 = vld [vmem:[#allocation2 + $0xc8] sm:$0xff]
    %v1996 = vld [vmem:[#allocation2 + $0xd0] sm:$0xff]
    %v1997 = vld [vmem:[#allocation2 + $0xd8] sm:$0xff]
    %v1998 = vld [vmem:[#allocation2 + $0xe0] sm:$0xff]
    %v1999 = vld [vmem:[#allocation2 + $0xe8] sm:$0xff]
    %v2000 = vld [vmem:[#allocation2 + $0xf0] sm:$0xff]
    %v2001 = vld [vmem:[#allocation2 + $0xf8] sm:$0xff]
    %v2002 = vld [vmem:[#allocation4] sm:$0xff]
    %v2003 = vld [vmem:[#allocation4 + $0x8] sm:$0xff]
    %v2004 = vld [vmem:[#allocation4 + $0x10] sm:$0xff]
    %v2005 = vld [vmem:[#allocation4 + $0x18] sm:$0xff]
    %v2006 = vld [vmem:[#allocation4 + $0x20] sm:$0xff]
    %v2007 = vld [vmem:[#allocation4 + $0x28] sm:$0xff]
    %v2008 = vld [vmem:[#allocation4 + $0x30] sm:$0xff]
    %v2009 = vld [vmem:[#allocation4 + $0x38] sm:$0xff]
    %v2010 = vld [vmem:[#allocation4 + $0x40] sm:$0xff]
    %v2011 = vld [vmem:[#allocation4 + $0x48] sm:$0xff]
    %v2012 = vld [vmem:[#allocation4 + $0x50] sm:$0xff]
    %v2013 = vld [vmem:[#allocation4 + $0x58] sm:$0xff]
    %v2014 = vld [vmem:[#allocation4 + $0x60] sm:$0xff]
    %v2015 = vld [vmem:[#allocation4 + $0x68] sm:$0xff]
    %v2016 = vld [vmem:[#allocation4 + $0x70] sm:$0xff]
    %v2017 = vld [vmem:[#allocation4 + $0x78] sm:$0xff]
    %v2018 = vld [vmem:[#allocation4 + $0x80] sm:$0xff]
    %v2019 = vld [vmem:[#allocation4 + $0x88] sm:$0xff]
    %v2020 = vld [vmem:[#allocation4 + $0x90] sm:$0xff]
    %v2021 = vld [vmem:[#allocation4 + $0x98] sm:$0xff]
    %v2022 = vld [vmem:[#allocation4 + $0xa0] sm:$0xff]
    %v2023 = vld [vmem:[#allocation4 + $0xa8] sm:$0xff]
    %v2024 = vld [vmem:[#allocation4 + $0xb0] sm:$0xff]
    %v2025 = vld [vmem:[#allocation4 + $0xb8] sm:$0xff]
    %v2026 = vld [vmem:[#allocation4 + $0xc0] sm:$0xff]
    %v2027 = vld [vmem:[#allocation4 + $0xc8] sm:$0xff]
    %v2028 = vld [vmem:[#allocation4 + $0xd0] sm:$0xff]
    %v2029 = vld [vmem:[#allocation4 + $0xd8] sm:$0xff]
    %v2030 = vld [vmem:[#allocation4 + $0xe0] sm:$0xff]
    %v2031 = vld [vmem:[#allocation4 + $0xe8] sm:$0xff]
    %v2032 = vld [vmem:[#allocation4 + $0xf0] sm:$0xff]
    %v2033 = vld [vmem:[#allocation4 + $0xf8] sm:$0xff]
    %v2034 = vld [vmem:[#allocation4 + $0x100] sm:$0xff]
    %v2035 = vld [vmem:[#allocation4 + $0x108] sm:$0xff]
    %v2036 = vld [vmem:[#allocation4 + $0x110] sm:$0xff]
    %v2037 = vld [vmem:[#allocation4 + $0x118] sm:$0xff]
    %v2038 = vld [vmem:[#allocation4 + $0x120] sm:$0xff]
    %v2039 = vld [vmem:[#allocation4 + $0x128] sm:$0xff]
    %v2040 = vld [vmem:[#allocation4 + $0x130] sm:$0xff]
    %v2041 = vld [vmem:[#allocation4 + $0x138] sm:$0xff]
    %v2042 = vld [vmem:[#allocation4 + $0x140] sm:$0xff]
    %v2043 = vld [vmem:[#allocation4 + $0x148] sm:$0xff]
    %v2044 = vld [vmem:[#allocation4 + $0x150] sm:$0xff]
    %v2045 = vld [vmem:[#allocation4 + $0x158] sm:$0xff]
    %v2046 = vld [vmem:[#allocation4 + $0x160] sm:$0xff]
    %v2047 = vld [vmem:[#allocation4 + $0x168] sm:$0xff]
    %v2048 = vld [vmem:[#allocation4 + $0x170] sm:$0xff]
    %v2049 = vld [vmem:[#allocation4 + $0x178] sm:$0xff]
    %v2050 = vld [vmem:[#allocation4 + $0x180] sm:$0xff]
    %v2051 = vld [vmem:[#allocation4 + $0x188] sm:$0xff]
    %v2052 = vld [vmem:[#allocation4 + $0x190] sm:$0xff]
    %v2053 = vld [vmem:[#allocation4 + $0x198] sm:$0xff]
    %v2054 = vld [vmem:[#allocation4 + $0x1a0] sm:$0xff]
    %v2055 = vld [vmem:[#allocation4 + $0x1a8] sm:$0xff]
    %v2056 = vld [vmem:[#allocation4 + $0x1b0] sm:$0xff]
    %v2057 = vld [vmem:[#allocation4 + $0x1b8] sm:$0xff]
    %v2058 = vld [vmem:[#allocation4 + $0x1c0] sm:$0xff]
    %v2059 = vld [vmem:[#allocation4 + $0x1c8] sm:$0xff]
    %v2060 = vld [vmem:[#allocation4 + $0x1d0] sm:$0xff]
    %v2061 = vld [vmem:[#allocation4 + $0x1d8] sm:$0xff]
    %v2062 = vld [vmem:[#allocation4 + $0x1e0] sm:$0xff]
    %v2063 = vld [vmem:[#allocation4 + $0x1e8] sm:$0xff]
    %v2064 = vld [vmem:[#allocation4 + $0x1f0] sm:$0xff]
    %v2065 = vld [vmem:[#allocation4 + $0x1f8] sm:$0xff]
    %v2066 = vld [vmem:[#allocation4 + $0x200] sm:$0xff]
    %v2067 = vld [vmem:[#allocation4 + $0x208] sm:$0xff]
    %v2068 = vld [vmem:[#allocation4 + $0x210] sm:$0xff]
    %v2069 = vld [vmem:[#allocation4 + $0x218] sm:$0xff]
    %v2070 = vld [vmem:[#allocation4 + $0x220] sm:$0xff]
    %v2071 = vld [vmem:[#allocation4 + $0x228] sm:$0xff]
    %v2072 = vld [vmem:[#allocation4 + $0x230] sm:$0xff]
    %v2073 = vld [vmem:[#allocation4 + $0x238] sm:$0xff]
    %v2074 = vld [vmem:[#allocation4 + $0x240] sm:$0xff]
    %v2075 = vld [vmem:[#allocation4 + $0x248] sm:$0xff]
    %v2076 = vld [vmem:[#allocation4 + $0x250] sm:$0xff]
    %v2077 = vld [vmem:[#allocation4 + $0x258] sm:$0xff]
    %v2078 = vld [vmem:[#allocation4 + $0x260] sm:$0xff]
    %v2079 = vld [vmem:[#allocation4 + $0x268] sm:$0xff]
    %v2080 = vld [vmem:[#allocation4 + $0x270] sm:$0xff]
    %v2081 = vld [vmem:[#allocation4 + $0x278] sm:$0xff]
    %v2082 = vld [vmem:[#allocation4 + $0x280] sm:$0xff]
    %v2083 = vld [vmem:[#allocation4 + $0x288] sm:$0xff]
    %v2084 = vld [vmem:[#allocation4 + $0x290] sm:$0xff]
    %v2085 = vld [vmem:[#allocation4 + $0x298] sm:$0xff]
    %v2086 = vld [vmem:[#allocation4 + $0x2a0] sm:$0xff]
    %v2087 = vld [vmem:[#allocation4 + $0x2a8] sm:$0xff]
    %v2088 = vld [vmem:[#allocation4 + $0x2b0] sm:$0xff]
    %v2089 = vld [vmem:[#allocation4 + $0x2b8] sm:$0xff]
    %v2090 = vld [vmem:[#allocation4 + $0x2c0] sm:$0xff]
    %v2091 = vld [vmem:[#allocation4 + $0x2c8] sm:$0xff]
    %v2092 = vld [vmem:[#allocation4 + $0x2d0] sm:$0xff]
    %v2093 = vld [vmem:[#allocation4 + $0x2d8] sm:$0xff]
    %v2094 = vld [vmem:[#allocation4 + $0x2e0] sm:$0xff]
    %v2095 = vld [vmem:[#allocation4 + $0x2e8] sm:$0xff]
    %v2096 = vld [vmem:[#allocation4 + $0x2f0] sm:$0xff]
    %v2097 = vld [vmem:[#allocation4 + $0x2f8] sm:$0xff]
    %v2098 = vld [vmem:[#allocation4 + $0x300] sm:$0xff]
    %v2099 = vld [vmem:[#allocation4 + $0x308] sm:$0xff]
    %v2100 = vld [vmem:[#allocation4 + $0x310] sm:$0xff]
    %v2101 = vld [vmem:[#allocation4 + $0x318] sm:$0xff]
    %v2102 = vld [vmem:[#allocation4 + $0x320] sm:$0xff]
    %v2103 = vld [vmem:[#allocation4 + $0x328] sm:$0xff]
    %v2104 = vld [vmem:[#allocation4 + $0x330] sm:$0xff]
    %v2105 = vld [vmem:[#allocation4 + $0x338] sm:$0xff]
    %v2106 = vld [vmem:[#allocation4 + $0x340] sm:$0xff]
    %v2107 = vld [vmem:[#allocation4 + $0x348] sm:$0xff]
    %v2108 = vld [vmem:[#allocation4 + $0x350] sm:$0xff]
    %v2109 = vld [vmem:[#allocation4 + $0x358] sm:$0xff]
    %v2110 = vld [vmem:[#allocation4 + $0x360] sm:$0xff]
    %v2111 = vld [vmem:[#allocation4 + $0x368] sm:$0xff]
    %v2112 = vld [vmem:[#allocation4 + $0x370] sm:$0xff]
    %v2113 = vld [vmem:[#allocation4 + $0x378] sm:$0xff]
    %v2114 = vld [vmem:[#allocation4 + $0x380] sm:$0xff]
    %v2115 = vld [vmem:[#allocation4 + $0x388] sm:$0xff]
    %v2116 = vld [vmem:[#allocation4 + $0x390] sm:$0xff]
    %v2117 = vld [vmem:[#allocation4 + $0x398] sm:$0xff]
    %v2118 = vld [vmem:[#allocation4 + $0x3a0] sm:$0xff]
    %v2119 = vld [vmem:[#allocation4 + $0x3a8] sm:$0xff]
    %v2120 = vld [vmem:[#allocation4 + $0x3b0] sm:$0xff]
    %v2121 = vld [vmem:[#allocation4 + $0x3b8] sm:$0xff]
    %v2122 = vld [vmem:[#allocation4 + $0x3c0] sm:$0xff]
    %v2123 = vld [vmem:[#allocation4 + $0x3c8] sm:$0xff]
    %v2124 = vld [vmem:[#allocation4 + $0x3d0] sm:$0xff]
    %v2125 = vld [vmem:[#allocation4 + $0x3d8] sm:$0xff]
    %v2126 = vld [vmem:[#allocation4 + $0x3e0] sm:$0xff]
    %v2127 = vld [vmem:[#allocation4 + $0x3e8] sm:$0xff]
    %v2128 = vld [vmem:[#allocation4 + $0x3f0] sm:$0xff]
    %v2129 = vld [vmem:[#allocation4 + $0x3f8] sm:$0xff]
    %vm2130 = vcmask 130048
    %v2132 = vsel %vm2130, %v1964, 0
    %v2135 = vsel %vm2130, %v1965, 0
    %v2138 = vsel %vm2130, %v1966, 0
    %v2141 = vsel %vm2130, %v1967, 0
    %2143 = vmatprep.subr.mxu0 0.0
    %2144 = vmatpush1.msra.mxu0 0.0
    %2145 = vmatprep.subr.mxu0 0.0
    %2146 = vmatpush1.msra.mxu0 0.0
    %2147 = vmatprep.subr.mxu0 0.0
    %2148 = vmatpush1.msra.mxu0 0.0
    %2149 = vmatprep.subr.mxu0 0.0
    %2150 = vmatpush1.msra.mxu0 0.0
    %2151 = vmatprep.subr.mxu0 0.0
    %2152 = vmatpush1.msra.mxu0 0.0
    %2153 = vmatprep.subr.mxu0 0.0
    %2154 = vmatpush1.msra.mxu0 0.0
    %2155 = vmatprep.subr.mxu0 0.0
    %2156 = vmatpush1.msra.mxu0 0.0
    %2157 = vmatprep.subr.mxu0 0.0
    %2158 = vmatpush1.msra.mxu0 0.0
    %2159 = vmatprep.subr.mxu0 0.0
    %2160 = vmatpush1.msra.mxu0 0.0
    %2161 = vmatprep.subr.mxu0 0.0
    %2162 = vmatpush1.msra.mxu0 0.0
    %2163 = vmatprep.subr.mxu0 0.0
    %2164 = vmatpush1.msra.mxu0 0.0
    %2165 = vmatprep.subr.mxu0 0.0
    %2166 = vmatpush1.msra.mxu0 0.0
    %2167 = vmatprep.subr.mxu0 0.0
    %2168 = vmatpush1.msra.mxu0 0.0
    %2169 = vmatprep.subr.mxu0 0.0
    %2170 = vmatpush1.msra.mxu0 0.0
    %2171 = vmatprep.subr.mxu0 0.0
    %2172 = vmatpush1.msra.mxu0 %v408
    %2173 = vmatprep.subr.mxu0 0.0
    %2174 = vmatpush1.msra.mxu0 %v407
    %2175 = vmatprep.subr.mxu0 0.0
    %2176 = vmatpush2.msra.mxu0 0.0
    %2177 = vmatprep.subr.mxu0 0.0
    %2178 = vmatpush2.msra.mxu0 0.0
    %2179 = vmatprep.subr.mxu0 0.0
    %2180 = vmatpush2.msra.mxu0 0.0
    %2181 = vmatprep.subr.mxu0 0.0
    %2182 = vmatpush2.msra.mxu0 0.0
    %2183 = vmatprep.subr.mxu0 0.0
    %2184 = vmatpush2.msra.mxu0 0.0
    %2185 = vmatprep.subr.mxu0 0.0
    %2186 = vmatpush2.msra.mxu0 0.0
    %2187 = vmatprep.subr.mxu0 0.0
    %2188 = vmatpush2.msra.mxu0 0.0
    %2189 = vmatprep.subr.mxu0 0.0
    %2190 = vmatpush2.msra.mxu0 0.0
    %2191 = vmatprep.subr.mxu0 0.0
    %2192 = vmatpush2.msra.mxu0 0.0
    %2193 = vmatprep.subr.mxu0 0.0
    %2194 = vmatpush2.msra.mxu0 0.0
    %2195 = vmatprep.subr.mxu0 0.0
    %2196 = vmatpush2.msra.mxu0 0.0
    %2197 = vmatprep.subr.mxu0 0.0
    %2198 = vmatpush2.msra.mxu0 0.0
    %2199 = vmatprep.subr.mxu0 0.0
    %2200 = vmatpush2.msra.mxu0 0.0
    %2201 = vmatprep.subr.mxu0 0.0
    %2202 = vmatpush2.msra.mxu0 0.0
    %2203 = vmatprep.subr.mxu0 0.0
    %2204 = vmatpush2.msra.mxu0 0.0
    %2205 = vmatprep.subr.mxu0 0.0
    %2206 = vmatpush2.msra.mxu0 0.0
    %2207 = vmatprep.mubr.f32.mxu0 0.0
    %2208 = vmatmul.mubr.f32.gmra.mxu0 %v2132
    %v2209 = vpop.f32.mrf.mxu0
    %v2210 = vadd.f32 0.0, %v2209
    %v2211 = vpop.f32.mrf.mxu0
    %2212 = vmatprep.mubr.f32.mxu0 0.0
    %2213 = vmatmul.mubr.f32.gmra.mxu0 %v2135
    %v2214 = vpop.f32.mrf.mxu0
    %v2215 = vadd.f32 0.0, %v2214
    %v2216 = vpop.f32.mrf.mxu0
    %2217 = vmatprep.mubr.f32.mxu0 0.0
    %2218 = vmatmul.mubr.f32.gmra.mxu0 %v2138
    %v2219 = vpop.f32.mrf.mxu0
    %v2220 = vadd.f32 0.0, %v2219
    %v2221 = vpop.f32.mrf.mxu0
    %2222 = vmatprep.mubr.f32.mxu0 0.0
    %2223 = vmatmul.mubr.f32.gmra.mxu0 %v2141
    %v2224 = vpop.f32.mrf.mxu0
    %v2225 = vadd.f32 0.0, %v2224
    %v2226 = vpop.f32.mrf.mxu0
    %2227 = vdwg.mxu0
    %v2229 = vsel %vm133, %v2210, 0
    %v2232 = vsel %vm133, %v2215, 0
    %v2235 = vsel %vm133, %v2220, 0
    %v2238 = vsel %vm133, %v2225, 0
    %2240 = vmatprep.subr.mxu0 0.0
    %2241 = vmatpush1.msra.mxu0 0.0
    %2242 = vmatprep.subr.mxu0 0.0
    %2243 = vmatpush1.msra.mxu0 0.0
    %2244 = vmatprep.subr.mxu0 0.0
    %2245 = vmatpush1.msra.mxu0 0.0
    %2246 = vmatprep.subr.mxu0 0.0
    %2247 = vmatpush1.msra.mxu0 0.0
    %2248 = vmatprep.subr.mxu0 0.0
    %2249 = vmatpush1.msra.mxu0 0.0
    %2250 = vmatprep.subr.mxu0 0.0
    %2251 = vmatpush1.msra.mxu0 0.0
    %2252 = vmatprep.subr.mxu0 0.0
    %2253 = vmatpush1.msra.mxu0 0.0
    %2254 = vmatprep.subr.mxu0 0.0
    %2255 = vmatpush1.msra.mxu0 0.0
    %2256 = vmatprep.subr.mxu0 0.0
    %2257 = vmatpush1.msra.mxu0 0.0
    %2258 = vmatprep.subr.mxu0 0.0
    %2259 = vmatpush1.msra.mxu0 0.0
    %2260 = vmatprep.subr.mxu0 0.0
    %2261 = vmatpush1.msra.mxu0 0.0
    %2262 = vmatprep.subr.mxu0 0.0
    %2263 = vmatpush1.msra.mxu0 0.0
    %2264 = vmatprep.subr.mxu0 %v1995
    %2265 = vmatpush1.msra.mxu0 %v1994
    %2266 = vmatprep.subr.mxu0 %v1987
    %2267 = vmatpush1.msra.mxu0 %v1986
    %2268 = vmatprep.subr.mxu0 %v1979
    %2269 = vmatpush1.msra.mxu0 %v1978
    %2270 = vmatprep.subr.mxu0 %v1971
    %2271 = vmatpush1.msra.mxu0 %v1970
    %2272 = vmatprep.subr.mxu0 0.0
    %2273 = vmatpush2.msra.mxu0 0.0
    %2274 = vmatprep.subr.mxu0 0.0
    %2275 = vmatpush2.msra.mxu0 0.0
    %2276 = vmatprep.subr.mxu0 0.0
    %2277 = vmatpush2.msra.mxu0 0.0
    %2278 = vmatprep.subr.mxu0 0.0
    %2279 = vmatpush2.msra.mxu0 0.0
    %2280 = vmatprep.subr.mxu0 0.0
    %2281 = vmatpush2.msra.mxu0 0.0
    %2282 = vmatprep.subr.mxu0 0.0
    %2283 = vmatpush2.msra.mxu0 0.0
    %2284 = vmatprep.subr.mxu0 0.0
    %2285 = vmatpush2.msra.mxu0 0.0
    %2286 = vmatprep.subr.mxu0 0.0
    %2287 = vmatpush2.msra.mxu0 0.0
    %2288 = vmatprep.subr.mxu0 0.0
    %2289 = vmatpush2.msra.mxu0 0.0
    %2290 = vmatprep.subr.mxu0 0.0
    %2291 = vmatpush2.msra.mxu0 0.0
    %2292 = vmatprep.subr.mxu0 0.0
    %2293 = vmatpush2.msra.mxu0 0.0
    %2294 = vmatprep.subr.mxu0 0.0
    %2295 = vmatpush2.msra.mxu0 0.0
    %2296 = vmatprep.subr.mxu0 0.0
    %2297 = vmatpush2.msra.mxu0 0.0
    %2298 = vmatprep.subr.mxu0 0.0
    %2299 = vmatpush2.msra.mxu0 0.0
    %2300 = vmatprep.subr.mxu0 0.0
    %2301 = vmatpush2.msra.mxu0 0.0
    %2302 = vmatprep.subr.mxu0 0.0
    %2303 = vmatpush2.msra.mxu0 0.0
    %2304 = vmatprep.mubr.f32.mxu0 0.0
    %2305 = vmatmul.mubr.f32.gmra.mxu0 %v2229
    %v2306 = vpop.f32.mrf.mxu0
    %v2307 = vadd.f32 0.0, %v2306
    %v2308 = vpop.f32.mrf.mxu0
    %v2309 = vadd.f32 0.0, %v2308
    %2310 = vmatprep.mubr.f32.mxu0 0.0
    %2311 = vmatmul.mubr.f32.gmra.mxu0 %v2232
    %v2312 = vpop.f32.mrf.mxu0
    %v2313 = vadd.f32 0.0, %v2312
    %v2314 = vpop.f32.mrf.mxu0
    %v2315 = vadd.f32 0.0, %v2314
    %2316 = vmatprep.mubr.f32.mxu0 0.0
    %2317 = vmatmul.mubr.f32.gmra.mxu0 %v2235
    %v2318 = vpop.f32.mrf.mxu0
    %v2319 = vadd.f32 0.0, %v2318
    %v2320 = vpop.f32.mrf.mxu0
    %v2321 = vadd.f32 0.0, %v2320
    %2322 = vmatprep.mubr.f32.mxu0 0.0
    %2323 = vmatmul.mubr.f32.gmra.mxu0 %v2238
    %v2324 = vpop.f32.mrf.mxu0
    %v2325 = vadd.f32 0.0, %v2324
    %v2326 = vpop.f32.mrf.mxu0
    %v2327 = vadd.f32 0.0, %v2326
    %2328 = vdwg.mxu0
    %2329 = vmatprep.subr.mxu0 0.0
    %2330 = vmatpush1.msra.mxu0 0.0
    %2331 = vmatprep.subr.mxu0 0.0
    %2332 = vmatpush1.msra.mxu0 0.0
    %2333 = vmatprep.subr.mxu0 0.0
    %2334 = vmatpush1.msra.mxu0 0.0
    %2335 = vmatprep.subr.mxu0 0.0
    %2336 = vmatpush1.msra.mxu0 0.0
    %2337 = vmatprep.subr.mxu0 0.0
    %2338 = vmatpush1.msra.mxu0 0.0
    %2339 = vmatprep.subr.mxu0 0.0
    %2340 = vmatpush1.msra.mxu0 0.0
    %2341 = vmatprep.subr.mxu0 0.0
    %2342 = vmatpush1.msra.mxu0 0.0
    %2343 = vmatprep.subr.mxu0 0.0
    %2344 = vmatpush1.msra.mxu0 0.0
    %2345 = vmatprep.subr.mxu0 0.0
    %2346 = vmatpush1.msra.mxu0 0.0
    %2347 = vmatprep.subr.mxu0 0.0
    %2348 = vmatpush1.msra.mxu0 0.0
    %2349 = vmatprep.subr.mxu0 0.0
    %2350 = vmatpush1.msra.mxu0 0.0
    %2351 = vmatprep.subr.mxu0 0.0
    %2352 = vmatpush1.msra.mxu0 0.0
    %2353 = vmatprep.subr.mxu0 %v1997
    %2354 = vmatpush1.msra.mxu0 %v1996
    %2355 = vmatprep.subr.mxu0 %v1989
    %2356 = vmatpush1.msra.mxu0 %v1988
    %2357 = vmatprep.subr.mxu0 %v1981
    %2358 = vmatpush1.msra.mxu0 %v1980
    %2359 = vmatprep.subr.mxu0 %v1973
    %2360 = vmatpush1.msra.mxu0 %v1972
    %2361 = vmatprep.subr.mxu0 0.0
    %2362 = vmatpush2.msra.mxu0 0.0
    %2363 = vmatprep.subr.mxu0 0.0
    %2364 = vmatpush2.msra.mxu0 0.0
    %2365 = vmatprep.subr.mxu0 0.0
    %2366 = vmatpush2.msra.mxu0 0.0
    %2367 = vmatprep.subr.mxu0 0.0
    %2368 = vmatpush2.msra.mxu0 0.0
    %2369 = vmatprep.subr.mxu0 0.0
    %2370 = vmatpush2.msra.mxu0 0.0
    %2371 = vmatprep.subr.mxu0 0.0
    %2372 = vmatpush2.msra.mxu0 0.0
    %2373 = vmatprep.subr.mxu0 0.0
    %2374 = vmatpush2.msra.mxu0 0.0
    %2375 = vmatprep.subr.mxu0 0.0
    %2376 = vmatpush2.msra.mxu0 0.0
    %2377 = vmatprep.subr.mxu0 0.0
    %2378 = vmatpush2.msra.mxu0 0.0
    %2379 = vmatprep.subr.mxu0 0.0
    %2380 = vmatpush2.msra.mxu0 0.0
    %2381 = vmatprep.subr.mxu0 0.0
    %2382 = vmatpush2.msra.mxu0 0.0
    %2383 = vmatprep.subr.mxu0 0.0
    %2384 = vmatpush2.msra.mxu0 0.0
    %2385 = vmatprep.subr.mxu0 0.0
    %2386 = vmatpush2.msra.mxu0 0.0
    %2387 = vmatprep.subr.mxu0 0.0
    %2388 = vmatpush2.msra.mxu0 0.0
    %2389 = vmatprep.subr.mxu0 0.0
    %2390 = vmatpush2.msra.mxu0 0.0
    %2391 = vmatprep.subr.mxu0 0.0
    %2392 = vmatpush2.msra.mxu0 0.0
    %2393 = vmatprep.mubr.f32.mxu0 0.0
    %2394 = vmatmul.mubr.f32.gmra.mxu0 %v2229
    %v2395 = vpop.f32.mrf.mxu0
    %v2396 = vadd.f32 0.0, %v2395
    %v2397 = vpop.f32.mrf.mxu0
    %v2398 = vadd.f32 0.0, %v2397
    %2399 = vmatprep.mubr.f32.mxu0 0.0
    %2400 = vmatmul.mubr.f32.gmra.mxu0 %v2232
    %v2401 = vpop.f32.mrf.mxu0
    %v2402 = vadd.f32 0.0, %v2401
    %v2403 = vpop.f32.mrf.mxu0
    %v2404 = vadd.f32 0.0, %v2403
    %2405 = vmatprep.mubr.f32.mxu0 0.0
    %2406 = vmatmul.mubr.f32.gmra.mxu0 %v2235
    %v2407 = vpop.f32.mrf.mxu0
    %v2408 = vadd.f32 0.0, %v2407
    %v2409 = vpop.f32.mrf.mxu0
    %v2410 = vadd.f32 0.0, %v2409
    %2411 = vmatprep.mubr.f32.mxu0 0.0
    %2412 = vmatmul.mubr.f32.gmra.mxu0 %v2238
    %v2413 = vpop.f32.mrf.mxu0
    %v2414 = vadd.f32 0.0, %v2413
    %v2415 = vpop.f32.mrf.mxu0
    %v2416 = vadd.f32 0.0, %v2415
    %2417 = vdwg.mxu0
    %2418 = vmatprep.subr.mxu0 0.0
    %2419 = vmatpush1.msra.mxu0 0.0
    %2420 = vmatprep.subr.mxu0 0.0
    %2421 = vmatpush1.msra.mxu0 0.0
    %2422 = vmatprep.subr.mxu0 0.0
    %2423 = vmatpush1.msra.mxu0 0.0
    %2424 = vmatprep.subr.mxu0 0.0
    %2425 = vmatpush1.msra.mxu0 0.0
    %2426 = vmatprep.subr.mxu0 0.0
    %2427 = vmatpush1.msra.mxu0 0.0
    %2428 = vmatprep.subr.mxu0 0.0
    %2429 = vmatpush1.msra.mxu0 0.0
    %2430 = vmatprep.subr.mxu0 0.0
    %2431 = vmatpush1.msra.mxu0 0.0
    %2432 = vmatprep.subr.mxu0 0.0
    %2433 = vmatpush1.msra.mxu0 0.0
    %2434 = vmatprep.subr.mxu0 0.0
    %2435 = vmatpush1.msra.mxu0 0.0
    %2436 = vmatprep.subr.mxu0 0.0
    %2437 = vmatpush1.msra.mxu0 0.0
    %2438 = vmatprep.subr.mxu0 0.0
    %2439 = vmatpush1.msra.mxu0 0.0
    %2440 = vmatprep.subr.mxu0 0.0
    %2441 = vmatpush1.msra.mxu0 0.0
    %2442 = vmatprep.subr.mxu0 %v1999
    %2443 = vmatpush1.msra.mxu0 %v1998
    %2444 = vmatprep.subr.mxu0 %v1991
    %2445 = vmatpush1.msra.mxu0 %v1990
    %2446 = vmatprep.subr.mxu0 %v1983
    %2447 = vmatpush1.msra.mxu0 %v1982
    %2448 = vmatprep.subr.mxu0 %v1975
    %2449 = vmatpush1.msra.mxu0 %v1974
    %2450 = vmatprep.subr.mxu0 0.0
    %2451 = vmatpush2.msra.mxu0 0.0
    %2452 = vmatprep.subr.mxu0 0.0
    %2453 = vmatpush2.msra.mxu0 0.0
    %2454 = vmatprep.subr.mxu0 0.0
    %2455 = vmatpush2.msra.mxu0 0.0
    %2456 = vmatprep.subr.mxu0 0.0
    %2457 = vmatpush2.msra.mxu0 0.0
    %2458 = vmatprep.subr.mxu0 0.0
    %2459 = vmatpush2.msra.mxu0 0.0
    %2460 = vmatprep.subr.mxu0 0.0
    %2461 = vmatpush2.msra.mxu0 0.0
    %2462 = vmatprep.subr.mxu0 0.0
    %2463 = vmatpush2.msra.mxu0 0.0
    %2464 = vmatprep.subr.mxu0 0.0
    %2465 = vmatpush2.msra.mxu0 0.0
    %2466 = vmatprep.subr.mxu0 0.0
    %2467 = vmatpush2.msra.mxu0 0.0
    %2468 = vmatprep.subr.mxu0 0.0
    %2469 = vmatpush2.msra.mxu0 0.0
    %2470 = vmatprep.subr.mxu0 0.0
    %2471 = vmatpush2.msra.mxu0 0.0
    %2472 = vmatprep.subr.mxu0 0.0
    %2473 = vmatpush2.msra.mxu0 0.0
    %2474 = vmatprep.subr.mxu0 0.0
    %2475 = vmatpush2.msra.mxu0 0.0
    %2476 = vmatprep.subr.mxu0 0.0
    %2477 = vmatpush2.msra.mxu0 0.0
    %2478 = vmatprep.subr.mxu0 0.0
    %2479 = vmatpush2.msra.mxu0 0.0
    %2480 = vmatprep.subr.mxu0 0.0
    %2481 = vmatpush2.msra.mxu0 0.0
    %2482 = vmatprep.mubr.f32.mxu0 0.0
    %2483 = vmatmul.mubr.f32.gmra.mxu0 %v2229
    %v2484 = vpop.f32.mrf.mxu0
    %v2485 = vadd.f32 0.0, %v2484
    %v2486 = vpop.f32.mrf.mxu0
    %v2487 = vadd.f32 0.0, %v2486
    %2488 = vmatprep.mubr.f32.mxu0 0.0
    %2489 = vmatmul.mubr.f32.gmra.mxu0 %v2232
    %v2490 = vpop.f32.mrf.mxu0
    %v2491 = vadd.f32 0.0, %v2490
    %v2492 = vpop.f32.mrf.mxu0
    %v2493 = vadd.f32 0.0, %v2492
    %2494 = vmatprep.mubr.f32.mxu0 0.0
    %2495 = vmatmul.mubr.f32.gmra.mxu0 %v2235
    %v2496 = vpop.f32.mrf.mxu0
    %v2497 = vadd.f32 0.0, %v2496
    %v2498 = vpop.f32.mrf.mxu0
    %v2499 = vadd.f32 0.0, %v2498
    %2500 = vmatprep.mubr.f32.mxu0 0.0
    %2501 = vmatmul.mubr.f32.gmra.mxu0 %v2238
    %v2502 = vpop.f32.mrf.mxu0
    %v2503 = vadd.f32 0.0, %v2502
    %v2504 = vpop.f32.mrf.mxu0
    %v2505 = vadd.f32 0.0, %v2504
    %2506 = vdwg.mxu0
    %2507 = vmatprep.subr.mxu0 0.0
    %2508 = vmatpush1.msra.mxu0 0.0
    %2509 = vmatprep.subr.mxu0 0.0
    %2510 = vmatpush1.msra.mxu0 0.0
    %2511 = vmatprep.subr.mxu0 0.0
    %2512 = vmatpush1.msra.mxu0 0.0
    %2513 = vmatprep.subr.mxu0 0.0
    %2514 = vmatpush1.msra.mxu0 0.0
    %2515 = vmatprep.subr.mxu0 0.0
    %2516 = vmatpush1.msra.mxu0 0.0
    %2517 = vmatprep.subr.mxu0 0.0
    %2518 = vmatpush1.msra.mxu0 0.0
    %2519 = vmatprep.subr.mxu0 0.0
    %2520 = vmatpush1.msra.mxu0 0.0
    %2521 = vmatprep.subr.mxu0 0.0
    %2522 = vmatpush1.msra.mxu0 0.0
    %2523 = vmatprep.subr.mxu0 0.0
    %2524 = vmatpush1.msra.mxu0 0.0
    %2525 = vmatprep.subr.mxu0 0.0
    %2526 = vmatpush1.msra.mxu0 0.0
    %2527 = vmatprep.subr.mxu0 0.0
    %2528 = vmatpush1.msra.mxu0 0.0
    %2529 = vmatprep.subr.mxu0 0.0
    %2530 = vmatpush1.msra.mxu0 0.0
    %2531 = vmatprep.subr.mxu0 %v2001
    %2532 = vmatpush1.msra.mxu0 %v2000
    %2533 = vmatprep.subr.mxu0 %v1993
    %2534 = vmatpush1.msra.mxu0 %v1992
    %2535 = vmatprep.subr.mxu0 %v1985
    %2536 = vmatpush1.msra.mxu0 %v1984
    %2537 = vmatprep.subr.mxu0 %v1977
    %2538 = vmatpush1.msra.mxu0 %v1976
    %2539 = vmatprep.subr.mxu0 0.0
    %2540 = vmatpush2.msra.mxu0 0.0
    %2541 = vmatprep.subr.mxu0 0.0
    %2542 = vmatpush2.msra.mxu0 0.0
    %2543 = vmatprep.subr.mxu0 0.0
    %2544 = vmatpush2.msra.mxu0 0.0
    %2545 = vmatprep.subr.mxu0 0.0
    %2546 = vmatpush2.msra.mxu0 0.0
    %2547 = vmatprep.subr.mxu0 0.0
    %2548 = vmatpush2.msra.mxu0 0.0
    %2549 = vmatprep.subr.mxu0 0.0
    %2550 = vmatpush2.msra.mxu0 0.0
    %2551 = vmatprep.subr.mxu0 0.0
    %2552 = vmatpush2.msra.mxu0 0.0
    %2553 = vmatprep.subr.mxu0 0.0
    %2554 = vmatpush2.msra.mxu0 0.0
    %2555 = vmatprep.subr.mxu0 0.0
    %2556 = vmatpush2.msra.mxu0 0.0
    %2557 = vmatprep.subr.mxu0 0.0
    %2558 = vmatpush2.msra.mxu0 0.0
    %2559 = vmatprep.subr.mxu0 0.0
    %2560 = vmatpush2.msra.mxu0 0.0
    %2561 = vmatprep.subr.mxu0 0.0
    %2562 = vmatpush2.msra.mxu0 0.0
    %2563 = vmatprep.subr.mxu0 0.0
    %2564 = vmatpush2.msra.mxu0 0.0
    %2565 = vmatprep.subr.mxu0 0.0
    %2566 = vmatpush2.msra.mxu0 0.0
    %2567 = vmatprep.subr.mxu0 0.0
    %2568 = vmatpush2.msra.mxu0 0.0
    %2569 = vmatprep.subr.mxu0 0.0
    %2570 = vmatpush2.msra.mxu0 0.0
    %2571 = vmatprep.mubr.f32.mxu0 0.0
    %2572 = vmatmul.mubr.f32.gmra.mxu0 %v2229
    %v2573 = vpop.f32.mrf.mxu0
    %v2574 = vadd.f32 0.0, %v2573
    %v2575 = vpop.f32.mrf.mxu0
    %v2576 = vadd.f32 0.0, %v2575
    %2577 = vmatprep.mubr.f32.mxu0 0.0
    %2578 = vmatmul.mubr.f32.gmra.mxu0 %v2232
    %v2579 = vpop.f32.mrf.mxu0
    %v2580 = vadd.f32 0.0, %v2579
    %v2581 = vpop.f32.mrf.mxu0
    %v2582 = vadd.f32 0.0, %v2581
    %2583 = vmatprep.mubr.f32.mxu0 0.0
    %2584 = vmatmul.mubr.f32.gmra.mxu0 %v2235
    %v2585 = vpop.f32.mrf.mxu0
    %v2586 = vadd.f32 0.0, %v2585
    %v2587 = vpop.f32.mrf.mxu0
    %v2588 = vadd.f32 0.0, %v2587
    %2589 = vmatprep.mubr.f32.mxu0 0.0
    %2590 = vmatmul.mubr.f32.gmra.mxu0 %v2238
    %v2591 = vpop.f32.mrf.mxu0
    %v2592 = vadd.f32 0.0, %v2591
    %v2593 = vpop.f32.mrf.mxu0
    %v2594 = vadd.f32 0.0, %v2593
    %2595 = vdwg.mxu0
    %v2596 = vmul.f32 %v2307, %v963
    %v2597 = vmul.f32 %v2309, %v965
    %v2598 = vmul.f32 %v2396, %v1052
    %v2599 = vmul.f32 %v2398, %v1054
    %v2600 = vmul.f32 %v2485, %v1141
    %v2601 = vmul.f32 %v2487, %v1143
    %v2602 = vmul.f32 %v2574, %v1230
    %v2603 = vmul.f32 %v2576, %v1232
    %v2604 = vmul.f32 %v2313, %v969
    %v2605 = vmul.f32 %v2315, %v971
    %v2606 = vmul.f32 %v2402, %v1058
    %v2607 = vmul.f32 %v2404, %v1060
    %v2608 = vmul.f32 %v2491, %v1147
    %v2609 = vmul.f32 %v2493, %v1149
    %v2610 = vmul.f32 %v2580, %v1236
    %v2611 = vmul.f32 %v2582, %v1238
    %v2612 = vmul.f32 %v2319, %v975
    %v2613 = vmul.f32 %v2321, %v977
    %v2614 = vmul.f32 %v2408, %v1064
    %v2615 = vmul.f32 %v2410, %v1066
    %v2616 = vmul.f32 %v2497, %v1153
    %v2617 = vmul.f32 %v2499, %v1155
    %v2618 = vmul.f32 %v2586, %v1242
    %v2619 = vmul.f32 %v2588, %v1244
    %v2620 = vmul.f32 %v2325, %v981
    %v2621 = vmul.f32 %v2327, %v983
    %v2622 = vmul.f32 %v2414, %v1070
    %v2623 = vmul.f32 %v2416, %v1072
    %v2624 = vmul.f32 %v2503, %v1159
    %v2625 = vmul.f32 %v2505, %v1161
    %v2626 = vmul.f32 %v2592, %v1248
    %v2627 = vmul.f32 %v2594, %v1250
    %2628 = vmatprep.subr.mxu0 0.0
    %2629 = vmatpush1.msra.mxu0 %v2017
    %2630 = vmatprep.subr.mxu0 0.0
    %2631 = vmatpush1.msra.mxu0 %v2016
    %2632 = vmatprep.subr.mxu0 0.0
    %2633 = vmatpush1.msra.mxu0 %v2015
    %2634 = vmatprep.subr.mxu0 0.0
    %2635 = vmatpush1.msra.mxu0 %v2014
    %2636 = vmatprep.subr.mxu0 0.0
    %2637 = vmatpush1.msra.mxu0 %v2013
    %2638 = vmatprep.subr.mxu0 0.0
    %2639 = vmatpush1.msra.mxu0 %v2012
    %2640 = vmatprep.subr.mxu0 0.0
    %2641 = vmatpush1.msra.mxu0 %v2011
    %2642 = vmatprep.subr.mxu0 0.0
    %2643 = vmatpush1.msra.mxu0 %v2010
    %2644 = vmatprep.subr.mxu0 0.0
    %2645 = vmatpush1.msra.mxu0 %v2009
    %2646 = vmatprep.subr.mxu0 0.0
    %2647 = vmatpush1.msra.mxu0 %v2008
    %2648 = vmatprep.subr.mxu0 0.0
    %2649 = vmatpush1.msra.mxu0 %v2007
    %2650 = vmatprep.subr.mxu0 0.0
    %2651 = vmatpush1.msra.mxu0 %v2006
    %2652 = vmatprep.subr.mxu0 0.0
    %2653 = vmatpush1.msra.mxu0 %v2005
    %2654 = vmatprep.subr.mxu0 0.0
    %2655 = vmatpush1.msra.mxu0 %v2004
    %2656 = vmatprep.subr.mxu0 0.0
    %2657 = vmatpush1.msra.mxu0 %v2003
    %2658 = vmatprep.subr.mxu0 0.0
    %2659 = vmatpush1.msra.mxu0 %v2002
    %2660 = vmatprep.subr.mxu0 0.0
    %2661 = vmatpush2.msra.mxu0 %v2033
    %2662 = vmatprep.subr.mxu0 0.0
    %2663 = vmatpush2.msra.mxu0 %v2032
    %2664 = vmatprep.subr.mxu0 0.0
    %2665 = vmatpush2.msra.mxu0 %v2031
    %2666 = vmatprep.subr.mxu0 0.0
    %2667 = vmatpush2.msra.mxu0 %v2030
    %2668 = vmatprep.subr.mxu0 0.0
    %2669 = vmatpush2.msra.mxu0 %v2029
    %2670 = vmatprep.subr.mxu0 0.0
    %2671 = vmatpush2.msra.mxu0 %v2028
    %2672 = vmatprep.subr.mxu0 0.0
    %2673 = vmatpush2.msra.mxu0 %v2027
    %2674 = vmatprep.subr.mxu0 0.0
    %2675 = vmatpush2.msra.mxu0 %v2026
    %2676 = vmatprep.subr.mxu0 0.0
    %2677 = vmatpush2.msra.mxu0 %v2025
    %2678 = vmatprep.subr.mxu0 0.0
    %2679 = vmatpush2.msra.mxu0 %v2024
    %2680 = vmatprep.subr.mxu0 0.0
    %2681 = vmatpush2.msra.mxu0 %v2023
    %2682 = vmatprep.subr.mxu0 0.0
    %2683 = vmatpush2.msra.mxu0 %v2022
    %2684 = vmatprep.subr.mxu0 0.0
    %2685 = vmatpush2.msra.mxu0 %v2021
    %2686 = vmatprep.subr.mxu0 0.0
    %2687 = vmatpush2.msra.mxu0 %v2020
    %2688 = vmatprep.subr.mxu0 0.0
    %2689 = vmatpush2.msra.mxu0 %v2019
    %2690 = vmatprep.subr.mxu0 0.0
    %2691 = vmatpush2.msra.mxu0 %v2018
    %2692 = vmatprep.mubr.f32.mxu0 %v2597
    %2693 = vmatmul.mubr.f32.gmra.mxu0 %v2596
    %v2694 = vpop.f32.mrf.mxu0
    %v2695 = vadd.f32 0.0, %v2694
    %v2696 = vpop.f32.mrf.mxu0
    %2697 = vmatprep.mubr.f32.mxu0 %v2605
    %2698 = vmatmul.mubr.f32.gmra.mxu0 %v2604
    %v2699 = vpop.f32.mrf.mxu0
    %v2700 = vadd.f32 0.0, %v2699
    %v2701 = vpop.f32.mrf.mxu0
    %2702 = vmatprep.mubr.f32.mxu0 %v2613
    %2703 = vmatmul.mubr.f32.gmra.mxu0 %v2612
    %v2704 = vpop.f32.mrf.mxu0
    %v2705 = vadd.f32 0.0, %v2704
    %v2706 = vpop.f32.mrf.mxu0
    %2707 = vmatprep.mubr.f32.mxu0 %v2621
    %2708 = vmatmul.mubr.f32.gmra.mxu0 %v2620
    %v2709 = vpop.f32.mrf.mxu0
    %v2710 = vadd.f32 0.0, %v2709
    %v2711 = vpop.f32.mrf.mxu0
    %2712 = vdwg.mxu0
    %2713 = vmatprep.subr.mxu0 0.0
    %2714 = vmatpush1.msra.mxu0 %v2049
    %2715 = vmatprep.subr.mxu0 0.0
    %2716 = vmatpush1.msra.mxu0 %v2048
    %2717 = vmatprep.subr.mxu0 0.0
    %2718 = vmatpush1.msra.mxu0 %v2047
    %2719 = vmatprep.subr.mxu0 0.0
    %2720 = vmatpush1.msra.mxu0 %v2046
    %2721 = vmatprep.subr.mxu0 0.0
    %2722 = vmatpush1.msra.mxu0 %v2045
    %2723 = vmatprep.subr.mxu0 0.0
    %2724 = vmatpush1.msra.mxu0 %v2044
    %2725 = vmatprep.subr.mxu0 0.0
    %2726 = vmatpush1.msra.mxu0 %v2043
    %2727 = vmatprep.subr.mxu0 0.0
    %2728 = vmatpush1.msra.mxu0 %v2042
    %2729 = vmatprep.subr.mxu0 0.0
    %2730 = vmatpush1.msra.mxu0 %v2041
    %2731 = vmatprep.subr.mxu0 0.0
    %2732 = vmatpush1.msra.mxu0 %v2040
    %2733 = vmatprep.subr.mxu0 0.0
    %2734 = vmatpush1.msra.mxu0 %v2039
    %2735 = vmatprep.subr.mxu0 0.0
    %2736 = vmatpush1.msra.mxu0 %v2038
    %2737 = vmatprep.subr.mxu0 0.0
    %2738 = vmatpush1.msra.mxu0 %v2037
    %2739 = vmatprep.subr.mxu0 0.0
    %2740 = vmatpush1.msra.mxu0 %v2036
    %2741 = vmatprep.subr.mxu0 0.0
    %2742 = vmatpush1.msra.mxu0 %v2035
    %2743 = vmatprep.subr.mxu0 0.0
    %2744 = vmatpush1.msra.mxu0 %v2034
    %2745 = vmatprep.subr.mxu0 0.0
    %2746 = vmatpush2.msra.mxu0 %v2065
    %2747 = vmatprep.subr.mxu0 0.0
    %2748 = vmatpush2.msra.mxu0 %v2064
    %2749 = vmatprep.subr.mxu0 0.0
    %2750 = vmatpush2.msra.mxu0 %v2063
    %2751 = vmatprep.subr.mxu0 0.0
    %2752 = vmatpush2.msra.mxu0 %v2062
    %2753 = vmatprep.subr.mxu0 0.0
    %2754 = vmatpush2.msra.mxu0 %v2061
    %2755 = vmatprep.subr.mxu0 0.0
    %2756 = vmatpush2.msra.mxu0 %v2060
    %2757 = vmatprep.subr.mxu0 0.0
    %2758 = vmatpush2.msra.mxu0 %v2059
    %2759 = vmatprep.subr.mxu0 0.0
    %2760 = vmatpush2.msra.mxu0 %v2058
    %2761 = vmatprep.subr.mxu0 0.0
    %2762 = vmatpush2.msra.mxu0 %v2057
    %2763 = vmatprep.subr.mxu0 0.0
    %2764 = vmatpush2.msra.mxu0 %v2056
    %2765 = vmatprep.subr.mxu0 0.0
    %2766 = vmatpush2.msra.mxu0 %v2055
    %2767 = vmatprep.subr.mxu0 0.0
    %2768 = vmatpush2.msra.mxu0 %v2054
    %2769 = vmatprep.subr.mxu0 0.0
    %2770 = vmatpush2.msra.mxu0 %v2053
    %2771 = vmatprep.subr.mxu0 0.0
    %2772 = vmatpush2.msra.mxu0 %v2052
    %2773 = vmatprep.subr.mxu0 0.0
    %2774 = vmatpush2.msra.mxu0 %v2051
    %2775 = vmatprep.subr.mxu0 0.0
    %2776 = vmatpush2.msra.mxu0 %v2050
    %2777 = vmatprep.mubr.f32.mxu0 %v2599
    %2778 = vmatmul.mubr.f32.gmra.mxu0 %v2598
    %v2779 = vpop.f32.mrf.mxu0
    %v2780 = vadd.f32 %v2695, %v2779
    %v2781 = vpop.f32.mrf.mxu0
    %2782 = vmatprep.mubr.f32.mxu0 %v2607
    %2783 = vmatmul.mubr.f32.gmra.mxu0 %v2606
    %v2784 = vpop.f32.mrf.mxu0
    %v2785 = vadd.f32 %v2700, %v2784
    %v2786 = vpop.f32.mrf.mxu0
    %2787 = vmatprep.mubr.f32.mxu0 %v2615
    %2788 = vmatmul.mubr.f32.gmra.mxu0 %v2614
    %v2789 = vpop.f32.mrf.mxu0
    %v2790 = vadd.f32 %v2705, %v2789
    %v2791 = vpop.f32.mrf.mxu0
    %2792 = vmatprep.mubr.f32.mxu0 %v2623
    %2793 = vmatmul.mubr.f32.gmra.mxu0 %v2622
    %v2794 = vpop.f32.mrf.mxu0
    %v2795 = vadd.f32 %v2710, %v2794
    %v2796 = vpop.f32.mrf.mxu0
    %2797 = vdwg.mxu0
    %2798 = vmatprep.subr.mxu0 0.0
    %2799 = vmatpush1.msra.mxu0 %v2081
    %2800 = vmatprep.subr.mxu0 0.0
    %2801 = vmatpush1.msra.mxu0 %v2080
    %2802 = vmatprep.subr.mxu0 0.0
    %2803 = vmatpush1.msra.mxu0 %v2079
    %2804 = vmatprep.subr.mxu0 0.0
    %2805 = vmatpush1.msra.mxu0 %v2078
    %2806 = vmatprep.subr.mxu0 0.0
    %2807 = vmatpush1.msra.mxu0 %v2077
    %2808 = vmatprep.subr.mxu0 0.0
    %2809 = vmatpush1.msra.mxu0 %v2076
    %2810 = vmatprep.subr.mxu0 0.0
    %2811 = vmatpush1.msra.mxu0 %v2075
    %2812 = vmatprep.subr.mxu0 0.0
    %2813 = vmatpush1.msra.mxu0 %v2074
    %2814 = vmatprep.subr.mxu0 0.0
    %2815 = vmatpush1.msra.mxu0 %v2073
    %2816 = vmatprep.subr.mxu0 0.0
    %2817 = vmatpush1.msra.mxu0 %v2072
    %2818 = vmatprep.subr.mxu0 0.0
    %2819 = vmatpush1.msra.mxu0 %v2071
    %2820 = vmatprep.subr.mxu0 0.0
    %2821 = vmatpush1.msra.mxu0 %v2070
    %2822 = vmatprep.subr.mxu0 0.0
    %2823 = vmatpush1.msra.mxu0 %v2069
    %2824 = vmatprep.subr.mxu0 0.0
    %2825 = vmatpush1.msra.mxu0 %v2068
    %2826 = vmatprep.subr.mxu0 0.0
    %2827 = vmatpush1.msra.mxu0 %v2067
    %2828 = vmatprep.subr.mxu0 0.0
    %2829 = vmatpush1.msra.mxu0 %v2066
    %2830 = vmatprep.subr.mxu0 0.0
    %2831 = vmatpush2.msra.mxu0 %v2097
    %2832 = vmatprep.subr.mxu0 0.0
    %2833 = vmatpush2.msra.mxu0 %v2096
    %2834 = vmatprep.subr.mxu0 0.0
    %2835 = vmatpush2.msra.mxu0 %v2095
    %2836 = vmatprep.subr.mxu0 0.0
    %2837 = vmatpush2.msra.mxu0 %v2094
    %2838 = vmatprep.subr.mxu0 0.0
    %2839 = vmatpush2.msra.mxu0 %v2093
    %2840 = vmatprep.subr.mxu0 0.0
    %2841 = vmatpush2.msra.mxu0 %v2092
    %2842 = vmatprep.subr.mxu0 0.0
    %2843 = vmatpush2.msra.mxu0 %v2091
    %2844 = vmatprep.subr.mxu0 0.0
    %2845 = vmatpush2.msra.mxu0 %v2090
    %2846 = vmatprep.subr.mxu0 0.0
    %2847 = vmatpush2.msra.mxu0 %v2089
    %2848 = vmatprep.subr.mxu0 0.0
    %2849 = vmatpush2.msra.mxu0 %v2088
    %2850 = vmatprep.subr.mxu0 0.0
    %2851 = vmatpush2.msra.mxu0 %v2087
    %2852 = vmatprep.subr.mxu0 0.0
    %2853 = vmatpush2.msra.mxu0 %v2086
    %2854 = vmatprep.subr.mxu0 0.0
    %2855 = vmatpush2.msra.mxu0 %v2085
    %2856 = vmatprep.subr.mxu0 0.0
    %2857 = vmatpush2.msra.mxu0 %v2084
    %2858 = vmatprep.subr.mxu0 0.0
    %2859 = vmatpush2.msra.mxu0 %v2083
    %2860 = vmatprep.subr.mxu0 0.0
    %2861 = vmatpush2.msra.mxu0 %v2082
    %2862 = vmatprep.mubr.f32.mxu0 %v2601
    %2863 = vmatmul.mubr.f32.gmra.mxu0 %v2600
    %v2864 = vpop.f32.mrf.mxu0
    %v2865 = vadd.f32 %v2780, %v2864
    %v2866 = vpop.f32.mrf.mxu0
    %2867 = vmatprep.mubr.f32.mxu0 %v2609
    %2868 = vmatmul.mubr.f32.gmra.mxu0 %v2608
    %v2869 = vpop.f32.mrf.mxu0
    %v2870 = vadd.f32 %v2785, %v2869
    %v2871 = vpop.f32.mrf.mxu0
    %2872 = vmatprep.mubr.f32.mxu0 %v2617
    %2873 = vmatmul.mubr.f32.gmra.mxu0 %v2616
    %v2874 = vpop.f32.mrf.mxu0
    %v2875 = vadd.f32 %v2790, %v2874
    %v2876 = vpop.f32.mrf.mxu0
    %2877 = vmatprep.mubr.f32.mxu0 %v2625
    %2878 = vmatmul.mubr.f32.gmra.mxu0 %v2624
    %v2879 = vpop.f32.mrf.mxu0
    %v2880 = vadd.f32 %v2795, %v2879
    %v2881 = vpop.f32.mrf.mxu0
    %2882 = vdwg.mxu0
    %2883 = vmatprep.subr.mxu0 0.0
    %2884 = vmatpush1.msra.mxu0 %v2113
    %2885 = vmatprep.subr.mxu0 0.0
    %2886 = vmatpush1.msra.mxu0 %v2112
    %2887 = vmatprep.subr.mxu0 0.0
    %2888 = vmatpush1.msra.mxu0 %v2111
    %2889 = vmatprep.subr.mxu0 0.0
    %2890 = vmatpush1.msra.mxu0 %v2110
    %2891 = vmatprep.subr.mxu0 0.0
    %2892 = vmatpush1.msra.mxu0 %v2109
    %2893 = vmatprep.subr.mxu0 0.0
    %2894 = vmatpush1.msra.mxu0 %v2108
    %2895 = vmatprep.subr.mxu0 0.0
    %2896 = vmatpush1.msra.mxu0 %v2107
    %2897 = vmatprep.subr.mxu0 0.0
    %2898 = vmatpush1.msra.mxu0 %v2106
    %2899 = vmatprep.subr.mxu0 0.0
    %2900 = vmatpush1.msra.mxu0 %v2105
    %2901 = vmatprep.subr.mxu0 0.0
    %2902 = vmatpush1.msra.mxu0 %v2104
    %2903 = vmatprep.subr.mxu0 0.0
    %2904 = vmatpush1.msra.mxu0 %v2103
    %2905 = vmatprep.subr.mxu0 0.0
    %2906 = vmatpush1.msra.mxu0 %v2102
    %2907 = vmatprep.subr.mxu0 0.0
    %2908 = vmatpush1.msra.mxu0 %v2101
    %2909 = vmatprep.subr.mxu0 0.0
    %2910 = vmatpush1.msra.mxu0 %v2100
    %2911 = vmatprep.subr.mxu0 0.0
    %2912 = vmatpush1.msra.mxu0 %v2099
    %2913 = vmatprep.subr.mxu0 0.0
    %2914 = vmatpush1.msra.mxu0 %v2098
    %2915 = vmatprep.subr.mxu0 0.0
    %2916 = vmatpush2.msra.mxu0 %v2129
    %2917 = vmatprep.subr.mxu0 0.0
    %2918 = vmatpush2.msra.mxu0 %v2128
    %2919 = vmatprep.subr.mxu0 0.0
    %2920 = vmatpush2.msra.mxu0 %v2127
    %2921 = vmatprep.subr.mxu0 0.0
    %2922 = vmatpush2.msra.mxu0 %v2126
    %2923 = vmatprep.subr.mxu0 0.0
    %2924 = vmatpush2.msra.mxu0 %v2125
    %2925 = vmatprep.subr.mxu0 0.0
    %2926 = vmatpush2.msra.mxu0 %v2124
    %2927 = vmatprep.subr.mxu0 0.0
    %2928 = vmatpush2.msra.mxu0 %v2123
    %2929 = vmatprep.subr.mxu0 0.0
    %2930 = vmatpush2.msra.mxu0 %v2122
    %2931 = vmatprep.subr.mxu0 0.0
    %2932 = vmatpush2.msra.mxu0 %v2121
    %2933 = vmatprep.subr.mxu0 0.0
    %2934 = vmatpush2.msra.mxu0 %v2120
    %2935 = vmatprep.subr.mxu0 0.0
    %2936 = vmatpush2.msra.mxu0 %v2119
    %2937 = vmatprep.subr.mxu0 0.0
    %2938 = vmatpush2.msra.mxu0 %v2118
    %2939 = vmatprep.subr.mxu0 0.0
    %2940 = vmatpush2.msra.mxu0 %v2117
    %2941 = vmatprep.subr.mxu0 0.0
    %2942 = vmatpush2.msra.mxu0 %v2116
    %2943 = vmatprep.subr.mxu0 0.0
    %2944 = vmatpush2.msra.mxu0 %v2115
    %2945 = vmatprep.subr.mxu0 0.0
    %2946 = vmatpush2.msra.mxu0 %v2114
    %2947 = vmatprep.mubr.f32.mxu0 %v2603
    %2948 = vmatmul.mubr.f32.gmra.mxu0 %v2602
    %v2949 = vpop.f32.mrf.mxu0
    %v2950 = vadd.f32 %v2865, %v2949
    %v2951 = vpop.f32.mrf.mxu0
    %2952 = vmatprep.mubr.f32.mxu0 %v2611
    %2953 = vmatmul.mubr.f32.gmra.mxu0 %v2610
    %v2954 = vpop.f32.mrf.mxu0
    %v2955 = vadd.f32 %v2870, %v2954
    %v2956 = vpop.f32.mrf.mxu0
    %2957 = vmatprep.mubr.f32.mxu0 %v2619
    %2958 = vmatmul.mubr.f32.gmra.mxu0 %v2618
    %v2959 = vpop.f32.mrf.mxu0
    %v2960 = vadd.f32 %v2875, %v2959
    %v2961 = vpop.f32.mrf.mxu0
    %2962 = vmatprep.mubr.f32.mxu0 %v2627
    %2963 = vmatmul.mubr.f32.gmra.mxu0 %v2626
    %v2964 = vpop.f32.mrf.mxu0
    %v2965 = vadd.f32 %v2880, %v2964
    %v2966 = vpop.f32.mrf.mxu0
    %2967 = vdwg.mxu0
    %vm2968 = vcmask 228352
    %v2970 = vsel %vm2968, %v1968, 0
    %v2973 = vsel %vm2968, %v1969, 0
    %vm2975 = vcmask 1043456
    %v2977 = vsel %vm2975, %v2965, 0
    %2979 = vmatprep.subr.mxu0 0.0
    %2980 = vmatpush1.msra.mxu0 0.0
    %2981 = vmatprep.subr.mxu0 0.0
    %2982 = vmatpush1.msra.mxu0 0.0
    %2983 = vmatprep.subr.mxu0 0.0
    %2984 = vmatpush1.msra.mxu0 0.0
    %2985 = vmatprep.subr.mxu0 0.0
    %2986 = vmatpush1.msra.mxu0 0.0
    %2987 = vmatprep.subr.mxu0 0.0
    %2988 = vmatpush1.msra.mxu0 0.0
    %2989 = vmatprep.subr.mxu0 0.0
    %2990 = vmatpush1.msra.mxu0 0.0
    %2991 = vmatprep.subr.mxu0 0.0
    %2992 = vmatpush1.msra.mxu0 0.0
    %2993 = vmatprep.subr.mxu0 0.0
    %2994 = vmatpush1.msra.mxu0 0.0
    %2995 = vmatprep.subr.mxu0 0.0
    %2996 = vmatpush1.msra.mxu0 0.0
    %2997 = vmatprep.subr.mxu0 0.0
    %2998 = vmatpush1.msra.mxu0 0.0
    %2999 = vmatprep.subr.mxu0 0.0
    %3000 = vmatpush1.msra.mxu0 0.0
    %3001 = vmatprep.subr.mxu0 0.0
    %3002 = vmatpush1.msra.mxu0 0.0
    %3003 = vmatprep.subr.mxu0 0.0
    %3004 = vmatpush1.msra.mxu0 %v2977
    %3005 = vmatprep.subr.mxu0 0.0
    %3006 = vmatpush1.msra.mxu0 %v2960
    %3007 = vmatprep.subr.mxu0 0.0
    %3008 = vmatpush1.msra.mxu0 %v2955
    %3009 = vmatprep.subr.mxu0 0.0
    %3010 = vmatpush1.msra.mxu0 %v2950
    %3011 = vmatprep.subr.mxu0 0.0
    %3012 = vmatpush2.msra.mxu0 0.0
    %3013 = vmatprep.subr.mxu0 0.0
    %3014 = vmatpush2.msra.mxu0 0.0
    %3015 = vmatprep.subr.mxu0 0.0
    %3016 = vmatpush2.msra.mxu0 0.0
    %3017 = vmatprep.subr.mxu0 0.0
    %3018 = vmatpush2.msra.mxu0 0.0
    %3019 = vmatprep.subr.mxu0 0.0
    %3020 = vmatpush2.msra.mxu0 0.0
    %3021 = vmatprep.subr.mxu0 0.0
    %3022 = vmatpush2.msra.mxu0 0.0
    %3023 = vmatprep.subr.mxu0 0.0
    %3024 = vmatpush2.msra.mxu0 0.0
    %3025 = vmatprep.subr.mxu0 0.0
    %3026 = vmatpush2.msra.mxu0 0.0
    %3027 = vmatprep.subr.mxu0 0.0
    %3028 = vmatpush2.msra.mxu0 0.0
    %3029 = vmatprep.subr.mxu0 0.0
    %3030 = vmatpush2.msra.mxu0 0.0
    %3031 = vmatprep.subr.mxu0 0.0
    %3032 = vmatpush2.msra.mxu0 0.0
    %3033 = vmatprep.subr.mxu0 0.0
    %3034 = vmatpush2.msra.mxu0 0.0
    %3035 = vmatprep.subr.mxu0 0.0
    %3036 = vmatpush2.msra.mxu0 0.0
    %3037 = vmatprep.subr.mxu0 0.0
    %3038 = vmatpush2.msra.mxu0 0.0
    %3039 = vmatprep.subr.mxu0 0.0
    %3040 = vmatpush2.msra.mxu0 0.0
    %3041 = vmatprep.subr.mxu0 0.0
    %3042 = vmatpush2.msra.mxu0 0.0
    %3043 = vmatprep.mubr.f32.mxu0 0.0
    %3044 = vmatmul.mubr.f32.gmra.mxu0 %v2970
    %v3045 = vpop.f32.mrf.mxu0
    %v3046 = vadd.f32 0.0, %v3045
    %v3047 = vpop.f32.mrf.mxu0
    %3048 = vmatprep.mubr.f32.mxu0 0.0
    %3049 = vmatmul.mubr.f32.gmra.mxu0 %v2973
    %v3050 = vpop.f32.mrf.mxu0
    %v3051 = vadd.f32 0.0, %v3050
    %v3052 = vpop.f32.mrf.mxu0
    %3053 = vdwg.mxu0
    %s3054 = scalar_lea.vmem [#allocation9], 96
    %v3055 = vld [vmem:[%s3054] sm:$0xff]
    %v3056 = vld [vmem:[%s3054 + $0x8] sm:$0xff]
    %v3057 = vld [vmem:[%s3054 + $0x10] sm:$0xff]
    %v3058 = vld [vmem:[%s3054 + $0x18] sm:$0xff]
    %s3059 = scalar_lea.vmem [#allocation10], 3
    %v3060 = vld [vmem:[%s3059] sm:$0x1]
    %v3062 = vlaneseq
    %v3063 = vshrl.u32 %v3062, 7
    %v3064 = vsub.s32 0, %v3063
    %v3065 = vrot.slane %v3060, %v3064
    %v3068 = vsel %vm133, %v407, 0
    %v3071 = vsel %vm133, %v408, 0
    %3073 = vmatprep.subr.mxu0 0.0
    %3074 = vmatpush1.msra.mxu0 0.0
    %3075 = vmatprep.subr.mxu0 0.0
    %3076 = vmatpush1.msra.mxu0 0.0
    %3077 = vmatprep.subr.mxu0 0.0
    %3078 = vmatpush1.msra.mxu0 0.0
    %3079 = vmatprep.subr.mxu0 0.0
    %3080 = vmatpush1.msra.mxu0 0.0
    %3081 = vmatprep.subr.mxu0 0.0
    %3082 = vmatpush1.msra.mxu0 0.0
    %3083 = vmatprep.subr.mxu0 0.0
    %3084 = vmatpush1.msra.mxu0 0.0
    %3085 = vmatprep.subr.mxu0 0.0
    %3086 = vmatpush1.msra.mxu0 0.0
    %3087 = vmatprep.subr.mxu0 0.0
    %3088 = vmatpush1.msra.mxu0 0.0
    %3089 = vmatprep.subr.mxu0 0.0
    %3090 = vmatpush1.msra.mxu0 0.0
    %3091 = vmatprep.subr.mxu0 0.0
    %3092 = vmatpush1.msra.mxu0 0.0
    %3093 = vmatprep.subr.mxu0 0.0
    %3094 = vmatpush1.msra.mxu0 0.0
    %3095 = vmatprep.subr.mxu0 0.0
    %3096 = vmatpush1.msra.mxu0 0.0
    %3097 = vmatprep.subr.mxu0 0.0
    %3098 = vmatpush1.msra.mxu0 %v3058
    %3099 = vmatprep.subr.mxu0 0.0
    %3100 = vmatpush1.msra.mxu0 %v3057
    %3101 = vmatprep.subr.mxu0 0.0
    %3102 = vmatpush1.msra.mxu0 %v3056
    %3103 = vmatprep.subr.mxu0 0.0
    %3104 = vmatpush1.msra.mxu0 %v3055
    %3105 = vmatprep.subr.mxu0 0.0
    %3106 = vmatpush2.msra.mxu0 0.0
    %3107 = vmatprep.subr.mxu0 0.0
    %3108 = vmatpush2.msra.mxu0 0.0
    %3109 = vmatprep.subr.mxu0 0.0
    %3110 = vmatpush2.msra.mxu0 0.0
    %3111 = vmatprep.subr.mxu0 0.0
    %3112 = vmatpush2.msra.mxu0 0.0
    %3113 = vmatprep.subr.mxu0 0.0
    %3114 = vmatpush2.msra.mxu0 0.0
    %3115 = vmatprep.subr.mxu0 0.0
    %3116 = vmatpush2.msra.mxu0 0.0
    %3117 = vmatprep.subr.mxu0 0.0
    %3118 = vmatpush2.msra.mxu0 0.0
    %3119 = vmatprep.subr.mxu0 0.0
    %3120 = vmatpush2.msra.mxu0 0.0
    %3121 = vmatprep.subr.mxu0 0.0
    %3122 = vmatpush2.msra.mxu0 0.0
    %3123 = vmatprep.subr.mxu0 0.0
    %3124 = vmatpush2.msra.mxu0 0.0
    %3125 = vmatprep.subr.mxu0 0.0
    %3126 = vmatpush2.msra.mxu0 0.0
    %3127 = vmatprep.subr.mxu0 0.0
    %3128 = vmatpush2.msra.mxu0 0.0
    %3129 = vmatprep.subr.mxu0 0.0
    %3130 = vmatpush2.msra.mxu0 0.0
    %3131 = vmatprep.subr.mxu0 0.0
    %3132 = vmatpush2.msra.mxu0 0.0
    %3133 = vmatprep.subr.mxu0 0.0
    %3134 = vmatpush2.msra.mxu0 0.0
    %3135 = vmatprep.subr.mxu0 0.0
    %3136 = vmatpush2.msra.mxu0 0.0
    %3137 = vmatprep.mubr.f32.mxu0 0.0
    %3138 = vmatmul.mubr.f32.gmra.mxu0 %v3068
    %v3139 = vpop.f32.mrf.mxu0
    %v3140 = vadd.f32 %v3065, %v3139
    %v3141 = vpop.f32.mrf.mxu0
    %3142 = vmatprep.mubr.f32.mxu0 0.0
    %3143 = vmatmul.mubr.f32.gmra.mxu0 %v3071
    %v3144 = vpop.f32.mrf.mxu0
    %v3145 = vadd.f32 %v3065, %v3144
    %v3146 = vpop.f32.mrf.mxu0
    %3147 = vdwg.mxu0
    %v3148 = vadd.f32 %v3140, %v3046
    %v3149 = vadd.f32 %v3145, %v3051
    %v3150 = vmax.f32 %v3148, 0.0
    %v3151 = vmax.f32 %v3149, 0.0
    %s3152 = scalar_lea.vmem [#allocation9], 128
    %v3153 = vld [vmem:[%s3152] sm:$0xff]
    %v3154 = vld [vmem:[%s3152 + $0x8] sm:$0xff]
    %v3155 = vld [vmem:[%s3152 + $0x10] sm:$0xff]
    %v3156 = vld [vmem:[%s3152 + $0x18] sm:$0xff]
    %s3157 = scalar_lea.vmem [#allocation9], 224
    %v3158 = vld [vmem:[%s3157] sm:$0xff]
    %v3159 = vld [vmem:[%s3157 + $0x8] sm:$0xff]
    %v3160 = vld [vmem:[%s3157 + $0x10] sm:$0xff]
    %v3161 = vld [vmem:[%s3157 + $0x18] sm:$0xff]
    %3162 = vmatprep.subr.mxu0 0.0
    %3163 = vmatpush1.msra.mxu0 0.0
    %3164 = vmatprep.subr.mxu0 0.0
    %3165 = vmatpush1.msra.mxu0 0.0
    %3166 = vmatprep.subr.mxu0 0.0
    %3167 = vmatpush1.msra.mxu0 0.0
    %3168 = vmatprep.subr.mxu0 0.0
    %3169 = vmatpush1.msra.mxu0 0.0
    %3170 = vmatprep.subr.mxu0 0.0
    %3171 = vmatpush1.msra.mxu0 0.0
    %3172 = vmatprep.subr.mxu0 0.0
    %3173 = vmatpush1.msra.mxu0 0.0
    %3174 = vmatprep.subr.mxu0 0.0
    %3175 = vmatpush1.msra.mxu0 0.0
    %3176 = vmatprep.subr.mxu0 0.0
    %3177 = vmatpush1.msra.mxu0 0.0
    %3178 = vmatprep.subr.mxu0 0.0
    %3179 = vmatpush1.msra.mxu0 0.0
    %3180 = vmatprep.subr.mxu0 0.0
    %3181 = vmatpush1.msra.mxu0 0.0
    %3182 = vmatprep.subr.mxu0 0.0
    %3183 = vmatpush1.msra.mxu0 0.0
    %3184 = vmatprep.subr.mxu0 0.0
    %3185 = vmatpush1.msra.mxu0 0.0
    %3186 = vmatprep.subr.mxu0 0.0
    %3187 = vmatpush1.msra.mxu0 %v3161
    %3188 = vmatprep.subr.mxu0 0.0
    %3189 = vmatpush1.msra.mxu0 %v3160
    %3190 = vmatprep.subr.mxu0 0.0
    %3191 = vmatpush1.msra.mxu0 %v3159
    %3192 = vmatprep.subr.mxu0 0.0
    %3193 = vmatpush1.msra.mxu0 %v3158
    %3194 = vmatprep.subr.mxu0 0.0
    %3195 = vmatpush2.msra.mxu0 0.0
    %3196 = vmatprep.subr.mxu0 0.0
    %3197 = vmatpush2.msra.mxu0 0.0
    %3198 = vmatprep.subr.mxu0 0.0
    %3199 = vmatpush2.msra.mxu0 0.0
    %3200 = vmatprep.subr.mxu0 0.0
    %3201 = vmatpush2.msra.mxu0 0.0
    %3202 = vmatprep.subr.mxu0 0.0
    %3203 = vmatpush2.msra.mxu0 0.0
    %3204 = vmatprep.subr.mxu0 0.0
    %3205 = vmatpush2.msra.mxu0 0.0
    %3206 = vmatprep.subr.mxu0 0.0
    %3207 = vmatpush2.msra.mxu0 0.0
    %3208 = vmatprep.subr.mxu0 0.0
    %3209 = vmatpush2.msra.mxu0 0.0
    %3210 = vmatprep.subr.mxu0 0.0
    %3211 = vmatpush2.msra.mxu0 0.0
    %3212 = vmatprep.subr.mxu0 0.0
    %3213 = vmatpush2.msra.mxu0 0.0
    %3214 = vmatprep.subr.mxu0 0.0
    %3215 = vmatpush2.msra.mxu0 0.0
    %3216 = vmatprep.subr.mxu0 0.0
    %3217 = vmatpush2.msra.mxu0 0.0
    %3218 = vmatprep.subr.mxu0 0.0
    %3219 = vmatpush2.msra.mxu0 0.0
    %3220 = vmatprep.subr.mxu0 0.0
    %3221 = vmatpush2.msra.mxu0 0.0
    %3222 = vmatprep.subr.mxu0 0.0
    %3223 = vmatpush2.msra.mxu0 0.0
    %3224 = vmatprep.subr.mxu0 0.0
    %3225 = vmatpush2.msra.mxu0 0.0
    %3226 = vmatprep.mubr.f32.mxu0 0.0
    %3227 = vmatmul.mubr.f32.gmra.mxu0 %v3068
    %v3228 = vpop.f32.mrf.mxu0
    %v3229 = vadd.f32 0.0, %v3228
    %v3230 = vpop.f32.mrf.mxu0
    %3231 = vmatprep.mubr.f32.mxu0 0.0
    %3232 = vmatmul.mubr.f32.gmra.mxu0 %v3071
    %v3233 = vpop.f32.mrf.mxu0
    %v3234 = vadd.f32 0.0, %v3233
    %v3235 = vpop.f32.mrf.mxu0
    %3236 = vdwg.mxu0
    %v3238 = vsel %vm133, %v3150, 0
    %v3241 = vsel %vm133, %v3151, 0
    %3243 = vmatprep.subr.mxu0 0.0
    %3244 = vmatpush1.msra.mxu0 0.0
    %3245 = vmatprep.subr.mxu0 0.0
    %3246 = vmatpush1.msra.mxu0 0.0
    %3247 = vmatprep.subr.mxu0 0.0
    %3248 = vmatpush1.msra.mxu0 0.0
    %3249 = vmatprep.subr.mxu0 0.0
    %3250 = vmatpush1.msra.mxu0 0.0
    %3251 = vmatprep.subr.mxu0 0.0
    %3252 = vmatpush1.msra.mxu0 0.0
    %3253 = vmatprep.subr.mxu0 0.0
    %3254 = vmatpush1.msra.mxu0 0.0
    %3255 = vmatprep.subr.mxu0 0.0
    %3256 = vmatpush1.msra.mxu0 0.0
    %3257 = vmatprep.subr.mxu0 0.0
    %3258 = vmatpush1.msra.mxu0 0.0
    %3259 = vmatprep.subr.mxu0 0.0
    %3260 = vmatpush1.msra.mxu0 0.0
    %3261 = vmatprep.subr.mxu0 0.0
    %3262 = vmatpush1.msra.mxu0 0.0
    %3263 = vmatprep.subr.mxu0 0.0
    %3264 = vmatpush1.msra.mxu0 0.0
    %3265 = vmatprep.subr.mxu0 0.0
    %3266 = vmatpush1.msra.mxu0 0.0
    %3267 = vmatprep.subr.mxu0 0.0
    %3268 = vmatpush1.msra.mxu0 %v3156
    %3269 = vmatprep.subr.mxu0 0.0
    %3270 = vmatpush1.msra.mxu0 %v3155
    %3271 = vmatprep.subr.mxu0 0.0
    %3272 = vmatpush1.msra.mxu0 %v3154
    %3273 = vmatprep.subr.mxu0 0.0
    %3274 = vmatpush1.msra.mxu0 %v3153
    %3275 = vmatprep.subr.mxu0 0.0
    %3276 = vmatpush2.msra.mxu0 0.0
    %3277 = vmatprep.subr.mxu0 0.0
    %3278 = vmatpush2.msra.mxu0 0.0
    %3279 = vmatprep.subr.mxu0 0.0
    %3280 = vmatpush2.msra.mxu0 0.0
    %3281 = vmatprep.subr.mxu0 0.0
    %3282 = vmatpush2.msra.mxu0 0.0
    %3283 = vmatprep.subr.mxu0 0.0
    %3284 = vmatpush2.msra.mxu0 0.0
    %3285 = vmatprep.subr.mxu0 0.0
    %3286 = vmatpush2.msra.mxu0 0.0
    %3287 = vmatprep.subr.mxu0 0.0
    %3288 = vmatpush2.msra.mxu0 0.0
    %3289 = vmatprep.subr.mxu0 0.0
    %3290 = vmatpush2.msra.mxu0 0.0
    %3291 = vmatprep.subr.mxu0 0.0
    %3292 = vmatpush2.msra.mxu0 0.0
    %3293 = vmatprep.subr.mxu0 0.0
    %3294 = vmatpush2.msra.mxu0 0.0
    %3295 = vmatprep.subr.mxu0 0.0
    %3296 = vmatpush2.msra.mxu0 0.0
    %3297 = vmatprep.subr.mxu0 0.0
    %3298 = vmatpush2.msra.mxu0 0.0
    %3299 = vmatprep.subr.mxu0 0.0
    %3300 = vmatpush2.msra.mxu0 0.0
    %3301 = vmatprep.subr.mxu0 0.0
    %3302 = vmatpush2.msra.mxu0 0.0
    %3303 = vmatprep.subr.mxu0 0.0
    %3304 = vmatpush2.msra.mxu0 0.0
    %3305 = vmatprep.subr.mxu0 0.0
    %3306 = vmatpush2.msra.mxu0 0.0
    %3307 = vmatprep.mubr.f32.mxu0 0.0
    %3308 = vmatmul.mubr.f32.gmra.mxu0 %v3238
    %v3309 = vpop.f32.mrf.mxu0
    %v3310 = vadd.f32 %v3229, %v3309
    %v3311 = vpop.f32.mrf.mxu0
    %3312 = vmatprep.mubr.f32.mxu0 0.0
    %3313 = vmatmul.mubr.f32.gmra.mxu0 %v3241
    %v3314 = vpop.f32.mrf.mxu0
    %v3315 = vadd.f32 %v3234, %v3314
    %v3316 = vpop.f32.mrf.mxu0
    %3317 = vdwg.mxu0
    %s3318 = scalar_lea.vmem [#allocation10], 4
    %v3319 = vld [vmem:[%s3318] sm:$0x1]
    %v3321 = vlaneseq
    %v3322 = vshrl.u32 %v3321, 7
    %v3323 = vsub.s32 0, %v3322
    %v3324 = vrot.slane %v3319, %v3323
    %v3326 = vadd.f32 %v3310, %v3324
    %v3327 = vadd.f32 %v3315, %v3324
    %v3328 = vxor.u32 %v3326, 2147483648
    %v3329 = vxor.u32 %v3327, 2147483648
    %v3330 = vmul.f32 %v3328, 1.442695
    %v3331 = vpow.pop %v3330
    %v3332 = vmul.f32 %v3329, 1.442695
    %v3333 = vpow.pop %v3332
    %v3334 = vadd.f32 %v3331, 1.0
    %v3335 = vadd.f32 %v3333, 1.0
    %v3336 = vrcp.pop %v3334
    %v3337 = vmul.f32 1.0, %v3336
    %v3338 = vrcp.pop %v3335
    %v3339 = vmul.f32 1.0, %v3338
    %s3340 = scalar_lea.vmem [#allocation9], 160
    %v3341 = vld [vmem:[%s3340] sm:$0xff]
    %v3342 = vld [vmem:[%s3340 + $0x8] sm:$0xff]
    %v3343 = vld [vmem:[%s3340 + $0x10] sm:$0xff]
    %v3344 = vld [vmem:[%s3340 + $0x18] sm:$0xff]
    %s3345 = scalar_lea.vmem [#allocation9], 256
    %v3346 = vld [vmem:[%s3345] sm:$0xff]
    %v3347 = vld [vmem:[%s3345 + $0x8] sm:$0xff]
    %v3348 = vld [vmem:[%s3345 + $0x10] sm:$0xff]
    %v3349 = vld [vmem:[%s3345 + $0x18] sm:$0xff]
    %3350 = vmatprep.subr.mxu0 0.0
    %3351 = vmatpush1.msra.mxu0 0.0
    %3352 = vmatprep.subr.mxu0 0.0
    %3353 = vmatpush1.msra.mxu0 0.0
    %3354 = vmatprep.subr.mxu0 0.0
    %3355 = vmatpush1.msra.mxu0 0.0
    %3356 = vmatprep.subr.mxu0 0.0
    %3357 = vmatpush1.msra.mxu0 0.0
    %3358 = vmatprep.subr.mxu0 0.0
    %3359 = vmatpush1.msra.mxu0 0.0
    %3360 = vmatprep.subr.mxu0 0.0
    %3361 = vmatpush1.msra.mxu0 0.0
    %3362 = vmatprep.subr.mxu0 0.0
    %3363 = vmatpush1.msra.mxu0 0.0
    %3364 = vmatprep.subr.mxu0 0.0
    %3365 = vmatpush1.msra.mxu0 0.0
    %3366 = vmatprep.subr.mxu0 0.0
    %3367 = vmatpush1.msra.mxu0 0.0
    %3368 = vmatprep.subr.mxu0 0.0
    %3369 = vmatpush1.msra.mxu0 0.0
    %3370 = vmatprep.subr.mxu0 0.0
    %3371 = vmatpush1.msra.mxu0 0.0
    %3372 = vmatprep.subr.mxu0 0.0
    %3373 = vmatpush1.msra.mxu0 0.0
    %3374 = vmatprep.subr.mxu0 0.0
    %3375 = vmatpush1.msra.mxu0 %v3349
    %3376 = vmatprep.subr.mxu0 0.0
    %3377 = vmatpush1.msra.mxu0 %v3348
    %3378 = vmatprep.subr.mxu0 0.0
    %3379 = vmatpush1.msra.mxu0 %v3347
    %3380 = vmatprep.subr.mxu0 0.0
    %3381 = vmatpush1.msra.mxu0 %v3346
    %3382 = vmatprep.subr.mxu0 0.0
    %3383 = vmatpush2.msra.mxu0 0.0
    %3384 = vmatprep.subr.mxu0 0.0
    %3385 = vmatpush2.msra.mxu0 0.0
    %3386 = vmatprep.subr.mxu0 0.0
    %3387 = vmatpush2.msra.mxu0 0.0
    %3388 = vmatprep.subr.mxu0 0.0
    %3389 = vmatpush2.msra.mxu0 0.0
    %3390 = vmatprep.subr.mxu0 0.0
    %3391 = vmatpush2.msra.mxu0 0.0
    %3392 = vmatprep.subr.mxu0 0.0
    %3393 = vmatpush2.msra.mxu0 0.0
    %3394 = vmatprep.subr.mxu0 0.0
    %3395 = vmatpush2.msra.mxu0 0.0
    %3396 = vmatprep.subr.mxu0 0.0
    %3397 = vmatpush2.msra.mxu0 0.0
    %3398 = vmatprep.subr.mxu0 0.0
    %3399 = vmatpush2.msra.mxu0 0.0
    %3400 = vmatprep.subr.mxu0 0.0
    %3401 = vmatpush2.msra.mxu0 0.0
    %3402 = vmatprep.subr.mxu0 0.0
    %3403 = vmatpush2.msra.mxu0 0.0
    %3404 = vmatprep.subr.mxu0 0.0
    %3405 = vmatpush2.msra.mxu0 0.0
    %3406 = vmatprep.subr.mxu0 0.0
    %3407 = vmatpush2.msra.mxu0 0.0
    %3408 = vmatprep.subr.mxu0 0.0
    %3409 = vmatpush2.msra.mxu0 0.0
    %3410 = vmatprep.subr.mxu0 0.0
    %3411 = vmatpush2.msra.mxu0 0.0
    %3412 = vmatprep.subr.mxu0 0.0
    %3413 = vmatpush2.msra.mxu0 0.0
    %3414 = vmatprep.mubr.f32.mxu0 0.0
    %3415 = vmatmul.mubr.f32.gmra.mxu0 %v3068
    %v3416 = vpop.f32.mrf.mxu0
    %v3417 = vadd.f32 0.0, %v3416
    %v3418 = vpop.f32.mrf.mxu0
    %3419 = vmatprep.mubr.f32.mxu0 0.0
    %3420 = vmatmul.mubr.f32.gmra.mxu0 %v3071
    %v3421 = vpop.f32.mrf.mxu0
    %v3422 = vadd.f32 0.0, %v3421
    %v3423 = vpop.f32.mrf.mxu0
    %3424 = vdwg.mxu0
    %3425 = vmatprep.subr.mxu0 0.0
    %3426 = vmatpush1.msra.mxu0 0.0
    %3427 = vmatprep.subr.mxu0 0.0
    %3428 = vmatpush1.msra.mxu0 0.0
    %3429 = vmatprep.subr.mxu0 0.0
    %3430 = vmatpush1.msra.mxu0 0.0
    %3431 = vmatprep.subr.mxu0 0.0
    %3432 = vmatpush1.msra.mxu0 0.0
    %3433 = vmatprep.subr.mxu0 0.0
    %3434 = vmatpush1.msra.mxu0 0.0
    %3435 = vmatprep.subr.mxu0 0.0
    %3436 = vmatpush1.msra.mxu0 0.0
    %3437 = vmatprep.subr.mxu0 0.0
    %3438 = vmatpush1.msra.mxu0 0.0
    %3439 = vmatprep.subr.mxu0 0.0
    %3440 = vmatpush1.msra.mxu0 0.0
    %3441 = vmatprep.subr.mxu0 0.0
    %3442 = vmatpush1.msra.mxu0 0.0
    %3443 = vmatprep.subr.mxu0 0.0
    %3444 = vmatpush1.msra.mxu0 0.0
    %3445 = vmatprep.subr.mxu0 0.0
    %3446 = vmatpush1.msra.mxu0 0.0
    %3447 = vmatprep.subr.mxu0 0.0
    %3448 = vmatpush1.msra.mxu0 0.0
    %3449 = vmatprep.subr.mxu0 0.0
    %3450 = vmatpush1.msra.mxu0 %v3344
    %3451 = vmatprep.subr.mxu0 0.0
    %3452 = vmatpush1.msra.mxu0 %v3343
    %3453 = vmatprep.subr.mxu0 0.0
    %3454 = vmatpush1.msra.mxu0 %v3342
    %3455 = vmatprep.subr.mxu0 0.0
    %3456 = vmatpush1.msra.mxu0 %v3341
    %3457 = vmatprep.subr.mxu0 0.0
    %3458 = vmatpush2.msra.mxu0 0.0
    %3459 = vmatprep.subr.mxu0 0.0
    %3460 = vmatpush2.msra.mxu0 0.0
    %3461 = vmatprep.subr.mxu0 0.0
    %3462 = vmatpush2.msra.mxu0 0.0
    %3463 = vmatprep.subr.mxu0 0.0
    %3464 = vmatpush2.msra.mxu0 0.0
    %3465 = vmatprep.subr.mxu0 0.0
    %3466 = vmatpush2.msra.mxu0 0.0
    %3467 = vmatprep.subr.mxu0 0.0
    %3468 = vmatpush2.msra.mxu0 0.0
    %3469 = vmatprep.subr.mxu0 0.0
    %3470 = vmatpush2.msra.mxu0 0.0
    %3471 = vmatprep.subr.mxu0 0.0
    %3472 = vmatpush2.msra.mxu0 0.0
    %3473 = vmatprep.subr.mxu0 0.0
    %3474 = vmatpush2.msra.mxu0 0.0
    %3475 = vmatprep.subr.mxu0 0.0
    %3476 = vmatpush2.msra.mxu0 0.0
    %3477 = vmatprep.subr.mxu0 0.0
    %3478 = vmatpush2.msra.mxu0 0.0
    %3479 = vmatprep.subr.mxu0 0.0
    %3480 = vmatpush2.msra.mxu0 0.0
    %3481 = vmatprep.subr.mxu0 0.0
    %3482 = vmatpush2.msra.mxu0 0.0
    %3483 = vmatprep.subr.mxu0 0.0
    %3484 = vmatpush2.msra.mxu0 0.0
    %3485 = vmatprep.subr.mxu0 0.0
    %3486 = vmatpush2.msra.mxu0 0.0
    %3487 = vmatprep.subr.mxu0 0.0
    %3488 = vmatpush2.msra.mxu0 0.0
    %3489 = vmatprep.mubr.f32.mxu0 0.0
    %3490 = vmatmul.mubr.f32.gmra.mxu0 %v3238
    %v3491 = vpop.f32.mrf.mxu0
    %v3492 = vadd.f32 %v3417, %v3491
    %v3493 = vpop.f32.mrf.mxu0
    %3494 = vmatprep.mubr.f32.mxu0 0.0
    %3495 = vmatmul.mubr.f32.gmra.mxu0 %v3241
    %v3496 = vpop.f32.mrf.mxu0
    %v3497 = vadd.f32 %v3422, %v3496
    %v3498 = vpop.f32.mrf.mxu0
    %3499 = vdwg.mxu0
    %s3500 = scalar_lea.vmem [#allocation10], 5
    %v3501 = vld [vmem:[%s3500] sm:$0x1]
    %v3503 = vlaneseq
    %v3504 = vshrl.u32 %v3503, 7
    %v3505 = vsub.s32 0, %v3504
    %v3506 = vrot.slane %v3501, %v3505
    %v3508 = vadd.f32 %v3492, %v3506
    %v3509 = vadd.f32 %v3497, %v3506
    %v3510 = vxor.u32 %v3508, 2147483648
    %v3511 = vxor.u32 %v3509, 2147483648
    %v3512 = vmul.f32 %v3510, 1.442695
    %v3513 = vpow.pop %v3512
    %v3514 = vmul.f32 %v3511, 1.442695
    %v3515 = vpow.pop %v3514
    %v3516 = vadd.f32 %v3513, 1.0
    %v3517 = vadd.f32 %v3515, 1.0
    %v3518 = vrcp.pop %v3516
    %v3519 = vmul.f32 1.0, %v3518
    %v3520 = vrcp.pop %v3517
    %v3521 = vmul.f32 1.0, %v3520
    %s3522 = scalar_lea.vmem [#allocation9], 192
    %v3523 = vld [vmem:[%s3522] sm:$0xff]
    %v3524 = vld [vmem:[%s3522 + $0x8] sm:$0xff]
    %v3525 = vld [vmem:[%s3522 + $0x10] sm:$0xff]
    %v3526 = vld [vmem:[%s3522 + $0x18] sm:$0xff]
    %s3527 = scalar_lea.vmem [#allocation10], 6
    %v3528 = vld [vmem:[%s3527] sm:$0x1]
    %v3530 = vlaneseq
    %v3531 = vshrl.u32 %v3530, 7
    %v3532 = vsub.s32 0, %v3531
    %v3533 = vrot.slane %v3528, %v3532
    %3535 = vmatprep.subr.mxu0 0.0
    %3536 = vmatpush1.msra.mxu0 0.0
    %3537 = vmatprep.subr.mxu0 0.0
    %3538 = vmatpush1.msra.mxu0 0.0
    %3539 = vmatprep.subr.mxu0 0.0
    %3540 = vmatpush1.msra.mxu0 0.0
    %3541 = vmatprep.subr.mxu0 0.0
    %3542 = vmatpush1.msra.mxu0 0.0
    %3543 = vmatprep.subr.mxu0 0.0
    %3544 = vmatpush1.msra.mxu0 0.0
    %3545 = vmatprep.subr.mxu0 0.0
    %3546 = vmatpush1.msra.mxu0 0.0
    %3547 = vmatprep.subr.mxu0 0.0
    %3548 = vmatpush1.msra.mxu0 0.0
    %3549 = vmatprep.subr.mxu0 0.0
    %3550 = vmatpush1.msra.mxu0 0.0
    %3551 = vmatprep.subr.mxu0 0.0
    %3552 = vmatpush1.msra.mxu0 0.0
    %3553 = vmatprep.subr.mxu0 0.0
    %3554 = vmatpush1.msra.mxu0 0.0
    %3555 = vmatprep.subr.mxu0 0.0
    %3556 = vmatpush1.msra.mxu0 0.0
    %3557 = vmatprep.subr.mxu0 0.0
    %3558 = vmatpush1.msra.mxu0 0.0
    %3559 = vmatprep.subr.mxu0 0.0
    %3560 = vmatpush1.msra.mxu0 %v3526
    %3561 = vmatprep.subr.mxu0 0.0
    %3562 = vmatpush1.msra.mxu0 %v3525
    %3563 = vmatprep.subr.mxu0 0.0
    %3564 = vmatpush1.msra.mxu0 %v3524
    %3565 = vmatprep.subr.mxu0 0.0
    %3566 = vmatpush1.msra.mxu0 %v3523
    %3567 = vmatprep.subr.mxu0 0.0
    %3568 = vmatpush2.msra.mxu0 0.0
    %3569 = vmatprep.subr.mxu0 0.0
    %3570 = vmatpush2.msra.mxu0 0.0
    %3571 = vmatprep.subr.mxu0 0.0
    %3572 = vmatpush2.msra.mxu0 0.0
    %3573 = vmatprep.subr.mxu0 0.0
    %3574 = vmatpush2.msra.mxu0 0.0
    %3575 = vmatprep.subr.mxu0 0.0
    %3576 = vmatpush2.msra.mxu0 0.0
    %3577 = vmatprep.subr.mxu0 0.0
    %3578 = vmatpush2.msra.mxu0 0.0
    %3579 = vmatprep.subr.mxu0 0.0
    %3580 = vmatpush2.msra.mxu0 0.0
    %3581 = vmatprep.subr.mxu0 0.0
    %3582 = vmatpush2.msra.mxu0 0.0
    %3583 = vmatprep.subr.mxu0 0.0
    %3584 = vmatpush2.msra.mxu0 0.0
    %3585 = vmatprep.subr.mxu0 0.0
    %3586 = vmatpush2.msra.mxu0 0.0
    %3587 = vmatprep.subr.mxu0 0.0
    %3588 = vmatpush2.msra.mxu0 0.0
    %3589 = vmatprep.subr.mxu0 0.0
    %3590 = vmatpush2.msra.mxu0 0.0
    %3591 = vmatprep.subr.mxu0 0.0
    %3592 = vmatpush2.msra.mxu0 0.0
    %3593 = vmatprep.subr.mxu0 0.0
    %3594 = vmatpush2.msra.mxu0 0.0
    %3595 = vmatprep.subr.mxu0 0.0
    %3596 = vmatpush2.msra.mxu0 0.0
    %3597 = vmatprep.subr.mxu0 0.0
    %3598 = vmatpush2.msra.mxu0 0.0
    %3599 = vmatprep.mubr.f32.mxu0 0.0
    %3600 = vmatmul.mubr.f32.gmra.mxu0 %v3238
    %v3601 = vpop.f32.mrf.mxu0
    %v3602 = vadd.f32 %v3533, %v3601
    %v3603 = vpop.f32.mrf.mxu0
    %3604 = vmatprep.mubr.f32.mxu0 0.0
    %3605 = vmatmul.mubr.f32.gmra.mxu0 %v3241
    %v3606 = vpop.f32.mrf.mxu0
    %v3607 = vadd.f32 %v3533, %v3606
    %v3608 = vpop.f32.mrf.mxu0
    %3609 = vdwg.mxu0
    %s3610 = scalar_lea.vmem [#allocation9], 288
    %v3611 = vld [vmem:[%s3610] sm:$0xff]
    %v3612 = vld [vmem:[%s3610 + $0x8] sm:$0xff]
    %v3613 = vld [vmem:[%s3610 + $0x10] sm:$0xff]
    %v3614 = vld [vmem:[%s3610 + $0x18] sm:$0xff]
    %s3615 = scalar_lea.vmem [#allocation10], 7
    %v3616 = vld [vmem:[%s3615] sm:$0x1]
    %v3618 = vlaneseq
    %v3619 = vshrl.u32 %v3618, 7
    %v3620 = vsub.s32 0, %v3619
    %v3621 = vrot.slane %v3616, %v3620
    %3623 = vmatprep.subr.mxu0 0.0
    %3624 = vmatpush1.msra.mxu0 0.0
    %3625 = vmatprep.subr.mxu0 0.0
    %3626 = vmatpush1.msra.mxu0 0.0
    %3627 = vmatprep.subr.mxu0 0.0
    %3628 = vmatpush1.msra.mxu0 0.0
    %3629 = vmatprep.subr.mxu0 0.0
    %3630 = vmatpush1.msra.mxu0 0.0
    %3631 = vmatprep.subr.mxu0 0.0
    %3632 = vmatpush1.msra.mxu0 0.0
    %3633 = vmatprep.subr.mxu0 0.0
    %3634 = vmatpush1.msra.mxu0 0.0
    %3635 = vmatprep.subr.mxu0 0.0
    %3636 = vmatpush1.msra.mxu0 0.0
    %3637 = vmatprep.subr.mxu0 0.0
    %3638 = vmatpush1.msra.mxu0 0.0
    %3639 = vmatprep.subr.mxu0 0.0
    %3640 = vmatpush1.msra.mxu0 0.0
    %3641 = vmatprep.subr.mxu0 0.0
    %3642 = vmatpush1.msra.mxu0 0.0
    %3643 = vmatprep.subr.mxu0 0.0
    %3644 = vmatpush1.msra.mxu0 0.0
    %3645 = vmatprep.subr.mxu0 0.0
    %3646 = vmatpush1.msra.mxu0 0.0
    %3647 = vmatprep.subr.mxu0 0.0
    %3648 = vmatpush1.msra.mxu0 %v3614
    %3649 = vmatprep.subr.mxu0 0.0
    %3650 = vmatpush1.msra.mxu0 %v3613
    %3651 = vmatprep.subr.mxu0 0.0
    %3652 = vmatpush1.msra.mxu0 %v3612
    %3653 = vmatprep.subr.mxu0 0.0
    %3654 = vmatpush1.msra.mxu0 %v3611
    %3655 = vmatprep.subr.mxu0 0.0
    %3656 = vmatpush2.msra.mxu0 0.0
    %3657 = vmatprep.subr.mxu0 0.0
    %3658 = vmatpush2.msra.mxu0 0.0
    %3659 = vmatprep.subr.mxu0 0.0
    %3660 = vmatpush2.msra.mxu0 0.0
    %3661 = vmatprep.subr.mxu0 0.0
    %3662 = vmatpush2.msra.mxu0 0.0
    %3663 = vmatprep.subr.mxu0 0.0
    %3664 = vmatpush2.msra.mxu0 0.0
    %3665 = vmatprep.subr.mxu0 0.0
    %3666 = vmatpush2.msra.mxu0 0.0
    %3667 = vmatprep.subr.mxu0 0.0
    %3668 = vmatpush2.msra.mxu0 0.0
    %3669 = vmatprep.subr.mxu0 0.0
    %3670 = vmatpush2.msra.mxu0 0.0
    %3671 = vmatprep.subr.mxu0 0.0
    %3672 = vmatpush2.msra.mxu0 0.0
    %3673 = vmatprep.subr.mxu0 0.0
    %3674 = vmatpush2.msra.mxu0 0.0
    %3675 = vmatprep.subr.mxu0 0.0
    %3676 = vmatpush2.msra.mxu0 0.0
    %3677 = vmatprep.subr.mxu0 0.0
    %3678 = vmatpush2.msra.mxu0 0.0
    %3679 = vmatprep.subr.mxu0 0.0
    %3680 = vmatpush2.msra.mxu0 0.0
    %3681 = vmatprep.subr.mxu0 0.0
    %3682 = vmatpush2.msra.mxu0 0.0
    %3683 = vmatprep.subr.mxu0 0.0
    %3684 = vmatpush2.msra.mxu0 0.0
    %3685 = vmatprep.subr.mxu0 0.0
    %3686 = vmatpush2.msra.mxu0 0.0
    %3687 = vmatprep.mubr.f32.mxu0 0.0
    %3688 = vmatmul.mubr.f32.gmra.mxu0 %v3068
    %v3689 = vpop.f32.mrf.mxu0
    %v3690 = vadd.f32 %v3621, %v3689
    %v3691 = vpop.f32.mrf.mxu0
    %3692 = vmatprep.mubr.f32.mxu0 0.0
    %3693 = vmatmul.mubr.f32.gmra.mxu0 %v3071
    %v3694 = vpop.f32.mrf.mxu0
    %v3695 = vadd.f32 %v3621, %v3694
    %v3696 = vpop.f32.mrf.mxu0
    %3697 = vdwg.mxu0
    %v3698 = vmul.f32 %v3337, %v3690
    %v3699 = vmul.f32 %v3339, %v3695
    %v3700 = vadd.f32 %v3602, %v3698
    %v3701 = vadd.f32 %v3607, %v3699
    %v3702 = vtanh.pop %v3700
    %v3703 = vtanh.pop %v3701
    %v3704 = vsub.f32 1.0, %v3519
    %v3705 = vsub.f32 1.0, %v3521
    %v3706 = vmul.f32 %v3704, %v3702
    %v3707 = vmul.f32 %v3705, %v3703
    %v3708 = vmul.f32 %v3519, %v407
    %v3709 = vmul.f32 %v3521, %v408
    %v3710 = vadd.f32 %v3706, %v3708
    %v3711 = vadd.f32 %v3707, %v3709
    %3712 = vmatprep.subr.mxu0 0.0
    %3713 = vmatpush1.msra.mxu0 0.0
    %3714 = vmatprep.subr.mxu0 0.0
    %3715 = vmatpush1.msra.mxu0 0.0
    %3716 = vmatprep.subr.mxu0 0.0
    %3717 = vmatpush1.msra.mxu0 0.0
    %3718 = vmatprep.subr.mxu0 0.0
    %3719 = vmatpush1.msra.mxu0 0.0
    %3720 = vmatprep.subr.mxu0 0.0
    %3721 = vmatpush1.msra.mxu0 0.0
    %3722 = vmatprep.subr.mxu0 0.0
    %3723 = vmatpush1.msra.mxu0 0.0
    %3724 = vmatprep.subr.mxu0 0.0
    %3725 = vmatpush1.msra.mxu0 0.0
    %3726 = vmatprep.subr.mxu0 0.0
    %3727 = vmatpush1.msra.mxu0 0.0
    %3728 = vmatprep.subr.mxu0 0.0
    %3729 = vmatpush1.msra.mxu0 0.0
    %3730 = vmatprep.subr.mxu0 0.0
    %3731 = vmatpush1.msra.mxu0 0.0
    %3732 = vmatprep.subr.mxu0 0.0
    %3733 = vmatpush1.msra.mxu0 0.0
    %3734 = vmatprep.subr.mxu0 0.0
    %3735 = vmatpush1.msra.mxu0 0.0
    %3736 = vmatprep.subr.mxu0 0.0
    %3737 = vmatpush1.msra.mxu0 0.0
    %3738 = vmatprep.subr.mxu0 0.0
    %3739 = vmatpush1.msra.mxu0 0.0
    %3740 = vmatprep.subr.mxu0 0.0
    %3741 = vmatpush1.msra.mxu0 %v3711
    %3742 = vmatprep.subr.mxu0 0.0
    %3743 = vmatpush1.msra.mxu0 %v3710
    %3744 = vmatprep.subr.mxu0 0.0
    %3745 = vmatpush2.msra.mxu0 0.0
    %3746 = vmatprep.subr.mxu0 0.0
    %3747 = vmatpush2.msra.mxu0 0.0
    %3748 = vmatprep.subr.mxu0 0.0
    %3749 = vmatpush2.msra.mxu0 0.0
    %3750 = vmatprep.subr.mxu0 0.0
    %3751 = vmatpush2.msra.mxu0 0.0
    %3752 = vmatprep.subr.mxu0 0.0
    %3753 = vmatpush2.msra.mxu0 0.0
    %3754 = vmatprep.subr.mxu0 0.0
    %3755 = vmatpush2.msra.mxu0 0.0
    %3756 = vmatprep.subr.mxu0 0.0
    %3757 = vmatpush2.msra.mxu0 0.0
    %3758 = vmatprep.subr.mxu0 0.0
    %3759 = vmatpush2.msra.mxu0 0.0
    %3760 = vmatprep.subr.mxu0 0.0
    %3761 = vmatpush2.msra.mxu0 0.0
    %3762 = vmatprep.subr.mxu0 0.0
    %3763 = vmatpush2.msra.mxu0 0.0
    %3764 = vmatprep.subr.mxu0 0.0
    %3765 = vmatpush2.msra.mxu0 0.0
    %3766 = vmatprep.subr.mxu0 0.0
    %3767 = vmatpush2.msra.mxu0 0.0
    %3768 = vmatprep.subr.mxu0 0.0
    %3769 = vmatpush2.msra.mxu0 0.0
    %3770 = vmatprep.subr.mxu0 0.0
    %3771 = vmatpush2.msra.mxu0 0.0
    %3772 = vmatprep.subr.mxu0 0.0
    %3773 = vmatpush2.msra.mxu0 0.0
    %3774 = vmatprep.subr.mxu0 0.0
    %3775 = vmatpush2.msra.mxu0 0.0
    %3776 = vmatprep.mubr.f32.mxu0 0.0
    %3777 = vmatmul.mubr.f32.gmra.mxu0 %v2132
    %v3778 = vpop.f32.mrf.mxu0
    %v3779 = vadd.f32 0.0, %v3778
    %v3780 = vpop.f32.mrf.mxu0
    %3781 = vmatprep.mubr.f32.mxu0 0.0
    %3782 = vmatmul.mubr.f32.gmra.mxu0 %v2135
    %v3783 = vpop.f32.mrf.mxu0
    %v3784 = vadd.f32 0.0, %v3783
    %v3785 = vpop.f32.mrf.mxu0
    %3786 = vmatprep.mubr.f32.mxu0 0.0
    %3787 = vmatmul.mubr.f32.gmra.mxu0 %v2138
    %v3788 = vpop.f32.mrf.mxu0
    %v3789 = vadd.f32 0.0, %v3788
    %v3790 = vpop.f32.mrf.mxu0
    %3791 = vmatprep.mubr.f32.mxu0 0.0
    %3792 = vmatmul.mubr.f32.gmra.mxu0 %v2141
    %v3793 = vpop.f32.mrf.mxu0
    %v3794 = vadd.f32 0.0, %v3793
    %v3795 = vpop.f32.mrf.mxu0
    %3796 = vdwg.mxu0
    %v3798 = vsel %vm133, %v3779, 0
    %v3801 = vsel %vm133, %v3784, 0
    %v3804 = vsel %vm133, %v3789, 0
    %v3807 = vsel %vm133, %v3794, 0
    %3809 = vmatprep.subr.mxu0 0.0
    %3810 = vmatpush1.msra.mxu0 0.0
    %3811 = vmatprep.subr.mxu0 0.0
    %3812 = vmatpush1.msra.mxu0 0.0
    %3813 = vmatprep.subr.mxu0 0.0
    %3814 = vmatpush1.msra.mxu0 0.0
    %3815 = vmatprep.subr.mxu0 0.0
    %3816 = vmatpush1.msra.mxu0 0.0
    %3817 = vmatprep.subr.mxu0 0.0
    %3818 = vmatpush1.msra.mxu0 0.0
    %3819 = vmatprep.subr.mxu0 0.0
    %3820 = vmatpush1.msra.mxu0 0.0
    %3821 = vmatprep.subr.mxu0 0.0
    %3822 = vmatpush1.msra.mxu0 0.0
    %3823 = vmatprep.subr.mxu0 0.0
    %3824 = vmatpush1.msra.mxu0 0.0
    %3825 = vmatprep.subr.mxu0 0.0
    %3826 = vmatpush1.msra.mxu0 0.0
    %3827 = vmatprep.subr.mxu0 0.0
    %3828 = vmatpush1.msra.mxu0 0.0
    %3829 = vmatprep.subr.mxu0 0.0
    %3830 = vmatpush1.msra.mxu0 0.0
    %3831 = vmatprep.subr.mxu0 0.0
    %3832 = vmatpush1.msra.mxu0 0.0
    %3833 = vmatprep.subr.mxu0 %v1995
    %3834 = vmatpush1.msra.mxu0 %v1994
    %3835 = vmatprep.subr.mxu0 %v1987
    %3836 = vmatpush1.msra.mxu0 %v1986
    %3837 = vmatprep.subr.mxu0 %v1979
    %3838 = vmatpush1.msra.mxu0 %v1978
    %3839 = vmatprep.subr.mxu0 %v1971
    %3840 = vmatpush1.msra.mxu0 %v1970
    %3841 = vmatprep.subr.mxu0 0.0
    %3842 = vmatpush2.msra.mxu0 0.0
    %3843 = vmatprep.subr.mxu0 0.0
    %3844 = vmatpush2.msra.mxu0 0.0
    %3845 = vmatprep.subr.mxu0 0.0
    %3846 = vmatpush2.msra.mxu0 0.0
    %3847 = vmatprep.subr.mxu0 0.0
    %3848 = vmatpush2.msra.mxu0 0.0
    %3849 = vmatprep.subr.mxu0 0.0
    %3850 = vmatpush2.msra.mxu0 0.0
    %3851 = vmatprep.subr.mxu0 0.0
    %3852 = vmatpush2.msra.mxu0 0.0
    %3853 = vmatprep.subr.mxu0 0.0
    %3854 = vmatpush2.msra.mxu0 0.0
    %3855 = vmatprep.subr.mxu0 0.0
    %3856 = vmatpush2.msra.mxu0 0.0
    %3857 = vmatprep.subr.mxu0 0.0
    %3858 = vmatpush2.msra.mxu0 0.0
    %3859 = vmatprep.subr.mxu0 0.0
    %3860 = vmatpush2.msra.mxu0 0.0
    %3861 = vmatprep.subr.mxu0 0.0
    %3862 = vmatpush2.msra.mxu0 0.0
    %3863 = vmatprep.subr.mxu0 0.0
    %3864 = vmatpush2.msra.mxu0 0.0
    %3865 = vmatprep.subr.mxu0 0.0
    %3866 = vmatpush2.msra.mxu0 0.0
    %3867 = vmatprep.subr.mxu0 0.0
    %3868 = vmatpush2.msra.mxu0 0.0
    %3869 = vmatprep.subr.mxu0 0.0
    %3870 = vmatpush2.msra.mxu0 0.0
    %3871 = vmatprep.subr.mxu0 0.0
    %3872 = vmatpush2.msra.mxu0 0.0
    %3873 = vmatprep.mubr.f32.mxu0 0.0
    %3874 = vmatmul.mubr.f32.gmra.mxu0 %v3798
    %v3875 = vpop.f32.mrf.mxu0
    %v3876 = vadd.f32 0.0, %v3875
    %v3877 = vpop.f32.mrf.mxu0
    %v3878 = vadd.f32 0.0, %v3877
    %3879 = vmatprep.mubr.f32.mxu0 0.0
    %3880 = vmatmul.mubr.f32.gmra.mxu0 %v3801
    %v3881 = vpop.f32.mrf.mxu0
    %v3882 = vadd.f32 0.0, %v3881
    %v3883 = vpop.f32.mrf.mxu0
    %v3884 = vadd.f32 0.0, %v3883
    %3885 = vmatprep.mubr.f32.mxu0 0.0
    %3886 = vmatmul.mubr.f32.gmra.mxu0 %v3804
    %v3887 = vpop.f32.mrf.mxu0
    %v3888 = vadd.f32 0.0, %v3887
    %v3889 = vpop.f32.mrf.mxu0
    %v3890 = vadd.f32 0.0, %v3889
    %3891 = vmatprep.mubr.f32.mxu0 0.0
    %3892 = vmatmul.mubr.f32.gmra.mxu0 %v3807
    %v3893 = vpop.f32.mrf.mxu0
    %v3894 = vadd.f32 0.0, %v3893
    %v3895 = vpop.f32.mrf.mxu0
    %v3896 = vadd.f32 0.0, %v3895
    %3897 = vdwg.mxu0
    %3898 = vmatprep.subr.mxu0 0.0
    %3899 = vmatpush1.msra.mxu0 0.0
    %3900 = vmatprep.subr.mxu0 0.0
    %3901 = vmatpush1.msra.mxu0 0.0
    %3902 = vmatprep.subr.mxu0 0.0
    %3903 = vmatpush1.msra.mxu0 0.0
    %3904 = vmatprep.subr.mxu0 0.0
    %3905 = vmatpush1.msra.mxu0 0.0
    %3906 = vmatprep.subr.mxu0 0.0
    %3907 = vmatpush1.msra.mxu0 0.0
    %3908 = vmatprep.subr.mxu0 0.0
    %3909 = vmatpush1.msra.mxu0 0.0
    %3910 = vmatprep.subr.mxu0 0.0
    %3911 = vmatpush1.msra.mxu0 0.0
    %3912 = vmatprep.subr.mxu0 0.0
    %3913 = vmatpush1.msra.mxu0 0.0
    %3914 = vmatprep.subr.mxu0 0.0
    %3915 = vmatpush1.msra.mxu0 0.0
    %3916 = vmatprep.subr.mxu0 0.0
    %3917 = vmatpush1.msra.mxu0 0.0
    %3918 = vmatprep.subr.mxu0 0.0
    %3919 = vmatpush1.msra.mxu0 0.0
    %3920 = vmatprep.subr.mxu0 0.0
    %3921 = vmatpush1.msra.mxu0 0.0
    %3922 = vmatprep.subr.mxu0 %v1997
    %3923 = vmatpush1.msra.mxu0 %v1996
    %3924 = vmatprep.subr.mxu0 %v1989
    %3925 = vmatpush1.msra.mxu0 %v1988
    %3926 = vmatprep.subr.mxu0 %v1981
    %3927 = vmatpush1.msra.mxu0 %v1980
    %3928 = vmatprep.subr.mxu0 %v1973
    %3929 = vmatpush1.msra.mxu0 %v1972
    %3930 = vmatprep.subr.mxu0 0.0
    %3931 = vmatpush2.msra.mxu0 0.0
    %3932 = vmatprep.subr.mxu0 0.0
    %3933 = vmatpush2.msra.mxu0 0.0
    %3934 = vmatprep.subr.mxu0 0.0
    %3935 = vmatpush2.msra.mxu0 0.0
    %3936 = vmatprep.subr.mxu0 0.0
    %3937 = vmatpush2.msra.mxu0 0.0
    %3938 = vmatprep.subr.mxu0 0.0
    %3939 = vmatpush2.msra.mxu0 0.0
    %3940 = vmatprep.subr.mxu0 0.0
    %3941 = vmatpush2.msra.mxu0 0.0
    %3942 = vmatprep.subr.mxu0 0.0
    %3943 = vmatpush2.msra.mxu0 0.0
    %3944 = vmatprep.subr.mxu0 0.0
    %3945 = vmatpush2.msra.mxu0 0.0
    %3946 = vmatprep.subr.mxu0 0.0
    %3947 = vmatpush2.msra.mxu0 0.0
    %3948 = vmatprep.subr.mxu0 0.0
    %3949 = vmatpush2.msra.mxu0 0.0
    %3950 = vmatprep.subr.mxu0 0.0
    %3951 = vmatpush2.msra.mxu0 0.0
    %3952 = vmatprep.subr.mxu0 0.0
    %3953 = vmatpush2.msra.mxu0 0.0
    %3954 = vmatprep.subr.mxu0 0.0
    %3955 = vmatpush2.msra.mxu0 0.0
    %3956 = vmatprep.subr.mxu0 0.0
    %3957 = vmatpush2.msra.mxu0 0.0
    %3958 = vmatprep.subr.mxu0 0.0
    %3959 = vmatpush2.msra.mxu0 0.0
    %3960 = vmatprep.subr.mxu0 0.0
    %3961 = vmatpush2.msra.mxu0 0.0
    %3962 = vmatprep.mubr.f32.mxu0 0.0
    %3963 = vmatmul.mubr.f32.gmra.mxu0 %v3798
    %v3964 = vpop.f32.mrf.mxu0
    %v3965 = vadd.f32 0.0, %v3964
    %v3966 = vpop.f32.mrf.mxu0
    %v3967 = vadd.f32 0.0, %v3966
    %3968 = vmatprep.mubr.f32.mxu0 0.0
    %3969 = vmatmul.mubr.f32.gmra.mxu0 %v3801
    %v3970 = vpop.f32.mrf.mxu0
    %v3971 = vadd.f32 0.0, %v3970
    %v3972 = vpop.f32.mrf.mxu0
    %v3973 = vadd.f32 0.0, %v3972
    %3974 = vmatprep.mubr.f32.mxu0 0.0
    %3975 = vmatmul.mubr.f32.gmra.mxu0 %v3804
    %v3976 = vpop.f32.mrf.mxu0
    %v3977 = vadd.f32 0.0, %v3976
    %v3978 = vpop.f32.mrf.mxu0
    %v3979 = vadd.f32 0.0, %v3978
    %3980 = vmatprep.mubr.f32.mxu0 0.0
    %3981 = vmatmul.mubr.f32.gmra.mxu0 %v3807
    %v3982 = vpop.f32.mrf.mxu0
    %v3983 = vadd.f32 0.0, %v3982
    %v3984 = vpop.f32.mrf.mxu0
    %v3985 = vadd.f32 0.0, %v3984
    %3986 = vdwg.mxu0
    %3987 = vmatprep.subr.mxu0 0.0
    %3988 = vmatpush1.msra.mxu0 0.0
    %3989 = vmatprep.subr.mxu0 0.0
    %3990 = vmatpush1.msra.mxu0 0.0
    %3991 = vmatprep.subr.mxu0 0.0
    %3992 = vmatpush1.msra.mxu0 0.0
    %3993 = vmatprep.subr.mxu0 0.0
    %3994 = vmatpush1.msra.mxu0 0.0
    %3995 = vmatprep.subr.mxu0 0.0
    %3996 = vmatpush1.msra.mxu0 0.0
    %3997 = vmatprep.subr.mxu0 0.0
    %3998 = vmatpush1.msra.mxu0 0.0
    %3999 = vmatprep.subr.mxu0 0.0
    %4000 = vmatpush1.msra.mxu0 0.0
    %4001 = vmatprep.subr.mxu0 0.0
    %4002 = vmatpush1.msra.mxu0 0.0
    %4003 = vmatprep.subr.mxu0 0.0
    %4004 = vmatpush1.msra.mxu0 0.0
    %4005 = vmatprep.subr.mxu0 0.0
    %4006 = vmatpush1.msra.mxu0 0.0
    %4007 = vmatprep.subr.mxu0 0.0
    %4008 = vmatpush1.msra.mxu0 0.0
    %4009 = vmatprep.subr.mxu0 0.0
    %4010 = vmatpush1.msra.mxu0 0.0
    %4011 = vmatprep.subr.mxu0 %v1999
    %4012 = vmatpush1.msra.mxu0 %v1998
    %4013 = vmatprep.subr.mxu0 %v1991
    %4014 = vmatpush1.msra.mxu0 %v1990
    %4015 = vmatprep.subr.mxu0 %v1983
    %4016 = vmatpush1.msra.mxu0 %v1982
    %4017 = vmatprep.subr.mxu0 %v1975
    %4018 = vmatpush1.msra.mxu0 %v1974
    %4019 = vmatprep.subr.mxu0 0.0
    %4020 = vmatpush2.msra.mxu0 0.0
    %4021 = vmatprep.subr.mxu0 0.0
    %4022 = vmatpush2.msra.mxu0 0.0
    %4023 = vmatprep.subr.mxu0 0.0
    %4024 = vmatpush2.msra.mxu0 0.0
    %4025 = vmatprep.subr.mxu0 0.0
    %4026 = vmatpush2.msra.mxu0 0.0
    %4027 = vmatprep.subr.mxu0 0.0
    %4028 = vmatpush2.msra.mxu0 0.0
    %4029 = vmatprep.subr.mxu0 0.0
    %4030 = vmatpush2.msra.mxu0 0.0
    %4031 = vmatprep.subr.mxu0 0.0
    %4032 = vmatpush2.msra.mxu0 0.0
    %4033 = vmatprep.subr.mxu0 0.0
    %4034 = vmatpush2.msra.mxu0 0.0
    %4035 = vmatprep.subr.mxu0 0.0
    %4036 = vmatpush2.msra.mxu0 0.0
    %4037 = vmatprep.subr.mxu0 0.0
    %4038 = vmatpush2.msra.mxu0 0.0
    %4039 = vmatprep.subr.mxu0 0.0
    %4040 = vmatpush2.msra.mxu0 0.0
    %4041 = vmatprep.subr.mxu0 0.0
    %4042 = vmatpush2.msra.mxu0 0.0
    %4043 = vmatprep.subr.mxu0 0.0
    %4044 = vmatpush2.msra.mxu0 0.0
    %4045 = vmatprep.subr.mxu0 0.0
    %4046 = vmatpush2.msra.mxu0 0.0
    %4047 = vmatprep.subr.mxu0 0.0
    %4048 = vmatpush2.msra.mxu0 0.0
    %4049 = vmatprep.subr.mxu0 0.0
    %4050 = vmatpush2.msra.mxu0 0.0
    %4051 = vmatprep.mubr.f32.mxu0 0.0
    %4052 = vmatmul.mubr.f32.gmra.mxu0 %v3798
    %v4053 = vpop.f32.mrf.mxu0
    %v4054 = vadd.f32 0.0, %v4053
    %v4055 = vpop.f32.mrf.mxu0
    %v4056 = vadd.f32 0.0, %v4055
    %4057 = vmatprep.mubr.f32.mxu0 0.0
    %4058 = vmatmul.mubr.f32.gmra.mxu0 %v3801
    %v4059 = vpop.f32.mrf.mxu0
    %v4060 = vadd.f32 0.0, %v4059
    %v4061 = vpop.f32.mrf.mxu0
    %v4062 = vadd.f32 0.0, %v4061
    %4063 = vmatprep.mubr.f32.mxu0 0.0
    %4064 = vmatmul.mubr.f32.gmra.mxu0 %v3804
    %v4065 = vpop.f32.mrf.mxu0
    %v4066 = vadd.f32 0.0, %v4065
    %v4067 = vpop.f32.mrf.mxu0
    %v4068 = vadd.f32 0.0, %v4067
    %4069 = vmatprep.mubr.f32.mxu0 0.0
    %4070 = vmatmul.mubr.f32.gmra.mxu0 %v3807
    %v4071 = vpop.f32.mrf.mxu0
    %v4072 = vadd.f32 0.0, %v4071
    %v4073 = vpop.f32.mrf.mxu0
    %v4074 = vadd.f32 0.0, %v4073
    %4075 = vdwg.mxu0
    %4076 = vmatprep.subr.mxu0 0.0
    %4077 = vmatpush1.msra.mxu0 0.0
    %4078 = vmatprep.subr.mxu0 0.0
    %4079 = vmatpush1.msra.mxu0 0.0
    %4080 = vmatprep.subr.mxu0 0.0
    %4081 = vmatpush1.msra.mxu0 0.0
    %4082 = vmatprep.subr.mxu0 0.0
    %4083 = vmatpush1.msra.mxu0 0.0
    %4084 = vmatprep.subr.mxu0 0.0
    %4085 = vmatpush1.msra.mxu0 0.0
    %4086 = vmatprep.subr.mxu0 0.0
    %4087 = vmatpush1.msra.mxu0 0.0
    %4088 = vmatprep.subr.mxu0 0.0
    %4089 = vmatpush1.msra.mxu0 0.0
    %4090 = vmatprep.subr.mxu0 0.0
    %4091 = vmatpush1.msra.mxu0 0.0
    %4092 = vmatprep.subr.mxu0 0.0
    %4093 = vmatpush1.msra.mxu0 0.0
    %4094 = vmatprep.subr.mxu0 0.0
    %4095 = vmatpush1.msra.mxu0 0.0
    %4096 = vmatprep.subr.mxu0 0.0
    %4097 = vmatpush1.msra.mxu0 0.0
    %4098 = vmatprep.subr.mxu0 0.0
    %4099 = vmatpush1.msra.mxu0 0.0
    %4100 = vmatprep.subr.mxu0 %v2001
    %4101 = vmatpush1.msra.mxu0 %v2000
    %4102 = vmatprep.subr.mxu0 %v1993
    %4103 = vmatpush1.msra.mxu0 %v1992
    %4104 = vmatprep.subr.mxu0 %v1985
    %4105 = vmatpush1.msra.mxu0 %v1984
    %4106 = vmatprep.subr.mxu0 %v1977
    %4107 = vmatpush1.msra.mxu0 %v1976
    %4108 = vmatprep.subr.mxu0 0.0
    %4109 = vmatpush2.msra.mxu0 0.0
    %4110 = vmatprep.subr.mxu0 0.0
    %4111 = vmatpush2.msra.mxu0 0.0
    %4112 = vmatprep.subr.mxu0 0.0
    %4113 = vmatpush2.msra.mxu0 0.0
    %4114 = vmatprep.subr.mxu0 0.0
    %4115 = vmatpush2.msra.mxu0 0.0
    %4116 = vmatprep.subr.mxu0 0.0
    %4117 = vmatpush2.msra.mxu0 0.0
    %4118 = vmatprep.subr.mxu0 0.0
    %4119 = vmatpush2.msra.mxu0 0.0
    %4120 = vmatprep.subr.mxu0 0.0
    %4121 = vmatpush2.msra.mxu0 0.0
    %4122 = vmatprep.subr.mxu0 0.0
    %4123 = vmatpush2.msra.mxu0 0.0
    %4124 = vmatprep.subr.mxu0 0.0
    %4125 = vmatpush2.msra.mxu0 0.0
    %4126 = vmatprep.subr.mxu0 0.0
    %4127 = vmatpush2.msra.mxu0 0.0
    %4128 = vmatprep.subr.mxu0 0.0
    %4129 = vmatpush2.msra.mxu0 0.0
    %4130 = vmatprep.subr.mxu0 0.0
    %4131 = vmatpush2.msra.mxu0 0.0
    %4132 = vmatprep.subr.mxu0 0.0
    %4133 = vmatpush2.msra.mxu0 0.0
    %4134 = vmatprep.subr.mxu0 0.0
    %4135 = vmatpush2.msra.mxu0 0.0
    %4136 = vmatprep.subr.mxu0 0.0
    %4137 = vmatpush2.msra.mxu0 0.0
    %4138 = vmatprep.subr.mxu0 0.0
    %4139 = vmatpush2.msra.mxu0 0.0
    %4140 = vmatprep.mubr.f32.mxu0 0.0
    %4141 = vmatmul.mubr.f32.gmra.mxu0 %v3798
    %v4142 = vpop.f32.mrf.mxu0
    %v4143 = vadd.f32 0.0, %v4142
    %v4144 = vpop.f32.mrf.mxu0
    %v4145 = vadd.f32 0.0, %v4144
    %4146 = vmatprep.mubr.f32.mxu0 0.0
    %4147 = vmatmul.mubr.f32.gmra.mxu0 %v3801
    %v4148 = vpop.f32.mrf.mxu0
    %v4149 = vadd.f32 0.0, %v4148
    %v4150 = vpop.f32.mrf.mxu0
    %v4151 = vadd.f32 0.0, %v4150
    %4152 = vmatprep.mubr.f32.mxu0 0.0
    %4153 = vmatmul.mubr.f32.gmra.mxu0 %v3804
    %v4154 = vpop.f32.mrf.mxu0
    %v4155 = vadd.f32 0.0, %v4154
    %v4156 = vpop.f32.mrf.mxu0
    %v4157 = vadd.f32 0.0, %v4156
    %4158 = vmatprep.mubr.f32.mxu0 0.0
    %4159 = vmatmul.mubr.f32.gmra.mxu0 %v3807
    %v4160 = vpop.f32.mrf.mxu0
    %v4161 = vadd.f32 0.0, %v4160
    %v4162 = vpop.f32.mrf.mxu0
    %v4163 = vadd.f32 0.0, %v4162
    %4164 = vdwg.mxu0
    %v4165 = vmul.f32 %v3876, %v1319
    %v4166 = vmul.f32 %v3878, %v1321
    %v4167 = vmul.f32 %v3965, %v1408
    %v4168 = vmul.f32 %v3967, %v1410
    %v4169 = vmul.f32 %v4054, %v1497
    %v4170 = vmul.f32 %v4056, %v1499
    %v4171 = vmul.f32 %v4143, %v1586
    %v4172 = vmul.f32 %v4145, %v1588
    %v4173 = vmul.f32 %v3882, %v1325
    %v4174 = vmul.f32 %v3884, %v1327
    %v4175 = vmul.f32 %v3971, %v1414
    %v4176 = vmul.f32 %v3973, %v1416
    %v4177 = vmul.f32 %v4060, %v1503
    %v4178 = vmul.f32 %v4062, %v1505
    %v4179 = vmul.f32 %v4149, %v1592
    %v4180 = vmul.f32 %v4151, %v1594
    %v4181 = vmul.f32 %v3888, %v1331
    %v4182 = vmul.f32 %v3890, %v1333
    %v4183 = vmul.f32 %v3977, %v1420
    %v4184 = vmul.f32 %v3979, %v1422
    %v4185 = vmul.f32 %v4066, %v1509
    %v4186 = vmul.f32 %v4068, %v1511
    %v4187 = vmul.f32 %v4155, %v1598
    %v4188 = vmul.f32 %v4157, %v1600
    %v4189 = vmul.f32 %v3894, %v1337
    %v4190 = vmul.f32 %v3896, %v1339
    %v4191 = vmul.f32 %v3983, %v1426
    %v4192 = vmul.f32 %v3985, %v1428
    %v4193 = vmul.f32 %v4072, %v1515
    %v4194 = vmul.f32 %v4074, %v1517
    %v4195 = vmul.f32 %v4161, %v1604
    %v4196 = vmul.f32 %v4163, %v1606
    %4197 = vmatprep.subr.mxu0 0.0
    %4198 = vmatpush1.msra.mxu0 %v2017
    %4199 = vmatprep.subr.mxu0 0.0
    %4200 = vmatpush1.msra.mxu0 %v2016
    %4201 = vmatprep.subr.mxu0 0.0
    %4202 = vmatpush1.msra.mxu0 %v2015
    %4203 = vmatprep.subr.mxu0 0.0
    %4204 = vmatpush1.msra.mxu0 %v2014
    %4205 = vmatprep.subr.mxu0 0.0
    %4206 = vmatpush1.msra.mxu0 %v2013
    %4207 = vmatprep.subr.mxu0 0.0
    %4208 = vmatpush1.msra.mxu0 %v2012
    %4209 = vmatprep.subr.mxu0 0.0
    %4210 = vmatpush1.msra.mxu0 %v2011
    %4211 = vmatprep.subr.mxu0 0.0
    %4212 = vmatpush1.msra.mxu0 %v2010
    %4213 = vmatprep.subr.mxu0 0.0
    %4214 = vmatpush1.msra.mxu0 %v2009
    %4215 = vmatprep.subr.mxu0 0.0
    %4216 = vmatpush1.msra.mxu0 %v2008
    %4217 = vmatprep.subr.mxu0 0.0
    %4218 = vmatpush1.msra.mxu0 %v2007
    %4219 = vmatprep.subr.mxu0 0.0
    %4220 = vmatpush1.msra.mxu0 %v2006
    %4221 = vmatprep.subr.mxu0 0.0
    %4222 = vmatpush1.msra.mxu0 %v2005
    %4223 = vmatprep.subr.mxu0 0.0
    %4224 = vmatpush1.msra.mxu0 %v2004
    %4225 = vmatprep.subr.mxu0 0.0
    %4226 = vmatpush1.msra.mxu0 %v2003
    %4227 = vmatprep.subr.mxu0 0.0
    %4228 = vmatpush1.msra.mxu0 %v2002
    %4229 = vmatprep.subr.mxu0 0.0
    %4230 = vmatpush2.msra.mxu0 %v2033
    %4231 = vmatprep.subr.mxu0 0.0
    %4232 = vmatpush2.msra.mxu0 %v2032
    %4233 = vmatprep.subr.mxu0 0.0
    %4234 = vmatpush2.msra.mxu0 %v2031
    %4235 = vmatprep.subr.mxu0 0.0
    %4236 = vmatpush2.msra.mxu0 %v2030
    %4237 = vmatprep.subr.mxu0 0.0
    %4238 = vmatpush2.msra.mxu0 %v2029
    %4239 = vmatprep.subr.mxu0 0.0
    %4240 = vmatpush2.msra.mxu0 %v2028
    %4241 = vmatprep.subr.mxu0 0.0
    %4242 = vmatpush2.msra.mxu0 %v2027
    %4243 = vmatprep.subr.mxu0 0.0
    %4244 = vmatpush2.msra.mxu0 %v2026
    %4245 = vmatprep.subr.mxu0 0.0
    %4246 = vmatpush2.msra.mxu0 %v2025
    %4247 = vmatprep.subr.mxu0 0.0
    %4248 = vmatpush2.msra.mxu0 %v2024
    %4249 = vmatprep.subr.mxu0 0.0
    %4250 = vmatpush2.msra.mxu0 %v2023
    %4251 = vmatprep.subr.mxu0 0.0
    %4252 = vmatpush2.msra.mxu0 %v2022
    %4253 = vmatprep.subr.mxu0 0.0
    %4254 = vmatpush2.msra.mxu0 %v2021
    %4255 = vmatprep.subr.mxu0 0.0
    %4256 = vmatpush2.msra.mxu0 %v2020
    %4257 = vmatprep.subr.mxu0 0.0
    %4258 = vmatpush2.msra.mxu0 %v2019
    %4259 = vmatprep.subr.mxu0 0.0
    %4260 = vmatpush2.msra.mxu0 %v2018
    %4261 = vmatprep.mubr.f32.mxu0 %v4166
    %4262 = vmatmul.mubr.f32.gmra.mxu0 %v4165
    %v4263 = vpop.f32.mrf.mxu0
    %v4264 = vadd.f32 0.0, %v4263
    %v4265 = vpop.f32.mrf.mxu0
    %4266 = vmatprep.mubr.f32.mxu0 %v4174
    %4267 = vmatmul.mubr.f32.gmra.mxu0 %v4173
    %v4268 = vpop.f32.mrf.mxu0
    %v4269 = vadd.f32 0.0, %v4268
    %v4270 = vpop.f32.mrf.mxu0
    %4271 = vmatprep.mubr.f32.mxu0 %v4182
    %4272 = vmatmul.mubr.f32.gmra.mxu0 %v4181
    %v4273 = vpop.f32.mrf.mxu0
    %v4274 = vadd.f32 0.0, %v4273
    %v4275 = vpop.f32.mrf.mxu0
    %4276 = vmatprep.mubr.f32.mxu0 %v4190
    %4277 = vmatmul.mubr.f32.gmra.mxu0 %v4189
    %v4278 = vpop.f32.mrf.mxu0
    %v4279 = vadd.f32 0.0, %v4278
    %v4280 = vpop.f32.mrf.mxu0
    %4281 = vdwg.mxu0
    %4282 = vmatprep.subr.mxu0 0.0
    %4283 = vmatpush1.msra.mxu0 %v2049
    %4284 = vmatprep.subr.mxu0 0.0
    %4285 = vmatpush1.msra.mxu0 %v2048
    %4286 = vmatprep.subr.mxu0 0.0
    %4287 = vmatpush1.msra.mxu0 %v2047
    %4288 = vmatprep.subr.mxu0 0.0
    %4289 = vmatpush1.msra.mxu0 %v2046
    %4290 = vmatprep.subr.mxu0 0.0
    %4291 = vmatpush1.msra.mxu0 %v2045
    %4292 = vmatprep.subr.mxu0 0.0
    %4293 = vmatpush1.msra.mxu0 %v2044
    %4294 = vmatprep.subr.mxu0 0.0
    %4295 = vmatpush1.msra.mxu0 %v2043
    %4296 = vmatprep.subr.mxu0 0.0
    %4297 = vmatpush1.msra.mxu0 %v2042
    %4298 = vmatprep.subr.mxu0 0.0
    %4299 = vmatpush1.msra.mxu0 %v2041
    %4300 = vmatprep.subr.mxu0 0.0
    %4301 = vmatpush1.msra.mxu0 %v2040
    %4302 = vmatprep.subr.mxu0 0.0
    %4303 = vmatpush1.msra.mxu0 %v2039
    %4304 = vmatprep.subr.mxu0 0.0
    %4305 = vmatpush1.msra.mxu0 %v2038
    %4306 = vmatprep.subr.mxu0 0.0
    %4307 = vmatpush1.msra.mxu0 %v2037
    %4308 = vmatprep.subr.mxu0 0.0
    %4309 = vmatpush1.msra.mxu0 %v2036
    %4310 = vmatprep.subr.mxu0 0.0
    %4311 = vmatpush1.msra.mxu0 %v2035
    %4312 = vmatprep.subr.mxu0 0.0
    %4313 = vmatpush1.msra.mxu0 %v2034
    %4314 = vmatprep.subr.mxu0 0.0
    %4315 = vmatpush2.msra.mxu0 %v2065
    %4316 = vmatprep.subr.mxu0 0.0
    %4317 = vmatpush2.msra.mxu0 %v2064
    %4318 = vmatprep.subr.mxu0 0.0
    %4319 = vmatpush2.msra.mxu0 %v2063
    %4320 = vmatprep.subr.mxu0 0.0
    %4321 = vmatpush2.msra.mxu0 %v2062
    %4322 = vmatprep.subr.mxu0 0.0
    %4323 = vmatpush2.msra.mxu0 %v2061
    %4324 = vmatprep.subr.mxu0 0.0
    %4325 = vmatpush2.msra.mxu0 %v2060
    %4326 = vmatprep.subr.mxu0 0.0
    %4327 = vmatpush2.msra.mxu0 %v2059
    %4328 = vmatprep.subr.mxu0 0.0
    %4329 = vmatpush2.msra.mxu0 %v2058
    %4330 = vmatprep.subr.mxu0 0.0
    %4331 = vmatpush2.msra.mxu0 %v2057
    %4332 = vmatprep.subr.mxu0 0.0
    %4333 = vmatpush2.msra.mxu0 %v2056
    %4334 = vmatprep.subr.mxu0 0.0
    %4335 = vmatpush2.msra.mxu0 %v2055
    %4336 = vmatprep.subr.mxu0 0.0
    %4337 = vmatpush2.msra.mxu0 %v2054
    %4338 = vmatprep.subr.mxu0 0.0
    %4339 = vmatpush2.msra.mxu0 %v2053
    %4340 = vmatprep.subr.mxu0 0.0
    %4341 = vmatpush2.msra.mxu0 %v2052
    %4342 = vmatprep.subr.mxu0 0.0
    %4343 = vmatpush2.msra.mxu0 %v2051
    %4344 = vmatprep.subr.mxu0 0.0
    %4345 = vmatpush2.msra.mxu0 %v2050
    %4346 = vmatprep.mubr.f32.mxu0 %v4168
    %4347 = vmatmul.mubr.f32.gmra.mxu0 %v4167
    %v4348 = vpop.f32.mrf.mxu0
    %v4349 = vadd.f32 %v4264, %v4348
    %v4350 = vpop.f32.mrf.mxu0
    %4351 = vmatprep.mubr.f32.mxu0 %v4176
    %4352 = vmatmul.mubr.f32.gmra.mxu0 %v4175
    %v4353 = vpop.f32.mrf.mxu0
    %v4354 = vadd.f32 %v4269, %v4353
    %v4355 = vpop.f32.mrf.mxu0
    %4356 = vmatprep.mubr.f32.mxu0 %v4184
    %4357 = vmatmul.mubr.f32.gmra.mxu0 %v4183
    %v4358 = vpop.f32.mrf.mxu0
    %v4359 = vadd.f32 %v4274, %v4358
    %v4360 = vpop.f32.mrf.mxu0
    %4361 = vmatprep.mubr.f32.mxu0 %v4192
    %4362 = vmatmul.mubr.f32.gmra.mxu0 %v4191
    %v4363 = vpop.f32.mrf.mxu0
    %v4364 = vadd.f32 %v4279, %v4363
    %v4365 = vpop.f32.mrf.mxu0
    %4366 = vdwg.mxu0
    %4367 = vmatprep.subr.mxu0 0.0
    %4368 = vmatpush1.msra.mxu0 %v2081
    %4369 = vmatprep.subr.mxu0 0.0
    %4370 = vmatpush1.msra.mxu0 %v2080
    %4371 = vmatprep.subr.mxu0 0.0
    %4372 = vmatpush1.msra.mxu0 %v2079
    %4373 = vmatprep.subr.mxu0 0.0
    %4374 = vmatpush1.msra.mxu0 %v2078
    %4375 = vmatprep.subr.mxu0 0.0
    %4376 = vmatpush1.msra.mxu0 %v2077
    %4377 = vmatprep.subr.mxu0 0.0
    %4378 = vmatpush1.msra.mxu0 %v2076
    %4379 = vmatprep.subr.mxu0 0.0
    %4380 = vmatpush1.msra.mxu0 %v2075
    %4381 = vmatprep.subr.mxu0 0.0
    %4382 = vmatpush1.msra.mxu0 %v2074
    %4383 = vmatprep.subr.mxu0 0.0
    %4384 = vmatpush1.msra.mxu0 %v2073
    %4385 = vmatprep.subr.mxu0 0.0
    %4386 = vmatpush1.msra.mxu0 %v2072
    %4387 = vmatprep.subr.mxu0 0.0
    %4388 = vmatpush1.msra.mxu0 %v2071
    %4389 = vmatprep.subr.mxu0 0.0
    %4390 = vmatpush1.msra.mxu0 %v2070
    %4391 = vmatprep.subr.mxu0 0.0
    %4392 = vmatpush1.msra.mxu0 %v2069
    %4393 = vmatprep.subr.mxu0 0.0
    %4394 = vmatpush1.msra.mxu0 %v2068
    %4395 = vmatprep.subr.mxu0 0.0
    %4396 = vmatpush1.msra.mxu0 %v2067
    %4397 = vmatprep.subr.mxu0 0.0
    %4398 = vmatpush1.msra.mxu0 %v2066
    %4399 = vmatprep.subr.mxu0 0.0
    %4400 = vmatpush2.msra.mxu0 %v2097
    %4401 = vmatprep.subr.mxu0 0.0
    %4402 = vmatpush2.msra.mxu0 %v2096
    %4403 = vmatprep.subr.mxu0 0.0
    %4404 = vmatpush2.msra.mxu0 %v2095
    %4405 = vmatprep.subr.mxu0 0.0
    %4406 = vmatpush2.msra.mxu0 %v2094
    %4407 = vmatprep.subr.mxu0 0.0
    %4408 = vmatpush2.msra.mxu0 %v2093
    %4409 = vmatprep.subr.mxu0 0.0
    %4410 = vmatpush2.msra.mxu0 %v2092
    %4411 = vmatprep.subr.mxu0 0.0
    %4412 = vmatpush2.msra.mxu0 %v2091
    %4413 = vmatprep.subr.mxu0 0.0
    %4414 = vmatpush2.msra.mxu0 %v2090
    %4415 = vmatprep.subr.mxu0 0.0
    %4416 = vmatpush2.msra.mxu0 %v2089
    %4417 = vmatprep.subr.mxu0 0.0
    %4418 = vmatpush2.msra.mxu0 %v2088
    %4419 = vmatprep.subr.mxu0 0.0
    %4420 = vmatpush2.msra.mxu0 %v2087
    %4421 = vmatprep.subr.mxu0 0.0
    %4422 = vmatpush2.msra.mxu0 %v2086
    %4423 = vmatprep.subr.mxu0 0.0
    %4424 = vmatpush2.msra.mxu0 %v2085
    %4425 = vmatprep.subr.mxu0 0.0
    %4426 = vmatpush2.msra.mxu0 %v2084
    %4427 = vmatprep.subr.mxu0 0.0
    %4428 = vmatpush2.msra.mxu0 %v2083
    %4429 = vmatprep.subr.mxu0 0.0
    %4430 = vmatpush2.msra.mxu0 %v2082
    %4431 = vmatprep.mubr.f32.mxu0 %v4170
    %4432 = vmatmul.mubr.f32.gmra.mxu0 %v4169
    %v4433 = vpop.f32.mrf.mxu0
    %v4434 = vadd.f32 %v4349, %v4433
    %v4435 = vpop.f32.mrf.mxu0
    %4436 = vmatprep.mubr.f32.mxu0 %v4178
    %4437 = vmatmul.mubr.f32.gmra.mxu0 %v4177
    %v4438 = vpop.f32.mrf.mxu0
    %v4439 = vadd.f32 %v4354, %v4438
    %v4440 = vpop.f32.mrf.mxu0
    %4441 = vmatprep.mubr.f32.mxu0 %v4186
    %4442 = vmatmul.mubr.f32.gmra.mxu0 %v4185
    %v4443 = vpop.f32.mrf.mxu0
    %v4444 = vadd.f32 %v4359, %v4443
    %v4445 = vpop.f32.mrf.mxu0
    %4446 = vmatprep.mubr.f32.mxu0 %v4194
    %4447 = vmatmul.mubr.f32.gmra.mxu0 %v4193
    %v4448 = vpop.f32.mrf.mxu0
    %v4449 = vadd.f32 %v4364, %v4448
    %v4450 = vpop.f32.mrf.mxu0
    %4451 = vdwg.mxu0
    %4452 = vmatprep.subr.mxu0 0.0
    %4453 = vmatpush1.msra.mxu0 %v2113
    %4454 = vmatprep.subr.mxu0 0.0
    %4455 = vmatpush1.msra.mxu0 %v2112
    %4456 = vmatprep.subr.mxu0 0.0
    %4457 = vmatpush1.msra.mxu0 %v2111
    %4458 = vmatprep.subr.mxu0 0.0
    %4459 = vmatpush1.msra.mxu0 %v2110
    %4460 = vmatprep.subr.mxu0 0.0
    %4461 = vmatpush1.msra.mxu0 %v2109
    %4462 = vmatprep.subr.mxu0 0.0
    %4463 = vmatpush1.msra.mxu0 %v2108
    %4464 = vmatprep.subr.mxu0 0.0
    %4465 = vmatpush1.msra.mxu0 %v2107
    %4466 = vmatprep.subr.mxu0 0.0
    %4467 = vmatpush1.msra.mxu0 %v2106
    %4468 = vmatprep.subr.mxu0 0.0
    %4469 = vmatpush1.msra.mxu0 %v2105
    %4470 = vmatprep.subr.mxu0 0.0
    %4471 = vmatpush1.msra.mxu0 %v2104
    %4472 = vmatprep.subr.mxu0 0.0
    %4473 = vmatpush1.msra.mxu0 %v2103
    %4474 = vmatprep.subr.mxu0 0.0
    %4475 = vmatpush1.msra.mxu0 %v2102
    %4476 = vmatprep.subr.mxu0 0.0
    %4477 = vmatpush1.msra.mxu0 %v2101
    %4478 = vmatprep.subr.mxu0 0.0
    %4479 = vmatpush1.msra.mxu0 %v2100
    %4480 = vmatprep.subr.mxu0 0.0
    %4481 = vmatpush1.msra.mxu0 %v2099
    %4482 = vmatprep.subr.mxu0 0.0
    %4483 = vmatpush1.msra.mxu0 %v2098
    %4484 = vmatprep.subr.mxu0 0.0
    %4485 = vmatpush2.msra.mxu0 %v2129
    %4486 = vmatprep.subr.mxu0 0.0
    %4487 = vmatpush2.msra.mxu0 %v2128
    %4488 = vmatprep.subr.mxu0 0.0
    %4489 = vmatpush2.msra.mxu0 %v2127
    %4490 = vmatprep.subr.mxu0 0.0
    %4491 = vmatpush2.msra.mxu0 %v2126
    %4492 = vmatprep.subr.mxu0 0.0
    %4493 = vmatpush2.msra.mxu0 %v2125
    %4494 = vmatprep.subr.mxu0 0.0
    %4495 = vmatpush2.msra.mxu0 %v2124
    %4496 = vmatprep.subr.mxu0 0.0
    %4497 = vmatpush2.msra.mxu0 %v2123
    %4498 = vmatprep.subr.mxu0 0.0
    %4499 = vmatpush2.msra.mxu0 %v2122
    %4500 = vmatprep.subr.mxu0 0.0
    %4501 = vmatpush2.msra.mxu0 %v2121
    %4502 = vmatprep.subr.mxu0 0.0
    %4503 = vmatpush2.msra.mxu0 %v2120
    %4504 = vmatprep.subr.mxu0 0.0
    %4505 = vmatpush2.msra.mxu0 %v2119
    %4506 = vmatprep.subr.mxu0 0.0
    %4507 = vmatpush2.msra.mxu0 %v2118
    %4508 = vmatprep.subr.mxu0 0.0
    %4509 = vmatpush2.msra.mxu0 %v2117
    %4510 = vmatprep.subr.mxu0 0.0
    %4511 = vmatpush2.msra.mxu0 %v2116
    %4512 = vmatprep.subr.mxu0 0.0
    %4513 = vmatpush2.msra.mxu0 %v2115
    %4514 = vmatprep.subr.mxu0 0.0
    %4515 = vmatpush2.msra.mxu0 %v2114
    %4516 = vmatprep.mubr.f32.mxu0 %v4172
    %4517 = vmatmul.mubr.f32.gmra.mxu0 %v4171
    %v4518 = vpop.f32.mrf.mxu0
    %v4519 = vadd.f32 %v4434, %v4518
    %v4520 = vpop.f32.mrf.mxu0
    %4521 = vmatprep.mubr.f32.mxu0 %v4180
    %4522 = vmatmul.mubr.f32.gmra.mxu0 %v4179
    %v4523 = vpop.f32.mrf.mxu0
    %v4524 = vadd.f32 %v4439, %v4523
    %v4525 = vpop.f32.mrf.mxu0
    %4526 = vmatprep.mubr.f32.mxu0 %v4188
    %4527 = vmatmul.mubr.f32.gmra.mxu0 %v4187
    %v4528 = vpop.f32.mrf.mxu0
    %v4529 = vadd.f32 %v4444, %v4528
    %v4530 = vpop.f32.mrf.mxu0
    %4531 = vmatprep.mubr.f32.mxu0 %v4196
    %4532 = vmatmul.mubr.f32.gmra.mxu0 %v4195
    %v4533 = vpop.f32.mrf.mxu0
    %v4534 = vadd.f32 %v4449, %v4533
    %v4535 = vpop.f32.mrf.mxu0
    %4536 = vdwg.mxu0
    %v4538 = vsel %vm2975, %v4534, 0
    %4540 = vmatprep.subr.mxu0 0.0
    %4541 = vmatpush1.msra.mxu0 0.0
    %4542 = vmatprep.subr.mxu0 0.0
    %4543 = vmatpush1.msra.mxu0 0.0
    %4544 = vmatprep.subr.mxu0 0.0
    %4545 = vmatpush1.msra.mxu0 0.0
    %4546 = vmatprep.subr.mxu0 0.0
    %4547 = vmatpush1.msra.mxu0 0.0
    %4548 = vmatprep.subr.mxu0 0.0
    %4549 = vmatpush1.msra.mxu0 0.0
    %4550 = vmatprep.subr.mxu0 0.0
    %4551 = vmatpush1.msra.mxu0 0.0
    %4552 = vmatprep.subr.mxu0 0.0
    %4553 = vmatpush1.msra.mxu0 0.0
    %4554 = vmatprep.subr.mxu0 0.0
    %4555 = vmatpush1.msra.mxu0 0.0
    %4556 = vmatprep.subr.mxu0 0.0
    %4557 = vmatpush1.msra.mxu0 0.0
    %4558 = vmatprep.subr.mxu0 0.0
    %4559 = vmatpush1.msra.mxu0 0.0
    %4560 = vmatprep.subr.mxu0 0.0
    %4561 = vmatpush1.msra.mxu0 0.0
    %4562 = vmatprep.subr.mxu0 0.0
    %4563 = vmatpush1.msra.mxu0 0.0
    %4564 = vmatprep.subr.mxu0 0.0
    %4565 = vmatpush1.msra.mxu0 %v4538
    %4566 = vmatprep.subr.mxu0 0.0
    %4567 = vmatpush1.msra.mxu0 %v4529
    %4568 = vmatprep.subr.mxu0 0.0
    %4569 = vmatpush1.msra.mxu0 %v4524
    %4570 = vmatprep.subr.mxu0 0.0
    %4571 = vmatpush1.msra.mxu0 %v4519
    %4572 = vmatprep.subr.mxu0 0.0
    %4573 = vmatpush2.msra.mxu0 0.0
    %4574 = vmatprep.subr.mxu0 0.0
    %4575 = vmatpush2.msra.mxu0 0.0
    %4576 = vmatprep.subr.mxu0 0.0
    %4577 = vmatpush2.msra.mxu0 0.0
    %4578 = vmatprep.subr.mxu0 0.0
    %4579 = vmatpush2.msra.mxu0 0.0
    %4580 = vmatprep.subr.mxu0 0.0
    %4581 = vmatpush2.msra.mxu0 0.0
    %4582 = vmatprep.subr.mxu0 0.0
    %4583 = vmatpush2.msra.mxu0 0.0
    %4584 = vmatprep.subr.mxu0 0.0
    %4585 = vmatpush2.msra.mxu0 0.0
    %4586 = vmatprep.subr.mxu0 0.0
    %4587 = vmatpush2.msra.mxu0 0.0
    %4588 = vmatprep.subr.mxu0 0.0
    %4589 = vmatpush2.msra.mxu0 0.0
    %4590 = vmatprep.subr.mxu0 0.0
    %4591 = vmatpush2.msra.mxu0 0.0
    %4592 = vmatprep.subr.mxu0 0.0
    %4593 = vmatpush2.msra.mxu0 0.0
    %4594 = vmatprep.subr.mxu0 0.0
    %4595 = vmatpush2.msra.mxu0 0.0
    %4596 = vmatprep.subr.mxu0 0.0
    %4597 = vmatpush2.msra.mxu0 0.0
    %4598 = vmatprep.subr.mxu0 0.0
    %4599 = vmatpush2.msra.mxu0 0.0
    %4600 = vmatprep.subr.mxu0 0.0
    %4601 = vmatpush2.msra.mxu0 0.0
    %4602 = vmatprep.subr.mxu0 0.0
    %4603 = vmatpush2.msra.mxu0 0.0
    %4604 = vmatprep.mubr.f32.mxu0 0.0
    %4605 = vmatmul.mubr.f32.gmra.mxu0 %v2970
    %v4606 = vpop.f32.mrf.mxu0
    %v4607 = vadd.f32 0.0, %v4606
    %v4608 = vpop.f32.mrf.mxu0
    %4609 = vmatprep.mubr.f32.mxu0 0.0
    %4610 = vmatmul.mubr.f32.gmra.mxu0 %v2973
    %v4611 = vpop.f32.mrf.mxu0
    %v4612 = vadd.f32 0.0, %v4611
    %v4613 = vpop.f32.mrf.mxu0
    %4614 = vdwg.mxu0
    %s4615 = scalar_lea.vmem [#allocation9], 320
    %v4616 = vld [vmem:[%s4615] sm:$0xff]
    %v4617 = vld [vmem:[%s4615 + $0x8] sm:$0xff]
    %v4618 = vld [vmem:[%s4615 + $0x10] sm:$0xff]
    %v4619 = vld [vmem:[%s4615 + $0x18] sm:$0xff]
    %s4620 = scalar_lea.vmem [#allocation10], 8
    %v4621 = vld [vmem:[%s4620] sm:$0x1]
    %v4623 = vlaneseq
    %v4624 = vshrl.u32 %v4623, 7
    %v4625 = vsub.s32 0, %v4624
    %v4626 = vrot.slane %v4621, %v4625
    %v4629 = vsel %vm133, %v3710, 0
    %v4632 = vsel %vm133, %v3711, 0
    %4634 = vmatprep.subr.mxu0 0.0
    %4635 = vmatpush1.msra.mxu0 0.0
    %4636 = vmatprep.subr.mxu0 0.0
    %4637 = vmatpush1.msra.mxu0 0.0
    %4638 = vmatprep.subr.mxu0 0.0
    %4639 = vmatpush1.msra.mxu0 0.0
    %4640 = vmatprep.subr.mxu0 0.0
    %4641 = vmatpush1.msra.mxu0 0.0
    %4642 = vmatprep.subr.mxu0 0.0
    %4643 = vmatpush1.msra.mxu0 0.0
    %4644 = vmatprep.subr.mxu0 0.0
    %4645 = vmatpush1.msra.mxu0 0.0
    %4646 = vmatprep.subr.mxu0 0.0
    %4647 = vmatpush1.msra.mxu0 0.0
    %4648 = vmatprep.subr.mxu0 0.0
    %4649 = vmatpush1.msra.mxu0 0.0
    %4650 = vmatprep.subr.mxu0 0.0
    %4651 = vmatpush1.msra.mxu0 0.0
    %4652 = vmatprep.subr.mxu0 0.0
    %4653 = vmatpush1.msra.mxu0 0.0
    %4654 = vmatprep.subr.mxu0 0.0
    %4655 = vmatpush1.msra.mxu0 0.0
    %4656 = vmatprep.subr.mxu0 0.0
    %4657 = vmatpush1.msra.mxu0 0.0
    %4658 = vmatprep.subr.mxu0 0.0
    %4659 = vmatpush1.msra.mxu0 %v4619
    %4660 = vmatprep.subr.mxu0 0.0
    %4661 = vmatpush1.msra.mxu0 %v4618
    %4662 = vmatprep.subr.mxu0 0.0
    %4663 = vmatpush1.msra.mxu0 %v4617
    %4664 = vmatprep.subr.mxu0 0.0
    %4665 = vmatpush1.msra.mxu0 %v4616
    %4666 = vmatprep.subr.mxu0 0.0
    %4667 = vmatpush2.msra.mxu0 0.0
    %4668 = vmatprep.subr.mxu0 0.0
    %4669 = vmatpush2.msra.mxu0 0.0
    %4670 = vmatprep.subr.mxu0 0.0
    %4671 = vmatpush2.msra.mxu0 0.0
    %4672 = vmatprep.subr.mxu0 0.0
    %4673 = vmatpush2.msra.mxu0 0.0
    %4674 = vmatprep.subr.mxu0 0.0
    %4675 = vmatpush2.msra.mxu0 0.0
    %4676 = vmatprep.subr.mxu0 0.0
    %4677 = vmatpush2.msra.mxu0 0.0
    %4678 = vmatprep.subr.mxu0 0.0
    %4679 = vmatpush2.msra.mxu0 0.0
    %4680 = vmatprep.subr.mxu0 0.0
    %4681 = vmatpush2.msra.mxu0 0.0
    %4682 = vmatprep.subr.mxu0 0.0
    %4683 = vmatpush2.msra.mxu0 0.0
    %4684 = vmatprep.subr.mxu0 0.0
    %4685 = vmatpush2.msra.mxu0 0.0
    %4686 = vmatprep.subr.mxu0 0.0
    %4687 = vmatpush2.msra.mxu0 0.0
    %4688 = vmatprep.subr.mxu0 0.0
    %4689 = vmatpush2.msra.mxu0 0.0
    %4690 = vmatprep.subr.mxu0 0.0
    %4691 = vmatpush2.msra.mxu0 0.0
    %4692 = vmatprep.subr.mxu0 0.0
    %4693 = vmatpush2.msra.mxu0 0.0
    %4694 = vmatprep.subr.mxu0 0.0
    %4695 = vmatpush2.msra.mxu0 0.0
    %4696 = vmatprep.subr.mxu0 0.0
    %4697 = vmatpush2.msra.mxu0 0.0
    %4698 = vmatprep.mubr.f32.mxu0 0.0
    %4699 = vmatmul.mubr.f32.gmra.mxu0 %v4629
    %v4700 = vpop.f32.mrf.mxu0
    %v4701 = vadd.f32 %v4626, %v4700
    %v4702 = vpop.f32.mrf.mxu0
    %4703 = vmatprep.mubr.f32.mxu0 0.0
    %4704 = vmatmul.mubr.f32.gmra.mxu0 %v4632
    %v4705 = vpop.f32.mrf.mxu0
    %v4706 = vadd.f32 %v4626, %v4705
    %v4707 = vpop.f32.mrf.mxu0
    %4708 = vdwg.mxu0
    %v4709 = vadd.f32 %v4701, %v4607
    %v4710 = vadd.f32 %v4706, %v4612
    %v4711 = vmax.f32 %v4709, 0.0
    %v4712 = vmax.f32 %v4710, 0.0
    %s4713 = scalar_lea.vmem [#allocation9], 352
    %v4714 = vld [vmem:[%s4713] sm:$0xff]
    %v4715 = vld [vmem:[%s4713 + $0x8] sm:$0xff]
    %v4716 = vld [vmem:[%s4713 + $0x10] sm:$0xff]
    %v4717 = vld [vmem:[%s4713 + $0x18] sm:$0xff]
    %s4718 = scalar_lea.vmem [#allocation9], 448
    %v4719 = vld [vmem:[%s4718] sm:$0xff]
    %v4720 = vld [vmem:[%s4718 + $0x8] sm:$0xff]
    %v4721 = vld [vmem:[%s4718 + $0x10] sm:$0xff]
    %v4722 = vld [vmem:[%s4718 + $0x18] sm:$0xff]
    %4723 = vmatprep.subr.mxu0 0.0
    %4724 = vmatpush1.msra.mxu0 0.0
    %4725 = vmatprep.subr.mxu0 0.0
    %4726 = vmatpush1.msra.mxu0 0.0
    %4727 = vmatprep.subr.mxu0 0.0
    %4728 = vmatpush1.msra.mxu0 0.0
    %4729 = vmatprep.subr.mxu0 0.0
    %4730 = vmatpush1.msra.mxu0 0.0
    %4731 = vmatprep.subr.mxu0 0.0
    %4732 = vmatpush1.msra.mxu0 0.0
    %4733 = vmatprep.subr.mxu0 0.0
    %4734 = vmatpush1.msra.mxu0 0.0
    %4735 = vmatprep.subr.mxu0 0.0
    %4736 = vmatpush1.msra.mxu0 0.0
    %4737 = vmatprep.subr.mxu0 0.0
    %4738 = vmatpush1.msra.mxu0 0.0
    %4739 = vmatprep.subr.mxu0 0.0
    %4740 = vmatpush1.msra.mxu0 0.0
    %4741 = vmatprep.subr.mxu0 0.0
    %4742 = vmatpush1.msra.mxu0 0.0
    %4743 = vmatprep.subr.mxu0 0.0
    %4744 = vmatpush1.msra.mxu0 0.0
    %4745 = vmatprep.subr.mxu0 0.0
    %4746 = vmatpush1.msra.mxu0 0.0
    %4747 = vmatprep.subr.mxu0 0.0
    %4748 = vmatpush1.msra.mxu0 %v4722
    %4749 = vmatprep.subr.mxu0 0.0
    %4750 = vmatpush1.msra.mxu0 %v4721
    %4751 = vmatprep.subr.mxu0 0.0
    %4752 = vmatpush1.msra.mxu0 %v4720
    %4753 = vmatprep.subr.mxu0 0.0
    %4754 = vmatpush1.msra.mxu0 %v4719
    %4755 = vmatprep.subr.mxu0 0.0
    %4756 = vmatpush2.msra.mxu0 0.0
    %4757 = vmatprep.subr.mxu0 0.0
    %4758 = vmatpush2.msra.mxu0 0.0
    %4759 = vmatprep.subr.mxu0 0.0
    %4760 = vmatpush2.msra.mxu0 0.0
    %4761 = vmatprep.subr.mxu0 0.0
    %4762 = vmatpush2.msra.mxu0 0.0
    %4763 = vmatprep.subr.mxu0 0.0
    %4764 = vmatpush2.msra.mxu0 0.0
    %4765 = vmatprep.subr.mxu0 0.0
    %4766 = vmatpush2.msra.mxu0 0.0
    %4767 = vmatprep.subr.mxu0 0.0
    %4768 = vmatpush2.msra.mxu0 0.0
    %4769 = vmatprep.subr.mxu0 0.0
    %4770 = vmatpush2.msra.mxu0 0.0
    %4771 = vmatprep.subr.mxu0 0.0
    %4772 = vmatpush2.msra.mxu0 0.0
    %4773 = vmatprep.subr.mxu0 0.0
    %4774 = vmatpush2.msra.mxu0 0.0
    %4775 = vmatprep.subr.mxu0 0.0
    %4776 = vmatpush2.msra.mxu0 0.0
    %4777 = vmatprep.subr.mxu0 0.0
    %4778 = vmatpush2.msra.mxu0 0.0
    %4779 = vmatprep.subr.mxu0 0.0
    %4780 = vmatpush2.msra.mxu0 0.0
    %4781 = vmatprep.subr.mxu0 0.0
    %4782 = vmatpush2.msra.mxu0 0.0
    %4783 = vmatprep.subr.mxu0 0.0
    %4784 = vmatpush2.msra.mxu0 0.0
    %4785 = vmatprep.subr.mxu0 0.0
    %4786 = vmatpush2.msra.mxu0 0.0
    %4787 = vmatprep.mubr.f32.mxu0 0.0
    %4788 = vmatmul.mubr.f32.gmra.mxu0 %v4629
    %v4789 = vpop.f32.mrf.mxu0
    %v4790 = vadd.f32 0.0, %v4789
    %v4791 = vpop.f32.mrf.mxu0
    %4792 = vmatprep.mubr.f32.mxu0 0.0
    %4793 = vmatmul.mubr.f32.gmra.mxu0 %v4632
    %v4794 = vpop.f32.mrf.mxu0
    %v4795 = vadd.f32 0.0, %v4794
    %v4796 = vpop.f32.mrf.mxu0
    %4797 = vdwg.mxu0
    %v4799 = vsel %vm133, %v4711, 0
    %v4802 = vsel %vm133, %v4712, 0
    %4804 = vmatprep.subr.mxu0 0.0
    %4805 = vmatpush1.msra.mxu0 0.0
    %4806 = vmatprep.subr.mxu0 0.0
    %4807 = vmatpush1.msra.mxu0 0.0
    %4808 = vmatprep.subr.mxu0 0.0
    %4809 = vmatpush1.msra.mxu0 0.0
    %4810 = vmatprep.subr.mxu0 0.0
    %4811 = vmatpush1.msra.mxu0 0.0
    %4812 = vmatprep.subr.mxu0 0.0
    %4813 = vmatpush1.msra.mxu0 0.0
    %4814 = vmatprep.subr.mxu0 0.0
    %4815 = vmatpush1.msra.mxu0 0.0
    %4816 = vmatprep.subr.mxu0 0.0
    %4817 = vmatpush1.msra.mxu0 0.0
    %4818 = vmatprep.subr.mxu0 0.0
    %4819 = vmatpush1.msra.mxu0 0.0
    %4820 = vmatprep.subr.mxu0 0.0
    %4821 = vmatpush1.msra.mxu0 0.0
    %4822 = vmatprep.subr.mxu0 0.0
    %4823 = vmatpush1.msra.mxu0 0.0
    %4824 = vmatprep.subr.mxu0 0.0
    %4825 = vmatpush1.msra.mxu0 0.0
    %4826 = vmatprep.subr.mxu0 0.0
    %4827 = vmatpush1.msra.mxu0 0.0
    %4828 = vmatprep.subr.mxu0 0.0
    %4829 = vmatpush1.msra.mxu0 %v4717
    %4830 = vmatprep.subr.mxu0 0.0
    %4831 = vmatpush1.msra.mxu0 %v4716
    %4832 = vmatprep.subr.mxu0 0.0
    %4833 = vmatpush1.msra.mxu0 %v4715
    %4834 = vmatprep.subr.mxu0 0.0
    %4835 = vmatpush1.msra.mxu0 %v4714
    %4836 = vmatprep.subr.mxu0 0.0
    %4837 = vmatpush2.msra.mxu0 0.0
    %4838 = vmatprep.subr.mxu0 0.0
    %4839 = vmatpush2.msra.mxu0 0.0
    %4840 = vmatprep.subr.mxu0 0.0
    %4841 = vmatpush2.msra.mxu0 0.0
    %4842 = vmatprep.subr.mxu0 0.0
    %4843 = vmatpush2.msra.mxu0 0.0
    %4844 = vmatprep.subr.mxu0 0.0
    %4845 = vmatpush2.msra.mxu0 0.0
    %4846 = vmatprep.subr.mxu0 0.0
    %4847 = vmatpush2.msra.mxu0 0.0
    %4848 = vmatprep.subr.mxu0 0.0
    %4849 = vmatpush2.msra.mxu0 0.0
    %4850 = vmatprep.subr.mxu0 0.0
    %4851 = vmatpush2.msra.mxu0 0.0
    %4852 = vmatprep.subr.mxu0 0.0
    %4853 = vmatpush2.msra.mxu0 0.0
    %4854 = vmatprep.subr.mxu0 0.0
    %4855 = vmatpush2.msra.mxu0 0.0
    %4856 = vmatprep.subr.mxu0 0.0
    %4857 = vmatpush2.msra.mxu0 0.0
    %4858 = vmatprep.subr.mxu0 0.0
    %4859 = vmatpush2.msra.mxu0 0.0
    %4860 = vmatprep.subr.mxu0 0.0
    %4861 = vmatpush2.msra.mxu0 0.0
    %4862 = vmatprep.subr.mxu0 0.0
    %4863 = vmatpush2.msra.mxu0 0.0
    %4864 = vmatprep.subr.mxu0 0.0
    %4865 = vmatpush2.msra.mxu0 0.0
    %4866 = vmatprep.subr.mxu0 0.0
    %4867 = vmatpush2.msra.mxu0 0.0
    %4868 = vmatprep.mubr.f32.mxu0 0.0
    %4869 = vmatmul.mubr.f32.gmra.mxu0 %v4799
    %v4870 = vpop.f32.mrf.mxu0
    %v4871 = vadd.f32 %v4790, %v4870
    %v4872 = vpop.f32.mrf.mxu0
    %4873 = vmatprep.mubr.f32.mxu0 0.0
    %4874 = vmatmul.mubr.f32.gmra.mxu0 %v4802
    %v4875 = vpop.f32.mrf.mxu0
    %v4876 = vadd.f32 %v4795, %v4875
    %v4877 = vpop.f32.mrf.mxu0
    %4878 = vdwg.mxu0
    %s4879 = scalar_lea.vmem [#allocation10], 9
    %v4880 = vld [vmem:[%s4879] sm:$0x1]
    %v4882 = vlaneseq
    %v4883 = vshrl.u32 %v4882, 7
    %v4884 = vsub.s32 0, %v4883
    %v4885 = vrot.slane %v4880, %v4884
    %v4887 = vadd.f32 %v4871, %v4885
    %v4888 = vadd.f32 %v4876, %v4885
    %v4889 = vxor.u32 %v4887, 2147483648
    %v4890 = vxor.u32 %v4888, 2147483648
    %v4891 = vmul.f32 %v4889, 1.442695
    %v4892 = vpow.pop %v4891
    %v4893 = vmul.f32 %v4890, 1.442695
    %v4894 = vpow.pop %v4893
    %v4895 = vadd.f32 %v4892, 1.0
    %v4896 = vadd.f32 %v4894, 1.0
    %v4897 = vrcp.pop %v4895
    %v4898 = vmul.f32 1.0, %v4897
    %v4899 = vrcp.pop %v4896
    %v4900 = vmul.f32 1.0, %v4899
    %s4901 = scalar_lea.vmem [#allocation9], 384
    %v4902 = vld [vmem:[%s4901] sm:$0xff]
    %v4903 = vld [vmem:[%s4901 + $0x8] sm:$0xff]
    %v4904 = vld [vmem:[%s4901 + $0x10] sm:$0xff]
    %v4905 = vld [vmem:[%s4901 + $0x18] sm:$0xff]
    %s4906 = scalar_lea.vmem [#allocation9], 480
    %v4907 = vld [vmem:[%s4906] sm:$0xff]
    %v4908 = vld [vmem:[%s4906 + $0x8] sm:$0xff]
    %v4909 = vld [vmem:[%s4906 + $0x10] sm:$0xff]
    %v4910 = vld [vmem:[%s4906 + $0x18] sm:$0xff]
    %4911 = vmatprep.subr.mxu0 0.0
    %4912 = vmatpush1.msra.mxu0 0.0
    %4913 = vmatprep.subr.mxu0 0.0
    %4914 = vmatpush1.msra.mxu0 0.0
    %4915 = vmatprep.subr.mxu0 0.0
    %4916 = vmatpush1.msra.mxu0 0.0
    %4917 = vmatprep.subr.mxu0 0.0
    %4918 = vmatpush1.msra.mxu0 0.0
    %4919 = vmatprep.subr.mxu0 0.0
    %4920 = vmatpush1.msra.mxu0 0.0
    %4921 = vmatprep.subr.mxu0 0.0
    %4922 = vmatpush1.msra.mxu0 0.0
    %4923 = vmatprep.subr.mxu0 0.0
    %4924 = vmatpush1.msra.mxu0 0.0
    %4925 = vmatprep.subr.mxu0 0.0
    %4926 = vmatpush1.msra.mxu0 0.0
    %4927 = vmatprep.subr.mxu0 0.0
    %4928 = vmatpush1.msra.mxu0 0.0
    %4929 = vmatprep.subr.mxu0 0.0
    %4930 = vmatpush1.msra.mxu0 0.0
    %4931 = vmatprep.subr.mxu0 0.0
    %4932 = vmatpush1.msra.mxu0 0.0
    %4933 = vmatprep.subr.mxu0 0.0
    %4934 = vmatpush1.msra.mxu0 0.0
    %4935 = vmatprep.subr.mxu0 0.0
    %4936 = vmatpush1.msra.mxu0 %v4910
    %4937 = vmatprep.subr.mxu0 0.0
    %4938 = vmatpush1.msra.mxu0 %v4909
    %4939 = vmatprep.subr.mxu0 0.0
    %4940 = vmatpush1.msra.mxu0 %v4908
    %4941 = vmatprep.subr.mxu0 0.0
    %4942 = vmatpush1.msra.mxu0 %v4907
    %4943 = vmatprep.subr.mxu0 0.0
    %4944 = vmatpush2.msra.mxu0 0.0
    %4945 = vmatprep.subr.mxu0 0.0
    %4946 = vmatpush2.msra.mxu0 0.0
    %4947 = vmatprep.subr.mxu0 0.0
    %4948 = vmatpush2.msra.mxu0 0.0
    %4949 = vmatprep.subr.mxu0 0.0
    %4950 = vmatpush2.msra.mxu0 0.0
    %4951 = vmatprep.subr.mxu0 0.0
    %4952 = vmatpush2.msra.mxu0 0.0
    %4953 = vmatprep.subr.mxu0 0.0
    %4954 = vmatpush2.msra.mxu0 0.0
    %4955 = vmatprep.subr.mxu0 0.0
    %4956 = vmatpush2.msra.mxu0 0.0
    %4957 = vmatprep.subr.mxu0 0.0
    %4958 = vmatpush2.msra.mxu0 0.0
    %4959 = vmatprep.subr.mxu0 0.0
    %4960 = vmatpush2.msra.mxu0 0.0
    %4961 = vmatprep.subr.mxu0 0.0
    %4962 = vmatpush2.msra.mxu0 0.0
    %4963 = vmatprep.subr.mxu0 0.0
    %4964 = vmatpush2.msra.mxu0 0.0
    %4965 = vmatprep.subr.mxu0 0.0
    %4966 = vmatpush2.msra.mxu0 0.0
    %4967 = vmatprep.subr.mxu0 0.0
    %4968 = vmatpush2.msra.mxu0 0.0
    %4969 = vmatprep.subr.mxu0 0.0
    %4970 = vmatpush2.msra.mxu0 0.0
    %4971 = vmatprep.subr.mxu0 0.0
    %4972 = vmatpush2.msra.mxu0 0.0
    %4973 = vmatprep.subr.mxu0 0.0
    %4974 = vmatpush2.msra.mxu0 0.0
    %4975 = vmatprep.mubr.f32.mxu0 0.0
    %4976 = vmatmul.mubr.f32.gmra.mxu0 %v4629
    %v4977 = vpop.f32.mrf.mxu0
    %v4978 = vadd.f32 0.0, %v4977
    %v4979 = vpop.f32.mrf.mxu0
    %4980 = vmatprep.mubr.f32.mxu0 0.0
    %4981 = vmatmul.mubr.f32.gmra.mxu0 %v4632
    %v4982 = vpop.f32.mrf.mxu0
    %v4983 = vadd.f32 0.0, %v4982
    %v4984 = vpop.f32.mrf.mxu0
    %4985 = vdwg.mxu0
    %4986 = vmatprep.subr.mxu0 0.0
    %4987 = vmatpush1.msra.mxu0 0.0
    %4988 = vmatprep.subr.mxu0 0.0
    %4989 = vmatpush1.msra.mxu0 0.0
    %4990 = vmatprep.subr.mxu0 0.0
    %4991 = vmatpush1.msra.mxu0 0.0
    %4992 = vmatprep.subr.mxu0 0.0
    %4993 = vmatpush1.msra.mxu0 0.0
    %4994 = vmatprep.subr.mxu0 0.0
    %4995 = vmatpush1.msra.mxu0 0.0
    %4996 = vmatprep.subr.mxu0 0.0
    %4997 = vmatpush1.msra.mxu0 0.0
    %4998 = vmatprep.subr.mxu0 0.0
    %4999 = vmatpush1.msra.mxu0 0.0
    %5000 = vmatprep.subr.mxu0 0.0
    %5001 = vmatpush1.msra.mxu0 0.0
    %5002 = vmatprep.subr.mxu0 0.0
    %5003 = vmatpush1.msra.mxu0 0.0
    %5004 = vmatprep.subr.mxu0 0.0
    %5005 = vmatpush1.msra.mxu0 0.0
    %5006 = vmatprep.subr.mxu0 0.0
    %5007 = vmatpush1.msra.mxu0 0.0
    %5008 = vmatprep.subr.mxu0 0.0
    %5009 = vmatpush1.msra.mxu0 0.0
    %5010 = vmatprep.subr.mxu0 0.0
    %5011 = vmatpush1.msra.mxu0 %v4905
    %5012 = vmatprep.subr.mxu0 0.0
    %5013 = vmatpush1.msra.mxu0 %v4904
    %5014 = vmatprep.subr.mxu0 0.0
    %5015 = vmatpush1.msra.mxu0 %v4903
    %5016 = vmatprep.subr.mxu0 0.0
    %5017 = vmatpush1.msra.mxu0 %v4902
    %5018 = vmatprep.subr.mxu0 0.0
    %5019 = vmatpush2.msra.mxu0 0.0
    %5020 = vmatprep.subr.mxu0 0.0
    %5021 = vmatpush2.msra.mxu0 0.0
    %5022 = vmatprep.subr.mxu0 0.0
    %5023 = vmatpush2.msra.mxu0 0.0
    %5024 = vmatprep.subr.mxu0 0.0
    %5025 = vmatpush2.msra.mxu0 0.0
    %5026 = vmatprep.subr.mxu0 0.0
    %5027 = vmatpush2.msra.mxu0 0.0
    %5028 = vmatprep.subr.mxu0 0.0
    %5029 = vmatpush2.msra.mxu0 0.0
    %5030 = vmatprep.subr.mxu0 0.0
    %5031 = vmatpush2.msra.mxu0 0.0
    %5032 = vmatprep.subr.mxu0 0.0
    %5033 = vmatpush2.msra.mxu0 0.0
    %5034 = vmatprep.subr.mxu0 0.0
    %5035 = vmatpush2.msra.mxu0 0.0
    %5036 = vmatprep.subr.mxu0 0.0
    %5037 = vmatpush2.msra.mxu0 0.0
    %5038 = vmatprep.subr.mxu0 0.0
    %5039 = vmatpush2.msra.mxu0 0.0
    %5040 = vmatprep.subr.mxu0 0.0
    %5041 = vmatpush2.msra.mxu0 0.0
    %5042 = vmatprep.subr.mxu0 0.0
    %5043 = vmatpush2.msra.mxu0 0.0
    %5044 = vmatprep.subr.mxu0 0.0
    %5045 = vmatpush2.msra.mxu0 0.0
    %5046 = vmatprep.subr.mxu0 0.0
    %5047 = vmatpush2.msra.mxu0 0.0
    %5048 = vmatprep.subr.mxu0 0.0
    %5049 = vmatpush2.msra.mxu0 0.0
    %5050 = vmatprep.mubr.f32.mxu0 0.0
    %5051 = vmatmul.mubr.f32.gmra.mxu0 %v4799
    %v5052 = vpop.f32.mrf.mxu0
    %v5053 = vadd.f32 %v4978, %v5052
    %v5054 = vpop.f32.mrf.mxu0
    %5055 = vmatprep.mubr.f32.mxu0 0.0
    %5056 = vmatmul.mubr.f32.gmra.mxu0 %v4802
    %v5057 = vpop.f32.mrf.mxu0
    %v5058 = vadd.f32 %v4983, %v5057
    %v5059 = vpop.f32.mrf.mxu0
    %5060 = vdwg.mxu0
    %s5061 = scalar_lea.vmem [#allocation10], 10
    %v5062 = vld [vmem:[%s5061] sm:$0x1]
    %v5064 = vlaneseq
    %v5065 = vshrl.u32 %v5064, 7
    %v5066 = vsub.s32 0, %v5065
    %v5067 = vrot.slane %v5062, %v5066
    %v5069 = vadd.f32 %v5053, %v5067
    %v5070 = vadd.f32 %v5058, %v5067
    %v5071 = vxor.u32 %v5069, 2147483648
    %v5072 = vxor.u32 %v5070, 2147483648
    %v5073 = vmul.f32 %v5071, 1.442695
    %v5074 = vpow.pop %v5073
    %v5075 = vmul.f32 %v5072, 1.442695
    %v5076 = vpow.pop %v5075
    %v5077 = vadd.f32 %v5074, 1.0
    %v5078 = vadd.f32 %v5076, 1.0
    %v5079 = vrcp.pop %v5077
    %v5080 = vmul.f32 1.0, %v5079
    %v5081 = vrcp.pop %v5078
    %v5082 = vmul.f32 1.0, %v5081
    %s5083 = scalar_lea.vmem [#allocation9], 416
    %v5084 = vld [vmem:[%s5083] sm:$0xff]
    %v5085 = vld [vmem:[%s5083 + $0x8] sm:$0xff]
    %v5086 = vld [vmem:[%s5083 + $0x10] sm:$0xff]
    %v5087 = vld [vmem:[%s5083 + $0x18] sm:$0xff]
    %s5088 = scalar_lea.vmem [#allocation10], 11
    %v5089 = vld [vmem:[%s5088] sm:$0x1]
    %v5091 = vlaneseq
    %v5092 = vshrl.u32 %v5091, 7
    %v5093 = vsub.s32 0, %v5092
    %v5094 = vrot.slane %v5089, %v5093
    %5096 = vmatprep.subr.mxu0 0.0
    %5097 = vmatpush1.msra.mxu0 0.0
    %5098 = vmatprep.subr.mxu0 0.0
    %5099 = vmatpush1.msra.mxu0 0.0
    %5100 = vmatprep.subr.mxu0 0.0
    %5101 = vmatpush1.msra.mxu0 0.0
    %5102 = vmatprep.subr.mxu0 0.0
    %5103 = vmatpush1.msra.mxu0 0.0
    %5104 = vmatprep.subr.mxu0 0.0
    %5105 = vmatpush1.msra.mxu0 0.0
    %5106 = vmatprep.subr.mxu0 0.0
    %5107 = vmatpush1.msra.mxu0 0.0
    %5108 = vmatprep.subr.mxu0 0.0
    %5109 = vmatpush1.msra.mxu0 0.0
    %5110 = vmatprep.subr.mxu0 0.0
    %5111 = vmatpush1.msra.mxu0 0.0
    %5112 = vmatprep.subr.mxu0 0.0
    %5113 = vmatpush1.msra.mxu0 0.0
    %5114 = vmatprep.subr.mxu0 0.0
    %5115 = vmatpush1.msra.mxu0 0.0
    %5116 = vmatprep.subr.mxu0 0.0
    %5117 = vmatpush1.msra.mxu0 0.0
    %5118 = vmatprep.subr.mxu0 0.0
    %5119 = vmatpush1.msra.mxu0 0.0
    %5120 = vmatprep.subr.mxu0 0.0
    %5121 = vmatpush1.msra.mxu0 %v5087
    %5122 = vmatprep.subr.mxu0 0.0
    %5123 = vmatpush1.msra.mxu0 %v5086
    %5124 = vmatprep.subr.mxu0 0.0
    %5125 = vmatpush1.msra.mxu0 %v5085
    %5126 = vmatprep.subr.mxu0 0.0
    %5127 = vmatpush1.msra.mxu0 %v5084
    %5128 = vmatprep.subr.mxu0 0.0
    %5129 = vmatpush2.msra.mxu0 0.0
    %5130 = vmatprep.subr.mxu0 0.0
    %5131 = vmatpush2.msra.mxu0 0.0
    %5132 = vmatprep.subr.mxu0 0.0
    %5133 = vmatpush2.msra.mxu0 0.0
    %5134 = vmatprep.subr.mxu0 0.0
    %5135 = vmatpush2.msra.mxu0 0.0
    %5136 = vmatprep.subr.mxu0 0.0
    %5137 = vmatpush2.msra.mxu0 0.0
    %5138 = vmatprep.subr.mxu0 0.0
    %5139 = vmatpush2.msra.mxu0 0.0
    %5140 = vmatprep.subr.mxu0 0.0
    %5141 = vmatpush2.msra.mxu0 0.0
    %5142 = vmatprep.subr.mxu0 0.0
    %5143 = vmatpush2.msra.mxu0 0.0
    %5144 = vmatprep.subr.mxu0 0.0
    %5145 = vmatpush2.msra.mxu0 0.0
    %5146 = vmatprep.subr.mxu0 0.0
    %5147 = vmatpush2.msra.mxu0 0.0
    %5148 = vmatprep.subr.mxu0 0.0
    %5149 = vmatpush2.msra.mxu0 0.0
    %5150 = vmatprep.subr.mxu0 0.0
    %5151 = vmatpush2.msra.mxu0 0.0
    %5152 = vmatprep.subr.mxu0 0.0
    %5153 = vmatpush2.msra.mxu0 0.0
    %5154 = vmatprep.subr.mxu0 0.0
    %5155 = vmatpush2.msra.mxu0 0.0
    %5156 = vmatprep.subr.mxu0 0.0
    %5157 = vmatpush2.msra.mxu0 0.0
    %5158 = vmatprep.subr.mxu0 0.0
    %5159 = vmatpush2.msra.mxu0 0.0
    %5160 = vmatprep.mubr.f32.mxu0 0.0
    %5161 = vmatmul.mubr.f32.gmra.mxu0 %v4799
    %v5162 = vpop.f32.mrf.mxu0
    %v5163 = vadd.f32 %v5094, %v5162
    %v5164 = vpop.f32.mrf.mxu0
    %5165 = vmatprep.mubr.f32.mxu0 0.0
    %5166 = vmatmul.mubr.f32.gmra.mxu0 %v4802
    %v5167 = vpop.f32.mrf.mxu0
    %v5168 = vadd.f32 %v5094, %v5167
    %v5169 = vpop.f32.mrf.mxu0
    %5170 = vdwg.mxu0
    %s5171 = scalar_lea.vmem [#allocation9], 512
    %v5172 = vld [vmem:[%s5171] sm:$0xff]
    %v5173 = vld [vmem:[%s5171 + $0x8] sm:$0xff]
    %v5174 = vld [vmem:[%s5171 + $0x10] sm:$0xff]
    %v5175 = vld [vmem:[%s5171 + $0x18] sm:$0xff]
    %s5176 = scalar_lea.vmem [#allocation10], 12
    %v5177 = vld [vmem:[%s5176] sm:$0x1]
    %v5179 = vlaneseq
    %v5180 = vshrl.u32 %v5179, 7
    %v5181 = vsub.s32 0, %v5180
    %v5182 = vrot.slane %v5177, %v5181
    %5184 = vmatprep.subr.mxu0 0.0
    %5185 = vmatpush1.msra.mxu0 0.0
    %5186 = vmatprep.subr.mxu0 0.0
    %5187 = vmatpush1.msra.mxu0 0.0
    %5188 = vmatprep.subr.mxu0 0.0
    %5189 = vmatpush1.msra.mxu0 0.0
    %5190 = vmatprep.subr.mxu0 0.0
    %5191 = vmatpush1.msra.mxu0 0.0
    %5192 = vmatprep.subr.mxu0 0.0
    %5193 = vmatpush1.msra.mxu0 0.0
    %5194 = vmatprep.subr.mxu0 0.0
    %5195 = vmatpush1.msra.mxu0 0.0
    %5196 = vmatprep.subr.mxu0 0.0
    %5197 = vmatpush1.msra.mxu0 0.0
    %5198 = vmatprep.subr.mxu0 0.0
    %5199 = vmatpush1.msra.mxu0 0.0
    %5200 = vmatprep.subr.mxu0 0.0
    %5201 = vmatpush1.msra.mxu0 0.0
    %5202 = vmatprep.subr.mxu0 0.0
    %5203 = vmatpush1.msra.mxu0 0.0
    %5204 = vmatprep.subr.mxu0 0.0
    %5205 = vmatpush1.msra.mxu0 0.0
    %5206 = vmatprep.subr.mxu0 0.0
    %5207 = vmatpush1.msra.mxu0 0.0
    %5208 = vmatprep.subr.mxu0 0.0
    %5209 = vmatpush1.msra.mxu0 %v5175
    %5210 = vmatprep.subr.mxu0 0.0
    %5211 = vmatpush1.msra.mxu0 %v5174
    %5212 = vmatprep.subr.mxu0 0.0
    %5213 = vmatpush1.msra.mxu0 %v5173
    %5214 = vmatprep.subr.mxu0 0.0
    %5215 = vmatpush1.msra.mxu0 %v5172
    %5216 = vmatprep.subr.mxu0 0.0
    %5217 = vmatpush2.msra.mxu0 0.0
    %5218 = vmatprep.subr.mxu0 0.0
    %5219 = vmatpush2.msra.mxu0 0.0
    %5220 = vmatprep.subr.mxu0 0.0
    %5221 = vmatpush2.msra.mxu0 0.0
    %5222 = vmatprep.subr.mxu0 0.0
    %5223 = vmatpush2.msra.mxu0 0.0
    %5224 = vmatprep.subr.mxu0 0.0
    %5225 = vmatpush2.msra.mxu0 0.0
    %5226 = vmatprep.subr.mxu0 0.0
    %5227 = vmatpush2.msra.mxu0 0.0
    %5228 = vmatprep.subr.mxu0 0.0
    %5229 = vmatpush2.msra.mxu0 0.0
    %5230 = vmatprep.subr.mxu0 0.0
    %5231 = vmatpush2.msra.mxu0 0.0
    %5232 = vmatprep.subr.mxu0 0.0
    %5233 = vmatpush2.msra.mxu0 0.0
    %5234 = vmatprep.subr.mxu0 0.0
    %5235 = vmatpush2.msra.mxu0 0.0
    %5236 = vmatprep.subr.mxu0 0.0
    %5237 = vmatpush2.msra.mxu0 0.0
    %5238 = vmatprep.subr.mxu0 0.0
    %5239 = vmatpush2.msra.mxu0 0.0
    %5240 = vmatprep.subr.mxu0 0.0
    %5241 = vmatpush2.msra.mxu0 0.0
    %5242 = vmatprep.subr.mxu0 0.0
    %5243 = vmatpush2.msra.mxu0 0.0
    %5244 = vmatprep.subr.mxu0 0.0
    %5245 = vmatpush2.msra.mxu0 0.0
    %5246 = vmatprep.subr.mxu0 0.0
    %5247 = vmatpush2.msra.mxu0 0.0
    %5248 = vmatprep.mubr.f32.mxu0 0.0
    %5249 = vmatmul.mubr.f32.gmra.mxu0 %v4629
    %v5250 = vpop.f32.mrf.mxu0
    %v5251 = vadd.f32 %v5182, %v5250
    %v5252 = vpop.f32.mrf.mxu0
    %5253 = vmatprep.mubr.f32.mxu0 0.0
    %5254 = vmatmul.mubr.f32.gmra.mxu0 %v4632
    %v5255 = vpop.f32.mrf.mxu0
    %v5256 = vadd.f32 %v5182, %v5255
    %v5257 = vpop.f32.mrf.mxu0
    %5258 = vdwg.mxu0
    %v5259 = vmul.f32 %v4898, %v5251
    %v5260 = vmul.f32 %v4900, %v5256
    %v5261 = vadd.f32 %v5163, %v5259
    %v5262 = vadd.f32 %v5168, %v5260
    %v5263 = vtanh.pop %v5261
    %v5264 = vtanh.pop %v5262
    %v5265 = vsub.f32 1.0, %v5080
    %v5266 = vsub.f32 1.0, %v5082
    %v5267 = vmul.f32 %v5265, %v5263
    %v5268 = vmul.f32 %v5266, %v5264
    %v5269 = vmul.f32 %v5080, %v3710
    %v5270 = vmul.f32 %v5082, %v3711
    %v5271 = vadd.f32 %v5267, %v5269
    %v5272 = vadd.f32 %v5268, %v5270
    %5273 = vmatprep.subr.mxu0 0.0
    %5274 = vmatpush1.msra.mxu0 0.0
    %5275 = vmatprep.subr.mxu0 0.0
    %5276 = vmatpush1.msra.mxu0 0.0
    %5277 = vmatprep.subr.mxu0 0.0
    %5278 = vmatpush1.msra.mxu0 0.0
    %5279 = vmatprep.subr.mxu0 0.0
    %5280 = vmatpush1.msra.mxu0 0.0
    %5281 = vmatprep.subr.mxu0 0.0
    %5282 = vmatpush1.msra.mxu0 0.0
    %5283 = vmatprep.subr.mxu0 0.0
    %5284 = vmatpush1.msra.mxu0 0.0
    %5285 = vmatprep.subr.mxu0 0.0
    %5286 = vmatpush1.msra.mxu0 0.0
    %5287 = vmatprep.subr.mxu0 0.0
    %5288 = vmatpush1.msra.mxu0 0.0
    %5289 = vmatprep.subr.mxu0 0.0
    %5290 = vmatpush1.msra.mxu0 0.0
    %5291 = vmatprep.subr.mxu0 0.0
    %5292 = vmatpush1.msra.mxu0 0.0
    %5293 = vmatprep.subr.mxu0 0.0
    %5294 = vmatpush1.msra.mxu0 0.0
    %5295 = vmatprep.subr.mxu0 0.0
    %5296 = vmatpush1.msra.mxu0 0.0
    %5297 = vmatprep.subr.mxu0 0.0
    %5298 = vmatpush1.msra.mxu0 0.0
    %5299 = vmatprep.subr.mxu0 0.0
    %5300 = vmatpush1.msra.mxu0 0.0
    %5301 = vmatprep.subr.mxu0 0.0
    %5302 = vmatpush1.msra.mxu0 %v5272
    %5303 = vmatprep.subr.mxu0 0.0
    %5304 = vmatpush1.msra.mxu0 %v5271
    %5305 = vmatprep.subr.mxu0 0.0
    %5306 = vmatpush2.msra.mxu0 0.0
    %5307 = vmatprep.subr.mxu0 0.0
    %5308 = vmatpush2.msra.mxu0 0.0
    %5309 = vmatprep.subr.mxu0 0.0
    %5310 = vmatpush2.msra.mxu0 0.0
    %5311 = vmatprep.subr.mxu0 0.0
    %5312 = vmatpush2.msra.mxu0 0.0
    %5313 = vmatprep.subr.mxu0 0.0
    %5314 = vmatpush2.msra.mxu0 0.0
    %5315 = vmatprep.subr.mxu0 0.0
    %5316 = vmatpush2.msra.mxu0 0.0
    %5317 = vmatprep.subr.mxu0 0.0
    %5318 = vmatpush2.msra.mxu0 0.0
    %5319 = vmatprep.subr.mxu0 0.0
    %5320 = vmatpush2.msra.mxu0 0.0
    %5321 = vmatprep.subr.mxu0 0.0
    %5322 = vmatpush2.msra.mxu0 0.0
    %5323 = vmatprep.subr.mxu0 0.0
    %5324 = vmatpush2.msra.mxu0 0.0
    %5325 = vmatprep.subr.mxu0 0.0
    %5326 = vmatpush2.msra.mxu0 0.0
    %5327 = vmatprep.subr.mxu0 0.0
    %5328 = vmatpush2.msra.mxu0 0.0
    %5329 = vmatprep.subr.mxu0 0.0
    %5330 = vmatpush2.msra.mxu0 0.0
    %5331 = vmatprep.subr.mxu0 0.0
    %5332 = vmatpush2.msra.mxu0 0.0
    %5333 = vmatprep.subr.mxu0 0.0
    %5334 = vmatpush2.msra.mxu0 0.0
    %5335 = vmatprep.subr.mxu0 0.0
    %5336 = vmatpush2.msra.mxu0 0.0
    %5337 = vmatprep.mubr.f32.mxu0 0.0
    %5338 = vmatmul.mubr.f32.gmra.mxu0 %v2132
    %v5339 = vpop.f32.mrf.mxu0
    %v5340 = vadd.f32 0.0, %v5339
    %v5341 = vpop.f32.mrf.mxu0
    %5342 = vmatprep.mubr.f32.mxu0 0.0
    %5343 = vmatmul.mubr.f32.gmra.mxu0 %v2135
    %v5344 = vpop.f32.mrf.mxu0
    %v5345 = vadd.f32 0.0, %v5344
    %v5346 = vpop.f32.mrf.mxu0
    %5347 = vmatprep.mubr.f32.mxu0 0.0
    %5348 = vmatmul.mubr.f32.gmra.mxu0 %v2138
    %v5349 = vpop.f32.mrf.mxu0
    %v5350 = vadd.f32 0.0, %v5349
    %v5351 = vpop.f32.mrf.mxu0
    %5352 = vmatprep.mubr.f32.mxu0 0.0
    %5353 = vmatmul.mubr.f32.gmra.mxu0 %v2141
    %v5354 = vpop.f32.mrf.mxu0
    %v5355 = vadd.f32 0.0, %v5354
    %v5356 = vpop.f32.mrf.mxu0
    %5357 = vdwg.mxu0
    %v5359 = vsel %vm133, %v5340, 0
    %v5362 = vsel %vm133, %v5345, 0
    %v5365 = vsel %vm133, %v5350, 0
    %v5368 = vsel %vm133, %v5355, 0
    %5370 = vmatprep.subr.mxu0 0.0
    %5371 = vmatpush1.msra.mxu0 0.0
    %5372 = vmatprep.subr.mxu0 0.0
    %5373 = vmatpush1.msra.mxu0 0.0
    %5374 = vmatprep.subr.mxu0 0.0
    %5375 = vmatpush1.msra.mxu0 0.0
    %5376 = vmatprep.subr.mxu0 0.0
    %5377 = vmatpush1.msra.mxu0 0.0
    %5378 = vmatprep.subr.mxu0 0.0
    %5379 = vmatpush1.msra.mxu0 0.0
    %5380 = vmatprep.subr.mxu0 0.0
    %5381 = vmatpush1.msra.mxu0 0.0
    %5382 = vmatprep.subr.mxu0 0.0
    %5383 = vmatpush1.msra.mxu0 0.0
    %5384 = vmatprep.subr.mxu0 0.0
    %5385 = vmatpush1.msra.mxu0 0.0
    %5386 = vmatprep.subr.mxu0 0.0
    %5387 = vmatpush1.msra.mxu0 0.0
    %5388 = vmatprep.subr.mxu0 0.0
    %5389 = vmatpush1.msra.mxu0 0.0
    %5390 = vmatprep.subr.mxu0 0.0
    %5391 = vmatpush1.msra.mxu0 0.0
    %5392 = vmatprep.subr.mxu0 0.0
    %5393 = vmatpush1.msra.mxu0 0.0
    %5394 = vmatprep.subr.mxu0 %v1995
    %5395 = vmatpush1.msra.mxu0 %v1994
    %5396 = vmatprep.subr.mxu0 %v1987
    %5397 = vmatpush1.msra.mxu0 %v1986
    %5398 = vmatprep.subr.mxu0 %v1979
    %5399 = vmatpush1.msra.mxu0 %v1978
    %5400 = vmatprep.subr.mxu0 %v1971
    %5401 = vmatpush1.msra.mxu0 %v1970
    %5402 = vmatprep.subr.mxu0 0.0
    %5403 = vmatpush2.msra.mxu0 0.0
    %5404 = vmatprep.subr.mxu0 0.0
    %5405 = vmatpush2.msra.mxu0 0.0
    %5406 = vmatprep.subr.mxu0 0.0
    %5407 = vmatpush2.msra.mxu0 0.0
    %5408 = vmatprep.subr.mxu0 0.0
    %5409 = vmatpush2.msra.mxu0 0.0
    %5410 = vmatprep.subr.mxu0 0.0
    %5411 = vmatpush2.msra.mxu0 0.0
    %5412 = vmatprep.subr.mxu0 0.0
    %5413 = vmatpush2.msra.mxu0 0.0
    %5414 = vmatprep.subr.mxu0 0.0
    %5415 = vmatpush2.msra.mxu0 0.0
    %5416 = vmatprep.subr.mxu0 0.0
    %5417 = vmatpush2.msra.mxu0 0.0
    %5418 = vmatprep.subr.mxu0 0.0
    %5419 = vmatpush2.msra.mxu0 0.0
    %5420 = vmatprep.subr.mxu0 0.0
    %5421 = vmatpush2.msra.mxu0 0.0
    %5422 = vmatprep.subr.mxu0 0.0
    %5423 = vmatpush2.msra.mxu0 0.0
    %5424 = vmatprep.subr.mxu0 0.0
    %5425 = vmatpush2.msra.mxu0 0.0
    %5426 = vmatprep.subr.mxu0 0.0
    %5427 = vmatpush2.msra.mxu0 0.0
    %5428 = vmatprep.subr.mxu0 0.0
    %5429 = vmatpush2.msra.mxu0 0.0
    %5430 = vmatprep.subr.mxu0 0.0
    %5431 = vmatpush2.msra.mxu0 0.0
    %5432 = vmatprep.subr.mxu0 0.0
    %5433 = vmatpush2.msra.mxu0 0.0
    %5434 = vmatprep.mubr.f32.mxu0 0.0
    %5435 = vmatmul.mubr.f32.gmra.mxu0 %v5359
    %v5436 = vpop.f32.mrf.mxu0
    %v5437 = vadd.f32 0.0, %v5436
    %v5438 = vpop.f32.mrf.mxu0
    %v5439 = vadd.f32 0.0, %v5438
    %5440 = vmatprep.mubr.f32.mxu0 0.0
    %5441 = vmatmul.mubr.f32.gmra.mxu0 %v5362
    %v5442 = vpop.f32.mrf.mxu0
    %v5443 = vadd.f32 0.0, %v5442
    %v5444 = vpop.f32.mrf.mxu0
    %v5445 = vadd.f32 0.0, %v5444
    %5446 = vmatprep.mubr.f32.mxu0 0.0
    %5447 = vmatmul.mubr.f32.gmra.mxu0 %v5365
    %v5448 = vpop.f32.mrf.mxu0
    %v5449 = vadd.f32 0.0, %v5448
    %v5450 = vpop.f32.mrf.mxu0
    %v5451 = vadd.f32 0.0, %v5450
    %5452 = vmatprep.mubr.f32.mxu0 0.0
    %5453 = vmatmul.mubr.f32.gmra.mxu0 %v5368
    %v5454 = vpop.f32.mrf.mxu0
    %v5455 = vadd.f32 0.0, %v5454
    %v5456 = vpop.f32.mrf.mxu0
    %v5457 = vadd.f32 0.0, %v5456
    %5458 = vdwg.mxu0
    %5459 = vmatprep.subr.mxu0 0.0
    %5460 = vmatpush1.msra.mxu0 0.0
    %5461 = vmatprep.subr.mxu0 0.0
    %5462 = vmatpush1.msra.mxu0 0.0
    %5463 = vmatprep.subr.mxu0 0.0
    %5464 = vmatpush1.msra.mxu0 0.0
    %5465 = vmatprep.subr.mxu0 0.0
    %5466 = vmatpush1.msra.mxu0 0.0
    %5467 = vmatprep.subr.mxu0 0.0
    %5468 = vmatpush1.msra.mxu0 0.0
    %5469 = vmatprep.subr.mxu0 0.0
    %5470 = vmatpush1.msra.mxu0 0.0
    %5471 = vmatprep.subr.mxu0 0.0
    %5472 = vmatpush1.msra.mxu0 0.0
    %5473 = vmatprep.subr.mxu0 0.0
    %5474 = vmatpush1.msra.mxu0 0.0
    %5475 = vmatprep.subr.mxu0 0.0
    %5476 = vmatpush1.msra.mxu0 0.0
    %5477 = vmatprep.subr.mxu0 0.0
    %5478 = vmatpush1.msra.mxu0 0.0
    %5479 = vmatprep.subr.mxu0 0.0
    %5480 = vmatpush1.msra.mxu0 0.0
    %5481 = vmatprep.subr.mxu0 0.0
    %5482 = vmatpush1.msra.mxu0 0.0
    %5483 = vmatprep.subr.mxu0 %v1997
    %5484 = vmatpush1.msra.mxu0 %v1996
    %5485 = vmatprep.subr.mxu0 %v1989
    %5486 = vmatpush1.msra.mxu0 %v1988
    %5487 = vmatprep.subr.mxu0 %v1981
    %5488 = vmatpush1.msra.mxu0 %v1980
    %5489 = vmatprep.subr.mxu0 %v1973
    %5490 = vmatpush1.msra.mxu0 %v1972
    %5491 = vmatprep.subr.mxu0 0.0
    %5492 = vmatpush2.msra.mxu0 0.0
    %5493 = vmatprep.subr.mxu0 0.0
    %5494 = vmatpush2.msra.mxu0 0.0
    %5495 = vmatprep.subr.mxu0 0.0
    %5496 = vmatpush2.msra.mxu0 0.0
    %5497 = vmatprep.subr.mxu0 0.0
    %5498 = vmatpush2.msra.mxu0 0.0
    %5499 = vmatprep.subr.mxu0 0.0
    %5500 = vmatpush2.msra.mxu0 0.0
    %5501 = vmatprep.subr.mxu0 0.0
    %5502 = vmatpush2.msra.mxu0 0.0
    %5503 = vmatprep.subr.mxu0 0.0
    %5504 = vmatpush2.msra.mxu0 0.0
    %5505 = vmatprep.subr.mxu0 0.0
    %5506 = vmatpush2.msra.mxu0 0.0
    %5507 = vmatprep.subr.mxu0 0.0
    %5508 = vmatpush2.msra.mxu0 0.0
    %5509 = vmatprep.subr.mxu0 0.0
    %5510 = vmatpush2.msra.mxu0 0.0
    %5511 = vmatprep.subr.mxu0 0.0
    %5512 = vmatpush2.msra.mxu0 0.0
    %5513 = vmatprep.subr.mxu0 0.0
    %5514 = vmatpush2.msra.mxu0 0.0
    %5515 = vmatprep.subr.mxu0 0.0
    %5516 = vmatpush2.msra.mxu0 0.0
    %5517 = vmatprep.subr.mxu0 0.0
    %5518 = vmatpush2.msra.mxu0 0.0
    %5519 = vmatprep.subr.mxu0 0.0
    %5520 = vmatpush2.msra.mxu0 0.0
    %5521 = vmatprep.subr.mxu0 0.0
    %5522 = vmatpush2.msra.mxu0 0.0
    %5523 = vmatprep.mubr.f32.mxu0 0.0
    %5524 = vmatmul.mubr.f32.gmra.mxu0 %v5359
    %v5525 = vpop.f32.mrf.mxu0
    %v5526 = vadd.f32 0.0, %v5525
    %v5527 = vpop.f32.mrf.mxu0
    %v5528 = vadd.f32 0.0, %v5527
    %5529 = vmatprep.mubr.f32.mxu0 0.0
    %5530 = vmatmul.mubr.f32.gmra.mxu0 %v5362
    %v5531 = vpop.f32.mrf.mxu0
    %v5532 = vadd.f32 0.0, %v5531
    %v5533 = vpop.f32.mrf.mxu0
    %v5534 = vadd.f32 0.0, %v5533
    %5535 = vmatprep.mubr.f32.mxu0 0.0
    %5536 = vmatmul.mubr.f32.gmra.mxu0 %v5365
    %v5537 = vpop.f32.mrf.mxu0
    %v5538 = vadd.f32 0.0, %v5537
    %v5539 = vpop.f32.mrf.mxu0
    %v5540 = vadd.f32 0.0, %v5539
    %5541 = vmatprep.mubr.f32.mxu0 0.0
    %5542 = vmatmul.mubr.f32.gmra.mxu0 %v5368
    %v5543 = vpop.f32.mrf.mxu0
    %v5544 = vadd.f32 0.0, %v5543
    %v5545 = vpop.f32.mrf.mxu0
    %v5546 = vadd.f32 0.0, %v5545
    %5547 = vdwg.mxu0
    %5548 = vmatprep.subr.mxu0 0.0
    %5549 = vmatpush1.msra.mxu0 0.0
    %5550 = vmatprep.subr.mxu0 0.0
    %5551 = vmatpush1.msra.mxu0 0.0
    %5552 = vmatprep.subr.mxu0 0.0
    %5553 = vmatpush1.msra.mxu0 0.0
    %5554 = vmatprep.subr.mxu0 0.0
    %5555 = vmatpush1.msra.mxu0 0.0
    %5556 = vmatprep.subr.mxu0 0.0
    %5557 = vmatpush1.msra.mxu0 0.0
    %5558 = vmatprep.subr.mxu0 0.0
    %5559 = vmatpush1.msra.mxu0 0.0
    %5560 = vmatprep.subr.mxu0 0.0
    %5561 = vmatpush1.msra.mxu0 0.0
    %5562 = vmatprep.subr.mxu0 0.0
    %5563 = vmatpush1.msra.mxu0 0.0
    %5564 = vmatprep.subr.mxu0 0.0
    %5565 = vmatpush1.msra.mxu0 0.0
    %5566 = vmatprep.subr.mxu0 0.0
    %5567 = vmatpush1.msra.mxu0 0.0
    %5568 = vmatprep.subr.mxu0 0.0
    %5569 = vmatpush1.msra.mxu0 0.0
    %5570 = vmatprep.subr.mxu0 0.0
    %5571 = vmatpush1.msra.mxu0 0.0
    %5572 = vmatprep.subr.mxu0 %v1999
    %5573 = vmatpush1.msra.mxu0 %v1998
    %5574 = vmatprep.subr.mxu0 %v1991
    %5575 = vmatpush1.msra.mxu0 %v1990
    %5576 = vmatprep.subr.mxu0 %v1983
    %5577 = vmatpush1.msra.mxu0 %v1982
    %5578 = vmatprep.subr.mxu0 %v1975
    %5579 = vmatpush1.msra.mxu0 %v1974
    %5580 = vmatprep.subr.mxu0 0.0
    %5581 = vmatpush2.msra.mxu0 0.0
    %5582 = vmatprep.subr.mxu0 0.0
    %5583 = vmatpush2.msra.mxu0 0.0
    %5584 = vmatprep.subr.mxu0 0.0
    %5585 = vmatpush2.msra.mxu0 0.0
    %5586 = vmatprep.subr.mxu0 0.0
    %5587 = vmatpush2.msra.mxu0 0.0
    %5588 = vmatprep.subr.mxu0 0.0
    %5589 = vmatpush2.msra.mxu0 0.0
    %5590 = vmatprep.subr.mxu0 0.0
    %5591 = vmatpush2.msra.mxu0 0.0
    %5592 = vmatprep.subr.mxu0 0.0
    %5593 = vmatpush2.msra.mxu0 0.0
    %5594 = vmatprep.subr.mxu0 0.0
    %5595 = vmatpush2.msra.mxu0 0.0
    %5596 = vmatprep.subr.mxu0 0.0
    %5597 = vmatpush2.msra.mxu0 0.0
    %5598 = vmatprep.subr.mxu0 0.0
    %5599 = vmatpush2.msra.mxu0 0.0
    %5600 = vmatprep.subr.mxu0 0.0
    %5601 = vmatpush2.msra.mxu0 0.0
    %5602 = vmatprep.subr.mxu0 0.0
    %5603 = vmatpush2.msra.mxu0 0.0
    %5604 = vmatprep.subr.mxu0 0.0
    %5605 = vmatpush2.msra.mxu0 0.0
    %5606 = vmatprep.subr.mxu0 0.0
    %5607 = vmatpush2.msra.mxu0 0.0
    %5608 = vmatprep.subr.mxu0 0.0
    %5609 = vmatpush2.msra.mxu0 0.0
    %5610 = vmatprep.subr.mxu0 0.0
    %5611 = vmatpush2.msra.mxu0 0.0
    %5612 = vmatprep.mubr.f32.mxu0 0.0
    %5613 = vmatmul.mubr.f32.gmra.mxu0 %v5359
    %v5614 = vpop.f32.mrf.mxu0
    %v5615 = vadd.f32 0.0, %v5614
    %v5616 = vpop.f32.mrf.mxu0
    %v5617 = vadd.f32 0.0, %v5616
    %5618 = vmatprep.mubr.f32.mxu0 0.0
    %5619 = vmatmul.mubr.f32.gmra.mxu0 %v5362
    %v5620 = vpop.f32.mrf.mxu0
    %v5621 = vadd.f32 0.0, %v5620
    %v5622 = vpop.f32.mrf.mxu0
    %v5623 = vadd.f32 0.0, %v5622
    %5624 = vmatprep.mubr.f32.mxu0 0.0
    %5625 = vmatmul.mubr.f32.gmra.mxu0 %v5365
    %v5626 = vpop.f32.mrf.mxu0
    %v5627 = vadd.f32 0.0, %v5626
    %v5628 = vpop.f32.mrf.mxu0
    %v5629 = vadd.f32 0.0, %v5628
    %5630 = vmatprep.mubr.f32.mxu0 0.0
    %5631 = vmatmul.mubr.f32.gmra.mxu0 %v5368
    %v5632 = vpop.f32.mrf.mxu0
    %v5633 = vadd.f32 0.0, %v5632
    %v5634 = vpop.f32.mrf.mxu0
    %v5635 = vadd.f32 0.0, %v5634
    %5636 = vdwg.mxu0
    %5637 = vmatprep.subr.mxu0 0.0
    %5638 = vmatpush1.msra.mxu0 0.0
    %5639 = vmatprep.subr.mxu0 0.0
    %5640 = vmatpush1.msra.mxu0 0.0
    %5641 = vmatprep.subr.mxu0 0.0
    %5642 = vmatpush1.msra.mxu0 0.0
    %5643 = vmatprep.subr.mxu0 0.0
    %5644 = vmatpush1.msra.mxu0 0.0
    %5645 = vmatprep.subr.mxu0 0.0
    %5646 = vmatpush1.msra.mxu0 0.0
    %5647 = vmatprep.subr.mxu0 0.0
    %5648 = vmatpush1.msra.mxu0 0.0
    %5649 = vmatprep.subr.mxu0 0.0
    %5650 = vmatpush1.msra.mxu0 0.0
    %5651 = vmatprep.subr.mxu0 0.0
    %5652 = vmatpush1.msra.mxu0 0.0
    %5653 = vmatprep.subr.mxu0 0.0
    %5654 = vmatpush1.msra.mxu0 0.0
    %5655 = vmatprep.subr.mxu0 0.0
    %5656 = vmatpush1.msra.mxu0 0.0
    %5657 = vmatprep.subr.mxu0 0.0
    %5658 = vmatpush1.msra.mxu0 0.0
    %5659 = vmatprep.subr.mxu0 0.0
    %5660 = vmatpush1.msra.mxu0 0.0
    %5661 = vmatprep.subr.mxu0 %v2001
    %5662 = vmatpush1.msra.mxu0 %v2000
    %5663 = vmatprep.subr.mxu0 %v1993
    %5664 = vmatpush1.msra.mxu0 %v1992
    %5665 = vmatprep.subr.mxu0 %v1985
    %5666 = vmatpush1.msra.mxu0 %v1984
    %5667 = vmatprep.subr.mxu0 %v1977
    %5668 = vmatpush1.msra.mxu0 %v1976
    %5669 = vmatprep.subr.mxu0 0.0
    %5670 = vmatpush2.msra.mxu0 0.0
    %5671 = vmatprep.subr.mxu0 0.0
    %5672 = vmatpush2.msra.mxu0 0.0
    %5673 = vmatprep.subr.mxu0 0.0
    %5674 = vmatpush2.msra.mxu0 0.0
    %5675 = vmatprep.subr.mxu0 0.0
    %5676 = vmatpush2.msra.mxu0 0.0
    %5677 = vmatprep.subr.mxu0 0.0
    %5678 = vmatpush2.msra.mxu0 0.0
    %5679 = vmatprep.subr.mxu0 0.0
    %5680 = vmatpush2.msra.mxu0 0.0
    %5681 = vmatprep.subr.mxu0 0.0
    %5682 = vmatpush2.msra.mxu0 0.0
    %5683 = vmatprep.subr.mxu0 0.0
    %5684 = vmatpush2.msra.mxu0 0.0
    %5685 = vmatprep.subr.mxu0 0.0
    %5686 = vmatpush2.msra.mxu0 0.0
    %5687 = vmatprep.subr.mxu0 0.0
    %5688 = vmatpush2.msra.mxu0 0.0
    %5689 = vmatprep.subr.mxu0 0.0
    %5690 = vmatpush2.msra.mxu0 0.0
    %5691 = vmatprep.subr.mxu0 0.0
    %5692 = vmatpush2.msra.mxu0 0.0
    %5693 = vmatprep.subr.mxu0 0.0
    %5694 = vmatpush2.msra.mxu0 0.0
    %5695 = vmatprep.subr.mxu0 0.0
    %5696 = vmatpush2.msra.mxu0 0.0
    %5697 = vmatprep.subr.mxu0 0.0
    %5698 = vmatpush2.msra.mxu0 0.0
    %5699 = vmatprep.subr.mxu0 0.0
    %5700 = vmatpush2.msra.mxu0 0.0
    %5701 = vmatprep.mubr.f32.mxu0 0.0
    %5702 = vmatmul.mubr.f32.gmra.mxu0 %v5359
    %v5703 = vpop.f32.mrf.mxu0
    %v5704 = vadd.f32 0.0, %v5703
    %v5705 = vpop.f32.mrf.mxu0
    %v5706 = vadd.f32 0.0, %v5705
    %5707 = vmatprep.mubr.f32.mxu0 0.0
    %5708 = vmatmul.mubr.f32.gmra.mxu0 %v5362
    %v5709 = vpop.f32.mrf.mxu0
    %v5710 = vadd.f32 0.0, %v5709
    %v5711 = vpop.f32.mrf.mxu0
    %v5712 = vadd.f32 0.0, %v5711
    %5713 = vmatprep.mubr.f32.mxu0 0.0
    %5714 = vmatmul.mubr.f32.gmra.mxu0 %v5365
    %v5715 = vpop.f32.mrf.mxu0
    %v5716 = vadd.f32 0.0, %v5715
    %v5717 = vpop.f32.mrf.mxu0
    %v5718 = vadd.f32 0.0, %v5717
    %5719 = vmatprep.mubr.f32.mxu0 0.0
    %5720 = vmatmul.mubr.f32.gmra.mxu0 %v5368
    %v5721 = vpop.f32.mrf.mxu0
    %v5722 = vadd.f32 0.0, %v5721
    %v5723 = vpop.f32.mrf.mxu0
    %v5724 = vadd.f32 0.0, %v5723
    %5725 = vdwg.mxu0
    %v5726 = vmul.f32 %v5437, %v1675
    %v5727 = vmul.f32 %v5439, %v1677
    %v5728 = vmul.f32 %v5526, %v1764
    %v5729 = vmul.f32 %v5528, %v1766
    %v5730 = vmul.f32 %v5615, %v1853
    %v5731 = vmul.f32 %v5617, %v1855
    %v5732 = vmul.f32 %v5704, %v1942
    %v5733 = vmul.f32 %v5706, %v1944
    %v5734 = vmul.f32 %v5443, %v1681
    %v5735 = vmul.f32 %v5445, %v1683
    %v5736 = vmul.f32 %v5532, %v1770
    %v5737 = vmul.f32 %v5534, %v1772
    %v5738 = vmul.f32 %v5621, %v1859
    %v5739 = vmul.f32 %v5623, %v1861
    %v5740 = vmul.f32 %v5710, %v1948
    %v5741 = vmul.f32 %v5712, %v1950
    %v5742 = vmul.f32 %v5449, %v1687
    %v5743 = vmul.f32 %v5451, %v1689
    %v5744 = vmul.f32 %v5538, %v1776
    %v5745 = vmul.f32 %v5540, %v1778
    %v5746 = vmul.f32 %v5627, %v1865
    %v5747 = vmul.f32 %v5629, %v1867
    %v5748 = vmul.f32 %v5716, %v1954
    %v5749 = vmul.f32 %v5718, %v1956
    %v5750 = vmul.f32 %v5455, %v1693
    %v5751 = vmul.f32 %v5457, %v1695
    %v5752 = vmul.f32 %v5544, %v1782
    %v5753 = vmul.f32 %v5546, %v1784
    %v5754 = vmul.f32 %v5633, %v1871
    %v5755 = vmul.f32 %v5635, %v1873
    %v5756 = vmul.f32 %v5722, %v1960
    %v5757 = vmul.f32 %v5724, %v1962
    %5758 = vmatprep.subr.mxu0 0.0
    %5759 = vmatpush1.msra.mxu0 %v2017
    %5760 = vmatprep.subr.mxu0 0.0
    %5761 = vmatpush1.msra.mxu0 %v2016
    %5762 = vmatprep.subr.mxu0 0.0
    %5763 = vmatpush1.msra.mxu0 %v2015
    %5764 = vmatprep.subr.mxu0 0.0
    %5765 = vmatpush1.msra.mxu0 %v2014
    %5766 = vmatprep.subr.mxu0 0.0
    %5767 = vmatpush1.msra.mxu0 %v2013
    %5768 = vmatprep.subr.mxu0 0.0
    %5769 = vmatpush1.msra.mxu0 %v2012
    %5770 = vmatprep.subr.mxu0 0.0
    %5771 = vmatpush1.msra.mxu0 %v2011
    %5772 = vmatprep.subr.mxu0 0.0
    %5773 = vmatpush1.msra.mxu0 %v2010
    %5774 = vmatprep.subr.mxu0 0.0
    %5775 = vmatpush1.msra.mxu0 %v2009
    %5776 = vmatprep.subr.mxu0 0.0
    %5777 = vmatpush1.msra.mxu0 %v2008
    %5778 = vmatprep.subr.mxu0 0.0
    %5779 = vmatpush1.msra.mxu0 %v2007
    %5780 = vmatprep.subr.mxu0 0.0
    %5781 = vmatpush1.msra.mxu0 %v2006
    %5782 = vmatprep.subr.mxu0 0.0
    %5783 = vmatpush1.msra.mxu0 %v2005
    %5784 = vmatprep.subr.mxu0 0.0
    %5785 = vmatpush1.msra.mxu0 %v2004
    %5786 = vmatprep.subr.mxu0 0.0
    %5787 = vmatpush1.msra.mxu0 %v2003
    %5788 = vmatprep.subr.mxu0 0.0
    %5789 = vmatpush1.msra.mxu0 %v2002
    %5790 = vmatprep.subr.mxu0 0.0
    %5791 = vmatpush2.msra.mxu0 %v2033
    %5792 = vmatprep.subr.mxu0 0.0
    %5793 = vmatpush2.msra.mxu0 %v2032
    %5794 = vmatprep.subr.mxu0 0.0
    %5795 = vmatpush2.msra.mxu0 %v2031
    %5796 = vmatprep.subr.mxu0 0.0
    %5797 = vmatpush2.msra.mxu0 %v2030
    %5798 = vmatprep.subr.mxu0 0.0
    %5799 = vmatpush2.msra.mxu0 %v2029
    %5800 = vmatprep.subr.mxu0 0.0
    %5801 = vmatpush2.msra.mxu0 %v2028
    %5802 = vmatprep.subr.mxu0 0.0
    %5803 = vmatpush2.msra.mxu0 %v2027
    %5804 = vmatprep.subr.mxu0 0.0
    %5805 = vmatpush2.msra.mxu0 %v2026
    %5806 = vmatprep.subr.mxu0 0.0
    %5807 = vmatpush2.msra.mxu0 %v2025
    %5808 = vmatprep.subr.mxu0 0.0
    %5809 = vmatpush2.msra.mxu0 %v2024
    %5810 = vmatprep.subr.mxu0 0.0
    %5811 = vmatpush2.msra.mxu0 %v2023
    %5812 = vmatprep.subr.mxu0 0.0
    %5813 = vmatpush2.msra.mxu0 %v2022
    %5814 = vmatprep.subr.mxu0 0.0
    %5815 = vmatpush2.msra.mxu0 %v2021
    %5816 = vmatprep.subr.mxu0 0.0
    %5817 = vmatpush2.msra.mxu0 %v2020
    %5818 = vmatprep.subr.mxu0 0.0
    %5819 = vmatpush2.msra.mxu0 %v2019
    %5820 = vmatprep.subr.mxu0 0.0
    %5821 = vmatpush2.msra.mxu0 %v2018
    %5822 = vmatprep.mubr.f32.mxu0 %v5727
    %5823 = vmatmul.mubr.f32.gmra.mxu0 %v5726
    %v5824 = vpop.f32.mrf.mxu0
    %v5825 = vadd.f32 0.0, %v5824
    %v5826 = vpop.f32.mrf.mxu0
    %5827 = vmatprep.mubr.f32.mxu0 %v5735
    %5828 = vmatmul.mubr.f32.gmra.mxu0 %v5734
    %v5829 = vpop.f32.mrf.mxu0
    %v5830 = vadd.f32 0.0, %v5829
    %v5831 = vpop.f32.mrf.mxu0
    %5832 = vmatprep.mubr.f32.mxu0 %v5743
    %5833 = vmatmul.mubr.f32.gmra.mxu0 %v5742
    %v5834 = vpop.f32.mrf.mxu0
    %v5835 = vadd.f32 0.0, %v5834
    %v5836 = vpop.f32.mrf.mxu0
    %5837 = vmatprep.mubr.f32.mxu0 %v5751
    %5838 = vmatmul.mubr.f32.gmra.mxu0 %v5750
    %v5839 = vpop.f32.mrf.mxu0
    %v5840 = vadd.f32 0.0, %v5839
    %v5841 = vpop.f32.mrf.mxu0
    %5842 = vdwg.mxu0
    %5843 = vmatprep.subr.mxu0 0.0
    %5844 = vmatpush1.msra.mxu0 %v2049
    %5845 = vmatprep.subr.mxu0 0.0
    %5846 = vmatpush1.msra.mxu0 %v2048
    %5847 = vmatprep.subr.mxu0 0.0
    %5848 = vmatpush1.msra.mxu0 %v2047
    %5849 = vmatprep.subr.mxu0 0.0
    %5850 = vmatpush1.msra.mxu0 %v2046
    %5851 = vmatprep.subr.mxu0 0.0
    %5852 = vmatpush1.msra.mxu0 %v2045
    %5853 = vmatprep.subr.mxu0 0.0
    %5854 = vmatpush1.msra.mxu0 %v2044
    %5855 = vmatprep.subr.mxu0 0.0
    %5856 = vmatpush1.msra.mxu0 %v2043
    %5857 = vmatprep.subr.mxu0 0.0
    %5858 = vmatpush1.msra.mxu0 %v2042
    %5859 = vmatprep.subr.mxu0 0.0
    %5860 = vmatpush1.msra.mxu0 %v2041
    %5861 = vmatprep.subr.mxu0 0.0
    %5862 = vmatpush1.msra.mxu0 %v2040
    %5863 = vmatprep.subr.mxu0 0.0
    %5864 = vmatpush1.msra.mxu0 %v2039
    %5865 = vmatprep.subr.mxu0 0.0
    %5866 = vmatpush1.msra.mxu0 %v2038
    %5867 = vmatprep.subr.mxu0 0.0
    %5868 = vmatpush1.msra.mxu0 %v2037
    %5869 = vmatprep.subr.mxu0 0.0
    %5870 = vmatpush1.msra.mxu0 %v2036
    %5871 = vmatprep.subr.mxu0 0.0
    %5872 = vmatpush1.msra.mxu0 %v2035
    %5873 = vmatprep.subr.mxu0 0.0
    %5874 = vmatpush1.msra.mxu0 %v2034
    %5875 = vmatprep.subr.mxu0 0.0
    %5876 = vmatpush2.msra.mxu0 %v2065
    %5877 = vmatprep.subr.mxu0 0.0
    %5878 = vmatpush2.msra.mxu0 %v2064
    %5879 = vmatprep.subr.mxu0 0.0
    %5880 = vmatpush2.msra.mxu0 %v2063
    %5881 = vmatprep.subr.mxu0 0.0
    %5882 = vmatpush2.msra.mxu0 %v2062
    %5883 = vmatprep.subr.mxu0 0.0
    %5884 = vmatpush2.msra.mxu0 %v2061
    %5885 = vmatprep.subr.mxu0 0.0
    %5886 = vmatpush2.msra.mxu0 %v2060
    %5887 = vmatprep.subr.mxu0 0.0
    %5888 = vmatpush2.msra.mxu0 %v2059
    %5889 = vmatprep.subr.mxu0 0.0
    %5890 = vmatpush2.msra.mxu0 %v2058
    %5891 = vmatprep.subr.mxu0 0.0
    %5892 = vmatpush2.msra.mxu0 %v2057
    %5893 = vmatprep.subr.mxu0 0.0
    %5894 = vmatpush2.msra.mxu0 %v2056
    %5895 = vmatprep.subr.mxu0 0.0
    %5896 = vmatpush2.msra.mxu0 %v2055
    %5897 = vmatprep.subr.mxu0 0.0
    %5898 = vmatpush2.msra.mxu0 %v2054
    %5899 = vmatprep.subr.mxu0 0.0
    %5900 = vmatpush2.msra.mxu0 %v2053
    %5901 = vmatprep.subr.mxu0 0.0
    %5902 = vmatpush2.msra.mxu0 %v2052
    %5903 = vmatprep.subr.mxu0 0.0
    %5904 = vmatpush2.msra.mxu0 %v2051
    %5905 = vmatprep.subr.mxu0 0.0
    %5906 = vmatpush2.msra.mxu0 %v2050
    %5907 = vmatprep.mubr.f32.mxu0 %v5729
    %5908 = vmatmul.mubr.f32.gmra.mxu0 %v5728
    %v5909 = vpop.f32.mrf.mxu0
    %v5910 = vadd.f32 %v5825, %v5909
    %v5911 = vpop.f32.mrf.mxu0
    %5912 = vmatprep.mubr.f32.mxu0 %v5737
    %5913 = vmatmul.mubr.f32.gmra.mxu0 %v5736
    %v5914 = vpop.f32.mrf.mxu0
    %v5915 = vadd.f32 %v5830, %v5914
    %v5916 = vpop.f32.mrf.mxu0
    %5917 = vmatprep.mubr.f32.mxu0 %v5745
    %5918 = vmatmul.mubr.f32.gmra.mxu0 %v5744
    %v5919 = vpop.f32.mrf.mxu0
    %v5920 = vadd.f32 %v5835, %v5919
    %v5921 = vpop.f32.mrf.mxu0
    %5922 = vmatprep.mubr.f32.mxu0 %v5753
    %5923 = vmatmul.mubr.f32.gmra.mxu0 %v5752
    %v5924 = vpop.f32.mrf.mxu0
    %v5925 = vadd.f32 %v5840, %v5924
    %v5926 = vpop.f32.mrf.mxu0
    %5927 = vdwg.mxu0
    %5928 = vmatprep.subr.mxu0 0.0
    %5929 = vmatpush1.msra.mxu0 %v2081
    %5930 = vmatprep.subr.mxu0 0.0
    %5931 = vmatpush1.msra.mxu0 %v2080
    %5932 = vmatprep.subr.mxu0 0.0
    %5933 = vmatpush1.msra.mxu0 %v2079
    %5934 = vmatprep.subr.mxu0 0.0
    %5935 = vmatpush1.msra.mxu0 %v2078
    %5936 = vmatprep.subr.mxu0 0.0
    %5937 = vmatpush1.msra.mxu0 %v2077
    %5938 = vmatprep.subr.mxu0 0.0
    %5939 = vmatpush1.msra.mxu0 %v2076
    %5940 = vmatprep.subr.mxu0 0.0
    %5941 = vmatpush1.msra.mxu0 %v2075
    %5942 = vmatprep.subr.mxu0 0.0
    %5943 = vmatpush1.msra.mxu0 %v2074
    %5944 = vmatprep.subr.mxu0 0.0
    %5945 = vmatpush1.msra.mxu0 %v2073
    %5946 = vmatprep.subr.mxu0 0.0
    %5947 = vmatpush1.msra.mxu0 %v2072
    %5948 = vmatprep.subr.mxu0 0.0
    %5949 = vmatpush1.msra.mxu0 %v2071
    %5950 = vmatprep.subr.mxu0 0.0
    %5951 = vmatpush1.msra.mxu0 %v2070
    %5952 = vmatprep.subr.mxu0 0.0
    %5953 = vmatpush1.msra.mxu0 %v2069
    %5954 = vmatprep.subr.mxu0 0.0
    %5955 = vmatpush1.msra.mxu0 %v2068
    %5956 = vmatprep.subr.mxu0 0.0
    %5957 = vmatpush1.msra.mxu0 %v2067
    %5958 = vmatprep.subr.mxu0 0.0
    %5959 = vmatpush1.msra.mxu0 %v2066
    %5960 = vmatprep.subr.mxu0 0.0
    %5961 = vmatpush2.msra.mxu0 %v2097
    %5962 = vmatprep.subr.mxu0 0.0
    %5963 = vmatpush2.msra.mxu0 %v2096
    %5964 = vmatprep.subr.mxu0 0.0
    %5965 = vmatpush2.msra.mxu0 %v2095
    %5966 = vmatprep.subr.mxu0 0.0
    %5967 = vmatpush2.msra.mxu0 %v2094
    %5968 = vmatprep.subr.mxu0 0.0
    %5969 = vmatpush2.msra.mxu0 %v2093
    %5970 = vmatprep.subr.mxu0 0.0
    %5971 = vmatpush2.msra.mxu0 %v2092
    %5972 = vmatprep.subr.mxu0 0.0
    %5973 = vmatpush2.msra.mxu0 %v2091
    %5974 = vmatprep.subr.mxu0 0.0
    %5975 = vmatpush2.msra.mxu0 %v2090
    %5976 = vmatprep.subr.mxu0 0.0
    %5977 = vmatpush2.msra.mxu0 %v2089
    %5978 = vmatprep.subr.mxu0 0.0
    %5979 = vmatpush2.msra.mxu0 %v2088
    %5980 = vmatprep.subr.mxu0 0.0
    %5981 = vmatpush2.msra.mxu0 %v2087
    %5982 = vmatprep.subr.mxu0 0.0
    %5983 = vmatpush2.msra.mxu0 %v2086
    %5984 = vmatprep.subr.mxu0 0.0
    %5985 = vmatpush2.msra.mxu0 %v2085
    %5986 = vmatprep.subr.mxu0 0.0
    %5987 = vmatpush2.msra.mxu0 %v2084
    %5988 = vmatprep.subr.mxu0 0.0
    %5989 = vmatpush2.msra.mxu0 %v2083
    %5990 = vmatprep.subr.mxu0 0.0
    %5991 = vmatpush2.msra.mxu0 %v2082
    %5992 = vmatprep.mubr.f32.mxu0 %v5731
    %5993 = vmatmul.mubr.f32.gmra.mxu0 %v5730
    %v5994 = vpop.f32.mrf.mxu0
    %v5995 = vadd.f32 %v5910, %v5994
    %v5996 = vpop.f32.mrf.mxu0
    %5997 = vmatprep.mubr.f32.mxu0 %v5739
    %5998 = vmatmul.mubr.f32.gmra.mxu0 %v5738
    %v5999 = vpop.f32.mrf.mxu0
    %v6000 = vadd.f32 %v5915, %v5999
    %v6001 = vpop.f32.mrf.mxu0
    %6002 = vmatprep.mubr.f32.mxu0 %v5747
    %6003 = vmatmul.mubr.f32.gmra.mxu0 %v5746
    %v6004 = vpop.f32.mrf.mxu0
    %v6005 = vadd.f32 %v5920, %v6004
    %v6006 = vpop.f32.mrf.mxu0
    %6007 = vmatprep.mubr.f32.mxu0 %v5755
    %6008 = vmatmul.mubr.f32.gmra.mxu0 %v5754
    %v6009 = vpop.f32.mrf.mxu0
    %v6010 = vadd.f32 %v5925, %v6009
    %v6011 = vpop.f32.mrf.mxu0
    %6012 = vdwg.mxu0
    %6013 = vmatprep.subr.mxu0 0.0
    %6014 = vmatpush1.msra.mxu0 %v2113
    %6015 = vmatprep.subr.mxu0 0.0
    %6016 = vmatpush1.msra.mxu0 %v2112
    %6017 = vmatprep.subr.mxu0 0.0
    %6018 = vmatpush1.msra.mxu0 %v2111
    %6019 = vmatprep.subr.mxu0 0.0
    %6020 = vmatpush1.msra.mxu0 %v2110
    %6021 = vmatprep.subr.mxu0 0.0
    %6022 = vmatpush1.msra.mxu0 %v2109
    %6023 = vmatprep.subr.mxu0 0.0
    %6024 = vmatpush1.msra.mxu0 %v2108
    %6025 = vmatprep.subr.mxu0 0.0
    %6026 = vmatpush1.msra.mxu0 %v2107
    %6027 = vmatprep.subr.mxu0 0.0
    %6028 = vmatpush1.msra.mxu0 %v2106
    %6029 = vmatprep.subr.mxu0 0.0
    %6030 = vmatpush1.msra.mxu0 %v2105
    %6031 = vmatprep.subr.mxu0 0.0
    %6032 = vmatpush1.msra.mxu0 %v2104
    %6033 = vmatprep.subr.mxu0 0.0
    %6034 = vmatpush1.msra.mxu0 %v2103
    %6035 = vmatprep.subr.mxu0 0.0
    %6036 = vmatpush1.msra.mxu0 %v2102
    %6037 = vmatprep.subr.mxu0 0.0
    %6038 = vmatpush1.msra.mxu0 %v2101
    %6039 = vmatprep.subr.mxu0 0.0
    %6040 = vmatpush1.msra.mxu0 %v2100
    %6041 = vmatprep.subr.mxu0 0.0
    %6042 = vmatpush1.msra.mxu0 %v2099
    %6043 = vmatprep.subr.mxu0 0.0
    %6044 = vmatpush1.msra.mxu0 %v2098
    %6045 = vmatprep.subr.mxu0 0.0
    %6046 = vmatpush2.msra.mxu0 %v2129
    %6047 = vmatprep.subr.mxu0 0.0
    %6048 = vmatpush2.msra.mxu0 %v2128
    %6049 = vmatprep.subr.mxu0 0.0
    %6050 = vmatpush2.msra.mxu0 %v2127
    %6051 = vmatprep.subr.mxu0 0.0
    %6052 = vmatpush2.msra.mxu0 %v2126
    %6053 = vmatprep.subr.mxu0 0.0
    %6054 = vmatpush2.msra.mxu0 %v2125
    %6055 = vmatprep.subr.mxu0 0.0
    %6056 = vmatpush2.msra.mxu0 %v2124
    %6057 = vmatprep.subr.mxu0 0.0
    %6058 = vmatpush2.msra.mxu0 %v2123
    %6059 = vmatprep.subr.mxu0 0.0
    %6060 = vmatpush2.msra.mxu0 %v2122
    %6061 = vmatprep.subr.mxu0 0.0
    %6062 = vmatpush2.msra.mxu0 %v2121
    %6063 = vmatprep.subr.mxu0 0.0
    %6064 = vmatpush2.msra.mxu0 %v2120
    %6065 = vmatprep.subr.mxu0 0.0
    %6066 = vmatpush2.msra.mxu0 %v2119
    %6067 = vmatprep.subr.mxu0 0.0
    %6068 = vmatpush2.msra.mxu0 %v2118
    %6069 = vmatprep.subr.mxu0 0.0
    %6070 = vmatpush2.msra.mxu0 %v2117
    %6071 = vmatprep.subr.mxu0 0.0
    %6072 = vmatpush2.msra.mxu0 %v2116
    %6073 = vmatprep.subr.mxu0 0.0
    %6074 = vmatpush2.msra.mxu0 %v2115
    %6075 = vmatprep.subr.mxu0 0.0
    %6076 = vmatpush2.msra.mxu0 %v2114
    %6077 = vmatprep.mubr.f32.mxu0 %v5733
    %6078 = vmatmul.mubr.f32.gmra.mxu0 %v5732
    %v6079 = vpop.f32.mrf.mxu0
    %v6080 = vadd.f32 %v5995, %v6079
    %v6081 = vpop.f32.mrf.mxu0
    %6082 = vmatprep.mubr.f32.mxu0 %v5741
    %6083 = vmatmul.mubr.f32.gmra.mxu0 %v5740
    %v6084 = vpop.f32.mrf.mxu0
    %v6085 = vadd.f32 %v6000, %v6084
    %v6086 = vpop.f32.mrf.mxu0
    %6087 = vmatprep.mubr.f32.mxu0 %v5749
    %6088 = vmatmul.mubr.f32.gmra.mxu0 %v5748
    %v6089 = vpop.f32.mrf.mxu0
    %v6090 = vadd.f32 %v6005, %v6089
    %v6091 = vpop.f32.mrf.mxu0
    %6092 = vmatprep.mubr.f32.mxu0 %v5757
    %6093 = vmatmul.mubr.f32.gmra.mxu0 %v5756
    %v6094 = vpop.f32.mrf.mxu0
    %v6095 = vadd.f32 %v6010, %v6094
    %v6096 = vpop.f32.mrf.mxu0
    %6097 = vdwg.mxu0
    %v6099 = vsel %vm2975, %v6095, 0
    %6101 = vmatprep.subr.mxu0 0.0
    %6102 = vmatpush1.msra.mxu0 0.0
    %6103 = vmatprep.subr.mxu0 0.0
    %6104 = vmatpush1.msra.mxu0 0.0
    %6105 = vmatprep.subr.mxu0 0.0
    %6106 = vmatpush1.msra.mxu0 0.0
    %6107 = vmatprep.subr.mxu0 0.0
    %6108 = vmatpush1.msra.mxu0 0.0
    %6109 = vmatprep.subr.mxu0 0.0
    %6110 = vmatpush1.msra.mxu0 0.0
    %6111 = vmatprep.subr.mxu0 0.0
    %6112 = vmatpush1.msra.mxu0 0.0
    %6113 = vmatprep.subr.mxu0 0.0
    %6114 = vmatpush1.msra.mxu0 0.0
    %6115 = vmatprep.subr.mxu0 0.0
    %6116 = vmatpush1.msra.mxu0 0.0
    %6117 = vmatprep.subr.mxu0 0.0
    %6118 = vmatpush1.msra.mxu0 0.0
    %6119 = vmatprep.subr.mxu0 0.0
    %6120 = vmatpush1.msra.mxu0 0.0
    %6121 = vmatprep.subr.mxu0 0.0
    %6122 = vmatpush1.msra.mxu0 0.0
    %6123 = vmatprep.subr.mxu0 0.0
    %6124 = vmatpush1.msra.mxu0 0.0
    %6125 = vmatprep.subr.mxu0 0.0
    %6126 = vmatpush1.msra.mxu0 %v6099
    %6127 = vmatprep.subr.mxu0 0.0
    %6128 = vmatpush1.msra.mxu0 %v6090
    %6129 = vmatprep.subr.mxu0 0.0
    %6130 = vmatpush1.msra.mxu0 %v6085
    %6131 = vmatprep.subr.mxu0 0.0
    %6132 = vmatpush1.msra.mxu0 %v6080
    %6133 = vmatprep.subr.mxu0 0.0
    %6134 = vmatpush2.msra.mxu0 0.0
    %6135 = vmatprep.subr.mxu0 0.0
    %6136 = vmatpush2.msra.mxu0 0.0
    %6137 = vmatprep.subr.mxu0 0.0
    %6138 = vmatpush2.msra.mxu0 0.0
    %6139 = vmatprep.subr.mxu0 0.0
    %6140 = vmatpush2.msra.mxu0 0.0
    %6141 = vmatprep.subr.mxu0 0.0
    %6142 = vmatpush2.msra.mxu0 0.0
    %6143 = vmatprep.subr.mxu0 0.0
    %6144 = vmatpush2.msra.mxu0 0.0
    %6145 = vmatprep.subr.mxu0 0.0
    %6146 = vmatpush2.msra.mxu0 0.0
    %6147 = vmatprep.subr.mxu0 0.0
    %6148 = vmatpush2.msra.mxu0 0.0
    %6149 = vmatprep.subr.mxu0 0.0
    %6150 = vmatpush2.msra.mxu0 0.0
    %6151 = vmatprep.subr.mxu0 0.0
    %6152 = vmatpush2.msra.mxu0 0.0
    %6153 = vmatprep.subr.mxu0 0.0
    %6154 = vmatpush2.msra.mxu0 0.0
    %6155 = vmatprep.subr.mxu0 0.0
    %6156 = vmatpush2.msra.mxu0 0.0
    %6157 = vmatprep.subr.mxu0 0.0
    %6158 = vmatpush2.msra.mxu0 0.0
    %6159 = vmatprep.subr.mxu0 0.0
    %6160 = vmatpush2.msra.mxu0 0.0
    %6161 = vmatprep.subr.mxu0 0.0
    %6162 = vmatpush2.msra.mxu0 0.0
    %6163 = vmatprep.subr.mxu0 0.0
    %6164 = vmatpush2.msra.mxu0 0.0
    %6165 = vmatprep.mubr.f32.mxu0 0.0
    %6166 = vmatmul.mubr.f32.gmra.mxu0 %v2970
    %v6167 = vpop.f32.mrf.mxu0
    %v6168 = vadd.f32 0.0, %v6167
    %v6169 = vpop.f32.mrf.mxu0
    %6170 = vmatprep.mubr.f32.mxu0 0.0
    %6171 = vmatmul.mubr.f32.gmra.mxu0 %v2973
    %v6172 = vpop.f32.mrf.mxu0
    %v6173 = vadd.f32 0.0, %v6172
    %v6174 = vpop.f32.mrf.mxu0
    %6175 = vdwg.mxu0
    %s6176 = scalar_lea.vmem [#allocation9], 544
    %v6177 = vld [vmem:[%s6176] sm:$0xff]
    %v6178 = vld [vmem:[%s6176 + $0x8] sm:$0xff]
    %v6179 = vld [vmem:[%s6176 + $0x10] sm:$0xff]
    %v6180 = vld [vmem:[%s6176 + $0x18] sm:$0xff]
    %s6181 = scalar_lea.vmem [#allocation10], 13
    %v6182 = vld [vmem:[%s6181] sm:$0x1]
    %v6184 = vlaneseq
    %v6185 = vshrl.u32 %v6184, 7
    %v6186 = vsub.s32 0, %v6185
    %v6187 = vrot.slane %v6182, %v6186
    %v6190 = vsel %vm133, %v5271, 0
    %v6193 = vsel %vm133, %v5272, 0
    %6195 = vmatprep.subr.mxu0 0.0
    %6196 = vmatpush1.msra.mxu0 0.0
    %6197 = vmatprep.subr.mxu0 0.0
    %6198 = vmatpush1.msra.mxu0 0.0
    %6199 = vmatprep.subr.mxu0 0.0
    %6200 = vmatpush1.msra.mxu0 0.0
    %6201 = vmatprep.subr.mxu0 0.0
    %6202 = vmatpush1.msra.mxu0 0.0
    %6203 = vmatprep.subr.mxu0 0.0
    %6204 = vmatpush1.msra.mxu0 0.0
    %6205 = vmatprep.subr.mxu0 0.0
    %6206 = vmatpush1.msra.mxu0 0.0
    %6207 = vmatprep.subr.mxu0 0.0
    %6208 = vmatpush1.msra.mxu0 0.0
    %6209 = vmatprep.subr.mxu0 0.0
    %6210 = vmatpush1.msra.mxu0 0.0
    %6211 = vmatprep.subr.mxu0 0.0
    %6212 = vmatpush1.msra.mxu0 0.0
    %6213 = vmatprep.subr.mxu0 0.0
    %6214 = vmatpush1.msra.mxu0 0.0
    %6215 = vmatprep.subr.mxu0 0.0
    %6216 = vmatpush1.msra.mxu0 0.0
    %6217 = vmatprep.subr.mxu0 0.0
    %6218 = vmatpush1.msra.mxu0 0.0
    %6219 = vmatprep.subr.mxu0 0.0
    %6220 = vmatpush1.msra.mxu0 %v6180
    %6221 = vmatprep.subr.mxu0 0.0
    %6222 = vmatpush1.msra.mxu0 %v6179
    %6223 = vmatprep.subr.mxu0 0.0
    %6224 = vmatpush1.msra.mxu0 %v6178
    %6225 = vmatprep.subr.mxu0 0.0
    %6226 = vmatpush1.msra.mxu0 %v6177
    %6227 = vmatprep.subr.mxu0 0.0
    %6228 = vmatpush2.msra.mxu0 0.0
    %6229 = vmatprep.subr.mxu0 0.0
    %6230 = vmatpush2.msra.mxu0 0.0
    %6231 = vmatprep.subr.mxu0 0.0
    %6232 = vmatpush2.msra.mxu0 0.0
    %6233 = vmatprep.subr.mxu0 0.0
    %6234 = vmatpush2.msra.mxu0 0.0
    %6235 = vmatprep.subr.mxu0 0.0
    %6236 = vmatpush2.msra.mxu0 0.0
    %6237 = vmatprep.subr.mxu0 0.0
    %6238 = vmatpush2.msra.mxu0 0.0
    %6239 = vmatprep.subr.mxu0 0.0
    %6240 = vmatpush2.msra.mxu0 0.0
    %6241 = vmatprep.subr.mxu0 0.0
    %6242 = vmatpush2.msra.mxu0 0.0
    %6243 = vmatprep.subr.mxu0 0.0
    %6244 = vmatpush2.msra.mxu0 0.0
    %6245 = vmatprep.subr.mxu0 0.0
    %6246 = vmatpush2.msra.mxu0 0.0
    %6247 = vmatprep.subr.mxu0 0.0
    %6248 = vmatpush2.msra.mxu0 0.0
    %6249 = vmatprep.subr.mxu0 0.0
    %6250 = vmatpush2.msra.mxu0 0.0
    %6251 = vmatprep.subr.mxu0 0.0
    %6252 = vmatpush2.msra.mxu0 0.0
    %6253 = vmatprep.subr.mxu0 0.0
    %6254 = vmatpush2.msra.mxu0 0.0
    %6255 = vmatprep.subr.mxu0 0.0
    %6256 = vmatpush2.msra.mxu0 0.0
    %6257 = vmatprep.subr.mxu0 0.0
    %6258 = vmatpush2.msra.mxu0 0.0
    %6259 = vmatprep.mubr.f32.mxu0 0.0
    %6260 = vmatmul.mubr.f32.gmra.mxu0 %v6190
    %v6261 = vpop.f32.mrf.mxu0
    %v6262 = vadd.f32 %v6187, %v6261
    %v6263 = vpop.f32.mrf.mxu0
    %6264 = vmatprep.mubr.f32.mxu0 0.0
    %6265 = vmatmul.mubr.f32.gmra.mxu0 %v6193
    %v6266 = vpop.f32.mrf.mxu0
    %v6267 = vadd.f32 %v6187, %v6266
    %v6268 = vpop.f32.mrf.mxu0
    %6269 = vdwg.mxu0
    %v6270 = vadd.f32 %v6262, %v6168
    %v6271 = vadd.f32 %v6267, %v6173
    %v6272 = vmax.f32 %v6270, 0.0
    %v6273 = vmax.f32 %v6271, 0.0
    %s6274 = scalar_lea.vmem [#allocation9], 576
    %v6275 = vld [vmem:[%s6274] sm:$0xff]
    %v6276 = vld [vmem:[%s6274 + $0x8] sm:$0xff]
    %v6277 = vld [vmem:[%s6274 + $0x10] sm:$0xff]
    %v6278 = vld [vmem:[%s6274 + $0x18] sm:$0xff]
    %s6279 = scalar_lea.vmem [#allocation9], 672
    %v6280 = vld [vmem:[%s6279] sm:$0xff]
    %v6281 = vld [vmem:[%s6279 + $0x8] sm:$0xff]
    %v6282 = vld [vmem:[%s6279 + $0x10] sm:$0xff]
    %v6283 = vld [vmem:[%s6279 + $0x18] sm:$0xff]
    %6284 = vmatprep.subr.mxu0 0.0
    %6285 = vmatpush1.msra.mxu0 0.0
    %6286 = vmatprep.subr.mxu0 0.0
    %6287 = vmatpush1.msra.mxu0 0.0
    %6288 = vmatprep.subr.mxu0 0.0
    %6289 = vmatpush1.msra.mxu0 0.0
    %6290 = vmatprep.subr.mxu0 0.0
    %6291 = vmatpush1.msra.mxu0 0.0
    %6292 = vmatprep.subr.mxu0 0.0
    %6293 = vmatpush1.msra.mxu0 0.0
    %6294 = vmatprep.subr.mxu0 0.0
    %6295 = vmatpush1.msra.mxu0 0.0
    %6296 = vmatprep.subr.mxu0 0.0
    %6297 = vmatpush1.msra.mxu0 0.0
    %6298 = vmatprep.subr.mxu0 0.0
    %6299 = vmatpush1.msra.mxu0 0.0
    %6300 = vmatprep.subr.mxu0 0.0
    %6301 = vmatpush1.msra.mxu0 0.0
    %6302 = vmatprep.subr.mxu0 0.0
    %6303 = vmatpush1.msra.mxu0 0.0
    %6304 = vmatprep.subr.mxu0 0.0
    %6305 = vmatpush1.msra.mxu0 0.0
    %6306 = vmatprep.subr.mxu0 0.0
    %6307 = vmatpush1.msra.mxu0 0.0
    %6308 = vmatprep.subr.mxu0 0.0
    %6309 = vmatpush1.msra.mxu0 %v6283
    %6310 = vmatprep.subr.mxu0 0.0
    %6311 = vmatpush1.msra.mxu0 %v6282
    %6312 = vmatprep.subr.mxu0 0.0
    %6313 = vmatpush1.msra.mxu0 %v6281
    %6314 = vmatprep.subr.mxu0 0.0
    %6315 = vmatpush1.msra.mxu0 %v6280
    %6316 = vmatprep.subr.mxu0 0.0
    %6317 = vmatpush2.msra.mxu0 0.0
    %6318 = vmatprep.subr.mxu0 0.0
    %6319 = vmatpush2.msra.mxu0 0.0
    %6320 = vmatprep.subr.mxu0 0.0
    %6321 = vmatpush2.msra.mxu0 0.0
    %6322 = vmatprep.subr.mxu0 0.0
    %6323 = vmatpush2.msra.mxu0 0.0
    %6324 = vmatprep.subr.mxu0 0.0
    %6325 = vmatpush2.msra.mxu0 0.0
    %6326 = vmatprep.subr.mxu0 0.0
    %6327 = vmatpush2.msra.mxu0 0.0
    %6328 = vmatprep.subr.mxu0 0.0
    %6329 = vmatpush2.msra.mxu0 0.0
    %6330 = vmatprep.subr.mxu0 0.0
    %6331 = vmatpush2.msra.mxu0 0.0
    %6332 = vmatprep.subr.mxu0 0.0
    %6333 = vmatpush2.msra.mxu0 0.0
    %6334 = vmatprep.subr.mxu0 0.0
    %6335 = vmatpush2.msra.mxu0 0.0
    %6336 = vmatprep.subr.mxu0 0.0
    %6337 = vmatpush2.msra.mxu0 0.0
    %6338 = vmatprep.subr.mxu0 0.0
    %6339 = vmatpush2.msra.mxu0 0.0
    %6340 = vmatprep.subr.mxu0 0.0
    %6341 = vmatpush2.msra.mxu0 0.0
    %6342 = vmatprep.subr.mxu0 0.0
    %6343 = vmatpush2.msra.mxu0 0.0
    %6344 = vmatprep.subr.mxu0 0.0
    %6345 = vmatpush2.msra.mxu0 0.0
    %6346 = vmatprep.subr.mxu0 0.0
    %6347 = vmatpush2.msra.mxu0 0.0
    %6348 = vmatprep.mubr.f32.mxu0 0.0
    %6349 = vmatmul.mubr.f32.gmra.mxu0 %v6190
    %v6350 = vpop.f32.mrf.mxu0
    %v6351 = vadd.f32 0.0, %v6350
    %v6352 = vpop.f32.mrf.mxu0
    %6353 = vmatprep.mubr.f32.mxu0 0.0
    %6354 = vmatmul.mubr.f32.gmra.mxu0 %v6193
    %v6355 = vpop.f32.mrf.mxu0
    %v6356 = vadd.f32 0.0, %v6355
    %v6357 = vpop.f32.mrf.mxu0
    %6358 = vdwg.mxu0
    %v6360 = vsel %vm133, %v6272, 0
    %v6363 = vsel %vm133, %v6273, 0
    %6365 = vmatprep.subr.mxu0 0.0
    %6366 = vmatpush1.msra.mxu0 0.0
    %6367 = vmatprep.subr.mxu0 0.0
    %6368 = vmatpush1.msra.mxu0 0.0
    %6369 = vmatprep.subr.mxu0 0.0
    %6370 = vmatpush1.msra.mxu0 0.0
    %6371 = vmatprep.subr.mxu0 0.0
    %6372 = vmatpush1.msra.mxu0 0.0
    %6373 = vmatprep.subr.mxu0 0.0
    %6374 = vmatpush1.msra.mxu0 0.0
    %6375 = vmatprep.subr.mxu0 0.0
    %6376 = vmatpush1.msra.mxu0 0.0
    %6377 = vmatprep.subr.mxu0 0.0
    %6378 = vmatpush1.msra.mxu0 0.0
    %6379 = vmatprep.subr.mxu0 0.0
    %6380 = vmatpush1.msra.mxu0 0.0
    %6381 = vmatprep.subr.mxu0 0.0
    %6382 = vmatpush1.msra.mxu0 0.0
    %6383 = vmatprep.subr.mxu0 0.0
    %6384 = vmatpush1.msra.mxu0 0.0
    %6385 = vmatprep.subr.mxu0 0.0
    %6386 = vmatpush1.msra.mxu0 0.0
    %6387 = vmatprep.subr.mxu0 0.0
    %6388 = vmatpush1.msra.mxu0 0.0
    %6389 = vmatprep.subr.mxu0 0.0
    %6390 = vmatpush1.msra.mxu0 %v6278
    %6391 = vmatprep.subr.mxu0 0.0
    %6392 = vmatpush1.msra.mxu0 %v6277
    %6393 = vmatprep.subr.mxu0 0.0
    %6394 = vmatpush1.msra.mxu0 %v6276
    %6395 = vmatprep.subr.mxu0 0.0
    %6396 = vmatpush1.msra.mxu0 %v6275
    %6397 = vmatprep.subr.mxu0 0.0
    %6398 = vmatpush2.msra.mxu0 0.0
    %6399 = vmatprep.subr.mxu0 0.0
    %6400 = vmatpush2.msra.mxu0 0.0
    %6401 = vmatprep.subr.mxu0 0.0
    %6402 = vmatpush2.msra.mxu0 0.0
    %6403 = vmatprep.subr.mxu0 0.0
    %6404 = vmatpush2.msra.mxu0 0.0
    %6405 = vmatprep.subr.mxu0 0.0
    %6406 = vmatpush2.msra.mxu0 0.0
    %6407 = vmatprep.subr.mxu0 0.0
    %6408 = vmatpush2.msra.mxu0 0.0
    %6409 = vmatprep.subr.mxu0 0.0
    %6410 = vmatpush2.msra.mxu0 0.0
    %6411 = vmatprep.subr.mxu0 0.0
    %6412 = vmatpush2.msra.mxu0 0.0
    %6413 = vmatprep.subr.mxu0 0.0
    %6414 = vmatpush2.msra.mxu0 0.0
    %6415 = vmatprep.subr.mxu0 0.0
    %6416 = vmatpush2.msra.mxu0 0.0
    %6417 = vmatprep.subr.mxu0 0.0
    %6418 = vmatpush2.msra.mxu0 0.0
    %6419 = vmatprep.subr.mxu0 0.0
    %6420 = vmatpush2.msra.mxu0 0.0
    %6421 = vmatprep.subr.mxu0 0.0
    %6422 = vmatpush2.msra.mxu0 0.0
    %6423 = vmatprep.subr.mxu0 0.0
    %6424 = vmatpush2.msra.mxu0 0.0
    %6425 = vmatprep.subr.mxu0 0.0
    %6426 = vmatpush2.msra.mxu0 0.0
    %6427 = vmatprep.subr.mxu0 0.0
    %6428 = vmatpush2.msra.mxu0 0.0
    %6429 = vmatprep.mubr.f32.mxu0 0.0
    %6430 = vmatmul.mubr.f32.gmra.mxu0 %v6360
    %v6431 = vpop.f32.mrf.mxu0
    %v6432 = vadd.f32 %v6351, %v6431
    %v6433 = vpop.f32.mrf.mxu0
    %6434 = vmatprep.mubr.f32.mxu0 0.0
    %6435 = vmatmul.mubr.f32.gmra.mxu0 %v6363
    %v6436 = vpop.f32.mrf.mxu0
    %v6437 = vadd.f32 %v6356, %v6436
    %v6438 = vpop.f32.mrf.mxu0
    %6439 = vdwg.mxu0
    %s6440 = scalar_lea.vmem [#allocation10], 14
    %v6441 = vld [vmem:[%s6440] sm:$0x1]
    %v6443 = vlaneseq
    %v6444 = vshrl.u32 %v6443, 7
    %v6445 = vsub.s32 0, %v6444
    %v6446 = vrot.slane %v6441, %v6445
    %v6448 = vadd.f32 %v6432, %v6446
    %v6449 = vadd.f32 %v6437, %v6446
    %v6450 = vxor.u32 %v6448, 2147483648
    %v6451 = vxor.u32 %v6449, 2147483648
    %v6452 = vmul.f32 %v6450, 1.442695
    %v6453 = vpow.pop %v6452
    %v6454 = vmul.f32 %v6451, 1.442695
    %v6455 = vpow.pop %v6454
    %v6456 = vadd.f32 %v6453, 1.0
    %v6457 = vadd.f32 %v6455, 1.0
    %v6458 = vrcp.pop %v6456
    %v6459 = vmul.f32 1.0, %v6458
    %v6460 = vrcp.pop %v6457
    %v6461 = vmul.f32 1.0, %v6460
    %s6462 = scalar_lea.vmem [#allocation9], 608
    %v6463 = vld [vmem:[%s6462] sm:$0xff]
    %v6464 = vld [vmem:[%s6462 + $0x8] sm:$0xff]
    %v6465 = vld [vmem:[%s6462 + $0x10] sm:$0xff]
    %v6466 = vld [vmem:[%s6462 + $0x18] sm:$0xff]
    %s6467 = scalar_lea.vmem [#allocation9], 704
    %v6468 = vld [vmem:[%s6467] sm:$0xff]
    %v6469 = vld [vmem:[%s6467 + $0x8] sm:$0xff]
    %v6470 = vld [vmem:[%s6467 + $0x10] sm:$0xff]
    %v6471 = vld [vmem:[%s6467 + $0x18] sm:$0xff]
    %6472 = vmatprep.subr.mxu0 0.0
    %6473 = vmatpush1.msra.mxu0 0.0
    %6474 = vmatprep.subr.mxu0 0.0
    %6475 = vmatpush1.msra.mxu0 0.0
    %6476 = vmatprep.subr.mxu0 0.0
    %6477 = vmatpush1.msra.mxu0 0.0
    %6478 = vmatprep.subr.mxu0 0.0
    %6479 = vmatpush1.msra.mxu0 0.0
    %6480 = vmatprep.subr.mxu0 0.0
    %6481 = vmatpush1.msra.mxu0 0.0
    %6482 = vmatprep.subr.mxu0 0.0
    %6483 = vmatpush1.msra.mxu0 0.0
    %6484 = vmatprep.subr.mxu0 0.0
    %6485 = vmatpush1.msra.mxu0 0.0
    %6486 = vmatprep.subr.mxu0 0.0
    %6487 = vmatpush1.msra.mxu0 0.0
    %6488 = vmatprep.subr.mxu0 0.0
    %6489 = vmatpush1.msra.mxu0 0.0
    %6490 = vmatprep.subr.mxu0 0.0
    %6491 = vmatpush1.msra.mxu0 0.0
    %6492 = vmatprep.subr.mxu0 0.0
    %6493 = vmatpush1.msra.mxu0 0.0
    %6494 = vmatprep.subr.mxu0 0.0
    %6495 = vmatpush1.msra.mxu0 0.0
    %6496 = vmatprep.subr.mxu0 0.0
    %6497 = vmatpush1.msra.mxu0 %v6471
    %6498 = vmatprep.subr.mxu0 0.0
    %6499 = vmatpush1.msra.mxu0 %v6470
    %6500 = vmatprep.subr.mxu0 0.0
    %6501 = vmatpush1.msra.mxu0 %v6469
    %6502 = vmatprep.subr.mxu0 0.0
    %6503 = vmatpush1.msra.mxu0 %v6468
    %6504 = vmatprep.subr.mxu0 0.0
    %6505 = vmatpush2.msra.mxu0 0.0
    %6506 = vmatprep.subr.mxu0 0.0
    %6507 = vmatpush2.msra.mxu0 0.0
    %6508 = vmatprep.subr.mxu0 0.0
    %6509 = vmatpush2.msra.mxu0 0.0
    %6510 = vmatprep.subr.mxu0 0.0
    %6511 = vmatpush2.msra.mxu0 0.0
    %6512 = vmatprep.subr.mxu0 0.0
    %6513 = vmatpush2.msra.mxu0 0.0
    %6514 = vmatprep.subr.mxu0 0.0
    %6515 = vmatpush2.msra.mxu0 0.0
    %6516 = vmatprep.subr.mxu0 0.0
    %6517 = vmatpush2.msra.mxu0 0.0
    %6518 = vmatprep.subr.mxu0 0.0
    %6519 = vmatpush2.msra.mxu0 0.0
    %6520 = vmatprep.subr.mxu0 0.0
    %6521 = vmatpush2.msra.mxu0 0.0
    %6522 = vmatprep.subr.mxu0 0.0
    %6523 = vmatpush2.msra.mxu0 0.0
    %6524 = vmatprep.subr.mxu0 0.0
    %6525 = vmatpush2.msra.mxu0 0.0
    %6526 = vmatprep.subr.mxu0 0.0
    %6527 = vmatpush2.msra.mxu0 0.0
    %6528 = vmatprep.subr.mxu0 0.0
    %6529 = vmatpush2.msra.mxu0 0.0
    %6530 = vmatprep.subr.mxu0 0.0
    %6531 = vmatpush2.msra.mxu0 0.0
    %6532 = vmatprep.subr.mxu0 0.0
    %6533 = vmatpush2.msra.mxu0 0.0
    %6534 = vmatprep.subr.mxu0 0.0
    %6535 = vmatpush2.msra.mxu0 0.0
    %6536 = vmatprep.mubr.f32.mxu0 0.0
    %6537 = vmatmul.mubr.f32.gmra.mxu0 %v6190
    %v6538 = vpop.f32.mrf.mxu0
    %v6539 = vadd.f32 0.0, %v6538
    %v6540 = vpop.f32.mrf.mxu0
    %6541 = vmatprep.mubr.f32.mxu0 0.0
    %6542 = vmatmul.mubr.f32.gmra.mxu0 %v6193
    %v6543 = vpop.f32.mrf.mxu0
    %v6544 = vadd.f32 0.0, %v6543
    %v6545 = vpop.f32.mrf.mxu0
    %6546 = vdwg.mxu0
    %6547 = vmatprep.subr.mxu0 0.0
    %6548 = vmatpush1.msra.mxu0 0.0
    %6549 = vmatprep.subr.mxu0 0.0
    %6550 = vmatpush1.msra.mxu0 0.0
    %6551 = vmatprep.subr.mxu0 0.0
    %6552 = vmatpush1.msra.mxu0 0.0
    %6553 = vmatprep.subr.mxu0 0.0
    %6554 = vmatpush1.msra.mxu0 0.0
    %6555 = vmatprep.subr.mxu0 0.0
    %6556 = vmatpush1.msra.mxu0 0.0
    %6557 = vmatprep.subr.mxu0 0.0
    %6558 = vmatpush1.msra.mxu0 0.0
    %6559 = vmatprep.subr.mxu0 0.0
    %6560 = vmatpush1.msra.mxu0 0.0
    %6561 = vmatprep.subr.mxu0 0.0
    %6562 = vmatpush1.msra.mxu0 0.0
    %6563 = vmatprep.subr.mxu0 0.0
    %6564 = vmatpush1.msra.mxu0 0.0
    %6565 = vmatprep.subr.mxu0 0.0
    %6566 = vmatpush1.msra.mxu0 0.0
    %6567 = vmatprep.subr.mxu0 0.0
    %6568 = vmatpush1.msra.mxu0 0.0
    %6569 = vmatprep.subr.mxu0 0.0
    %6570 = vmatpush1.msra.mxu0 0.0
    %6571 = vmatprep.subr.mxu0 0.0
    %6572 = vmatpush1.msra.mxu0 %v6466
    %6573 = vmatprep.subr.mxu0 0.0
    %6574 = vmatpush1.msra.mxu0 %v6465
    %6575 = vmatprep.subr.mxu0 0.0
    %6576 = vmatpush1.msra.mxu0 %v6464
    %6577 = vmatprep.subr.mxu0 0.0
    %6578 = vmatpush1.msra.mxu0 %v6463
    %6579 = vmatprep.subr.mxu0 0.0
    %6580 = vmatpush2.msra.mxu0 0.0
    %6581 = vmatprep.subr.mxu0 0.0
    %6582 = vmatpush2.msra.mxu0 0.0
    %6583 = vmatprep.subr.mxu0 0.0
    %6584 = vmatpush2.msra.mxu0 0.0
    %6585 = vmatprep.subr.mxu0 0.0
    %6586 = vmatpush2.msra.mxu0 0.0
    %6587 = vmatprep.subr.mxu0 0.0
    %6588 = vmatpush2.msra.mxu0 0.0
    %6589 = vmatprep.subr.mxu0 0.0
    %6590 = vmatpush2.msra.mxu0 0.0
    %6591 = vmatprep.subr.mxu0 0.0
    %6592 = vmatpush2.msra.mxu0 0.0
    %6593 = vmatprep.subr.mxu0 0.0
    %6594 = vmatpush2.msra.mxu0 0.0
    %6595 = vmatprep.subr.mxu0 0.0
    %6596 = vmatpush2.msra.mxu0 0.0
    %6597 = vmatprep.subr.mxu0 0.0
    %6598 = vmatpush2.msra.mxu0 0.0
    %6599 = vmatprep.subr.mxu0 0.0
    %6600 = vmatpush2.msra.mxu0 0.0
    %6601 = vmatprep.subr.mxu0 0.0
    %6602 = vmatpush2.msra.mxu0 0.0
    %6603 = vmatprep.subr.mxu0 0.0
    %6604 = vmatpush2.msra.mxu0 0.0
    %6605 = vmatprep.subr.mxu0 0.0
    %6606 = vmatpush2.msra.mxu0 0.0
    %6607 = vmatprep.subr.mxu0 0.0
    %6608 = vmatpush2.msra.mxu0 0.0
    %6609 = vmatprep.subr.mxu0 0.0
    %6610 = vmatpush2.msra.mxu0 0.0
    %6611 = vmatprep.mubr.f32.mxu0 0.0
    %6612 = vmatmul.mubr.f32.gmra.mxu0 %v6360
    %v6613 = vpop.f32.mrf.mxu0
    %v6614 = vadd.f32 %v6539, %v6613
    %v6615 = vpop.f32.mrf.mxu0
    %6616 = vmatprep.mubr.f32.mxu0 0.0
    %6617 = vmatmul.mubr.f32.gmra.mxu0 %v6363
    %v6618 = vpop.f32.mrf.mxu0
    %v6619 = vadd.f32 %v6544, %v6618
    %v6620 = vpop.f32.mrf.mxu0
    %6621 = vdwg.mxu0
    %s6622 = scalar_lea.vmem [#allocation10], 15
    %v6623 = vld [vmem:[%s6622] sm:$0x1]
    %v6625 = vlaneseq
    %v6626 = vshrl.u32 %v6625, 7
    %v6627 = vsub.s32 0, %v6626
    %v6628 = vrot.slane %v6623, %v6627
    %v6630 = vadd.f32 %v6614, %v6628
    %v6631 = vadd.f32 %v6619, %v6628
    %v6632 = vxor.u32 %v6630, 2147483648
    %v6633 = vxor.u32 %v6631, 2147483648
    %v6634 = vmul.f32 %v6632, 1.442695
    %v6635 = vpow.pop %v6634
    %v6636 = vmul.f32 %v6633, 1.442695
    %v6637 = vpow.pop %v6636
    %v6638 = vadd.f32 %v6635, 1.0
    %v6639 = vadd.f32 %v6637, 1.0
    %v6640 = vrcp.pop %v6638
    %v6641 = vmul.f32 1.0, %v6640
    %v6642 = vrcp.pop %v6639
    %v6643 = vmul.f32 1.0, %v6642
    %s6644 = scalar_lea.vmem [#allocation9], 640
    %v6645 = vld [vmem:[%s6644] sm:$0xff]
    %v6646 = vld [vmem:[%s6644 + $0x8] sm:$0xff]
    %v6647 = vld [vmem:[%s6644 + $0x10] sm:$0xff]
    %v6648 = vld [vmem:[%s6644 + $0x18] sm:$0xff]
    %s6649 = scalar_lea.vmem [#allocation10], 16
    %v6650 = vld [vmem:[%s6649] sm:$0x1]
    %v6652 = vlaneseq
    %v6653 = vshrl.u32 %v6652, 7
    %v6654 = vsub.s32 0, %v6653
    %v6655 = vrot.slane %v6650, %v6654
    %6657 = vmatprep.subr.mxu0 0.0
    %6658 = vmatpush1.msra.mxu0 0.0
    %6659 = vmatprep.subr.mxu0 0.0
    %6660 = vmatpush1.msra.mxu0 0.0
    %6661 = vmatprep.subr.mxu0 0.0
    %6662 = vmatpush1.msra.mxu0 0.0
    %6663 = vmatprep.subr.mxu0 0.0
    %6664 = vmatpush1.msra.mxu0 0.0
    %6665 = vmatprep.subr.mxu0 0.0
    %6666 = vmatpush1.msra.mxu0 0.0
    %6667 = vmatprep.subr.mxu0 0.0
    %6668 = vmatpush1.msra.mxu0 0.0
    %6669 = vmatprep.subr.mxu0 0.0
    %6670 = vmatpush1.msra.mxu0 0.0
    %6671 = vmatprep.subr.mxu0 0.0
    %6672 = vmatpush1.msra.mxu0 0.0
    %6673 = vmatprep.subr.mxu0 0.0
    %6674 = vmatpush1.msra.mxu0 0.0
    %6675 = vmatprep.subr.mxu0 0.0
    %6676 = vmatpush1.msra.mxu0 0.0
    %6677 = vmatprep.subr.mxu0 0.0
    %6678 = vmatpush1.msra.mxu0 0.0
    %6679 = vmatprep.subr.mxu0 0.0
    %6680 = vmatpush1.msra.mxu0 0.0
    %6681 = vmatprep.subr.mxu0 0.0
    %6682 = vmatpush1.msra.mxu0 %v6648
    %6683 = vmatprep.subr.mxu0 0.0
    %6684 = vmatpush1.msra.mxu0 %v6647
    %6685 = vmatprep.subr.mxu0 0.0
    %6686 = vmatpush1.msra.mxu0 %v6646
    %6687 = vmatprep.subr.mxu0 0.0
    %6688 = vmatpush1.msra.mxu0 %v6645
    %6689 = vmatprep.subr.mxu0 0.0
    %6690 = vmatpush2.msra.mxu0 0.0
    %6691 = vmatprep.subr.mxu0 0.0
    %6692 = vmatpush2.msra.mxu0 0.0
    %6693 = vmatprep.subr.mxu0 0.0
    %6694 = vmatpush2.msra.mxu0 0.0
    %6695 = vmatprep.subr.mxu0 0.0
    %6696 = vmatpush2.msra.mxu0 0.0
    %6697 = vmatprep.subr.mxu0 0.0
    %6698 = vmatpush2.msra.mxu0 0.0
    %6699 = vmatprep.subr.mxu0 0.0
    %6700 = vmatpush2.msra.mxu0 0.0
    %6701 = vmatprep.subr.mxu0 0.0
    %6702 = vmatpush2.msra.mxu0 0.0
    %6703 = vmatprep.subr.mxu0 0.0
    %6704 = vmatpush2.msra.mxu0 0.0
    %6705 = vmatprep.subr.mxu0 0.0
    %6706 = vmatpush2.msra.mxu0 0.0
    %6707 = vmatprep.subr.mxu0 0.0
    %6708 = vmatpush2.msra.mxu0 0.0
    %6709 = vmatprep.subr.mxu0 0.0
    %6710 = vmatpush2.msra.mxu0 0.0
    %6711 = vmatprep.subr.mxu0 0.0
    %6712 = vmatpush2.msra.mxu0 0.0
    %6713 = vmatprep.subr.mxu0 0.0
    %6714 = vmatpush2.msra.mxu0 0.0
    %6715 = vmatprep.subr.mxu0 0.0
    %6716 = vmatpush2.msra.mxu0 0.0
    %6717 = vmatprep.subr.mxu0 0.0
    %6718 = vmatpush2.msra.mxu0 0.0
    %6719 = vmatprep.subr.mxu0 0.0
    %6720 = vmatpush2.msra.mxu0 0.0
    %6721 = vmatprep.mubr.f32.mxu0 0.0
    %6722 = vmatmul.mubr.f32.gmra.mxu0 %v6360
    %v6723 = vpop.f32.mrf.mxu0
    %v6724 = vadd.f32 %v6655, %v6723
    %v6725 = vpop.f32.mrf.mxu0
    %6726 = vmatprep.mubr.f32.mxu0 0.0
    %6727 = vmatmul.mubr.f32.gmra.mxu0 %v6363
    %v6728 = vpop.f32.mrf.mxu0
    %v6729 = vadd.f32 %v6655, %v6728
    %v6730 = vpop.f32.mrf.mxu0
    %6731 = vdwg.mxu0
    %s6732 = scalar_lea.vmem [#allocation9], 736
    %v6733 = vld [vmem:[%s6732] sm:$0xff]
    %v6734 = vld [vmem:[%s6732 + $0x8] sm:$0xff]
    %v6735 = vld [vmem:[%s6732 + $0x10] sm:$0xff]
    %v6736 = vld [vmem:[%s6732 + $0x18] sm:$0xff]
    %s6737 = scalar_lea.vmem [#allocation10], 17
    %v6738 = vld [vmem:[%s6737] sm:$0x1]
    %v6740 = vlaneseq
    %v6741 = vshrl.u32 %v6740, 7
    %v6742 = vsub.s32 0, %v6741
    %v6743 = vrot.slane %v6738, %v6742
    %6745 = vmatprep.subr.mxu0 0.0
    %6746 = vmatpush1.msra.mxu0 0.0
    %6747 = vmatprep.subr.mxu0 0.0
    %6748 = vmatpush1.msra.mxu0 0.0
    %6749 = vmatprep.subr.mxu0 0.0
    %6750 = vmatpush1.msra.mxu0 0.0
    %6751 = vmatprep.subr.mxu0 0.0
    %6752 = vmatpush1.msra.mxu0 0.0
    %6753 = vmatprep.subr.mxu0 0.0
    %6754 = vmatpush1.msra.mxu0 0.0
    %6755 = vmatprep.subr.mxu0 0.0
    %6756 = vmatpush1.msra.mxu0 0.0
    %6757 = vmatprep.subr.mxu0 0.0
    %6758 = vmatpush1.msra.mxu0 0.0
    %6759 = vmatprep.subr.mxu0 0.0
    %6760 = vmatpush1.msra.mxu0 0.0
    %6761 = vmatprep.subr.mxu0 0.0
    %6762 = vmatpush1.msra.mxu0 0.0
    %6763 = vmatprep.subr.mxu0 0.0
    %6764 = vmatpush1.msra.mxu0 0.0
    %6765 = vmatprep.subr.mxu0 0.0
    %6766 = vmatpush1.msra.mxu0 0.0
    %6767 = vmatprep.subr.mxu0 0.0
    %6768 = vmatpush1.msra.mxu0 0.0
    %6769 = vmatprep.subr.mxu0 0.0
    %6770 = vmatpush1.msra.mxu0 %v6736
    %6771 = vmatprep.subr.mxu0 0.0
    %6772 = vmatpush1.msra.mxu0 %v6735
    %6773 = vmatprep.subr.mxu0 0.0
    %6774 = vmatpush1.msra.mxu0 %v6734
    %6775 = vmatprep.subr.mxu0 0.0
    %6776 = vmatpush1.msra.mxu0 %v6733
    %6777 = vmatprep.subr.mxu0 0.0
    %6778 = vmatpush2.msra.mxu0 0.0
    %6779 = vmatprep.subr.mxu0 0.0
    %6780 = vmatpush2.msra.mxu0 0.0
    %6781 = vmatprep.subr.mxu0 0.0
    %6782 = vmatpush2.msra.mxu0 0.0
    %6783 = vmatprep.subr.mxu0 0.0
    %6784 = vmatpush2.msra.mxu0 0.0
    %6785 = vmatprep.subr.mxu0 0.0
    %6786 = vmatpush2.msra.mxu0 0.0
    %6787 = vmatprep.subr.mxu0 0.0
    %6788 = vmatpush2.msra.mxu0 0.0
    %6789 = vmatprep.subr.mxu0 0.0
    %6790 = vmatpush2.msra.mxu0 0.0
    %6791 = vmatprep.subr.mxu0 0.0
    %6792 = vmatpush2.msra.mxu0 0.0
    %6793 = vmatprep.subr.mxu0 0.0
    %6794 = vmatpush2.msra.mxu0 0.0
    %6795 = vmatprep.subr.mxu0 0.0
    %6796 = vmatpush2.msra.mxu0 0.0
    %6797 = vmatprep.subr.mxu0 0.0
    %6798 = vmatpush2.msra.mxu0 0.0
    %6799 = vmatprep.subr.mxu0 0.0
    %6800 = vmatpush2.msra.mxu0 0.0
    %6801 = vmatprep.subr.mxu0 0.0
    %6802 = vmatpush2.msra.mxu0 0.0
    %6803 = vmatprep.subr.mxu0 0.0
    %6804 = vmatpush2.msra.mxu0 0.0
    %6805 = vmatprep.subr.mxu0 0.0
    %6806 = vmatpush2.msra.mxu0 0.0
    %6807 = vmatprep.subr.mxu0 0.0
    %6808 = vmatpush2.msra.mxu0 0.0
    %6809 = vmatprep.mubr.f32.mxu0 0.0
    %6810 = vmatmul.mubr.f32.gmra.mxu0 %v6190
    %v6811 = vpop.f32.mrf.mxu0
    %v6812 = vadd.f32 %v6743, %v6811
    %v6813 = vpop.f32.mrf.mxu0
    %6814 = vmatprep.mubr.f32.mxu0 0.0
    %6815 = vmatmul.mubr.f32.gmra.mxu0 %v6193
    %v6816 = vpop.f32.mrf.mxu0
    %v6817 = vadd.f32 %v6743, %v6816
    %v6818 = vpop.f32.mrf.mxu0
    %6819 = vdwg.mxu0
    %v6820 = vmul.f32 %v6459, %v6812
    %v6821 = vmul.f32 %v6461, %v6817
    %v6822 = vadd.f32 %v6724, %v6820
    %v6823 = vadd.f32 %v6729, %v6821
    %v6824 = vtanh.pop %v6822
    %v6825 = vtanh.pop %v6823
    %v6826 = vsub.f32 1.0, %v6641
    %v6827 = vsub.f32 1.0, %v6643
    %v6828 = vmul.f32 %v6826, %v6824
    %v6829 = vmul.f32 %v6827, %v6825
    %v6830 = vmul.f32 %v6641, %v5271
    %v6831 = vmul.f32 %v6643, %v5272
    %v6832 = vadd.f32 %v6828, %v6830
    %v6833 = vadd.f32 %v6829, %v6831
    %v6834 = vld [vmem:[%s4] sm:$0x3]
    %s6835 = scalar_lea.vmem [#allocation10], 18
    %v6836 = vld [vmem:[%s6835] sm:$0x1]
    %v6837 = vxor.u32 %v6836, 2147483648
    %v6838 = vmul.f32 %v6837, 1.442695
    %v6839 = vpow.pop %v6838
    %v6840 = vadd.f32 %v6839, 1.0
    %v6841 = vrcp.pop %v6840
    %v6842 = vmul.f32 1.0, %v6841
    %s6843 = scalar_lea.vmem [#allocation10], 19
    %v6844 = vld [vmem:[%s6843] sm:$0x1]
    %v6845 = vxor.u32 %v6844, 2147483648
    %v6846 = vmul.f32 %v6845, 1.442695
    %v6847 = vpow.pop %v6846
    %v6848 = vadd.f32 %v6847, 1.0
    %v6849 = vrcp.pop %v6848
    %v6850 = vmul.f32 1.0, %v6849
    %s6851 = scalar_lea.vmem [#allocation10], 20
    %v6852 = vld [vmem:[%s6851] sm:$0x1]
    %v6853 = vtanh.pop %v6852
    %s6854 = scalar_lea.vmem [#allocation10], 21
    %v6855 = vld [vmem:[%s6854] sm:$0x1]
    %v6856 = vxor.u32 %v6855, 2147483648
    %v6857 = vmul.f32 %v6856, 1.442695
    %v6858 = vpow.pop %v6857
    %v6859 = vadd.f32 %v6858, 1.0
    %v6860 = vrcp.pop %v6859
    %v6861 = vmul.f32 1.0, %v6860
    %v6863 = vlaneseq
    %v6864 = vshrl.u32 %v6863, 7
    %v6865 = vsub.s32 0, %v6864
    %v6866 = vrot.slane %v6850, %v6865
    %v6868 = vmul.f32 %v6866, 0.0
    %v6869 = vmul.f32 %v6842, %v6853
    %v6871 = vlaneseq
    %v6872 = vshrl.u32 %v6871, 7
    %v6873 = vsub.s32 0, %v6872
    %v6874 = vrot.slane %v6869, %v6873
    %v6876 = vadd.f32 %v6868, %v6874
    %v6877 = vtanh.pop %v6876
    %v6879 = vlaneseq
    %v6880 = vshrl.u32 %v6879, 7
    %v6881 = vsub.s32 0, %v6880
    %v6882 = vrot.slane %v6861, %v6881
    %v6884 = vmul.f32 %v6882, %v6877
    %v6886 = vsel %vm133, %v6884, 0
    %v6889 = vsel %vm133, %v6832, 0
    %v6892 = vsel %vm133, %v6833, 0
    %6894 = vmatprep.subr.mxu0 0.0
    %6895 = vmatpush1.xpose.msra.mxu0 0.0
    %6896 = vmatprep.subr.mxu0 0.0
    %6897 = vmatpush1.xpose.msra.mxu0 0.0
    %6898 = vmatprep.subr.mxu0 0.0
    %6899 = vmatpush1.xpose.msra.mxu0 0.0
    %6900 = vmatprep.subr.mxu0 0.0
    %6901 = vmatpush1.xpose.msra.mxu0 0.0
    %6902 = vmatprep.subr.mxu0 0.0
    %6903 = vmatpush1.xpose.msra.mxu0 0.0
    %6904 = vmatprep.subr.mxu0 0.0
    %6905 = vmatpush1.xpose.msra.mxu0 0.0
    %6906 = vmatprep.subr.mxu0 0.0
    %6907 = vmatpush1.xpose.msra.mxu0 0.0
    %6908 = vmatprep.subr.mxu0 0.0
    %6909 = vmatpush1.xpose.msra.mxu0 0.0
    %6910 = vmatprep.subr.mxu0 0.0
    %6911 = vmatpush1.xpose.msra.mxu0 0.0
    %6912 = vmatprep.subr.mxu0 0.0
    %6913 = vmatpush1.xpose.msra.mxu0 0.0
    %6914 = vmatprep.subr.mxu0 0.0
    %6915 = vmatpush1.xpose.msra.mxu0 0.0
    %6916 = vmatprep.subr.mxu0 0.0
    %6917 = vmatpush1.xpose.msra.mxu0 0.0
    %6918 = vmatprep.subr.mxu0 0.0
    %6919 = vmatpush1.xpose.msra.mxu0 0.0
    %6920 = vmatprep.subr.mxu0 0.0
    %6921 = vmatpush1.xpose.msra.mxu0 0.0
    %6922 = vmatprep.subr.mxu0 0.0
    %6923 = vmatpush1.xpose.msra.mxu0 %v6892
    %6924 = vmatprep.subr.mxu0 0.0
    %6925 = vmatpush1.xpose.msra.mxu0 %v6889
    %6926 = vmatprep.subr.mxu0 0.0
    %6927 = vmatpush2.xpose.msra.mxu0 0.0
    %6928 = vmatprep.subr.mxu0 0.0
    %6929 = vmatpush2.xpose.msra.mxu0 0.0
    %6930 = vmatprep.subr.mxu0 0.0
    %6931 = vmatpush2.xpose.msra.mxu0 0.0
    %6932 = vmatprep.subr.mxu0 0.0
    %6933 = vmatpush2.xpose.msra.mxu0 0.0
    %6934 = vmatprep.subr.mxu0 0.0
    %6935 = vmatpush2.xpose.msra.mxu0 0.0
    %6936 = vmatprep.subr.mxu0 0.0
    %6937 = vmatpush2.xpose.msra.mxu0 0.0
    %6938 = vmatprep.subr.mxu0 0.0
    %6939 = vmatpush2.xpose.msra.mxu0 0.0
    %6940 = vmatprep.subr.mxu0 0.0
    %6941 = vmatpush2.xpose.msra.mxu0 0.0
    %6942 = vmatprep.subr.mxu0 0.0
    %6943 = vmatpush2.xpose.msra.mxu0 0.0
    %6944 = vmatprep.subr.mxu0 0.0
    %6945 = vmatpush2.xpose.msra.mxu0 0.0
    %6946 = vmatprep.subr.mxu0 0.0
    %6947 = vmatpush2.xpose.msra.mxu0 0.0
    %6948 = vmatprep.subr.mxu0 0.0
    %6949 = vmatpush2.xpose.msra.mxu0 0.0
    %6950 = vmatprep.subr.mxu0 0.0
    %6951 = vmatpush2.xpose.msra.mxu0 0.0
    %6952 = vmatprep.subr.mxu0 0.0
    %6953 = vmatpush2.xpose.msra.mxu0 0.0
    %6954 = vmatprep.subr.mxu0 0.0
    %6955 = vmatpush2.xpose.msra.mxu0 0.0
    %6956 = vmatprep.subr.mxu0 0.0
    %6957 = vmatpush2.xpose.msra.mxu0 0.0
    %6958 = vmatprep.mubr.f32.mxu0 0.0
    %6959 = vmatmul.mubr.f32.gmra.mxu0 %v6886
    %v6960 = vpop.f32.mrf.mxu0
    %v6961 = vadd.f32 %v6834, %v6960
    %v6962 = vpop.f32.mrf.mxu0
    %6963 = vdwg.mxu0
    %vm6964 = vcmask 123904
    %v6965 = vsel %vm6964, %v6961, -inf
    %6966 = vmax.xlane.f32.xlu0 %v6965
    %v6967 = vpop.xlane.xlu0 %6966
    %v6968 = vsub.f32 %v6961, %v6967
    %v6969 = vmul.f32 %v6968, 1.442695
    %v6970 = vpow.pop %v6969
    %v6971 = vsel %vm6964, %v6970, 0.0
    %6972 = vadd.xlane.f32.xlu0 %v6971
    %v6973 = vpop.xlane.xlu0 %6972
    %v6974 = vmax.f32 %v6973, 1e-20
    %v6975 = vrcp.pop %v6974
    %v6976 = vmul.f32 %v6970, %v6975
    %v6978 = vsel %vm2130, %v6976, 0
    %6980 = vmatprep.subr.mxu0 0.0
    %6981 = vmatpush1.msra.mxu0 0.0
    %6982 = vmatprep.subr.mxu0 0.0
    %6983 = vmatpush1.msra.mxu0 0.0
    %6984 = vmatprep.subr.mxu0 0.0
    %6985 = vmatpush1.msra.mxu0 0.0
    %6986 = vmatprep.subr.mxu0 0.0
    %6987 = vmatpush1.msra.mxu0 0.0
    %6988 = vmatprep.subr.mxu0 0.0
    %6989 = vmatpush1.msra.mxu0 0.0
    %6990 = vmatprep.subr.mxu0 0.0
    %6991 = vmatpush1.msra.mxu0 0.0
    %6992 = vmatprep.subr.mxu0 0.0
    %6993 = vmatpush1.msra.mxu0 0.0
    %6994 = vmatprep.subr.mxu0 0.0
    %6995 = vmatpush1.msra.mxu0 0.0
    %6996 = vmatprep.subr.mxu0 0.0
    %6997 = vmatpush1.msra.mxu0 0.0
    %6998 = vmatprep.subr.mxu0 0.0
    %6999 = vmatpush1.msra.mxu0 0.0
    %7000 = vmatprep.subr.mxu0 0.0
    %7001 = vmatpush1.msra.mxu0 0.0
    %7002 = vmatprep.subr.mxu0 0.0
    %7003 = vmatpush1.msra.mxu0 0.0
    %7004 = vmatprep.subr.mxu0 0.0
    %7005 = vmatpush1.msra.mxu0 0.0
    %7006 = vmatprep.subr.mxu0 0.0
    %7007 = vmatpush1.msra.mxu0 0.0
    %7008 = vmatprep.subr.mxu0 0.0
    %7009 = vmatpush1.msra.mxu0 %v6833
    %7010 = vmatprep.subr.mxu0 0.0
    %7011 = vmatpush1.msra.mxu0 %v6832
    %7012 = vmatprep.subr.mxu0 0.0
    %7013 = vmatpush2.msra.mxu0 0.0
    %7014 = vmatprep.subr.mxu0 0.0
    %7015 = vmatpush2.msra.mxu0 0.0
    %7016 = vmatprep.subr.mxu0 0.0
    %7017 = vmatpush2.msra.mxu0 0.0
    %7018 = vmatprep.subr.mxu0 0.0
    %7019 = vmatpush2.msra.mxu0 0.0
    %7020 = vmatprep.subr.mxu0 0.0
    %7021 = vmatpush2.msra.mxu0 0.0
    %7022 = vmatprep.subr.mxu0 0.0
    %7023 = vmatpush2.msra.mxu0 0.0
    %7024 = vmatprep.subr.mxu0 0.0
    %7025 = vmatpush2.msra.mxu0 0.0
    %7026 = vmatprep.subr.mxu0 0.0
    %7027 = vmatpush2.msra.mxu0 0.0
    %7028 = vmatprep.subr.mxu0 0.0
    %7029 = vmatpush2.msra.mxu0 0.0
    %7030 = vmatprep.subr.mxu0 0.0
    %7031 = vmatpush2.msra.mxu0 0.0
    %7032 = vmatprep.subr.mxu0 0.0
    %7033 = vmatpush2.msra.mxu0 0.0
    %7034 = vmatprep.subr.mxu0 0.0
    %7035 = vmatpush2.msra.mxu0 0.0
    %7036 = vmatprep.subr.mxu0 0.0
    %7037 = vmatpush2.msra.mxu0 0.0
    %7038 = vmatprep.subr.mxu0 0.0
    %7039 = vmatpush2.msra.mxu0 0.0
    %7040 = vmatprep.subr.mxu0 0.0
    %7041 = vmatpush2.msra.mxu0 0.0
    %7042 = vmatprep.subr.mxu0 0.0
    %7043 = vmatpush2.msra.mxu0 0.0
    %7044 = vmatprep.mubr.f32.mxu0 0.0
    %7045 = vmatmul.mubr.f32.gmra.mxu0 %v6978
    %v7046 = vpop.f32.mrf.mxu0
    %v7047 = vadd.f32 0.0, %v7046
    %v7048 = vpop.f32.mrf.mxu0
    %7049 = vdwg.mxu0
    %s7050 = scalar_lea.vmem [#allocation9], 768
    %v7051 = vld [vmem:[%s7050] sm:$0xff]
    %v7052 = vld [vmem:[%s7050 + $0x8] sm:$0xff]
    %v7053 = vld [vmem:[%s7050 + $0x10] sm:$0xff]
    %v7054 = vld [vmem:[%s7050 + $0x18] sm:$0xff]
    %7055 = vmatprep.subr.mxu0 0.0
    %7056 = vmatpush1.msra.mxu0 0.0
    %7057 = vmatprep.subr.mxu0 0.0
    %7058 = vmatpush1.msra.mxu0 0.0
    %7059 = vmatprep.subr.mxu0 0.0
    %7060 = vmatpush1.msra.mxu0 0.0
    %7061 = vmatprep.subr.mxu0 0.0
    %7062 = vmatpush1.msra.mxu0 0.0
    %7063 = vmatprep.subr.mxu0 0.0
    %7064 = vmatpush1.msra.mxu0 0.0
    %7065 = vmatprep.subr.mxu0 0.0
    %7066 = vmatpush1.msra.mxu0 0.0
    %7067 = vmatprep.subr.mxu0 0.0
    %7068 = vmatpush1.msra.mxu0 0.0
    %7069 = vmatprep.subr.mxu0 0.0
    %7070 = vmatpush1.msra.mxu0 0.0
    %7071 = vmatprep.subr.mxu0 0.0
    %7072 = vmatpush1.msra.mxu0 0.0
    %7073 = vmatprep.subr.mxu0 0.0
    %7074 = vmatpush1.msra.mxu0 0.0
    %7075 = vmatprep.subr.mxu0 0.0
    %7076 = vmatpush1.msra.mxu0 0.0
    %7077 = vmatprep.subr.mxu0 0.0
    %7078 = vmatpush1.msra.mxu0 0.0
    %7079 = vmatprep.subr.mxu0 0.0
    %7080 = vmatpush1.msra.mxu0 %v7054
    %7081 = vmatprep.subr.mxu0 0.0
    %7082 = vmatpush1.msra.mxu0 %v7053
    %7083 = vmatprep.subr.mxu0 0.0
    %7084 = vmatpush1.msra.mxu0 %v7052
    %7085 = vmatprep.subr.mxu0 0.0
    %7086 = vmatpush1.msra.mxu0 %v7051
    %7087 = vmatprep.subr.mxu0 0.0
    %7088 = vmatpush2.msra.mxu0 0.0
    %7089 = vmatprep.subr.mxu0 0.0
    %7090 = vmatpush2.msra.mxu0 0.0
    %7091 = vmatprep.subr.mxu0 0.0
    %7092 = vmatpush2.msra.mxu0 0.0
    %7093 = vmatprep.subr.mxu0 0.0
    %7094 = vmatpush2.msra.mxu0 0.0
    %7095 = vmatprep.subr.mxu0 0.0
    %7096 = vmatpush2.msra.mxu0 0.0
    %7097 = vmatprep.subr.mxu0 0.0
    %7098 = vmatpush2.msra.mxu0 0.0
    %7099 = vmatprep.subr.mxu0 0.0
    %7100 = vmatpush2.msra.mxu0 0.0
    %7101 = vmatprep.subr.mxu0 0.0
    %7102 = vmatpush2.msra.mxu0 0.0
    %7103 = vmatprep.subr.mxu0 0.0
    %7104 = vmatpush2.msra.mxu0 0.0
    %7105 = vmatprep.subr.mxu0 0.0
    %7106 = vmatpush2.msra.mxu0 0.0
    %7107 = vmatprep.subr.mxu0 0.0
    %7108 = vmatpush2.msra.mxu0 0.0
    %7109 = vmatprep.subr.mxu0 0.0
    %7110 = vmatpush2.msra.mxu0 0.0
    %7111 = vmatprep.subr.mxu0 0.0
    %7112 = vmatpush2.msra.mxu0 0.0
    %7113 = vmatprep.subr.mxu0 0.0
    %7114 = vmatpush2.msra.mxu0 0.0
    %7115 = vmatprep.subr.mxu0 0.0
    %7116 = vmatpush2.msra.mxu0 0.0
    %7117 = vmatprep.subr.mxu0 0.0
    %7118 = vmatpush2.msra.mxu0 0.0
    %7119 = vmatprep.mubr.f32.mxu0 0.0
    %7120 = vmatmul.mubr.f32.gmra.mxu0 %v6886
    %v7121 = vpop.f32.mrf.mxu0
    %v7122 = vadd.f32 0.0, %v7121
    %v7123 = vpop.f32.mrf.mxu0
    %7124 = vdwg.mxu0
    %v7126 = vlaneseq
    %v7127 = vshrl.u32 %v7126, 7
    %v7128 = vsub.s32 0, %v7127
    %v7129 = vrot.slane %v6836, %v7128
    %v7131 = vadd.f32 %v7129, %v7122
    %s7132 = scalar_lea.vmem [#allocation9], 800
    %v7133 = vld [vmem:[%s7132] sm:$0xff]
    %v7134 = vld [vmem:[%s7132 + $0x8] sm:$0xff]
    %v7135 = vld [vmem:[%s7132 + $0x10] sm:$0xff]
    %v7136 = vld [vmem:[%s7132 + $0x18] sm:$0xff]
    %v7138 = vsel %vm133, %v7047, 0
    %7140 = vmatprep.subr.mxu0 0.0
    %7141 = vmatpush1.msra.mxu0 0.0
    %7142 = vmatprep.subr.mxu0 0.0
    %7143 = vmatpush1.msra.mxu0 0.0
    %7144 = vmatprep.subr.mxu0 0.0
    %7145 = vmatpush1.msra.mxu0 0.0
    %7146 = vmatprep.subr.mxu0 0.0
    %7147 = vmatpush1.msra.mxu0 0.0
    %7148 = vmatprep.subr.mxu0 0.0
    %7149 = vmatpush1.msra.mxu0 0.0
    %7150 = vmatprep.subr.mxu0 0.0
    %7151 = vmatpush1.msra.mxu0 0.0
    %7152 = vmatprep.subr.mxu0 0.0
    %7153 = vmatpush1.msra.mxu0 0.0
    %7154 = vmatprep.subr.mxu0 0.0
    %7155 = vmatpush1.msra.mxu0 0.0
    %7156 = vmatprep.subr.mxu0 0.0
    %7157 = vmatpush1.msra.mxu0 0.0
    %7158 = vmatprep.subr.mxu0 0.0
    %7159 = vmatpush1.msra.mxu0 0.0
    %7160 = vmatprep.subr.mxu0 0.0
    %7161 = vmatpush1.msra.mxu0 0.0
    %7162 = vmatprep.subr.mxu0 0.0
    %7163 = vmatpush1.msra.mxu0 0.0
    %7164 = vmatprep.subr.mxu0 0.0
    %7165 = vmatpush1.msra.mxu0 %v7136
    %7166 = vmatprep.subr.mxu0 0.0
    %7167 = vmatpush1.msra.mxu0 %v7135
    %7168 = vmatprep.subr.mxu0 0.0
    %7169 = vmatpush1.msra.mxu0 %v7134
    %7170 = vmatprep.subr.mxu0 0.0
    %7171 = vmatpush1.msra.mxu0 %v7133
    %7172 = vmatprep.subr.mxu0 0.0
    %7173 = vmatpush2.msra.mxu0 0.0
    %7174 = vmatprep.subr.mxu0 0.0
    %7175 = vmatpush2.msra.mxu0 0.0
    %7176 = vmatprep.subr.mxu0 0.0
    %7177 = vmatpush2.msra.mxu0 0.0
    %7178 = vmatprep.subr.mxu0 0.0
    %7179 = vmatpush2.msra.mxu0 0.0
    %7180 = vmatprep.subr.mxu0 0.0
    %7181 = vmatpush2.msra.mxu0 0.0
    %7182 = vmatprep.subr.mxu0 0.0
    %7183 = vmatpush2.msra.mxu0 0.0
    %7184 = vmatprep.subr.mxu0 0.0
    %7185 = vmatpush2.msra.mxu0 0.0
    %7186 = vmatprep.subr.mxu0 0.0
    %7187 = vmatpush2.msra.mxu0 0.0
    %7188 = vmatprep.subr.mxu0 0.0
    %7189 = vmatpush2.msra.mxu0 0.0
    %7190 = vmatprep.subr.mxu0 0.0
    %7191 = vmatpush2.msra.mxu0 0.0
    %7192 = vmatprep.subr.mxu0 0.0
    %7193 = vmatpush2.msra.mxu0 0.0
    %7194 = vmatprep.subr.mxu0 0.0
    %7195 = vmatpush2.msra.mxu0 0.0
    %7196 = vmatprep.subr.mxu0 0.0
    %7197 = vmatpush2.msra.mxu0 0.0
    %7198 = vmatprep.subr.mxu0 0.0
    %7199 = vmatpush2.msra.mxu0 0.0
    %7200 = vmatprep.subr.mxu0 0.0
    %7201 = vmatpush2.msra.mxu0 0.0
    %7202 = vmatprep.subr.mxu0 0.0
    %7203 = vmatpush2.msra.mxu0 0.0
    %7204 = vmatprep.mubr.f32.mxu0 0.0
    %7205 = vmatmul.mubr.f32.gmra.mxu0 %v7138
    %v7206 = vpop.f32.mrf.mxu0
    %v7207 = vadd.f32 0.0, %v7206
    %v7208 = vpop.f32.mrf.mxu0
    %7209 = vdwg.mxu0
    %v7210 = vadd.f32 %v7131, %v7207
    %s7211 = scalar_lea.vmem [#allocation9], 832
    %v7212 = vld [vmem:[%s7211] sm:$0xff]
    %v7213 = vld [vmem:[%s7211 + $0x8] sm:$0xff]
    %v7214 = vld [vmem:[%s7211 + $0x10] sm:$0xff]
    %v7215 = vld [vmem:[%s7211 + $0x18] sm:$0xff]
    %7216 = vmatprep.subr.mxu0 0.0
    %7217 = vmatpush1.msra.mxu0 0.0
    %7218 = vmatprep.subr.mxu0 0.0
    %7219 = vmatpush1.msra.mxu0 0.0
    %7220 = vmatprep.subr.mxu0 0.0
    %7221 = vmatpush1.msra.mxu0 0.0
    %7222 = vmatprep.subr.mxu0 0.0
    %7223 = vmatpush1.msra.mxu0 0.0
    %7224 = vmatprep.subr.mxu0 0.0
    %7225 = vmatpush1.msra.mxu0 0.0
    %7226 = vmatprep.subr.mxu0 0.0
    %7227 = vmatpush1.msra.mxu0 0.0
    %7228 = vmatprep.subr.mxu0 0.0
    %7229 = vmatpush1.msra.mxu0 0.0
    %7230 = vmatprep.subr.mxu0 0.0
    %7231 = vmatpush1.msra.mxu0 0.0
    %7232 = vmatprep.subr.mxu0 0.0
    %7233 = vmatpush1.msra.mxu0 0.0
    %7234 = vmatprep.subr.mxu0 0.0
    %7235 = vmatpush1.msra.mxu0 0.0
    %7236 = vmatprep.subr.mxu0 0.0
    %7237 = vmatpush1.msra.mxu0 0.0
    %7238 = vmatprep.subr.mxu0 0.0
    %7239 = vmatpush1.msra.mxu0 0.0
    %7240 = vmatprep.subr.mxu0 0.0
    %7241 = vmatpush1.msra.mxu0 %v7215
    %7242 = vmatprep.subr.mxu0 0.0
    %7243 = vmatpush1.msra.mxu0 %v7214
    %7244 = vmatprep.subr.mxu0 0.0
    %7245 = vmatpush1.msra.mxu0 %v7213
    %7246 = vmatprep.subr.mxu0 0.0
    %7247 = vmatpush1.msra.mxu0 %v7212
    %7248 = vmatprep.subr.mxu0 0.0
    %7249 = vmatpush2.msra.mxu0 0.0
    %7250 = vmatprep.subr.mxu0 0.0
    %7251 = vmatpush2.msra.mxu0 0.0
    %7252 = vmatprep.subr.mxu0 0.0
    %7253 = vmatpush2.msra.mxu0 0.0
    %7254 = vmatprep.subr.mxu0 0.0
    %7255 = vmatpush2.msra.mxu0 0.0
    %7256 = vmatprep.subr.mxu0 0.0
    %7257 = vmatpush2.msra.mxu0 0.0
    %7258 = vmatprep.subr.mxu0 0.0
    %7259 = vmatpush2.msra.mxu0 0.0
    %7260 = vmatprep.subr.mxu0 0.0
    %7261 = vmatpush2.msra.mxu0 0.0
    %7262 = vmatprep.subr.mxu0 0.0
    %7263 = vmatpush2.msra.mxu0 0.0
    %7264 = vmatprep.subr.mxu0 0.0
    %7265 = vmatpush2.msra.mxu0 0.0
    %7266 = vmatprep.subr.mxu0 0.0
    %7267 = vmatpush2.msra.mxu0 0.0
    %7268 = vmatprep.subr.mxu0 0.0
    %7269 = vmatpush2.msra.mxu0 0.0
    %7270 = vmatprep.subr.mxu0 0.0
    %7271 = vmatpush2.msra.mxu0 0.0
    %7272 = vmatprep.subr.mxu0 0.0
    %7273 = vmatpush2.msra.mxu0 0.0
    %7274 = vmatprep.subr.mxu0 0.0
    %7275 = vmatpush2.msra.mxu0 0.0
    %7276 = vmatprep.subr.mxu0 0.0
    %7277 = vmatpush2.msra.mxu0 0.0
    %7278 = vmatprep.subr.mxu0 0.0
    %7279 = vmatpush2.msra.mxu0 0.0
    %7280 = vmatprep.mubr.f32.mxu0 0.0
    %7281 = vmatmul.mubr.f32.gmra.mxu0 %v6886
    %v7282 = vpop.f32.mrf.mxu0
    %v7283 = vadd.f32 0.0, %v7282
    %v7284 = vpop.f32.mrf.mxu0
    %7285 = vdwg.mxu0
    %v7286 = vadd.f32 %v7210, %v7283
    %v7287 = vxor.u32 %v7286, 2147483648
    %v7288 = vmul.f32 %v7287, 1.442695
    %v7289 = vpow.pop %v7288
    %v7290 = vadd.f32 %v7289, 1.0
    %v7291 = vrcp.pop %v7290
    %v7292 = vmul.f32 1.0, %v7291
    %s7293 = scalar_lea.vmem [#allocation9], 864
    %v7294 = vld [vmem:[%s7293] sm:$0xff]
    %v7295 = vld [vmem:[%s7293 + $0x8] sm:$0xff]
    %v7296 = vld [vmem:[%s7293 + $0x10] sm:$0xff]
    %v7297 = vld [vmem:[%s7293 + $0x18] sm:$0xff]
    %7298 = vmatprep.subr.mxu0 0.0
    %7299 = vmatpush1.msra.mxu0 0.0
    %7300 = vmatprep.subr.mxu0 0.0
    %7301 = vmatpush1.msra.mxu0 0.0
    %7302 = vmatprep.subr.mxu0 0.0
    %7303 = vmatpush1.msra.mxu0 0.0
    %7304 = vmatprep.subr.mxu0 0.0
    %7305 = vmatpush1.msra.mxu0 0.0
    %7306 = vmatprep.subr.mxu0 0.0
    %7307 = vmatpush1.msra.mxu0 0.0
    %7308 = vmatprep.subr.mxu0 0.0
    %7309 = vmatpush1.msra.mxu0 0.0
    %7310 = vmatprep.subr.mxu0 0.0
    %7311 = vmatpush1.msra.mxu0 0.0
    %7312 = vmatprep.subr.mxu0 0.0
    %7313 = vmatpush1.msra.mxu0 0.0
    %7314 = vmatprep.subr.mxu0 0.0
    %7315 = vmatpush1.msra.mxu0 0.0
    %7316 = vmatprep.subr.mxu0 0.0
    %7317 = vmatpush1.msra.mxu0 0.0
    %7318 = vmatprep.subr.mxu0 0.0
    %7319 = vmatpush1.msra.mxu0 0.0
    %7320 = vmatprep.subr.mxu0 0.0
    %7321 = vmatpush1.msra.mxu0 0.0
    %7322 = vmatprep.subr.mxu0 0.0
    %7323 = vmatpush1.msra.mxu0 %v7297
    %7324 = vmatprep.subr.mxu0 0.0
    %7325 = vmatpush1.msra.mxu0 %v7296
    %7326 = vmatprep.subr.mxu0 0.0
    %7327 = vmatpush1.msra.mxu0 %v7295
    %7328 = vmatprep.subr.mxu0 0.0
    %7329 = vmatpush1.msra.mxu0 %v7294
    %7330 = vmatprep.subr.mxu0 0.0
    %7331 = vmatpush2.msra.mxu0 0.0
    %7332 = vmatprep.subr.mxu0 0.0
    %7333 = vmatpush2.msra.mxu0 0.0
    %7334 = vmatprep.subr.mxu0 0.0
    %7335 = vmatpush2.msra.mxu0 0.0
    %7336 = vmatprep.subr.mxu0 0.0
    %7337 = vmatpush2.msra.mxu0 0.0
    %7338 = vmatprep.subr.mxu0 0.0
    %7339 = vmatpush2.msra.mxu0 0.0
    %7340 = vmatprep.subr.mxu0 0.0
    %7341 = vmatpush2.msra.mxu0 0.0
    %7342 = vmatprep.subr.mxu0 0.0
    %7343 = vmatpush2.msra.mxu0 0.0
    %7344 = vmatprep.subr.mxu0 0.0
    %7345 = vmatpush2.msra.mxu0 0.0
    %7346 = vmatprep.subr.mxu0 0.0
    %7347 = vmatpush2.msra.mxu0 0.0
    %7348 = vmatprep.subr.mxu0 0.0
    %7349 = vmatpush2.msra.mxu0 0.0
    %7350 = vmatprep.subr.mxu0 0.0
    %7351 = vmatpush2.msra.mxu0 0.0
    %7352 = vmatprep.subr.mxu0 0.0
    %7353 = vmatpush2.msra.mxu0 0.0
    %7354 = vmatprep.subr.mxu0 0.0
    %7355 = vmatpush2.msra.mxu0 0.0
    %7356 = vmatprep.subr.mxu0 0.0
    %7357 = vmatpush2.msra.mxu0 0.0
    %7358 = vmatprep.subr.mxu0 0.0
    %7359 = vmatpush2.msra.mxu0 0.0
    %7360 = vmatprep.subr.mxu0 0.0
    %7361 = vmatpush2.msra.mxu0 0.0
    %7362 = vmatprep.mubr.f32.mxu0 0.0
    %7363 = vmatmul.mubr.f32.gmra.mxu0 %v6886
    %v7364 = vpop.f32.mrf.mxu0
    %v7365 = vadd.f32 0.0, %v7364
    %v7366 = vpop.f32.mrf.mxu0
    %7367 = vdwg.mxu0
    %v7369 = vlaneseq
    %v7370 = vshrl.u32 %v7369, 7
    %v7371 = vsub.s32 0, %v7370
    %v7372 = vrot.slane %v6844, %v7371
    %v7374 = vadd.f32 %v7372, %v7365
    %s7375 = scalar_lea.vmem [#allocation9], 896
    %v7376 = vld [vmem:[%s7375] sm:$0xff]
    %v7377 = vld [vmem:[%s7375 + $0x8] sm:$0xff]
    %v7378 = vld [vmem:[%s7375 + $0x10] sm:$0xff]
    %v7379 = vld [vmem:[%s7375 + $0x18] sm:$0xff]
    %7380 = vmatprep.subr.mxu0 0.0
    %7381 = vmatpush1.msra.mxu0 0.0
    %7382 = vmatprep.subr.mxu0 0.0
    %7383 = vmatpush1.msra.mxu0 0.0
    %7384 = vmatprep.subr.mxu0 0.0
    %7385 = vmatpush1.msra.mxu0 0.0
    %7386 = vmatprep.subr.mxu0 0.0
    %7387 = vmatpush1.msra.mxu0 0.0
    %7388 = vmatprep.subr.mxu0 0.0
    %7389 = vmatpush1.msra.mxu0 0.0
    %7390 = vmatprep.subr.mxu0 0.0
    %7391 = vmatpush1.msra.mxu0 0.0
    %7392 = vmatprep.subr.mxu0 0.0
    %7393 = vmatpush1.msra.mxu0 0.0
    %7394 = vmatprep.subr.mxu0 0.0
    %7395 = vmatpush1.msra.mxu0 0.0
    %7396 = vmatprep.subr.mxu0 0.0
    %7397 = vmatpush1.msra.mxu0 0.0
    %7398 = vmatprep.subr.mxu0 0.0
    %7399 = vmatpush1.msra.mxu0 0.0
    %7400 = vmatprep.subr.mxu0 0.0
    %7401 = vmatpush1.msra.mxu0 0.0
    %7402 = vmatprep.subr.mxu0 0.0
    %7403 = vmatpush1.msra.mxu0 0.0
    %7404 = vmatprep.subr.mxu0 0.0
    %7405 = vmatpush1.msra.mxu0 %v7379
    %7406 = vmatprep.subr.mxu0 0.0
    %7407 = vmatpush1.msra.mxu0 %v7378
    %7408 = vmatprep.subr.mxu0 0.0
    %7409 = vmatpush1.msra.mxu0 %v7377
    %7410 = vmatprep.subr.mxu0 0.0
    %7411 = vmatpush1.msra.mxu0 %v7376
    %7412 = vmatprep.subr.mxu0 0.0
    %7413 = vmatpush2.msra.mxu0 0.0
    %7414 = vmatprep.subr.mxu0 0.0
    %7415 = vmatpush2.msra.mxu0 0.0
    %7416 = vmatprep.subr.mxu0 0.0
    %7417 = vmatpush2.msra.mxu0 0.0
    %7418 = vmatprep.subr.mxu0 0.0
    %7419 = vmatpush2.msra.mxu0 0.0
    %7420 = vmatprep.subr.mxu0 0.0
    %7421 = vmatpush2.msra.mxu0 0.0
    %7422 = vmatprep.subr.mxu0 0.0
    %7423 = vmatpush2.msra.mxu0 0.0
    %7424 = vmatprep.subr.mxu0 0.0
    %7425 = vmatpush2.msra.mxu0 0.0
    %7426 = vmatprep.subr.mxu0 0.0
    %7427 = vmatpush2.msra.mxu0 0.0
    %7428 = vmatprep.subr.mxu0 0.0
    %7429 = vmatpush2.msra.mxu0 0.0
    %7430 = vmatprep.subr.mxu0 0.0
    %7431 = vmatpush2.msra.mxu0 0.0
    %7432 = vmatprep.subr.mxu0 0.0
    %7433 = vmatpush2.msra.mxu0 0.0
    %7434 = vmatprep.subr.mxu0 0.0
    %7435 = vmatpush2.msra.mxu0 0.0
    %7436 = vmatprep.subr.mxu0 0.0
    %7437 = vmatpush2.msra.mxu0 0.0
    %7438 = vmatprep.subr.mxu0 0.0
    %7439 = vmatpush2.msra.mxu0 0.0
    %7440 = vmatprep.subr.mxu0 0.0
    %7441 = vmatpush2.msra.mxu0 0.0
    %7442 = vmatprep.subr.mxu0 0.0
    %7443 = vmatpush2.msra.mxu0 0.0
    %7444 = vmatprep.mubr.f32.mxu0 0.0
    %7445 = vmatmul.mubr.f32.gmra.mxu0 %v7138
    %v7446 = vpop.f32.mrf.mxu0
    %v7447 = vadd.f32 0.0, %v7446
    %v7448 = vpop.f32.mrf.mxu0
    %7449 = vdwg.mxu0
    %v7450 = vadd.f32 %v7374, %v7447
    %s7451 = scalar_lea.vmem [#allocation9], 928
    %v7452 = vld [vmem:[%s7451] sm:$0xff]
    %v7453 = vld [vmem:[%s7451 + $0x8] sm:$0xff]
    %v7454 = vld [vmem:[%s7451 + $0x10] sm:$0xff]
    %v7455 = vld [vmem:[%s7451 + $0x18] sm:$0xff]
    %7456 = vmatprep.subr.mxu0 0.0
    %7457 = vmatpush1.msra.mxu0 0.0
    %7458 = vmatprep.subr.mxu0 0.0
    %7459 = vmatpush1.msra.mxu0 0.0
    %7460 = vmatprep.subr.mxu0 0.0
    %7461 = vmatpush1.msra.mxu0 0.0
    %7462 = vmatprep.subr.mxu0 0.0
    %7463 = vmatpush1.msra.mxu0 0.0
    %7464 = vmatprep.subr.mxu0 0.0
    %7465 = vmatpush1.msra.mxu0 0.0
    %7466 = vmatprep.subr.mxu0 0.0
    %7467 = vmatpush1.msra.mxu0 0.0
    %7468 = vmatprep.subr.mxu0 0.0
    %7469 = vmatpush1.msra.mxu0 0.0
    %7470 = vmatprep.subr.mxu0 0.0
    %7471 = vmatpush1.msra.mxu0 0.0
    %7472 = vmatprep.subr.mxu0 0.0
    %7473 = vmatpush1.msra.mxu0 0.0
    %7474 = vmatprep.subr.mxu0 0.0
    %7475 = vmatpush1.msra.mxu0 0.0
    %7476 = vmatprep.subr.mxu0 0.0
    %7477 = vmatpush1.msra.mxu0 0.0
    %7478 = vmatprep.subr.mxu0 0.0
    %7479 = vmatpush1.msra.mxu0 0.0
    %7480 = vmatprep.subr.mxu0 0.0
    %7481 = vmatpush1.msra.mxu0 %v7455
    %7482 = vmatprep.subr.mxu0 0.0
    %7483 = vmatpush1.msra.mxu0 %v7454
    %7484 = vmatprep.subr.mxu0 0.0
    %7485 = vmatpush1.msra.mxu0 %v7453
    %7486 = vmatprep.subr.mxu0 0.0
    %7487 = vmatpush1.msra.mxu0 %v7452
    %7488 = vmatprep.subr.mxu0 0.0
    %7489 = vmatpush2.msra.mxu0 0.0
    %7490 = vmatprep.subr.mxu0 0.0
    %7491 = vmatpush2.msra.mxu0 0.0
    %7492 = vmatprep.subr.mxu0 0.0
    %7493 = vmatpush2.msra.mxu0 0.0
    %7494 = vmatprep.subr.mxu0 0.0
    %7495 = vmatpush2.msra.mxu0 0.0
    %7496 = vmatprep.subr.mxu0 0.0
    %7497 = vmatpush2.msra.mxu0 0.0
    %7498 = vmatprep.subr.mxu0 0.0
    %7499 = vmatpush2.msra.mxu0 0.0
    %7500 = vmatprep.subr.mxu0 0.0
    %7501 = vmatpush2.msra.mxu0 0.0
    %7502 = vmatprep.subr.mxu0 0.0
    %7503 = vmatpush2.msra.mxu0 0.0
    %7504 = vmatprep.subr.mxu0 0.0
    %7505 = vmatpush2.msra.mxu0 0.0
    %7506 = vmatprep.subr.mxu0 0.0
    %7507 = vmatpush2.msra.mxu0 0.0
    %7508 = vmatprep.subr.mxu0 0.0
    %7509 = vmatpush2.msra.mxu0 0.0
    %7510 = vmatprep.subr.mxu0 0.0
    %7511 = vmatpush2.msra.mxu0 0.0
    %7512 = vmatprep.subr.mxu0 0.0
    %7513 = vmatpush2.msra.mxu0 0.0
    %7514 = vmatprep.subr.mxu0 0.0
    %7515 = vmatpush2.msra.mxu0 0.0
    %7516 = vmatprep.subr.mxu0 0.0
    %7517 = vmatpush2.msra.mxu0 0.0
    %7518 = vmatprep.subr.mxu0 0.0
    %7519 = vmatpush2.msra.mxu0 0.0
    %7520 = vmatprep.mubr.f32.mxu0 0.0
    %7521 = vmatmul.mubr.f32.gmra.mxu0 %v6886
    %v7522 = vpop.f32.mrf.mxu0
    %v7523 = vadd.f32 0.0, %v7522
    %v7524 = vpop.f32.mrf.mxu0
    %7525 = vdwg.mxu0
    %v7526 = vadd.f32 %v7450, %v7523
    %v7527 = vxor.u32 %v7526, 2147483648
    %v7528 = vmul.f32 %v7527, 1.442695
    %v7529 = vpow.pop %v7528
    %v7530 = vadd.f32 %v7529, 1.0
    %v7531 = vrcp.pop %v7530
    %v7532 = vmul.f32 1.0, %v7531
    %s7533 = scalar_lea.vmem [#allocation9], 960
    %v7534 = vld [vmem:[%s7533] sm:$0xff]
    %v7535 = vld [vmem:[%s7533 + $0x8] sm:$0xff]
    %v7536 = vld [vmem:[%s7533 + $0x10] sm:$0xff]
    %v7537 = vld [vmem:[%s7533 + $0x18] sm:$0xff]
    %7538 = vmatprep.subr.mxu0 0.0
    %7539 = vmatpush1.msra.mxu0 0.0
    %7540 = vmatprep.subr.mxu0 0.0
    %7541 = vmatpush1.msra.mxu0 0.0
    %7542 = vmatprep.subr.mxu0 0.0
    %7543 = vmatpush1.msra.mxu0 0.0
    %7544 = vmatprep.subr.mxu0 0.0
    %7545 = vmatpush1.msra.mxu0 0.0
    %7546 = vmatprep.subr.mxu0 0.0
    %7547 = vmatpush1.msra.mxu0 0.0
    %7548 = vmatprep.subr.mxu0 0.0
    %7549 = vmatpush1.msra.mxu0 0.0
    %7550 = vmatprep.subr.mxu0 0.0
    %7551 = vmatpush1.msra.mxu0 0.0
    %7552 = vmatprep.subr.mxu0 0.0
    %7553 = vmatpush1.msra.mxu0 0.0
    %7554 = vmatprep.subr.mxu0 0.0
    %7555 = vmatpush1.msra.mxu0 0.0
    %7556 = vmatprep.subr.mxu0 0.0
    %7557 = vmatpush1.msra.mxu0 0.0
    %7558 = vmatprep.subr.mxu0 0.0
    %7559 = vmatpush1.msra.mxu0 0.0
    %7560 = vmatprep.subr.mxu0 0.0
    %7561 = vmatpush1.msra.mxu0 0.0
    %7562 = vmatprep.subr.mxu0 0.0
    %7563 = vmatpush1.msra.mxu0 %v7537
    %7564 = vmatprep.subr.mxu0 0.0
    %7565 = vmatpush1.msra.mxu0 %v7536
    %7566 = vmatprep.subr.mxu0 0.0
    %7567 = vmatpush1.msra.mxu0 %v7535
    %7568 = vmatprep.subr.mxu0 0.0
    %7569 = vmatpush1.msra.mxu0 %v7534
    %7570 = vmatprep.subr.mxu0 0.0
    %7571 = vmatpush2.msra.mxu0 0.0
    %7572 = vmatprep.subr.mxu0 0.0
    %7573 = vmatpush2.msra.mxu0 0.0
    %7574 = vmatprep.subr.mxu0 0.0
    %7575 = vmatpush2.msra.mxu0 0.0
    %7576 = vmatprep.subr.mxu0 0.0
    %7577 = vmatpush2.msra.mxu0 0.0
    %7578 = vmatprep.subr.mxu0 0.0
    %7579 = vmatpush2.msra.mxu0 0.0
    %7580 = vmatprep.subr.mxu0 0.0
    %7581 = vmatpush2.msra.mxu0 0.0
    %7582 = vmatprep.subr.mxu0 0.0
    %7583 = vmatpush2.msra.mxu0 0.0
    %7584 = vmatprep.subr.mxu0 0.0
    %7585 = vmatpush2.msra.mxu0 0.0
    %7586 = vmatprep.subr.mxu0 0.0
    %7587 = vmatpush2.msra.mxu0 0.0
    %7588 = vmatprep.subr.mxu0 0.0
    %7589 = vmatpush2.msra.mxu0 0.0
    %7590 = vmatprep.subr.mxu0 0.0
    %7591 = vmatpush2.msra.mxu0 0.0
    %7592 = vmatprep.subr.mxu0 0.0
    %7593 = vmatpush2.msra.mxu0 0.0
    %7594 = vmatprep.subr.mxu0 0.0
    %7595 = vmatpush2.msra.mxu0 0.0
    %7596 = vmatprep.subr.mxu0 0.0
    %7597 = vmatpush2.msra.mxu0 0.0
    %7598 = vmatprep.subr.mxu0 0.0
    %7599 = vmatpush2.msra.mxu0 0.0
    %7600 = vmatprep.subr.mxu0 0.0
    %7601 = vmatpush2.msra.mxu0 0.0
    %7602 = vmatprep.mubr.f32.mxu0 0.0
    %7603 = vmatmul.mubr.f32.gmra.mxu0 %v6886
    %v7604 = vpop.f32.mrf.mxu0
    %v7605 = vadd.f32 0.0, %v7604
    %v7606 = vpop.f32.mrf.mxu0
    %7607 = vdwg.mxu0
    %v7609 = vlaneseq
    %v7610 = vshrl.u32 %v7609, 7
    %v7611 = vsub.s32 0, %v7610
    %v7612 = vrot.slane %v6852, %v7611
    %v7614 = vadd.f32 %v7612, %v7605
    %s7615 = scalar_lea.vmem [#allocation9], 992
    %v7616 = vld [vmem:[%s7615] sm:$0xff]
    %v7617 = vld [vmem:[%s7615 + $0x8] sm:$0xff]
    %v7618 = vld [vmem:[%s7615 + $0x10] sm:$0xff]
    %v7619 = vld [vmem:[%s7615 + $0x18] sm:$0xff]
    %7620 = vmatprep.subr.mxu0 0.0
    %7621 = vmatpush1.msra.mxu0 0.0
    %7622 = vmatprep.subr.mxu0 0.0
    %7623 = vmatpush1.msra.mxu0 0.0
    %7624 = vmatprep.subr.mxu0 0.0
    %7625 = vmatpush1.msra.mxu0 0.0
    %7626 = vmatprep.subr.mxu0 0.0
    %7627 = vmatpush1.msra.mxu0 0.0
    %7628 = vmatprep.subr.mxu0 0.0
    %7629 = vmatpush1.msra.mxu0 0.0
    %7630 = vmatprep.subr.mxu0 0.0
    %7631 = vmatpush1.msra.mxu0 0.0
    %7632 = vmatprep.subr.mxu0 0.0
    %7633 = vmatpush1.msra.mxu0 0.0
    %7634 = vmatprep.subr.mxu0 0.0
    %7635 = vmatpush1.msra.mxu0 0.0
    %7636 = vmatprep.subr.mxu0 0.0
    %7637 = vmatpush1.msra.mxu0 0.0
    %7638 = vmatprep.subr.mxu0 0.0
    %7639 = vmatpush1.msra.mxu0 0.0
    %7640 = vmatprep.subr.mxu0 0.0
    %7641 = vmatpush1.msra.mxu0 0.0
    %7642 = vmatprep.subr.mxu0 0.0
    %7643 = vmatpush1.msra.mxu0 0.0
    %7644 = vmatprep.subr.mxu0 0.0
    %7645 = vmatpush1.msra.mxu0 %v7619
    %7646 = vmatprep.subr.mxu0 0.0
    %7647 = vmatpush1.msra.mxu0 %v7618
    %7648 = vmatprep.subr.mxu0 0.0
    %7649 = vmatpush1.msra.mxu0 %v7617
    %7650 = vmatprep.subr.mxu0 0.0
    %7651 = vmatpush1.msra.mxu0 %v7616
    %7652 = vmatprep.subr.mxu0 0.0
    %7653 = vmatpush2.msra.mxu0 0.0
    %7654 = vmatprep.subr.mxu0 0.0
    %7655 = vmatpush2.msra.mxu0 0.0
    %7656 = vmatprep.subr.mxu0 0.0
    %7657 = vmatpush2.msra.mxu0 0.0
    %7658 = vmatprep.subr.mxu0 0.0
    %7659 = vmatpush2.msra.mxu0 0.0
    %7660 = vmatprep.subr.mxu0 0.0
    %7661 = vmatpush2.msra.mxu0 0.0
    %7662 = vmatprep.subr.mxu0 0.0
    %7663 = vmatpush2.msra.mxu0 0.0
    %7664 = vmatprep.subr.mxu0 0.0
    %7665 = vmatpush2.msra.mxu0 0.0
    %7666 = vmatprep.subr.mxu0 0.0
    %7667 = vmatpush2.msra.mxu0 0.0
    %7668 = vmatprep.subr.mxu0 0.0
    %7669 = vmatpush2.msra.mxu0 0.0
    %7670 = vmatprep.subr.mxu0 0.0
    %7671 = vmatpush2.msra.mxu0 0.0
    %7672 = vmatprep.subr.mxu0 0.0
    %7673 = vmatpush2.msra.mxu0 0.0
    %7674 = vmatprep.subr.mxu0 0.0
    %7675 = vmatpush2.msra.mxu0 0.0
    %7676 = vmatprep.subr.mxu0 0.0
    %7677 = vmatpush2.msra.mxu0 0.0
    %7678 = vmatprep.subr.mxu0 0.0
    %7679 = vmatpush2.msra.mxu0 0.0
    %7680 = vmatprep.subr.mxu0 0.0
    %7681 = vmatpush2.msra.mxu0 0.0
    %7682 = vmatprep.subr.mxu0 0.0
    %7683 = vmatpush2.msra.mxu0 0.0
    %7684 = vmatprep.mubr.f32.mxu0 0.0
    %7685 = vmatmul.mubr.f32.gmra.mxu0 %v7138
    %v7686 = vpop.f32.mrf.mxu0
    %v7687 = vadd.f32 0.0, %v7686
    %v7688 = vpop.f32.mrf.mxu0
    %7689 = vdwg.mxu0
    %v7690 = vadd.f32 %v7614, %v7687
    %s7691 = scalar_lea.vmem [#allocation9], 1024
    %v7692 = vld [vmem:[%s7691] sm:$0xff]
    %v7693 = vld [vmem:[%s7691 + $0x8] sm:$0xff]
    %v7694 = vld [vmem:[%s7691 + $0x10] sm:$0xff]
    %v7695 = vld [vmem:[%s7691 + $0x18] sm:$0xff]
    %7696 = vmatprep.subr.mxu0 0.0
    %7697 = vmatpush1.msra.mxu0 0.0
    %7698 = vmatprep.subr.mxu0 0.0
    %7699 = vmatpush1.msra.mxu0 0.0
    %7700 = vmatprep.subr.mxu0 0.0
    %7701 = vmatpush1.msra.mxu0 0.0
    %7702 = vmatprep.subr.mxu0 0.0
    %7703 = vmatpush1.msra.mxu0 0.0
    %7704 = vmatprep.subr.mxu0 0.0
    %7705 = vmatpush1.msra.mxu0 0.0
    %7706 = vmatprep.subr.mxu0 0.0
    %7707 = vmatpush1.msra.mxu0 0.0
    %7708 = vmatprep.subr.mxu0 0.0
    %7709 = vmatpush1.msra.mxu0 0.0
    %7710 = vmatprep.subr.mxu0 0.0
    %7711 = vmatpush1.msra.mxu0 0.0
    %7712 = vmatprep.subr.mxu0 0.0
    %7713 = vmatpush1.msra.mxu0 0.0
    %7714 = vmatprep.subr.mxu0 0.0
    %7715 = vmatpush1.msra.mxu0 0.0
    %7716 = vmatprep.subr.mxu0 0.0
    %7717 = vmatpush1.msra.mxu0 0.0
    %7718 = vmatprep.subr.mxu0 0.0
    %7719 = vmatpush1.msra.mxu0 0.0
    %7720 = vmatprep.subr.mxu0 0.0
    %7721 = vmatpush1.msra.mxu0 %v7695
    %7722 = vmatprep.subr.mxu0 0.0
    %7723 = vmatpush1.msra.mxu0 %v7694
    %7724 = vmatprep.subr.mxu0 0.0
    %7725 = vmatpush1.msra.mxu0 %v7693
    %7726 = vmatprep.subr.mxu0 0.0
    %7727 = vmatpush1.msra.mxu0 %v7692
    %7728 = vmatprep.subr.mxu0 0.0
    %7729 = vmatpush2.msra.mxu0 0.0
    %7730 = vmatprep.subr.mxu0 0.0
    %7731 = vmatpush2.msra.mxu0 0.0
    %7732 = vmatprep.subr.mxu0 0.0
    %7733 = vmatpush2.msra.mxu0 0.0
    %7734 = vmatprep.subr.mxu0 0.0
    %7735 = vmatpush2.msra.mxu0 0.0
    %7736 = vmatprep.subr.mxu0 0.0
    %7737 = vmatpush2.msra.mxu0 0.0
    %7738 = vmatprep.subr.mxu0 0.0
    %7739 = vmatpush2.msra.mxu0 0.0
    %7740 = vmatprep.subr.mxu0 0.0
    %7741 = vmatpush2.msra.mxu0 0.0
    %7742 = vmatprep.subr.mxu0 0.0
    %7743 = vmatpush2.msra.mxu0 0.0
    %7744 = vmatprep.subr.mxu0 0.0
    %7745 = vmatpush2.msra.mxu0 0.0
    %7746 = vmatprep.subr.mxu0 0.0
    %7747 = vmatpush2.msra.mxu0 0.0
    %7748 = vmatprep.subr.mxu0 0.0
    %7749 = vmatpush2.msra.mxu0 0.0
    %7750 = vmatprep.subr.mxu0 0.0
    %7751 = vmatpush2.msra.mxu0 0.0
    %7752 = vmatprep.subr.mxu0 0.0
    %7753 = vmatpush2.msra.mxu0 0.0
    %7754 = vmatprep.subr.mxu0 0.0
    %7755 = vmatpush2.msra.mxu0 0.0
    %7756 = vmatprep.subr.mxu0 0.0
    %7757 = vmatpush2.msra.mxu0 0.0
    %7758 = vmatprep.subr.mxu0 0.0
    %7759 = vmatpush2.msra.mxu0 0.0
    %7760 = vmatprep.mubr.f32.mxu0 0.0
    %7761 = vmatmul.mubr.f32.gmra.mxu0 %v6886
    %v7762 = vpop.f32.mrf.mxu0
    %v7763 = vadd.f32 0.0, %v7762
    %v7764 = vpop.f32.mrf.mxu0
    %7765 = vdwg.mxu0
    %v7766 = vadd.f32 %v7690, %v7763
    %v7767 = vtanh.pop %v7766
    %s7768 = scalar_lea.vmem [#allocation9], 1056
    %v7769 = vld [vmem:[%s7768] sm:$0xff]
    %v7770 = vld [vmem:[%s7768 + $0x8] sm:$0xff]
    %v7771 = vld [vmem:[%s7768 + $0x10] sm:$0xff]
    %v7772 = vld [vmem:[%s7768 + $0x18] sm:$0xff]
    %7773 = vmatprep.subr.mxu0 0.0
    %7774 = vmatpush1.msra.mxu0 0.0
    %7775 = vmatprep.subr.mxu0 0.0
    %7776 = vmatpush1.msra.mxu0 0.0
    %7777 = vmatprep.subr.mxu0 0.0
    %7778 = vmatpush1.msra.mxu0 0.0
    %7779 = vmatprep.subr.mxu0 0.0
    %7780 = vmatpush1.msra.mxu0 0.0
    %7781 = vmatprep.subr.mxu0 0.0
    %7782 = vmatpush1.msra.mxu0 0.0
    %7783 = vmatprep.subr.mxu0 0.0
    %7784 = vmatpush1.msra.mxu0 0.0
    %7785 = vmatprep.subr.mxu0 0.0
    %7786 = vmatpush1.msra.mxu0 0.0
    %7787 = vmatprep.subr.mxu0 0.0
    %7788 = vmatpush1.msra.mxu0 0.0
    %7789 = vmatprep.subr.mxu0 0.0
    %7790 = vmatpush1.msra.mxu0 0.0
    %7791 = vmatprep.subr.mxu0 0.0
    %7792 = vmatpush1.msra.mxu0 0.0
    %7793 = vmatprep.subr.mxu0 0.0
    %7794 = vmatpush1.msra.mxu0 0.0
    %7795 = vmatprep.subr.mxu0 0.0
    %7796 = vmatpush1.msra.mxu0 0.0
    %7797 = vmatprep.subr.mxu0 0.0
    %7798 = vmatpush1.msra.mxu0 %v7772
    %7799 = vmatprep.subr.mxu0 0.0
    %7800 = vmatpush1.msra.mxu0 %v7771
    %7801 = vmatprep.subr.mxu0 0.0
    %7802 = vmatpush1.msra.mxu0 %v7770
    %7803 = vmatprep.subr.mxu0 0.0
    %7804 = vmatpush1.msra.mxu0 %v7769
    %7805 = vmatprep.subr.mxu0 0.0
    %7806 = vmatpush2.msra.mxu0 0.0
    %7807 = vmatprep.subr.mxu0 0.0
    %7808 = vmatpush2.msra.mxu0 0.0
    %7809 = vmatprep.subr.mxu0 0.0
    %7810 = vmatpush2.msra.mxu0 0.0
    %7811 = vmatprep.subr.mxu0 0.0
    %7812 = vmatpush2.msra.mxu0 0.0
    %7813 = vmatprep.subr.mxu0 0.0
    %7814 = vmatpush2.msra.mxu0 0.0
    %7815 = vmatprep.subr.mxu0 0.0
    %7816 = vmatpush2.msra.mxu0 0.0
    %7817 = vmatprep.subr.mxu0 0.0
    %7818 = vmatpush2.msra.mxu0 0.0
    %7819 = vmatprep.subr.mxu0 0.0
    %7820 = vmatpush2.msra.mxu0 0.0
    %7821 = vmatprep.subr.mxu0 0.0
    %7822 = vmatpush2.msra.mxu0 0.0
    %7823 = vmatprep.subr.mxu0 0.0
    %7824 = vmatpush2.msra.mxu0 0.0
    %7825 = vmatprep.subr.mxu0 0.0
    %7826 = vmatpush2.msra.mxu0 0.0
    %7827 = vmatprep.subr.mxu0 0.0
    %7828 = vmatpush2.msra.mxu0 0.0
    %7829 = vmatprep.subr.mxu0 0.0
    %7830 = vmatpush2.msra.mxu0 0.0
    %7831 = vmatprep.subr.mxu0 0.0
    %7832 = vmatpush2.msra.mxu0 0.0
    %7833 = vmatprep.subr.mxu0 0.0
    %7834 = vmatpush2.msra.mxu0 0.0
    %7835 = vmatprep.subr.mxu0 0.0
    %7836 = vmatpush2.msra.mxu0 0.0
    %7837 = vmatprep.mubr.f32.mxu0 0.0
    %7838 = vmatmul.mubr.f32.gmra.mxu0 %v6886
    %v7839 = vpop.f32.mrf.mxu0
    %v7840 = vadd.f32 0.0, %v7839
    %v7841 = vpop.f32.mrf.mxu0
    %7842 = vdwg.mxu0
    %v7844 = vlaneseq
    %v7845 = vshrl.u32 %v7844, 7
    %v7846 = vsub.s32 0, %v7845
    %v7847 = vrot.slane %v6855, %v7846
    %v7849 = vadd.f32 %v7847, %v7840
    %s7850 = scalar_lea.vmem [#allocation9], 1088
    %v7851 = vld [vmem:[%s7850] sm:$0xff]
    %v7852 = vld [vmem:[%s7850 + $0x8] sm:$0xff]
    %v7853 = vld [vmem:[%s7850 + $0x10] sm:$0xff]
    %v7854 = vld [vmem:[%s7850 + $0x18] sm:$0xff]
    %7855 = vmatprep.subr.mxu0 0.0
    %7856 = vmatpush1.msra.mxu0 0.0
    %7857 = vmatprep.subr.mxu0 0.0
    %7858 = vmatpush1.msra.mxu0 0.0
    %7859 = vmatprep.subr.mxu0 0.0
    %7860 = vmatpush1.msra.mxu0 0.0
    %7861 = vmatprep.subr.mxu0 0.0
    %7862 = vmatpush1.msra.mxu0 0.0
    %7863 = vmatprep.subr.mxu0 0.0
    %7864 = vmatpush1.msra.mxu0 0.0
    %7865 = vmatprep.subr.mxu0 0.0
    %7866 = vmatpush1.msra.mxu0 0.0
    %7867 = vmatprep.subr.mxu0 0.0
    %7868 = vmatpush1.msra.mxu0 0.0
    %7869 = vmatprep.subr.mxu0 0.0
    %7870 = vmatpush1.msra.mxu0 0.0
    %7871 = vmatprep.subr.mxu0 0.0
    %7872 = vmatpush1.msra.mxu0 0.0
    %7873 = vmatprep.subr.mxu0 0.0
    %7874 = vmatpush1.msra.mxu0 0.0
    %7875 = vmatprep.subr.mxu0 0.0
    %7876 = vmatpush1.msra.mxu0 0.0
    %7877 = vmatprep.subr.mxu0 0.0
    %7878 = vmatpush1.msra.mxu0 0.0
    %7879 = vmatprep.subr.mxu0 0.0
    %7880 = vmatpush1.msra.mxu0 %v7854
    %7881 = vmatprep.subr.mxu0 0.0
    %7882 = vmatpush1.msra.mxu0 %v7853
    %7883 = vmatprep.subr.mxu0 0.0
    %7884 = vmatpush1.msra.mxu0 %v7852
    %7885 = vmatprep.subr.mxu0 0.0
    %7886 = vmatpush1.msra.mxu0 %v7851
    %7887 = vmatprep.subr.mxu0 0.0
    %7888 = vmatpush2.msra.mxu0 0.0
    %7889 = vmatprep.subr.mxu0 0.0
    %7890 = vmatpush2.msra.mxu0 0.0
    %7891 = vmatprep.subr.mxu0 0.0
    %7892 = vmatpush2.msra.mxu0 0.0
    %7893 = vmatprep.subr.mxu0 0.0
    %7894 = vmatpush2.msra.mxu0 0.0
    %7895 = vmatprep.subr.mxu0 0.0
    %7896 = vmatpush2.msra.mxu0 0.0
    %7897 = vmatprep.subr.mxu0 0.0
    %7898 = vmatpush2.msra.mxu0 0.0
    %7899 = vmatprep.subr.mxu0 0.0
    %7900 = vmatpush2.msra.mxu0 0.0
    %7901 = vmatprep.subr.mxu0 0.0
    %7902 = vmatpush2.msra.mxu0 0.0
    %7903 = vmatprep.subr.mxu0 0.0
    %7904 = vmatpush2.msra.mxu0 0.0
    %7905 = vmatprep.subr.mxu0 0.0
    %7906 = vmatpush2.msra.mxu0 0.0
    %7907 = vmatprep.subr.mxu0 0.0
    %7908 = vmatpush2.msra.mxu0 0.0
    %7909 = vmatprep.subr.mxu0 0.0
    %7910 = vmatpush2.msra.mxu0 0.0
    %7911 = vmatprep.subr.mxu0 0.0
    %7912 = vmatpush2.msra.mxu0 0.0
    %7913 = vmatprep.subr.mxu0 0.0
    %7914 = vmatpush2.msra.mxu0 0.0
    %7915 = vmatprep.subr.mxu0 0.0
    %7916 = vmatpush2.msra.mxu0 0.0
    %7917 = vmatprep.subr.mxu0 0.0
    %7918 = vmatpush2.msra.mxu0 0.0
    %7919 = vmatprep.mubr.f32.mxu0 0.0
    %7920 = vmatmul.mubr.f32.gmra.mxu0 %v7138
    %v7921 = vpop.f32.mrf.mxu0
    %v7922 = vadd.f32 0.0, %v7921
    %v7923 = vpop.f32.mrf.mxu0
    %7924 = vdwg.mxu0
    %v7925 = vadd.f32 %v7849, %v7922
    %s7926 = scalar_lea.vmem [#allocation9], 1120
    %v7927 = vld [vmem:[%s7926] sm:$0xff]
    %v7928 = vld [vmem:[%s7926 + $0x8] sm:$0xff]
    %v7929 = vld [vmem:[%s7926 + $0x10] sm:$0xff]
    %v7930 = vld [vmem:[%s7926 + $0x18] sm:$0xff]
    %7931 = vmatprep.subr.mxu0 0.0
    %7932 = vmatpush1.msra.mxu0 0.0
    %7933 = vmatprep.subr.mxu0 0.0
    %7934 = vmatpush1.msra.mxu0 0.0
    %7935 = vmatprep.subr.mxu0 0.0
    %7936 = vmatpush1.msra.mxu0 0.0
    %7937 = vmatprep.subr.mxu0 0.0
    %7938 = vmatpush1.msra.mxu0 0.0
    %7939 = vmatprep.subr.mxu0 0.0
    %7940 = vmatpush1.msra.mxu0 0.0
    %7941 = vmatprep.subr.mxu0 0.0
    %7942 = vmatpush1.msra.mxu0 0.0
    %7943 = vmatprep.subr.mxu0 0.0
    %7944 = vmatpush1.msra.mxu0 0.0
    %7945 = vmatprep.subr.mxu0 0.0
    %7946 = vmatpush1.msra.mxu0 0.0
    %7947 = vmatprep.subr.mxu0 0.0
    %7948 = vmatpush1.msra.mxu0 0.0
    %7949 = vmatprep.subr.mxu0 0.0
    %7950 = vmatpush1.msra.mxu0 0.0
    %7951 = vmatprep.subr.mxu0 0.0
    %7952 = vmatpush1.msra.mxu0 0.0
    %7953 = vmatprep.subr.mxu0 0.0
    %7954 = vmatpush1.msra.mxu0 0.0
    %7955 = vmatprep.subr.mxu0 0.0
    %7956 = vmatpush1.msra.mxu0 %v7930
    %7957 = vmatprep.subr.mxu0 0.0
    %7958 = vmatpush1.msra.mxu0 %v7929
    %7959 = vmatprep.subr.mxu0 0.0
    %7960 = vmatpush1.msra.mxu0 %v7928
    %7961 = vmatprep.subr.mxu0 0.0
    %7962 = vmatpush1.msra.mxu0 %v7927
    %7963 = vmatprep.subr.mxu0 0.0
    %7964 = vmatpush2.msra.mxu0 0.0
    %7965 = vmatprep.subr.mxu0 0.0
    %7966 = vmatpush2.msra.mxu0 0.0
    %7967 = vmatprep.subr.mxu0 0.0
    %7968 = vmatpush2.msra.mxu0 0.0
    %7969 = vmatprep.subr.mxu0 0.0
    %7970 = vmatpush2.msra.mxu0 0.0
    %7971 = vmatprep.subr.mxu0 0.0
    %7972 = vmatpush2.msra.mxu0 0.0
    %7973 = vmatprep.subr.mxu0 0.0
    %7974 = vmatpush2.msra.mxu0 0.0
    %7975 = vmatprep.subr.mxu0 0.0
    %7976 = vmatpush2.msra.mxu0 0.0
    %7977 = vmatprep.subr.mxu0 0.0
    %7978 = vmatpush2.msra.mxu0 0.0
    %7979 = vmatprep.subr.mxu0 0.0
    %7980 = vmatpush2.msra.mxu0 0.0
    %7981 = vmatprep.subr.mxu0 0.0
    %7982 = vmatpush2.msra.mxu0 0.0
    %7983 = vmatprep.subr.mxu0 0.0
    %7984 = vmatpush2.msra.mxu0 0.0
    %7985 = vmatprep.subr.mxu0 0.0
    %7986 = vmatpush2.msra.mxu0 0.0
    %7987 = vmatprep.subr.mxu0 0.0
    %7988 = vmatpush2.msra.mxu0 0.0
    %7989 = vmatprep.subr.mxu0 0.0
    %7990 = vmatpush2.msra.mxu0 0.0
    %7991 = vmatprep.subr.mxu0 0.0
    %7992 = vmatpush2.msra.mxu0 0.0
    %7993 = vmatprep.subr.mxu0 0.0
    %7994 = vmatpush2.msra.mxu0 0.0
    %7995 = vmatprep.mubr.f32.mxu0 0.0
    %7996 = vmatmul.mubr.f32.gmra.mxu0 %v6886
    %v7997 = vpop.f32.mrf.mxu0
    %v7998 = vadd.f32 0.0, %v7997
    %v7999 = vpop.f32.mrf.mxu0
    %8000 = vdwg.mxu0
    %v8001 = vadd.f32 %v7925, %v7998
    %v8002 = vxor.u32 %v8001, 2147483648
    %v8003 = vmul.f32 %v8002, 1.442695
    %v8004 = vpow.pop %v8003
    %v8005 = vadd.f32 %v8004, 1.0
    %v8006 = vrcp.pop %v8005
    %v8007 = vmul.f32 1.0, %v8006
    %v8008 = vmul.f32 %v7532, %v6876
    %v8009 = vmul.f32 %v7292, %v7767
    %v8010 = vadd.f32 %v8008, %v8009
    %v8011 = vtanh.pop %v8010
    %v8012 = vmul.f32 %v8007, %v8011
    %v8014 = vsel %vm133, %v8012, 0
    %8016 = vmatprep.subr.mxu0 0.0
    %8017 = vmatpush1.xpose.msra.mxu0 0.0
    %8018 = vmatprep.subr.mxu0 0.0
    %8019 = vmatpush1.xpose.msra.mxu0 0.0
    %8020 = vmatprep.subr.mxu0 0.0
    %8021 = vmatpush1.xpose.msra.mxu0 0.0
    %8022 = vmatprep.subr.mxu0 0.0
    %8023 = vmatpush1.xpose.msra.mxu0 0.0
    %8024 = vmatprep.subr.mxu0 0.0
    %8025 = vmatpush1.xpose.msra.mxu0 0.0
    %8026 = vmatprep.subr.mxu0 0.0
    %8027 = vmatpush1.xpose.msra.mxu0 0.0
    %8028 = vmatprep.subr.mxu0 0.0
    %8029 = vmatpush1.xpose.msra.mxu0 0.0
    %8030 = vmatprep.subr.mxu0 0.0
    %8031 = vmatpush1.xpose.msra.mxu0 0.0
    %8032 = vmatprep.subr.mxu0 0.0
    %8033 = vmatpush1.xpose.msra.mxu0 0.0
    %8034 = vmatprep.subr.mxu0 0.0
    %8035 = vmatpush1.xpose.msra.mxu0 0.0
    %8036 = vmatprep.subr.mxu0 0.0
    %8037 = vmatpush1.xpose.msra.mxu0 0.0
    %8038 = vmatprep.subr.mxu0 0.0
    %8039 = vmatpush1.xpose.msra.mxu0 0.0
    %8040 = vmatprep.subr.mxu0 0.0
    %8041 = vmatpush1.xpose.msra.mxu0 0.0
    %8042 = vmatprep.subr.mxu0 0.0
    %8043 = vmatpush1.xpose.msra.mxu0 0.0
    %8044 = vmatprep.subr.mxu0 0.0
    %8045 = vmatpush1.xpose.msra.mxu0 %v6892
    %8046 = vmatprep.subr.mxu0 0.0
    %8047 = vmatpush1.xpose.msra.mxu0 %v6889
    %8048 = vmatprep.subr.mxu0 0.0
    %8049 = vmatpush2.xpose.msra.mxu0 0.0
    %8050 = vmatprep.subr.mxu0 0.0
    %8051 = vmatpush2.xpose.msra.mxu0 0.0
    %8052 = vmatprep.subr.mxu0 0.0
    %8053 = vmatpush2.xpose.msra.mxu0 0.0
    %8054 = vmatprep.subr.mxu0 0.0
    %8055 = vmatpush2.xpose.msra.mxu0 0.0
    %8056 = vmatprep.subr.mxu0 0.0
    %8057 = vmatpush2.xpose.msra.mxu0 0.0
    %8058 = vmatprep.subr.mxu0 0.0
    %8059 = vmatpush2.xpose.msra.mxu0 0.0
    %8060 = vmatprep.subr.mxu0 0.0
    %8061 = vmatpush2.xpose.msra.mxu0 0.0
    %8062 = vmatprep.subr.mxu0 0.0
    %8063 = vmatpush2.xpose.msra.mxu0 0.0
    %8064 = vmatprep.subr.mxu0 0.0
    %8065 = vmatpush2.xpose.msra.mxu0 0.0
    %8066 = vmatprep.subr.mxu0 0.0
    %8067 = vmatpush2.xpose.msra.mxu0 0.0
    %8068 = vmatprep.subr.mxu0 0.0
    %8069 = vmatpush2.xpose.msra.mxu0 0.0
    %8070 = vmatprep.subr.mxu0 0.0
    %8071 = vmatpush2.xpose.msra.mxu0 0.0
    %8072 = vmatprep.subr.mxu0 0.0
    %8073 = vmatpush2.xpose.msra.mxu0 0.0
    %8074 = vmatprep.subr.mxu0 0.0
    %8075 = vmatpush2.xpose.msra.mxu0 0.0
    %8076 = vmatprep.subr.mxu0 0.0
    %8077 = vmatpush2.xpose.msra.mxu0 0.0
    %8078 = vmatprep.subr.mxu0 0.0
    %8079 = vmatpush2.xpose.msra.mxu0 0.0
    %8080 = vmatprep.mubr.f32.mxu0 0.0
    %8081 = vmatmul.mubr.f32.gmra.mxu0 %v8014
    %v8082 = vpop.f32.mrf.mxu0
    %v8083 = vadd.f32 %v6834, %v8082
    %v8084 = vpop.f32.mrf.mxu0
    %8085 = vdwg.mxu0
    %v8086 = vsel %vm6964, %v8083, -inf
    %8087 = vmax.xlane.f32.xlu0 %v8086
    %v8088 = vpop.xlane.xlu0 %8087
    %v8089 = vsub.f32 %v8083, %v8088
    %v8090 = vmul.f32 %v8089, 1.442695
    %v8091 = vpow.pop %v8090
    %v8092 = vsel %vm6964, %v8091, 0.0
    %8093 = vadd.xlane.f32.xlu0 %v8092
    %v8094 = vpop.xlane.xlu0 %8093
    %v8095 = vmax.f32 %v8094, 1e-20
    %v8096 = vrcp.pop %v8095
    %v8097 = vmul.f32 %v8091, %v8096
    %v8099 = vsel %vm2130, %v8097, 0
    %8101 = vmatprep.subr.mxu0 0.0
    %8102 = vmatpush1.msra.mxu0 0.0
    %8103 = vmatprep.subr.mxu0 0.0
    %8104 = vmatpush1.msra.mxu0 0.0
    %8105 = vmatprep.subr.mxu0 0.0
    %8106 = vmatpush1.msra.mxu0 0.0
    %8107 = vmatprep.subr.mxu0 0.0
    %8108 = vmatpush1.msra.mxu0 0.0
    %8109 = vmatprep.subr.mxu0 0.0
    %8110 = vmatpush1.msra.mxu0 0.0
    %8111 = vmatprep.subr.mxu0 0.0
    %8112 = vmatpush1.msra.mxu0 0.0
    %8113 = vmatprep.subr.mxu0 0.0
    %8114 = vmatpush1.msra.mxu0 0.0
    %8115 = vmatprep.subr.mxu0 0.0
    %8116 = vmatpush1.msra.mxu0 0.0
    %8117 = vmatprep.subr.mxu0 0.0
    %8118 = vmatpush1.msra.mxu0 0.0
    %8119 = vmatprep.subr.mxu0 0.0
    %8120 = vmatpush1.msra.mxu0 0.0
    %8121 = vmatprep.subr.mxu0 0.0
    %8122 = vmatpush1.msra.mxu0 0.0
    %8123 = vmatprep.subr.mxu0 0.0
    %8124 = vmatpush1.msra.mxu0 0.0
    %8125 = vmatprep.subr.mxu0 0.0
    %8126 = vmatpush1.msra.mxu0 0.0
    %8127 = vmatprep.subr.mxu0 0.0
    %8128 = vmatpush1.msra.mxu0 0.0
    %8129 = vmatprep.subr.mxu0 0.0
    %8130 = vmatpush1.msra.mxu0 %v6833
    %8131 = vmatprep.subr.mxu0 0.0
    %8132 = vmatpush1.msra.mxu0 %v6832
    %8133 = vmatprep.subr.mxu0 0.0
    %8134 = vmatpush2.msra.mxu0 0.0
    %8135 = vmatprep.subr.mxu0 0.0
    %8136 = vmatpush2.msra.mxu0 0.0
    %8137 = vmatprep.subr.mxu0 0.0
    %8138 = vmatpush2.msra.mxu0 0.0
    %8139 = vmatprep.subr.mxu0 0.0
    %8140 = vmatpush2.msra.mxu0 0.0
    %8141 = vmatprep.subr.mxu0 0.0
    %8142 = vmatpush2.msra.mxu0 0.0
    %8143 = vmatprep.subr.mxu0 0.0
    %8144 = vmatpush2.msra.mxu0 0.0
    %8145 = vmatprep.subr.mxu0 0.0
    %8146 = vmatpush2.msra.mxu0 0.0
    %8147 = vmatprep.subr.mxu0 0.0
    %8148 = vmatpush2.msra.mxu0 0.0
    %8149 = vmatprep.subr.mxu0 0.0
    %8150 = vmatpush2.msra.mxu0 0.0
    %8151 = vmatprep.subr.mxu0 0.0
    %8152 = vmatpush2.msra.mxu0 0.0
    %8153 = vmatprep.subr.mxu0 0.0
    %8154 = vmatpush2.msra.mxu0 0.0
    %8155 = vmatprep.subr.mxu0 0.0
    %8156 = vmatpush2.msra.mxu0 0.0
    %8157 = vmatprep.subr.mxu0 0.0
    %8158 = vmatpush2.msra.mxu0 0.0
    %8159 = vmatprep.subr.mxu0 0.0
    %8160 = vmatpush2.msra.mxu0 0.0
    %8161 = vmatprep.subr.mxu0 0.0
    %8162 = vmatpush2.msra.mxu0 0.0
    %8163 = vmatprep.subr.mxu0 0.0
    %8164 = vmatpush2.msra.mxu0 0.0
    %8165 = vmatprep.mubr.f32.mxu0 0.0
    %8166 = vmatmul.mubr.f32.gmra.mxu0 %v8099
    %v8167 = vpop.f32.mrf.mxu0
    %v8168 = vadd.f32 0.0, %v8167
    %v8169 = vpop.f32.mrf.mxu0
    %8170 = vdwg.mxu0
    %8171 = vmatprep.subr.mxu0 0.0
    %8172 = vmatpush1.msra.mxu0 0.0
    %8173 = vmatprep.subr.mxu0 0.0
    %8174 = vmatpush1.msra.mxu0 0.0
    %8175 = vmatprep.subr.mxu0 0.0
    %8176 = vmatpush1.msra.mxu0 0.0
    %8177 = vmatprep.subr.mxu0 0.0
    %8178 = vmatpush1.msra.mxu0 0.0
    %8179 = vmatprep.subr.mxu0 0.0
    %8180 = vmatpush1.msra.mxu0 0.0
    %8181 = vmatprep.subr.mxu0 0.0
    %8182 = vmatpush1.msra.mxu0 0.0
    %8183 = vmatprep.subr.mxu0 0.0
    %8184 = vmatpush1.msra.mxu0 0.0
    %8185 = vmatprep.subr.mxu0 0.0
    %8186 = vmatpush1.msra.mxu0 0.0
    %8187 = vmatprep.subr.mxu0 0.0
    %8188 = vmatpush1.msra.mxu0 0.0
    %8189 = vmatprep.subr.mxu0 0.0
    %8190 = vmatpush1.msra.mxu0 0.0
    %8191 = vmatprep.subr.mxu0 0.0
    %8192 = vmatpush1.msra.mxu0 0.0
    %8193 = vmatprep.subr.mxu0 0.0
    %8194 = vmatpush1.msra.mxu0 0.0
    %8195 = vmatprep.subr.mxu0 0.0
    %8196 = vmatpush1.msra.mxu0 %v7054
    %8197 = vmatprep.subr.mxu0 0.0
    %8198 = vmatpush1.msra.mxu0 %v7053
    %8199 = vmatprep.subr.mxu0 0.0
    %8200 = vmatpush1.msra.mxu0 %v7052
    %8201 = vmatprep.subr.mxu0 0.0
    %8202 = vmatpush1.msra.mxu0 %v7051
    %8203 = vmatprep.subr.mxu0 0.0
    %8204 = vmatpush2.msra.mxu0 0.0
    %8205 = vmatprep.subr.mxu0 0.0
    %8206 = vmatpush2.msra.mxu0 0.0
    %8207 = vmatprep.subr.mxu0 0.0
    %8208 = vmatpush2.msra.mxu0 0.0
    %8209 = vmatprep.subr.mxu0 0.0
    %8210 = vmatpush2.msra.mxu0 0.0
    %8211 = vmatprep.subr.mxu0 0.0
    %8212 = vmatpush2.msra.mxu0 0.0
    %8213 = vmatprep.subr.mxu0 0.0
    %8214 = vmatpush2.msra.mxu0 0.0
    %8215 = vmatprep.subr.mxu0 0.0
    %8216 = vmatpush2.msra.mxu0 0.0
    %8217 = vmatprep.subr.mxu0 0.0
    %8218 = vmatpush2.msra.mxu0 0.0
    %8219 = vmatprep.subr.mxu0 0.0
    %8220 = vmatpush2.msra.mxu0 0.0
    %8221 = vmatprep.subr.mxu0 0.0
    %8222 = vmatpush2.msra.mxu0 0.0
    %8223 = vmatprep.subr.mxu0 0.0
    %8224 = vmatpush2.msra.mxu0 0.0
    %8225 = vmatprep.subr.mxu0 0.0
    %8226 = vmatpush2.msra.mxu0 0.0
    %8227 = vmatprep.subr.mxu0 0.0
    %8228 = vmatpush2.msra.mxu0 0.0
    %8229 = vmatprep.subr.mxu0 0.0
    %8230 = vmatpush2.msra.mxu0 0.0
    %8231 = vmatprep.subr.mxu0 0.0
    %8232 = vmatpush2.msra.mxu0 0.0
    %8233 = vmatprep.subr.mxu0 0.0
    %8234 = vmatpush2.msra.mxu0 0.0
    %8235 = vmatprep.mubr.f32.mxu0 0.0
    %8236 = vmatmul.mubr.f32.gmra.mxu0 %v8014
    %v8237 = vpop.f32.mrf.mxu0
    %v8238 = vadd.f32 0.0, %v8237
    %v8239 = vpop.f32.mrf.mxu0
    %8240 = vdwg.mxu0
    %v8241 = vadd.f32 %v7129, %v8238
    %v8243 = vsel %vm133, %v8168, 0
    %8245 = vmatprep.subr.mxu0 0.0
    %8246 = vmatpush1.msra.mxu0 0.0
    %8247 = vmatprep.subr.mxu0 0.0
    %8248 = vmatpush1.msra.mxu0 0.0
    %8249 = vmatprep.subr.mxu0 0.0
    %8250 = vmatpush1.msra.mxu0 0.0
    %8251 = vmatprep.subr.mxu0 0.0
    %8252 = vmatpush1.msra.mxu0 0.0
    %8253 = vmatprep.subr.mxu0 0.0
    %8254 = vmatpush1.msra.mxu0 0.0
    %8255 = vmatprep.subr.mxu0 0.0
    %8256 = vmatpush1.msra.mxu0 0.0
    %8257 = vmatprep.subr.mxu0 0.0
    %8258 = vmatpush1.msra.mxu0 0.0
    %8259 = vmatprep.subr.mxu0 0.0
    %8260 = vmatpush1.msra.mxu0 0.0
    %8261 = vmatprep.subr.mxu0 0.0
    %8262 = vmatpush1.msra.mxu0 0.0
    %8263 = vmatprep.subr.mxu0 0.0
    %8264 = vmatpush1.msra.mxu0 0.0
    %8265 = vmatprep.subr.mxu0 0.0
    %8266 = vmatpush1.msra.mxu0 0.0
    %8267 = vmatprep.subr.mxu0 0.0
    %8268 = vmatpush1.msra.mxu0 0.0
    %8269 = vmatprep.subr.mxu0 0.0
    %8270 = vmatpush1.msra.mxu0 %v7136
    %8271 = vmatprep.subr.mxu0 0.0
    %8272 = vmatpush1.msra.mxu0 %v7135
    %8273 = vmatprep.subr.mxu0 0.0
    %8274 = vmatpush1.msra.mxu0 %v7134
    %8275 = vmatprep.subr.mxu0 0.0
    %8276 = vmatpush1.msra.mxu0 %v7133
    %8277 = vmatprep.subr.mxu0 0.0
    %8278 = vmatpush2.msra.mxu0 0.0
    %8279 = vmatprep.subr.mxu0 0.0
    %8280 = vmatpush2.msra.mxu0 0.0
    %8281 = vmatprep.subr.mxu0 0.0
    %8282 = vmatpush2.msra.mxu0 0.0
    %8283 = vmatprep.subr.mxu0 0.0
    %8284 = vmatpush2.msra.mxu0 0.0
    %8285 = vmatprep.subr.mxu0 0.0
    %8286 = vmatpush2.msra.mxu0 0.0
    %8287 = vmatprep.subr.mxu0 0.0
    %8288 = vmatpush2.msra.mxu0 0.0
    %8289 = vmatprep.subr.mxu0 0.0
    %8290 = vmatpush2.msra.mxu0 0.0
    %8291 = vmatprep.subr.mxu0 0.0
    %8292 = vmatpush2.msra.mxu0 0.0
    %8293 = vmatprep.subr.mxu0 0.0
    %8294 = vmatpush2.msra.mxu0 0.0
    %8295 = vmatprep.subr.mxu0 0.0
    %8296 = vmatpush2.msra.mxu0 0.0
    %8297 = vmatprep.subr.mxu0 0.0
    %8298 = vmatpush2.msra.mxu0 0.0
    %8299 = vmatprep.subr.mxu0 0.0
    %8300 = vmatpush2.msra.mxu0 0.0
    %8301 = vmatprep.subr.mxu0 0.0
    %8302 = vmatpush2.msra.mxu0 0.0
    %8303 = vmatprep.subr.mxu0 0.0
    %8304 = vmatpush2.msra.mxu0 0.0
    %8305 = vmatprep.subr.mxu0 0.0
    %8306 = vmatpush2.msra.mxu0 0.0
    %8307 = vmatprep.subr.mxu0 0.0
    %8308 = vmatpush2.msra.mxu0 0.0
    %8309 = vmatprep.mubr.f32.mxu0 0.0
    %8310 = vmatmul.mubr.f32.gmra.mxu0 %v8243
    %v8311 = vpop.f32.mrf.mxu0
    %v8312 = vadd.f32 0.0, %v8311
    %v8313 = vpop.f32.mrf.mxu0
    %8314 = vdwg.mxu0
    %v8315 = vadd.f32 %v8241, %v8312
    %8316 = vmatprep.subr.mxu0 0.0
    %8317 = vmatpush1.msra.mxu0 0.0
    %8318 = vmatprep.subr.mxu0 0.0
    %8319 = vmatpush1.msra.mxu0 0.0
    %8320 = vmatprep.subr.mxu0 0.0
    %8321 = vmatpush1.msra.mxu0 0.0
    %8322 = vmatprep.subr.mxu0 0.0
    %8323 = vmatpush1.msra.mxu0 0.0
    %8324 = vmatprep.subr.mxu0 0.0
    %8325 = vmatpush1.msra.mxu0 0.0
    %8326 = vmatprep.subr.mxu0 0.0
    %8327 = vmatpush1.msra.mxu0 0.0
    %8328 = vmatprep.subr.mxu0 0.0
    %8329 = vmatpush1.msra.mxu0 0.0
    %8330 = vmatprep.subr.mxu0 0.0
    %8331 = vmatpush1.msra.mxu0 0.0
    %8332 = vmatprep.subr.mxu0 0.0
    %8333 = vmatpush1.msra.mxu0 0.0
    %8334 = vmatprep.subr.mxu0 0.0
    %8335 = vmatpush1.msra.mxu0 0.0
    %8336 = vmatprep.subr.mxu0 0.0
    %8337 = vmatpush1.msra.mxu0 0.0
    %8338 = vmatprep.subr.mxu0 0.0
    %8339 = vmatpush1.msra.mxu0 0.0
    %8340 = vmatprep.subr.mxu0 0.0
    %8341 = vmatpush1.msra.mxu0 %v7215
    %8342 = vmatprep.subr.mxu0 0.0
    %8343 = vmatpush1.msra.mxu0 %v7214
    %8344 = vmatprep.subr.mxu0 0.0
    %8345 = vmatpush1.msra.mxu0 %v7213
    %8346 = vmatprep.subr.mxu0 0.0
    %8347 = vmatpush1.msra.mxu0 %v7212
    %8348 = vmatprep.subr.mxu0 0.0
    %8349 = vmatpush2.msra.mxu0 0.0
    %8350 = vmatprep.subr.mxu0 0.0
    %8351 = vmatpush2.msra.mxu0 0.0
    %8352 = vmatprep.subr.mxu0 0.0
    %8353 = vmatpush2.msra.mxu0 0.0
    %8354 = vmatprep.subr.mxu0 0.0
    %8355 = vmatpush2.msra.mxu0 0.0
    %8356 = vmatprep.subr.mxu0 0.0
    %8357 = vmatpush2.msra.mxu0 0.0
    %8358 = vmatprep.subr.mxu0 0.0
    %8359 = vmatpush2.msra.mxu0 0.0
    %8360 = vmatprep.subr.mxu0 0.0
    %8361 = vmatpush2.msra.mxu0 0.0
    %8362 = vmatprep.subr.mxu0 0.0
    %8363 = vmatpush2.msra.mxu0 0.0
    %8364 = vmatprep.subr.mxu0 0.0
    %8365 = vmatpush2.msra.mxu0 0.0
    %8366 = vmatprep.subr.mxu0 0.0
    %8367 = vmatpush2.msra.mxu0 0.0
    %8368 = vmatprep.subr.mxu0 0.0
    %8369 = vmatpush2.msra.mxu0 0.0
    %8370 = vmatprep.subr.mxu0 0.0
    %8371 = vmatpush2.msra.mxu0 0.0
    %8372 = vmatprep.subr.mxu0 0.0
    %8373 = vmatpush2.msra.mxu0 0.0
    %8374 = vmatprep.subr.mxu0 0.0
    %8375 = vmatpush2.msra.mxu0 0.0
    %8376 = vmatprep.subr.mxu0 0.0
    %8377 = vmatpush2.msra.mxu0 0.0
    %8378 = vmatprep.subr.mxu0 0.0
    %8379 = vmatpush2.msra.mxu0 0.0
    %8380 = vmatprep.mubr.f32.mxu0 0.0
    %8381 = vmatmul.mubr.f32.gmra.mxu0 %v8014
    %v8382 = vpop.f32.mrf.mxu0
    %v8383 = vadd.f32 0.0, %v8382
    %v8384 = vpop.f32.mrf.mxu0
    %8385 = vdwg.mxu0
    %v8386 = vadd.f32 %v8315, %v8383
    %v8387 = vxor.u32 %v8386, 2147483648
    %v8388 = vmul.f32 %v8387, 1.442695
    %v8389 = vpow.pop %v8388
    %v8390 = vadd.f32 %v8389, 1.0
    %v8391 = vrcp.pop %v8390
    %v8392 = vmul.f32 1.0, %v8391
    %8393 = vmatprep.subr.mxu0 0.0
    %8394 = vmatpush1.msra.mxu0 0.0
    %8395 = vmatprep.subr.mxu0 0.0
    %8396 = vmatpush1.msra.mxu0 0.0
    %8397 = vmatprep.subr.mxu0 0.0
    %8398 = vmatpush1.msra.mxu0 0.0
    %8399 = vmatprep.subr.mxu0 0.0
    %8400 = vmatpush1.msra.mxu0 0.0
    %8401 = vmatprep.subr.mxu0 0.0
    %8402 = vmatpush1.msra.mxu0 0.0
    %8403 = vmatprep.subr.mxu0 0.0
    %8404 = vmatpush1.msra.mxu0 0.0
    %8405 = vmatprep.subr.mxu0 0.0
    %8406 = vmatpush1.msra.mxu0 0.0
    %8407 = vmatprep.subr.mxu0 0.0
    %8408 = vmatpush1.msra.mxu0 0.0
    %8409 = vmatprep.subr.mxu0 0.0
    %8410 = vmatpush1.msra.mxu0 0.0
    %8411 = vmatprep.subr.mxu0 0.0
    %8412 = vmatpush1.msra.mxu0 0.0
    %8413 = vmatprep.subr.mxu0 0.0
    %8414 = vmatpush1.msra.mxu0 0.0
    %8415 = vmatprep.subr.mxu0 0.0
    %8416 = vmatpush1.msra.mxu0 0.0
    %8417 = vmatprep.subr.mxu0 0.0
    %8418 = vmatpush1.msra.mxu0 %v7297
    %8419 = vmatprep.subr.mxu0 0.0
    %8420 = vmatpush1.msra.mxu0 %v7296
    %8421 = vmatprep.subr.mxu0 0.0
    %8422 = vmatpush1.msra.mxu0 %v7295
    %8423 = vmatprep.subr.mxu0 0.0
    %8424 = vmatpush1.msra.mxu0 %v7294
    %8425 = vmatprep.subr.mxu0 0.0
    %8426 = vmatpush2.msra.mxu0 0.0
    %8427 = vmatprep.subr.mxu0 0.0
    %8428 = vmatpush2.msra.mxu0 0.0
    %8429 = vmatprep.subr.mxu0 0.0
    %8430 = vmatpush2.msra.mxu0 0.0
    %8431 = vmatprep.subr.mxu0 0.0
    %8432 = vmatpush2.msra.mxu0 0.0
    %8433 = vmatprep.subr.mxu0 0.0
    %8434 = vmatpush2.msra.mxu0 0.0
    %8435 = vmatprep.subr.mxu0 0.0
    %8436 = vmatpush2.msra.mxu0 0.0
    %8437 = vmatprep.subr.mxu0 0.0
    %8438 = vmatpush2.msra.mxu0 0.0
    %8439 = vmatprep.subr.mxu0 0.0
    %8440 = vmatpush2.msra.mxu0 0.0
    %8441 = vmatprep.subr.mxu0 0.0
    %8442 = vmatpush2.msra.mxu0 0.0
    %8443 = vmatprep.subr.mxu0 0.0
    %8444 = vmatpush2.msra.mxu0 0.0
    %8445 = vmatprep.subr.mxu0 0.0
    %8446 = vmatpush2.msra.mxu0 0.0
    %8447 = vmatprep.subr.mxu0 0.0
    %8448 = vmatpush2.msra.mxu0 0.0
    %8449 = vmatprep.subr.mxu0 0.0
    %8450 = vmatpush2.msra.mxu0 0.0
    %8451 = vmatprep.subr.mxu0 0.0
    %8452 = vmatpush2.msra.mxu0 0.0
    %8453 = vmatprep.subr.mxu0 0.0
    %8454 = vmatpush2.msra.mxu0 0.0
    %8455 = vmatprep.subr.mxu0 0.0
    %8456 = vmatpush2.msra.mxu0 0.0
    %8457 = vmatprep.mubr.f32.mxu0 0.0
    %8458 = vmatmul.mubr.f32.gmra.mxu0 %v8014
    %v8459 = vpop.f32.mrf.mxu0
    %v8460 = vadd.f32 0.0, %v8459
    %v8461 = vpop.f32.mrf.mxu0
    %8462 = vdwg.mxu0
    %v8463 = vadd.f32 %v7372, %v8460
    %8464 = vmatprep.subr.mxu0 0.0
    %8465 = vmatpush1.msra.mxu0 0.0
    %8466 = vmatprep.subr.mxu0 0.0
    %8467 = vmatpush1.msra.mxu0 0.0
    %8468 = vmatprep.subr.mxu0 0.0
    %8469 = vmatpush1.msra.mxu0 0.0
    %8470 = vmatprep.subr.mxu0 0.0
    %8471 = vmatpush1.msra.mxu0 0.0
    %8472 = vmatprep.subr.mxu0 0.0
    %8473 = vmatpush1.msra.mxu0 0.0
    %8474 = vmatprep.subr.mxu0 0.0
    %8475 = vmatpush1.msra.mxu0 0.0
    %8476 = vmatprep.subr.mxu0 0.0
    %8477 = vmatpush1.msra.mxu0 0.0
    %8478 = vmatprep.subr.mxu0 0.0
    %8479 = vmatpush1.msra.mxu0 0.0
    %8480 = vmatprep.subr.mxu0 0.0
    %8481 = vmatpush1.msra.mxu0 0.0
    %8482 = vmatprep.subr.mxu0 0.0
    %8483 = vmatpush1.msra.mxu0 0.0
    %8484 = vmatprep.subr.mxu0 0.0
    %8485 = vmatpush1.msra.mxu0 0.0
    %8486 = vmatprep.subr.mxu0 0.0
    %8487 = vmatpush1.msra.mxu0 0.0
    %8488 = vmatprep.subr.mxu0 0.0
    %8489 = vmatpush1.msra.mxu0 %v7379
    %8490 = vmatprep.subr.mxu0 0.0
    %8491 = vmatpush1.msra.mxu0 %v7378
    %8492 = vmatprep.subr.mxu0 0.0
    %8493 = vmatpush1.msra.mxu0 %v7377
    %8494 = vmatprep.subr.mxu0 0.0
    %8495 = vmatpush1.msra.mxu0 %v7376
    %8496 = vmatprep.subr.mxu0 0.0
    %8497 = vmatpush2.msra.mxu0 0.0
    %8498 = vmatprep.subr.mxu0 0.0
    %8499 = vmatpush2.msra.mxu0 0.0
    %8500 = vmatprep.subr.mxu0 0.0
    %8501 = vmatpush2.msra.mxu0 0.0
    %8502 = vmatprep.subr.mxu0 0.0
    %8503 = vmatpush2.msra.mxu0 0.0
    %8504 = vmatprep.subr.mxu0 0.0
    %8505 = vmatpush2.msra.mxu0 0.0
    %8506 = vmatprep.subr.mxu0 0.0
    %8507 = vmatpush2.msra.mxu0 0.0
    %8508 = vmatprep.subr.mxu0 0.0
    %8509 = vmatpush2.msra.mxu0 0.0
    %8510 = vmatprep.subr.mxu0 0.0
    %8511 = vmatpush2.msra.mxu0 0.0
    %8512 = vmatprep.subr.mxu0 0.0
    %8513 = vmatpush2.msra.mxu0 0.0
    %8514 = vmatprep.subr.mxu0 0.0
    %8515 = vmatpush2.msra.mxu0 0.0
    %8516 = vmatprep.subr.mxu0 0.0
    %8517 = vmatpush2.msra.mxu0 0.0
    %8518 = vmatprep.subr.mxu0 0.0
    %8519 = vmatpush2.msra.mxu0 0.0
    %8520 = vmatprep.subr.mxu0 0.0
    %8521 = vmatpush2.msra.mxu0 0.0
    %8522 = vmatprep.subr.mxu0 0.0
    %8523 = vmatpush2.msra.mxu0 0.0
    %8524 = vmatprep.subr.mxu0 0.0
    %8525 = vmatpush2.msra.mxu0 0.0
    %8526 = vmatprep.subr.mxu0 0.0
    %8527 = vmatpush2.msra.mxu0 0.0
    %8528 = vmatprep.mubr.f32.mxu0 0.0
    %8529 = vmatmul.mubr.f32.gmra.mxu0 %v8243
    %v8530 = vpop.f32.mrf.mxu0
    %v8531 = vadd.f32 0.0, %v8530
    %v8532 = vpop.f32.mrf.mxu0
    %8533 = vdwg.mxu0
    %v8534 = vadd.f32 %v8463, %v8531
    %8535 = vmatprep.subr.mxu0 0.0
    %8536 = vmatpush1.msra.mxu0 0.0
    %8537 = vmatprep.subr.mxu0 0.0
    %8538 = vmatpush1.msra.mxu0 0.0
    %8539 = vmatprep.subr.mxu0 0.0
    %8540 = vmatpush1.msra.mxu0 0.0
    %8541 = vmatprep.subr.mxu0 0.0
    %8542 = vmatpush1.msra.mxu0 0.0
    %8543 = vmatprep.subr.mxu0 0.0
    %8544 = vmatpush1.msra.mxu0 0.0
    %8545 = vmatprep.subr.mxu0 0.0
    %8546 = vmatpush1.msra.mxu0 0.0
    %8547 = vmatprep.subr.mxu0 0.0
    %8548 = vmatpush1.msra.mxu0 0.0
    %8549 = vmatprep.subr.mxu0 0.0
    %8550 = vmatpush1.msra.mxu0 0.0
    %8551 = vmatprep.subr.mxu0 0.0
    %8552 = vmatpush1.msra.mxu0 0.0
    %8553 = vmatprep.subr.mxu0 0.0
    %8554 = vmatpush1.msra.mxu0 0.0
    %8555 = vmatprep.subr.mxu0 0.0
    %8556 = vmatpush1.msra.mxu0 0.0
    %8557 = vmatprep.subr.mxu0 0.0
    %8558 = vmatpush1.msra.mxu0 0.0
    %8559 = vmatprep.subr.mxu0 0.0
    %8560 = vmatpush1.msra.mxu0 %v7455
    %8561 = vmatprep.subr.mxu0 0.0
    %8562 = vmatpush1.msra.mxu0 %v7454
    %8563 = vmatprep.subr.mxu0 0.0
    %8564 = vmatpush1.msra.mxu0 %v7453
    %8565 = vmatprep.subr.mxu0 0.0
    %8566 = vmatpush1.msra.mxu0 %v7452
    %8567 = vmatprep.subr.mxu0 0.0
    %8568 = vmatpush2.msra.mxu0 0.0
    %8569 = vmatprep.subr.mxu0 0.0
    %8570 = vmatpush2.msra.mxu0 0.0
    %8571 = vmatprep.subr.mxu0 0.0
    %8572 = vmatpush2.msra.mxu0 0.0
    %8573 = vmatprep.subr.mxu0 0.0
    %8574 = vmatpush2.msra.mxu0 0.0
    %8575 = vmatprep.subr.mxu0 0.0
    %8576 = vmatpush2.msra.mxu0 0.0
    %8577 = vmatprep.subr.mxu0 0.0
    %8578 = vmatpush2.msra.mxu0 0.0
    %8579 = vmatprep.subr.mxu0 0.0
    %8580 = vmatpush2.msra.mxu0 0.0
    %8581 = vmatprep.subr.mxu0 0.0
    %8582 = vmatpush2.msra.mxu0 0.0
    %8583 = vmatprep.subr.mxu0 0.0
    %8584 = vmatpush2.msra.mxu0 0.0
    %8585 = vmatprep.subr.mxu0 0.0
    %8586 = vmatpush2.msra.mxu0 0.0
    %8587 = vmatprep.subr.mxu0 0.0
    %8588 = vmatpush2.msra.mxu0 0.0
    %8589 = vmatprep.subr.mxu0 0.0
    %8590 = vmatpush2.msra.mxu0 0.0
    %8591 = vmatprep.subr.mxu0 0.0
    %8592 = vmatpush2.msra.mxu0 0.0
    %8593 = vmatprep.subr.mxu0 0.0
    %8594 = vmatpush2.msra.mxu0 0.0
    %8595 = vmatprep.subr.mxu0 0.0
    %8596 = vmatpush2.msra.mxu0 0.0
    %8597 = vmatprep.subr.mxu0 0.0
    %8598 = vmatpush2.msra.mxu0 0.0
    %8599 = vmatprep.mubr.f32.mxu0 0.0
    %8600 = vmatmul.mubr.f32.gmra.mxu0 %v8014
    %v8601 = vpop.f32.mrf.mxu0
    %v8602 = vadd.f32 0.0, %v8601
    %v8603 = vpop.f32.mrf.mxu0
    %8604 = vdwg.mxu0
    %v8605 = vadd.f32 %v8534, %v8602
    %v8606 = vxor.u32 %v8605, 2147483648
    %v8607 = vmul.f32 %v8606, 1.442695
    %v8608 = vpow.pop %v8607
    %v8609 = vadd.f32 %v8608, 1.0
    %v8610 = vrcp.pop %v8609
    %v8611 = vmul.f32 1.0, %v8610
    %8612 = vmatprep.subr.mxu0 0.0
    %8613 = vmatpush1.msra.mxu0 0.0
    %8614 = vmatprep.subr.mxu0 0.0
    %8615 = vmatpush1.msra.mxu0 0.0
    %8616 = vmatprep.subr.mxu0 0.0
    %8617 = vmatpush1.msra.mxu0 0.0
    %8618 = vmatprep.subr.mxu0 0.0
    %8619 = vmatpush1.msra.mxu0 0.0
    %8620 = vmatprep.subr.mxu0 0.0
    %8621 = vmatpush1.msra.mxu0 0.0
    %8622 = vmatprep.subr.mxu0 0.0
    %8623 = vmatpush1.msra.mxu0 0.0
    %8624 = vmatprep.subr.mxu0 0.0
    %8625 = vmatpush1.msra.mxu0 0.0
    %8626 = vmatprep.subr.mxu0 0.0
    %8627 = vmatpush1.msra.mxu0 0.0
    %8628 = vmatprep.subr.mxu0 0.0
    %8629 = vmatpush1.msra.mxu0 0.0
    %8630 = vmatprep.subr.mxu0 0.0
    %8631 = vmatpush1.msra.mxu0 0.0
    %8632 = vmatprep.subr.mxu0 0.0
    %8633 = vmatpush1.msra.mxu0 0.0
    %8634 = vmatprep.subr.mxu0 0.0
    %8635 = vmatpush1.msra.mxu0 0.0
    %8636 = vmatprep.subr.mxu0 0.0
    %8637 = vmatpush1.msra.mxu0 %v7537
    %8638 = vmatprep.subr.mxu0 0.0
    %8639 = vmatpush1.msra.mxu0 %v7536
    %8640 = vmatprep.subr.mxu0 0.0
    %8641 = vmatpush1.msra.mxu0 %v7535
    %8642 = vmatprep.subr.mxu0 0.0
    %8643 = vmatpush1.msra.mxu0 %v7534
    %8644 = vmatprep.subr.mxu0 0.0
    %8645 = vmatpush2.msra.mxu0 0.0
    %8646 = vmatprep.subr.mxu0 0.0
    %8647 = vmatpush2.msra.mxu0 0.0
    %8648 = vmatprep.subr.mxu0 0.0
    %8649 = vmatpush2.msra.mxu0 0.0
    %8650 = vmatprep.subr.mxu0 0.0
    %8651 = vmatpush2.msra.mxu0 0.0
    %8652 = vmatprep.subr.mxu0 0.0
    %8653 = vmatpush2.msra.mxu0 0.0
    %8654 = vmatprep.subr.mxu0 0.0
    %8655 = vmatpush2.msra.mxu0 0.0
    %8656 = vmatprep.subr.mxu0 0.0
    %8657 = vmatpush2.msra.mxu0 0.0
    %8658 = vmatprep.subr.mxu0 0.0
    %8659 = vmatpush2.msra.mxu0 0.0
    %8660 = vmatprep.subr.mxu0 0.0
    %8661 = vmatpush2.msra.mxu0 0.0
    %8662 = vmatprep.subr.mxu0 0.0
    %8663 = vmatpush2.msra.mxu0 0.0
    %8664 = vmatprep.subr.mxu0 0.0
    %8665 = vmatpush2.msra.mxu0 0.0
    %8666 = vmatprep.subr.mxu0 0.0
    %8667 = vmatpush2.msra.mxu0 0.0
    %8668 = vmatprep.subr.mxu0 0.0
    %8669 = vmatpush2.msra.mxu0 0.0
    %8670 = vmatprep.subr.mxu0 0.0
    %8671 = vmatpush2.msra.mxu0 0.0
    %8672 = vmatprep.subr.mxu0 0.0
    %8673 = vmatpush2.msra.mxu0 0.0
    %8674 = vmatprep.subr.mxu0 0.0
    %8675 = vmatpush2.msra.mxu0 0.0
    %8676 = vmatprep.mubr.f32.mxu0 0.0
    %8677 = vmatmul.mubr.f32.gmra.mxu0 %v8014
    %v8678 = vpop.f32.mrf.mxu0
    %v8679 = vadd.f32 0.0, %v8678
    %v8680 = vpop.f32.mrf.mxu0
    %8681 = vdwg.mxu0
    %v8682 = vadd.f32 %v7612, %v8679
    %8683 = vmatprep.subr.mxu0 0.0
    %8684 = vmatpush1.msra.mxu0 0.0
    %8685 = vmatprep.subr.mxu0 0.0
    %8686 = vmatpush1.msra.mxu0 0.0
    %8687 = vmatprep.subr.mxu0 0.0
    %8688 = vmatpush1.msra.mxu0 0.0
    %8689 = vmatprep.subr.mxu0 0.0
    %8690 = vmatpush1.msra.mxu0 0.0
    %8691 = vmatprep.subr.mxu0 0.0
    %8692 = vmatpush1.msra.mxu0 0.0
    %8693 = vmatprep.subr.mxu0 0.0
    %8694 = vmatpush1.msra.mxu0 0.0
    %8695 = vmatprep.subr.mxu0 0.0
    %8696 = vmatpush1.msra.mxu0 0.0
    %8697 = vmatprep.subr.mxu0 0.0
    %8698 = vmatpush1.msra.mxu0 0.0
    %8699 = vmatprep.subr.mxu0 0.0
    %8700 = vmatpush1.msra.mxu0 0.0
    %8701 = vmatprep.subr.mxu0 0.0
    %8702 = vmatpush1.msra.mxu0 0.0
    %8703 = vmatprep.subr.mxu0 0.0
    %8704 = vmatpush1.msra.mxu0 0.0
    %8705 = vmatprep.subr.mxu0 0.0
    %8706 = vmatpush1.msra.mxu0 0.0
    %8707 = vmatprep.subr.mxu0 0.0
    %8708 = vmatpush1.msra.mxu0 %v7619
    %8709 = vmatprep.subr.mxu0 0.0
    %8710 = vmatpush1.msra.mxu0 %v7618
    %8711 = vmatprep.subr.mxu0 0.0
    %8712 = vmatpush1.msra.mxu0 %v7617
    %8713 = vmatprep.subr.mxu0 0.0
    %8714 = vmatpush1.msra.mxu0 %v7616
    %8715 = vmatprep.subr.mxu0 0.0
    %8716 = vmatpush2.msra.mxu0 0.0
    %8717 = vmatprep.subr.mxu0 0.0
    %8718 = vmatpush2.msra.mxu0 0.0
    %8719 = vmatprep.subr.mxu0 0.0
    %8720 = vmatpush2.msra.mxu0 0.0
    %8721 = vmatprep.subr.mxu0 0.0
    %8722 = vmatpush2.msra.mxu0 0.0
    %8723 = vmatprep.subr.mxu0 0.0
    %8724 = vmatpush2.msra.mxu0 0.0
    %8725 = vmatprep.subr.mxu0 0.0
    %8726 = vmatpush2.msra.mxu0 0.0
    %8727 = vmatprep.subr.mxu0 0.0
    %8728 = vmatpush2.msra.mxu0 0.0
    %8729 = vmatprep.subr.mxu0 0.0
    %8730 = vmatpush2.msra.mxu0 0.0
    %8731 = vmatprep.subr.mxu0 0.0
    %8732 = vmatpush2.msra.mxu0 0.0
    %8733 = vmatprep.subr.mxu0 0.0
    %8734 = vmatpush2.msra.mxu0 0.0
    %8735 = vmatprep.subr.mxu0 0.0
    %8736 = vmatpush2.msra.mxu0 0.0
    %8737 = vmatprep.subr.mxu0 0.0
    %8738 = vmatpush2.msra.mxu0 0.0
    %8739 = vmatprep.subr.mxu0 0.0
    %8740 = vmatpush2.msra.mxu0 0.0
    %8741 = vmatprep.subr.mxu0 0.0
    %8742 = vmatpush2.msra.mxu0 0.0
    %8743 = vmatprep.subr.mxu0 0.0
    %8744 = vmatpush2.msra.mxu0 0.0
    %8745 = vmatprep.subr.mxu0 0.0
    %8746 = vmatpush2.msra.mxu0 0.0
    %8747 = vmatprep.mubr.f32.mxu0 0.0
    %8748 = vmatmul.mubr.f32.gmra.mxu0 %v8243
    %v8749 = vpop.f32.mrf.mxu0
    %v8750 = vadd.f32 0.0, %v8749
    %v8751 = vpop.f32.mrf.mxu0
    %8752 = vdwg.mxu0
    %v8753 = vadd.f32 %v8682, %v8750
    %8754 = vmatprep.subr.mxu0 0.0
    %8755 = vmatpush1.msra.mxu0 0.0
    %8756 = vmatprep.subr.mxu0 0.0
    %8757 = vmatpush1.msra.mxu0 0.0
    %8758 = vmatprep.subr.mxu0 0.0
    %8759 = vmatpush1.msra.mxu0 0.0
    %8760 = vmatprep.subr.mxu0 0.0
    %8761 = vmatpush1.msra.mxu0 0.0
    %8762 = vmatprep.subr.mxu0 0.0
    %8763 = vmatpush1.msra.mxu0 0.0
    %8764 = vmatprep.subr.mxu0 0.0
    %8765 = vmatpush1.msra.mxu0 0.0
    %8766 = vmatprep.subr.mxu0 0.0
    %8767 = vmatpush1.msra.mxu0 0.0
    %8768 = vmatprep.subr.mxu0 0.0
    %8769 = vmatpush1.msra.mxu0 0.0
    %8770 = vmatprep.subr.mxu0 0.0
    %8771 = vmatpush1.msra.mxu0 0.0
    %8772 = vmatprep.subr.mxu0 0.0
    %8773 = vmatpush1.msra.mxu0 0.0
    %8774 = vmatprep.subr.mxu0 0.0
    %8775 = vmatpush1.msra.mxu0 0.0
    %8776 = vmatprep.subr.mxu0 0.0
    %8777 = vmatpush1.msra.mxu0 0.0
    %8778 = vmatprep.subr.mxu0 0.0
    %8779 = vmatpush1.msra.mxu0 %v7695
    %8780 = vmatprep.subr.mxu0 0.0
    %8781 = vmatpush1.msra.mxu0 %v7694
    %8782 = vmatprep.subr.mxu0 0.0
    %8783 = vmatpush1.msra.mxu0 %v7693
    %8784 = vmatprep.subr.mxu0 0.0
    %8785 = vmatpush1.msra.mxu0 %v7692
    %8786 = vmatprep.subr.mxu0 0.0
    %8787 = vmatpush2.msra.mxu0 0.0
    %8788 = vmatprep.subr.mxu0 0.0
    %8789 = vmatpush2.msra.mxu0 0.0
    %8790 = vmatprep.subr.mxu0 0.0
    %8791 = vmatpush2.msra.mxu0 0.0
    %8792 = vmatprep.subr.mxu0 0.0
    %8793 = vmatpush2.msra.mxu0 0.0
    %8794 = vmatprep.subr.mxu0 0.0
    %8795 = vmatpush2.msra.mxu0 0.0
    %8796 = vmatprep.subr.mxu0 0.0
    %8797 = vmatpush2.msra.mxu0 0.0
    %8798 = vmatprep.subr.mxu0 0.0
    %8799 = vmatpush2.msra.mxu0 0.0
    %8800 = vmatprep.subr.mxu0 0.0
    %8801 = vmatpush2.msra.mxu0 0.0
    %8802 = vmatprep.subr.mxu0 0.0
    %8803 = vmatpush2.msra.mxu0 0.0
    %8804 = vmatprep.subr.mxu0 0.0
    %8805 = vmatpush2.msra.mxu0 0.0
    %8806 = vmatprep.subr.mxu0 0.0
    %8807 = vmatpush2.msra.mxu0 0.0
    %8808 = vmatprep.subr.mxu0 0.0
    %8809 = vmatpush2.msra.mxu0 0.0
    %8810 = vmatprep.subr.mxu0 0.0
    %8811 = vmatpush2.msra.mxu0 0.0
    %8812 = vmatprep.subr.mxu0 0.0
    %8813 = vmatpush2.msra.mxu0 0.0
    %8814 = vmatprep.subr.mxu0 0.0
    %8815 = vmatpush2.msra.mxu0 0.0
    %8816 = vmatprep.subr.mxu0 0.0
    %8817 = vmatpush2.msra.mxu0 0.0
    %8818 = vmatprep.mubr.f32.mxu0 0.0
    %8819 = vmatmul.mubr.f32.gmra.mxu0 %v8014
    %v8820 = vpop.f32.mrf.mxu0
    %v8821 = vadd.f32 0.0, %v8820
    %v8822 = vpop.f32.mrf.mxu0
    %8823 = vdwg.mxu0
    %v8824 = vadd.f32 %v8753, %v8821
    %v8825 = vtanh.pop %v8824
    %8826 = vmatprep.subr.mxu0 0.0
    %8827 = vmatpush1.msra.mxu0 0.0
    %8828 = vmatprep.subr.mxu0 0.0
    %8829 = vmatpush1.msra.mxu0 0.0
    %8830 = vmatprep.subr.mxu0 0.0
    %8831 = vmatpush1.msra.mxu0 0.0
    %8832 = vmatprep.subr.mxu0 0.0
    %8833 = vmatpush1.msra.mxu0 0.0
    %8834 = vmatprep.subr.mxu0 0.0
    %8835 = vmatpush1.msra.mxu0 0.0
    %8836 = vmatprep.subr.mxu0 0.0
    %8837 = vmatpush1.msra.mxu0 0.0
    %8838 = vmatprep.subr.mxu0 0.0
    %8839 = vmatpush1.msra.mxu0 0.0
    %8840 = vmatprep.subr.mxu0 0.0
    %8841 = vmatpush1.msra.mxu0 0.0
    %8842 = vmatprep.subr.mxu0 0.0
    %8843 = vmatpush1.msra.mxu0 0.0
    %8844 = vmatprep.subr.mxu0 0.0
    %8845 = vmatpush1.msra.mxu0 0.0
    %8846 = vmatprep.subr.mxu0 0.0
    %8847 = vmatpush1.msra.mxu0 0.0
    %8848 = vmatprep.subr.mxu0 0.0
    %8849 = vmatpush1.msra.mxu0 0.0
    %8850 = vmatprep.subr.mxu0 0.0
    %8851 = vmatpush1.msra.mxu0 %v7772
    %8852 = vmatprep.subr.mxu0 0.0
    %8853 = vmatpush1.msra.mxu0 %v7771
    %8854 = vmatprep.subr.mxu0 0.0
    %8855 = vmatpush1.msra.mxu0 %v7770
    %8856 = vmatprep.subr.mxu0 0.0
    %8857 = vmatpush1.msra.mxu0 %v7769
    %8858 = vmatprep.subr.mxu0 0.0
    %8859 = vmatpush2.msra.mxu0 0.0
    %8860 = vmatprep.subr.mxu0 0.0
    %8861 = vmatpush2.msra.mxu0 0.0
    %8862 = vmatprep.subr.mxu0 0.0
    %8863 = vmatpush2.msra.mxu0 0.0
    %8864 = vmatprep.subr.mxu0 0.0
    %8865 = vmatpush2.msra.mxu0 0.0
    %8866 = vmatprep.subr.mxu0 0.0
    %8867 = vmatpush2.msra.mxu0 0.0
    %8868 = vmatprep.subr.mxu0 0.0
    %8869 = vmatpush2.msra.mxu0 0.0
    %8870 = vmatprep.subr.mxu0 0.0
    %8871 = vmatpush2.msra.mxu0 0.0
    %8872 = vmatprep.subr.mxu0 0.0
    %8873 = vmatpush2.msra.mxu0 0.0
    %8874 = vmatprep.subr.mxu0 0.0
    %8875 = vmatpush2.msra.mxu0 0.0
    %8876 = vmatprep.subr.mxu0 0.0
    %8877 = vmatpush2.msra.mxu0 0.0
    %8878 = vmatprep.subr.mxu0 0.0
    %8879 = vmatpush2.msra.mxu0 0.0
    %8880 = vmatprep.subr.mxu0 0.0
    %8881 = vmatpush2.msra.mxu0 0.0
    %8882 = vmatprep.subr.mxu0 0.0
    %8883 = vmatpush2.msra.mxu0 0.0
    %8884 = vmatprep.subr.mxu0 0.0
    %8885 = vmatpush2.msra.mxu0 0.0
    %8886 = vmatprep.subr.mxu0 0.0
    %8887 = vmatpush2.msra.mxu0 0.0
    %8888 = vmatprep.subr.mxu0 0.0
    %8889 = vmatpush2.msra.mxu0 0.0
    %8890 = vmatprep.mubr.f32.mxu0 0.0
    %8891 = vmatmul.mubr.f32.gmra.mxu0 %v8014
    %v8892 = vpop.f32.mrf.mxu0
    %v8893 = vadd.f32 0.0, %v8892
    %v8894 = vpop.f32.mrf.mxu0
    %8895 = vdwg.mxu0
    %v8896 = vadd.f32 %v7847, %v8893
    %8897 = vmatprep.subr.mxu0 0.0
    %8898 = vmatpush1.msra.mxu0 0.0
    %8899 = vmatprep.subr.mxu0 0.0
    %8900 = vmatpush1.msra.mxu0 0.0
    %8901 = vmatprep.subr.mxu0 0.0
    %8902 = vmatpush1.msra.mxu0 0.0
    %8903 = vmatprep.subr.mxu0 0.0
    %8904 = vmatpush1.msra.mxu0 0.0
    %8905 = vmatprep.subr.mxu0 0.0
    %8906 = vmatpush1.msra.mxu0 0.0
    %8907 = vmatprep.subr.mxu0 0.0
    %8908 = vmatpush1.msra.mxu0 0.0
    %8909 = vmatprep.subr.mxu0 0.0
    %8910 = vmatpush1.msra.mxu0 0.0
    %8911 = vmatprep.subr.mxu0 0.0
    %8912 = vmatpush1.msra.mxu0 0.0
    %8913 = vmatprep.subr.mxu0 0.0
    %8914 = vmatpush1.msra.mxu0 0.0
    %8915 = vmatprep.subr.mxu0 0.0
    %8916 = vmatpush1.msra.mxu0 0.0
    %8917 = vmatprep.subr.mxu0 0.0
    %8918 = vmatpush1.msra.mxu0 0.0
    %8919 = vmatprep.subr.mxu0 0.0
    %8920 = vmatpush1.msra.mxu0 0.0
    %8921 = vmatprep.subr.mxu0 0.0
    %8922 = vmatpush1.msra.mxu0 %v7854
    %8923 = vmatprep.subr.mxu0 0.0
    %8924 = vmatpush1.msra.mxu0 %v7853
    %8925 = vmatprep.subr.mxu0 0.0
    %8926 = vmatpush1.msra.mxu0 %v7852
    %8927 = vmatprep.subr.mxu0 0.0
    %8928 = vmatpush1.msra.mxu0 %v7851
    %8929 = vmatprep.subr.mxu0 0.0
    %8930 = vmatpush2.msra.mxu0 0.0
    %8931 = vmatprep.subr.mxu0 0.0
    %8932 = vmatpush2.msra.mxu0 0.0
    %8933 = vmatprep.subr.mxu0 0.0
    %8934 = vmatpush2.msra.mxu0 0.0
    %8935 = vmatprep.subr.mxu0 0.0
    %8936 = vmatpush2.msra.mxu0 0.0
    %8937 = vmatprep.subr.mxu0 0.0
    %8938 = vmatpush2.msra.mxu0 0.0
    %8939 = vmatprep.subr.mxu0 0.0
    %8940 = vmatpush2.msra.mxu0 0.0
    %8941 = vmatprep.subr.mxu0 0.0
    %8942 = vmatpush2.msra.mxu0 0.0
    %8943 = vmatprep.subr.mxu0 0.0
    %8944 = vmatpush2.msra.mxu0 0.0
    %8945 = vmatprep.subr.mxu0 0.0
    %8946 = vmatpush2.msra.mxu0 0.0
    %8947 = vmatprep.subr.mxu0 0.0
    %8948 = vmatpush2.msra.mxu0 0.0
    %8949 = vmatprep.subr.mxu0 0.0
    %8950 = vmatpush2.msra.mxu0 0.0
    %8951 = vmatprep.subr.mxu0 0.0
    %8952 = vmatpush2.msra.mxu0 0.0
    %8953 = vmatprep.subr.mxu0 0.0
    %8954 = vmatpush2.msra.mxu0 0.0
    %8955 = vmatprep.subr.mxu0 0.0
    %8956 = vmatpush2.msra.mxu0 0.0
    %8957 = vmatprep.subr.mxu0 0.0
    %8958 = vmatpush2.msra.mxu0 0.0
    %8959 = vmatprep.subr.mxu0 0.0
    %8960 = vmatpush2.msra.mxu0 0.0
    %8961 = vmatprep.mubr.f32.mxu0 0.0
    %8962 = vmatmul.mubr.f32.gmra.mxu0 %v8243
    %v8963 = vpop.f32.mrf.mxu0
    %v8964 = vadd.f32 0.0, %v8963
    %v8965 = vpop.f32.mrf.mxu0
    %8966 = vdwg.mxu0
    %v8967 = vadd.f32 %v8896, %v8964
    %8968 = vmatprep.subr.mxu0 0.0
    %8969 = vmatpush1.msra.mxu0 0.0
    %8970 = vmatprep.subr.mxu0 0.0
    %8971 = vmatpush1.msra.mxu0 0.0
    %8972 = vmatprep.subr.mxu0 0.0
    %8973 = vmatpush1.msra.mxu0 0.0
    %8974 = vmatprep.subr.mxu0 0.0
    %8975 = vmatpush1.msra.mxu0 0.0
    %8976 = vmatprep.subr.mxu0 0.0
    %8977 = vmatpush1.msra.mxu0 0.0
    %8978 = vmatprep.subr.mxu0 0.0
    %8979 = vmatpush1.msra.mxu0 0.0
    %8980 = vmatprep.subr.mxu0 0.0
    %8981 = vmatpush1.msra.mxu0 0.0
    %8982 = vmatprep.subr.mxu0 0.0
    %8983 = vmatpush1.msra.mxu0 0.0
    %8984 = vmatprep.subr.mxu0 0.0
    %8985 = vmatpush1.msra.mxu0 0.0
    %8986 = vmatprep.subr.mxu0 0.0
    %8987 = vmatpush1.msra.mxu0 0.0
    %8988 = vmatprep.subr.mxu0 0.0
    %8989 = vmatpush1.msra.mxu0 0.0
    %8990 = vmatprep.subr.mxu0 0.0
    %8991 = vmatpush1.msra.mxu0 0.0
    %8992 = vmatprep.subr.mxu0 0.0
    %8993 = vmatpush1.msra.mxu0 %v7930
    %8994 = vmatprep.subr.mxu0 0.0
    %8995 = vmatpush1.msra.mxu0 %v7929
    %8996 = vmatprep.subr.mxu0 0.0
    %8997 = vmatpush1.msra.mxu0 %v7928
    %8998 = vmatprep.subr.mxu0 0.0
    %8999 = vmatpush1.msra.mxu0 %v7927
    %9000 = vmatprep.subr.mxu0 0.0
    %9001 = vmatpush2.msra.mxu0 0.0
    %9002 = vmatprep.subr.mxu0 0.0
    %9003 = vmatpush2.msra.mxu0 0.0
    %9004 = vmatprep.subr.mxu0 0.0
    %9005 = vmatpush2.msra.mxu0 0.0
    %9006 = vmatprep.subr.mxu0 0.0
    %9007 = vmatpush2.msra.mxu0 0.0
    %9008 = vmatprep.subr.mxu0 0.0
    %9009 = vmatpush2.msra.mxu0 0.0
    %9010 = vmatprep.subr.mxu0 0.0
    %9011 = vmatpush2.msra.mxu0 0.0
    %9012 = vmatprep.subr.mxu0 0.0
    %9013 = vmatpush2.msra.mxu0 0.0
    %9014 = vmatprep.subr.mxu0 0.0
    %9015 = vmatpush2.msra.mxu0 0.0
    %9016 = vmatprep.subr.mxu0 0.0
    %9017 = vmatpush2.msra.mxu0 0.0
    %9018 = vmatprep.subr.mxu0 0.0
    %9019 = vmatpush2.msra.mxu0 0.0
    %9020 = vmatprep.subr.mxu0 0.0
    %9021 = vmatpush2.msra.mxu0 0.0
    %9022 = vmatprep.subr.mxu0 0.0
    %9023 = vmatpush2.msra.mxu0 0.0
    %9024 = vmatprep.subr.mxu0 0.0
    %9025 = vmatpush2.msra.mxu0 0.0
    %9026 = vmatprep.subr.mxu0 0.0
    %9027 = vmatpush2.msra.mxu0 0.0
    %9028 = vmatprep.subr.mxu0 0.0
    %9029 = vmatpush2.msra.mxu0 0.0
    %9030 = vmatprep.subr.mxu0 0.0
    %9031 = vmatpush2.msra.mxu0 0.0
    %9032 = vmatprep.mubr.f32.mxu0 0.0
    %9033 = vmatmul.mubr.f32.gmra.mxu0 %v8014
    %v9034 = vpop.f32.mrf.mxu0
    %v9035 = vadd.f32 0.0, %v9034
    %v9036 = vpop.f32.mrf.mxu0
    %9037 = vdwg.mxu0
    %v9038 = vadd.f32 %v8967, %v9035
    %v9039 = vxor.u32 %v9038, 2147483648
    %v9040 = vmul.f32 %v9039, 1.442695
    %v9041 = vpow.pop %v9040
    %v9042 = vadd.f32 %v9041, 1.0
    %v9043 = vrcp.pop %v9042
    %v9044 = vmul.f32 1.0, %v9043
    %v9045 = vmul.f32 %v8611, %v8010
    %v9046 = vmul.f32 %v8392, %v8825
    %v9047 = vadd.f32 %v9045, %v9046
    %v9048 = vtanh.pop %v9047
    %v9049 = vmul.f32 %v9044, %v9048
    %v9051 = vsel %vm133, %v9049, 0
    %9053 = vmatprep.subr.mxu0 0.0
    %9054 = vmatpush1.xpose.msra.mxu0 0.0
    %9055 = vmatprep.subr.mxu0 0.0
    %9056 = vmatpush1.xpose.msra.mxu0 0.0
    %9057 = vmatprep.subr.mxu0 0.0
    %9058 = vmatpush1.xpose.msra.mxu0 0.0
    %9059 = vmatprep.subr.mxu0 0.0
    %9060 = vmatpush1.xpose.msra.mxu0 0.0
    %9061 = vmatprep.subr.mxu0 0.0
    %9062 = vmatpush1.xpose.msra.mxu0 0.0
    %9063 = vmatprep.subr.mxu0 0.0
    %9064 = vmatpush1.xpose.msra.mxu0 0.0
    %9065 = vmatprep.subr.mxu0 0.0
    %9066 = vmatpush1.xpose.msra.mxu0 0.0
    %9067 = vmatprep.subr.mxu0 0.0
    %9068 = vmatpush1.xpose.msra.mxu0 0.0
    %9069 = vmatprep.subr.mxu0 0.0
    %9070 = vmatpush1.xpose.msra.mxu0 0.0
    %9071 = vmatprep.subr.mxu0 0.0
    %9072 = vmatpush1.xpose.msra.mxu0 0.0
    %9073 = vmatprep.subr.mxu0 0.0
    %9074 = vmatpush1.xpose.msra.mxu0 0.0
    %9075 = vmatprep.subr.mxu0 0.0
    %9076 = vmatpush1.xpose.msra.mxu0 0.0
    %9077 = vmatprep.subr.mxu0 0.0
    %9078 = vmatpush1.xpose.msra.mxu0 0.0
    %9079 = vmatprep.subr.mxu0 0.0
    %9080 = vmatpush1.xpose.msra.mxu0 0.0
    %9081 = vmatprep.subr.mxu0 0.0
    %9082 = vmatpush1.xpose.msra.mxu0 %v6892
    %9083 = vmatprep.subr.mxu0 0.0
    %9084 = vmatpush1.xpose.msra.mxu0 %v6889
    %9085 = vmatprep.subr.mxu0 0.0
    %9086 = vmatpush2.xpose.msra.mxu0 0.0
    %9087 = vmatprep.subr.mxu0 0.0
    %9088 = vmatpush2.xpose.msra.mxu0 0.0
    %9089 = vmatprep.subr.mxu0 0.0
    %9090 = vmatpush2.xpose.msra.mxu0 0.0
    %9091 = vmatprep.subr.mxu0 0.0
    %9092 = vmatpush2.xpose.msra.mxu0 0.0
    %9093 = vmatprep.subr.mxu0 0.0
    %9094 = vmatpush2.xpose.msra.mxu0 0.0
    %9095 = vmatprep.subr.mxu0 0.0
    %9096 = vmatpush2.xpose.msra.mxu0 0.0
    %9097 = vmatprep.subr.mxu0 0.0
    %9098 = vmatpush2.xpose.msra.mxu0 0.0
    %9099 = vmatprep.subr.mxu0 0.0
    %9100 = vmatpush2.xpose.msra.mxu0 0.0
    %9101 = vmatprep.subr.mxu0 0.0
    %9102 = vmatpush2.xpose.msra.mxu0 0.0
    %9103 = vmatprep.subr.mxu0 0.0
    %9104 = vmatpush2.xpose.msra.mxu0 0.0
    %9105 = vmatprep.subr.mxu0 0.0
    %9106 = vmatpush2.xpose.msra.mxu0 0.0
    %9107 = vmatprep.subr.mxu0 0.0
    %9108 = vmatpush2.xpose.msra.mxu0 0.0
    %9109 = vmatprep.subr.mxu0 0.0
    %9110 = vmatpush2.xpose.msra.mxu0 0.0
    %9111 = vmatprep.subr.mxu0 0.0
    %9112 = vmatpush2.xpose.msra.mxu0 0.0
    %9113 = vmatprep.subr.mxu0 0.0
    %9114 = vmatpush2.xpose.msra.mxu0 0.0
    %9115 = vmatprep.subr.mxu0 0.0
    %9116 = vmatpush2.xpose.msra.mxu0 0.0
    %9117 = vmatprep.mubr.f32.mxu0 0.0
    %9118 = vmatmul.mubr.f32.gmra.mxu0 %v9051
    %v9119 = vpop.f32.mrf.mxu0
    %v9120 = vadd.f32 %v6834, %v9119
    %v9121 = vpop.f32.mrf.mxu0
    %9122 = vdwg.mxu0
    %v9123 = vsel %vm6964, %v9120, -inf
    %9124 = vmax.xlane.f32.xlu0 %v9123
    %v9125 = vpop.xlane.xlu0 %9124
    %v9126 = vsub.f32 %v9120, %v9125
    %v9127 = vmul.f32 %v9126, 1.442695
    %v9128 = vpow.pop %v9127
    %v9129 = vsel %vm6964, %v9128, 0.0
    %9130 = vadd.xlane.f32.xlu0 %v9129
    %v9131 = vpop.xlane.xlu0 %9130
    %v9132 = vmax.f32 %v9131, 1e-20
    %v9133 = vrcp.pop %v9132
    %v9134 = vmul.f32 %v9128, %v9133
    %v9136 = vsel %vm2130, %v9134, 0
    %9138 = vmatprep.subr.mxu0 0.0
    %9139 = vmatpush1.msra.mxu0 0.0
    %9140 = vmatprep.subr.mxu0 0.0
    %9141 = vmatpush1.msra.mxu0 0.0
    %9142 = vmatprep.subr.mxu0 0.0
    %9143 = vmatpush1.msra.mxu0 0.0
    %9144 = vmatprep.subr.mxu0 0.0
    %9145 = vmatpush1.msra.mxu0 0.0
    %9146 = vmatprep.subr.mxu0 0.0
    %9147 = vmatpush1.msra.mxu0 0.0
    %9148 = vmatprep.subr.mxu0 0.0
    %9149 = vmatpush1.msra.mxu0 0.0
    %9150 = vmatprep.subr.mxu0 0.0
    %9151 = vmatpush1.msra.mxu0 0.0
    %9152 = vmatprep.subr.mxu0 0.0
    %9153 = vmatpush1.msra.mxu0 0.0
    %9154 = vmatprep.subr.mxu0 0.0
    %9155 = vmatpush1.msra.mxu0 0.0
    %9156 = vmatprep.subr.mxu0 0.0
    %9157 = vmatpush1.msra.mxu0 0.0
    %9158 = vmatprep.subr.mxu0 0.0
    %9159 = vmatpush1.msra.mxu0 0.0
    %9160 = vmatprep.subr.mxu0 0.0
    %9161 = vmatpush1.msra.mxu0 0.0
    %9162 = vmatprep.subr.mxu0 0.0
    %9163 = vmatpush1.msra.mxu0 0.0
    %9164 = vmatprep.subr.mxu0 0.0
    %9165 = vmatpush1.msra.mxu0 0.0
    %9166 = vmatprep.subr.mxu0 0.0
    %9167 = vmatpush1.msra.mxu0 %v6833
    %9168 = vmatprep.subr.mxu0 0.0
    %9169 = vmatpush1.msra.mxu0 %v6832
    %9170 = vmatprep.subr.mxu0 0.0
    %9171 = vmatpush2.msra.mxu0 0.0
    %9172 = vmatprep.subr.mxu0 0.0
    %9173 = vmatpush2.msra.mxu0 0.0
    %9174 = vmatprep.subr.mxu0 0.0
    %9175 = vmatpush2.msra.mxu0 0.0
    %9176 = vmatprep.subr.mxu0 0.0
    %9177 = vmatpush2.msra.mxu0 0.0
    %9178 = vmatprep.subr.mxu0 0.0
    %9179 = vmatpush2.msra.mxu0 0.0
    %9180 = vmatprep.subr.mxu0 0.0
    %9181 = vmatpush2.msra.mxu0 0.0
    %9182 = vmatprep.subr.mxu0 0.0
    %9183 = vmatpush2.msra.mxu0 0.0
    %9184 = vmatprep.subr.mxu0 0.0
    %9185 = vmatpush2.msra.mxu0 0.0
    %9186 = vmatprep.subr.mxu0 0.0
    %9187 = vmatpush2.msra.mxu0 0.0
    %9188 = vmatprep.subr.mxu0 0.0
    %9189 = vmatpush2.msra.mxu0 0.0
    %9190 = vmatprep.subr.mxu0 0.0
    %9191 = vmatpush2.msra.mxu0 0.0
    %9192 = vmatprep.subr.mxu0 0.0
    %9193 = vmatpush2.msra.mxu0 0.0
    %9194 = vmatprep.subr.mxu0 0.0
    %9195 = vmatpush2.msra.mxu0 0.0
    %9196 = vmatprep.subr.mxu0 0.0
    %9197 = vmatpush2.msra.mxu0 0.0
    %9198 = vmatprep.subr.mxu0 0.0
    %9199 = vmatpush2.msra.mxu0 0.0
    %9200 = vmatprep.subr.mxu0 0.0
    %9201 = vmatpush2.msra.mxu0 0.0
    %9202 = vmatprep.mubr.f32.mxu0 0.0
    %9203 = vmatmul.mubr.f32.gmra.mxu0 %v9136
    %v9204 = vpop.f32.mrf.mxu0
    %v9205 = vadd.f32 0.0, %v9204
    %v9206 = vpop.f32.mrf.mxu0
    %9207 = vdwg.mxu0
    %s9208 = scalar_lea.vmem [#allocation9], 1152
    %v9209 = vld [vmem:[%s9208] sm:$0xff]
    %v9210 = vld [vmem:[%s9208 + $0x8] sm:$0xff]
    %v9211 = vld [vmem:[%s9208 + $0x10] sm:$0xff]
    %v9212 = vld [vmem:[%s9208 + $0x18] sm:$0xff]
    %s9213 = scalar_lea.vmem [#allocation9], 1184
    %v9214 = vld [vmem:[%s9213] sm:$0xff]
    %v9215 = vld [vmem:[%s9213 + $0x8] sm:$0xff]
    %v9216 = vld [vmem:[%s9213 + $0x10] sm:$0xff]
    %v9217 = vld [vmem:[%s9213 + $0x18] sm:$0xff]
    %v9219 = vsel %vm133, %v9205, 0
    %9221 = vmatprep.subr.mxu0 0.0
    %9222 = vmatpush1.msra.mxu0 0.0
    %9223 = vmatprep.subr.mxu0 0.0
    %9224 = vmatpush1.msra.mxu0 0.0
    %9225 = vmatprep.subr.mxu0 0.0
    %9226 = vmatpush1.msra.mxu0 0.0
    %9227 = vmatprep.subr.mxu0 0.0
    %9228 = vmatpush1.msra.mxu0 0.0
    %9229 = vmatprep.subr.mxu0 0.0
    %9230 = vmatpush1.msra.mxu0 0.0
    %9231 = vmatprep.subr.mxu0 0.0
    %9232 = vmatpush1.msra.mxu0 0.0
    %9233 = vmatprep.subr.mxu0 0.0
    %9234 = vmatpush1.msra.mxu0 0.0
    %9235 = vmatprep.subr.mxu0 0.0
    %9236 = vmatpush1.msra.mxu0 0.0
    %9237 = vmatprep.subr.mxu0 0.0
    %9238 = vmatpush1.msra.mxu0 0.0
    %9239 = vmatprep.subr.mxu0 0.0
    %9240 = vmatpush1.msra.mxu0 0.0
    %9241 = vmatprep.subr.mxu0 0.0
    %9242 = vmatpush1.msra.mxu0 0.0
    %9243 = vmatprep.subr.mxu0 0.0
    %9244 = vmatpush1.msra.mxu0 0.0
    %9245 = vmatprep.subr.mxu0 0.0
    %9246 = vmatpush1.msra.mxu0 %v9217
    %9247 = vmatprep.subr.mxu0 0.0
    %9248 = vmatpush1.msra.mxu0 %v9216
    %9249 = vmatprep.subr.mxu0 0.0
    %9250 = vmatpush1.msra.mxu0 %v9215
    %9251 = vmatprep.subr.mxu0 0.0
    %9252 = vmatpush1.msra.mxu0 %v9214
    %9253 = vmatprep.subr.mxu0 0.0
    %9254 = vmatpush2.msra.mxu0 0.0
    %9255 = vmatprep.subr.mxu0 0.0
    %9256 = vmatpush2.msra.mxu0 0.0
    %9257 = vmatprep.subr.mxu0 0.0
    %9258 = vmatpush2.msra.mxu0 0.0
    %9259 = vmatprep.subr.mxu0 0.0
    %9260 = vmatpush2.msra.mxu0 0.0
    %9261 = vmatprep.subr.mxu0 0.0
    %9262 = vmatpush2.msra.mxu0 0.0
    %9263 = vmatprep.subr.mxu0 0.0
    %9264 = vmatpush2.msra.mxu0 0.0
    %9265 = vmatprep.subr.mxu0 0.0
    %9266 = vmatpush2.msra.mxu0 0.0
    %9267 = vmatprep.subr.mxu0 0.0
    %9268 = vmatpush2.msra.mxu0 0.0
    %9269 = vmatprep.subr.mxu0 0.0
    %9270 = vmatpush2.msra.mxu0 0.0
    %9271 = vmatprep.subr.mxu0 0.0
    %9272 = vmatpush2.msra.mxu0 0.0
    %9273 = vmatprep.subr.mxu0 0.0
    %9274 = vmatpush2.msra.mxu0 0.0
    %9275 = vmatprep.subr.mxu0 0.0
    %9276 = vmatpush2.msra.mxu0 0.0
    %9277 = vmatprep.subr.mxu0 0.0
    %9278 = vmatpush2.msra.mxu0 0.0
    %9279 = vmatprep.subr.mxu0 0.0
    %9280 = vmatpush2.msra.mxu0 0.0
    %9281 = vmatprep.subr.mxu0 0.0
    %9282 = vmatpush2.msra.mxu0 0.0
    %9283 = vmatprep.subr.mxu0 0.0
    %9284 = vmatpush2.msra.mxu0 0.0
    %9285 = vmatprep.mubr.f32.mxu0 0.0
    %9286 = vmatmul.mubr.f32.gmra.mxu0 %v9219
    %v9287 = vpop.f32.mrf.mxu0
    %v9288 = vadd.f32 0.0, %v9287
    %v9289 = vpop.f32.mrf.mxu0
    %9290 = vdwg.mxu0
    %9291 = vmatprep.subr.mxu0 0.0
    %9292 = vmatpush1.msra.mxu0 0.0
    %9293 = vmatprep.subr.mxu0 0.0
    %9294 = vmatpush1.msra.mxu0 0.0
    %9295 = vmatprep.subr.mxu0 0.0
    %9296 = vmatpush1.msra.mxu0 0.0
    %9297 = vmatprep.subr.mxu0 0.0
    %9298 = vmatpush1.msra.mxu0 0.0
    %9299 = vmatprep.subr.mxu0 0.0
    %9300 = vmatpush1.msra.mxu0 0.0
    %9301 = vmatprep.subr.mxu0 0.0
    %9302 = vmatpush1.msra.mxu0 0.0
    %9303 = vmatprep.subr.mxu0 0.0
    %9304 = vmatpush1.msra.mxu0 0.0
    %9305 = vmatprep.subr.mxu0 0.0
    %9306 = vmatpush1.msra.mxu0 0.0
    %9307 = vmatprep.subr.mxu0 0.0
    %9308 = vmatpush1.msra.mxu0 0.0
    %9309 = vmatprep.subr.mxu0 0.0
    %9310 = vmatpush1.msra.mxu0 0.0
    %9311 = vmatprep.subr.mxu0 0.0
    %9312 = vmatpush1.msra.mxu0 0.0
    %9313 = vmatprep.subr.mxu0 0.0
    %9314 = vmatpush1.msra.mxu0 0.0
    %9315 = vmatprep.subr.mxu0 0.0
    %9316 = vmatpush1.msra.mxu0 %v9212
    %9317 = vmatprep.subr.mxu0 0.0
    %9318 = vmatpush1.msra.mxu0 %v9211
    %9319 = vmatprep.subr.mxu0 0.0
    %9320 = vmatpush1.msra.mxu0 %v9210
    %9321 = vmatprep.subr.mxu0 0.0
    %9322 = vmatpush1.msra.mxu0 %v9209
    %9323 = vmatprep.subr.mxu0 0.0
    %9324 = vmatpush2.msra.mxu0 0.0
    %9325 = vmatprep.subr.mxu0 0.0
    %9326 = vmatpush2.msra.mxu0 0.0
    %9327 = vmatprep.subr.mxu0 0.0
    %9328 = vmatpush2.msra.mxu0 0.0
    %9329 = vmatprep.subr.mxu0 0.0
    %9330 = vmatpush2.msra.mxu0 0.0
    %9331 = vmatprep.subr.mxu0 0.0
    %9332 = vmatpush2.msra.mxu0 0.0
    %9333 = vmatprep.subr.mxu0 0.0
    %9334 = vmatpush2.msra.mxu0 0.0
    %9335 = vmatprep.subr.mxu0 0.0
    %9336 = vmatpush2.msra.mxu0 0.0
    %9337 = vmatprep.subr.mxu0 0.0
    %9338 = vmatpush2.msra.mxu0 0.0
    %9339 = vmatprep.subr.mxu0 0.0
    %9340 = vmatpush2.msra.mxu0 0.0
    %9341 = vmatprep.subr.mxu0 0.0
    %9342 = vmatpush2.msra.mxu0 0.0
    %9343 = vmatprep.subr.mxu0 0.0
    %9344 = vmatpush2.msra.mxu0 0.0
    %9345 = vmatprep.subr.mxu0 0.0
    %9346 = vmatpush2.msra.mxu0 0.0
    %9347 = vmatprep.subr.mxu0 0.0
    %9348 = vmatpush2.msra.mxu0 0.0
    %9349 = vmatprep.subr.mxu0 0.0
    %9350 = vmatpush2.msra.mxu0 0.0
    %9351 = vmatprep.subr.mxu0 0.0
    %9352 = vmatpush2.msra.mxu0 0.0
    %9353 = vmatprep.subr.mxu0 0.0
    %9354 = vmatpush2.msra.mxu0 0.0
    %9355 = vmatprep.mubr.f32.mxu0 0.0
    %9356 = vmatmul.mubr.f32.gmra.mxu0 %v9051
    %v9357 = vpop.f32.mrf.mxu0
    %v9358 = vadd.f32 %v9288, %v9357
    %v9359 = vpop.f32.mrf.mxu0
    %9360 = vdwg.mxu0
    %s9361 = scalar_lea.vmem [#allocation10], 22
    %v9362 = vld [vmem:[%s9361] sm:$0x1]
    %v9364 = vlaneseq
    %v9365 = vshrl.u32 %v9364, 7
    %v9366 = vsub.s32 0, %v9365
    %v9367 = vrot.slane %v9362, %v9366
    %v9369 = vadd.f32 %v9358, %v9367
    %v9370 = vmax.f32 %v9369, 0.0
    %s9371 = scalar_lea.vmem [#allocation9], 1216
    %v9372 = vld [vmem:[%s9371] sm:$0xff]
    %v9373 = vld [vmem:[%s9371 + $0x8] sm:$0xff]
    %v9374 = vld [vmem:[%s9371 + $0x10] sm:$0xff]
    %v9375 = vld [vmem:[%s9371 + $0x18] sm:$0xff]
    %s9376 = scalar_lea.vmem [#allocation10], 23
    %v9377 = vld [vmem:[%s9376] sm:$0x1]
    %v9379 = vlaneseq
    %v9380 = vshrl.u32 %v9379, 7
    %v9381 = vsub.s32 0, %v9380
    %v9382 = vrot.slane %v9377, %v9381
    %v9385 = vsel %vm133, %v9370, 0
    %9387 = vmatprep.subr.mxu0 0.0
    %9388 = vmatpush1.msra.mxu0 0.0
    %9389 = vmatprep.subr.mxu0 0.0
    %9390 = vmatpush1.msra.mxu0 0.0
    %9391 = vmatprep.subr.mxu0 0.0
    %9392 = vmatpush1.msra.mxu0 0.0
    %9393 = vmatprep.subr.mxu0 0.0
    %9394 = vmatpush1.msra.mxu0 0.0
    %9395 = vmatprep.subr.mxu0 0.0
    %9396 = vmatpush1.msra.mxu0 0.0
    %9397 = vmatprep.subr.mxu0 0.0
    %9398 = vmatpush1.msra.mxu0 0.0
    %9399 = vmatprep.subr.mxu0 0.0
    %9400 = vmatpush1.msra.mxu0 0.0
    %9401 = vmatprep.subr.mxu0 0.0
    %9402 = vmatpush1.msra.mxu0 0.0
    %9403 = vmatprep.subr.mxu0 0.0
    %9404 = vmatpush1.msra.mxu0 0.0
    %9405 = vmatprep.subr.mxu0 0.0
    %9406 = vmatpush1.msra.mxu0 0.0
    %9407 = vmatprep.subr.mxu0 0.0
    %9408 = vmatpush1.msra.mxu0 0.0
    %9409 = vmatprep.subr.mxu0 0.0
    %9410 = vmatpush1.msra.mxu0 0.0
    %9411 = vmatprep.subr.mxu0 0.0
    %9412 = vmatpush1.msra.mxu0 %v9375
    %9413 = vmatprep.subr.mxu0 0.0
    %9414 = vmatpush1.msra.mxu0 %v9374
    %9415 = vmatprep.subr.mxu0 0.0
    %9416 = vmatpush1.msra.mxu0 %v9373
    %9417 = vmatprep.subr.mxu0 0.0
    %9418 = vmatpush1.msra.mxu0 %v9372
    %9419 = vmatprep.subr.mxu0 0.0
    %9420 = vmatpush2.msra.mxu0 0.0
    %9421 = vmatprep.subr.mxu0 0.0
    %9422 = vmatpush2.msra.mxu0 0.0
    %9423 = vmatprep.subr.mxu0 0.0
    %9424 = vmatpush2.msra.mxu0 0.0
    %9425 = vmatprep.subr.mxu0 0.0
    %9426 = vmatpush2.msra.mxu0 0.0
    %9427 = vmatprep.subr.mxu0 0.0
    %9428 = vmatpush2.msra.mxu0 0.0
    %9429 = vmatprep.subr.mxu0 0.0
    %9430 = vmatpush2.msra.mxu0 0.0
    %9431 = vmatprep.subr.mxu0 0.0
    %9432 = vmatpush2.msra.mxu0 0.0
    %9433 = vmatprep.subr.mxu0 0.0
    %9434 = vmatpush2.msra.mxu0 0.0
    %9435 = vmatprep.subr.mxu0 0.0
    %9436 = vmatpush2.msra.mxu0 0.0
    %9437 = vmatprep.subr.mxu0 0.0
    %9438 = vmatpush2.msra.mxu0 0.0
    %9439 = vmatprep.subr.mxu0 0.0
    %9440 = vmatpush2.msra.mxu0 0.0
    %9441 = vmatprep.subr.mxu0 0.0
    %9442 = vmatpush2.msra.mxu0 0.0
    %9443 = vmatprep.subr.mxu0 0.0
    %9444 = vmatpush2.msra.mxu0 0.0
    %9445 = vmatprep.subr.mxu0 0.0
    %9446 = vmatpush2.msra.mxu0 0.0
    %9447 = vmatprep.subr.mxu0 0.0
    %9448 = vmatpush2.msra.mxu0 0.0
    %9449 = vmatprep.subr.mxu0 0.0
    %9450 = vmatpush2.msra.mxu0 0.0
    %9451 = vmatprep.mubr.f32.mxu0 0.0
    %9452 = vmatmul.mubr.f32.gmra.mxu0 %v9385
    %v9453 = vpop.f32.mrf.mxu0
    %v9454 = vadd.f32 %v9382, %v9453
    %v9455 = vpop.f32.mrf.mxu0
    %9456 = vdwg.mxu0
    %v9457 = vmax.f32 %v9454, 0.0
    %s9458 = scalar_lea.vmem [#allocation9], 1248
    %v9459 = vld [vmem:[%s9458] sm:$0xff]
    %v9460 = vld [vmem:[%s9458 + $0x8] sm:$0xff]
    %v9461 = vld [vmem:[%s9458 + $0x10] sm:$0xff]
    %v9462 = vld [vmem:[%s9458 + $0x18] sm:$0xff]
    %s9463 = scalar_lea.vmem [#allocation10], 24
    %v9464 = vld [vmem:[%s9463] sm:$0x1]
    %v9466 = vlaneseq
    %v9467 = vshrl.u32 %v9466, 7
    %v9468 = vsub.s32 0, %v9467
    %v9469 = vrot.slane %v9464, %v9468
    %v9472 = vsel %vm133, %v9457, 0
    %9474 = vmatprep.subr.mxu0 0.0
    %9475 = vmatpush1.msra.mxu0 0.0
    %9476 = vmatprep.subr.mxu0 0.0
    %9477 = vmatpush1.msra.mxu0 0.0
    %9478 = vmatprep.subr.mxu0 0.0
    %9479 = vmatpush1.msra.mxu0 0.0
    %9480 = vmatprep.subr.mxu0 0.0
    %9481 = vmatpush1.msra.mxu0 0.0
    %9482 = vmatprep.subr.mxu0 0.0
    %9483 = vmatpush1.msra.mxu0 0.0
    %9484 = vmatprep.subr.mxu0 0.0
    %9485 = vmatpush1.msra.mxu0 0.0
    %9486 = vmatprep.subr.mxu0 0.0
    %9487 = vmatpush1.msra.mxu0 0.0
    %9488 = vmatprep.subr.mxu0 0.0
    %9489 = vmatpush1.msra.mxu0 0.0
    %9490 = vmatprep.subr.mxu0 0.0
    %9491 = vmatpush1.msra.mxu0 0.0
    %9492 = vmatprep.subr.mxu0 0.0
    %9493 = vmatpush1.msra.mxu0 0.0
    %9494 = vmatprep.subr.mxu0 0.0
    %9495 = vmatpush1.msra.mxu0 0.0
    %9496 = vmatprep.subr.mxu0 0.0
    %9497 = vmatpush1.msra.mxu0 0.0
    %9498 = vmatprep.subr.mxu0 0.0
    %9499 = vmatpush1.msra.mxu0 %v9462
    %9500 = vmatprep.subr.mxu0 0.0
    %9501 = vmatpush1.msra.mxu0 %v9461
    %9502 = vmatprep.subr.mxu0 0.0
    %9503 = vmatpush1.msra.mxu0 %v9460
    %9504 = vmatprep.subr.mxu0 0.0
    %9505 = vmatpush1.msra.mxu0 %v9459
    %9506 = vmatprep.subr.mxu0 0.0
    %9507 = vmatpush2.msra.mxu0 0.0
    %9508 = vmatprep.subr.mxu0 0.0
    %9509 = vmatpush2.msra.mxu0 0.0
    %9510 = vmatprep.subr.mxu0 0.0
    %9511 = vmatpush2.msra.mxu0 0.0
    %9512 = vmatprep.subr.mxu0 0.0
    %9513 = vmatpush2.msra.mxu0 0.0
    %9514 = vmatprep.subr.mxu0 0.0
    %9515 = vmatpush2.msra.mxu0 0.0
    %9516 = vmatprep.subr.mxu0 0.0
    %9517 = vmatpush2.msra.mxu0 0.0
    %9518 = vmatprep.subr.mxu0 0.0
    %9519 = vmatpush2.msra.mxu0 0.0
    %9520 = vmatprep.subr.mxu0 0.0
    %9521 = vmatpush2.msra.mxu0 0.0
    %9522 = vmatprep.subr.mxu0 0.0
    %9523 = vmatpush2.msra.mxu0 0.0
    %9524 = vmatprep.subr.mxu0 0.0
    %9525 = vmatpush2.msra.mxu0 0.0
    %9526 = vmatprep.subr.mxu0 0.0
    %9527 = vmatpush2.msra.mxu0 0.0
    %9528 = vmatprep.subr.mxu0 0.0
    %9529 = vmatpush2.msra.mxu0 0.0
    %9530 = vmatprep.subr.mxu0 0.0
    %9531 = vmatpush2.msra.mxu0 0.0
    %9532 = vmatprep.subr.mxu0 0.0
    %9533 = vmatpush2.msra.mxu0 0.0
    %9534 = vmatprep.subr.mxu0 0.0
    %9535 = vmatpush2.msra.mxu0 0.0
    %9536 = vmatprep.subr.mxu0 0.0
    %9537 = vmatpush2.msra.mxu0 0.0
    %9538 = vmatprep.mubr.f32.mxu0 0.0
    %9539 = vmatmul.mubr.f32.gmra.mxu0 %v9472
    %v9540 = vpop.f32.mrf.mxu0
    %v9541 = vadd.f32 %v9469, %v9540
    %v9542 = vpop.f32.mrf.mxu0
    %9543 = vdwg.mxu0
    %v9544 = vmax.f32 %v9541, 0.0
    %s9545 = scalar_lea.vmem [#allocation9], 1280
    %v9546 = vld [vmem:[%s9545] sm:$0xff]
    %v9547 = vld [vmem:[%s9545 + $0x8] sm:$0xff]
    %v9548 = vld [vmem:[%s9545 + $0x10] sm:$0xff]
    %v9549 = vld [vmem:[%s9545 + $0x18] sm:$0xff]
    %s9550 = scalar_lea.vmem [#allocation10], 25
    %v9551 = vld [vmem:[%s9550] sm:$0x1]
    %v9553 = vlaneseq
    %v9554 = vshrl.u32 %v9553, 7
    %v9555 = vsub.s32 0, %v9554
    %v9556 = vrot.slane %v9551, %v9555
    %v9559 = vsel %vm133, %v9544, 0
    %9561 = vmatprep.subr.mxu0 0.0
    %9562 = vmatpush1.msra.mxu0 0.0
    %9563 = vmatprep.subr.mxu0 0.0
    %9564 = vmatpush1.msra.mxu0 0.0
    %9565 = vmatprep.subr.mxu0 0.0
    %9566 = vmatpush1.msra.mxu0 0.0
    %9567 = vmatprep.subr.mxu0 0.0
    %9568 = vmatpush1.msra.mxu0 0.0
    %9569 = vmatprep.subr.mxu0 0.0
    %9570 = vmatpush1.msra.mxu0 0.0
    %9571 = vmatprep.subr.mxu0 0.0
    %9572 = vmatpush1.msra.mxu0 0.0
    %9573 = vmatprep.subr.mxu0 0.0
    %9574 = vmatpush1.msra.mxu0 0.0
    %9575 = vmatprep.subr.mxu0 0.0
    %9576 = vmatpush1.msra.mxu0 0.0
    %9577 = vmatprep.subr.mxu0 0.0
    %9578 = vmatpush1.msra.mxu0 0.0
    %9579 = vmatprep.subr.mxu0 0.0
    %9580 = vmatpush1.msra.mxu0 0.0
    %9581 = vmatprep.subr.mxu0 0.0
    %9582 = vmatpush1.msra.mxu0 0.0
    %9583 = vmatprep.subr.mxu0 0.0
    %9584 = vmatpush1.msra.mxu0 0.0
    %9585 = vmatprep.subr.mxu0 0.0
    %9586 = vmatpush1.msra.mxu0 %v9549
    %9587 = vmatprep.subr.mxu0 0.0
    %9588 = vmatpush1.msra.mxu0 %v9548
    %9589 = vmatprep.subr.mxu0 0.0
    %9590 = vmatpush1.msra.mxu0 %v9547
    %9591 = vmatprep.subr.mxu0 0.0
    %9592 = vmatpush1.msra.mxu0 %v9546
    %9593 = vmatprep.subr.mxu0 0.0
    %9594 = vmatpush2.msra.mxu0 0.0
    %9595 = vmatprep.subr.mxu0 0.0
    %9596 = vmatpush2.msra.mxu0 0.0
    %9597 = vmatprep.subr.mxu0 0.0
    %9598 = vmatpush2.msra.mxu0 0.0
    %9599 = vmatprep.subr.mxu0 0.0
    %9600 = vmatpush2.msra.mxu0 0.0
    %9601 = vmatprep.subr.mxu0 0.0
    %9602 = vmatpush2.msra.mxu0 0.0
    %9603 = vmatprep.subr.mxu0 0.0
    %9604 = vmatpush2.msra.mxu0 0.0
    %9605 = vmatprep.subr.mxu0 0.0
    %9606 = vmatpush2.msra.mxu0 0.0
    %9607 = vmatprep.subr.mxu0 0.0
    %9608 = vmatpush2.msra.mxu0 0.0
    %9609 = vmatprep.subr.mxu0 0.0
    %9610 = vmatpush2.msra.mxu0 0.0
    %9611 = vmatprep.subr.mxu0 0.0
    %9612 = vmatpush2.msra.mxu0 0.0
    %9613 = vmatprep.subr.mxu0 0.0
    %9614 = vmatpush2.msra.mxu0 0.0
    %9615 = vmatprep.subr.mxu0 0.0
    %9616 = vmatpush2.msra.mxu0 0.0
    %9617 = vmatprep.subr.mxu0 0.0
    %9618 = vmatpush2.msra.mxu0 0.0
    %9619 = vmatprep.subr.mxu0 0.0
    %9620 = vmatpush2.msra.mxu0 0.0
    %9621 = vmatprep.subr.mxu0 0.0
    %9622 = vmatpush2.msra.mxu0 0.0
    %9623 = vmatprep.subr.mxu0 0.0
    %9624 = vmatpush2.msra.mxu0 0.0
    %9625 = vmatprep.mubr.f32.mxu0 0.0
    %9626 = vmatmul.mubr.f32.gmra.mxu0 %v9559
    %v9627 = vpop.f32.mrf.mxu0
    %v9628 = vadd.f32 %v9556, %v9627
    %v9629 = vpop.f32.mrf.mxu0
    %9630 = vdwg.mxu0
    %vm9631 = vcmask 254976
    %9632 = vst.msk [vmem:[%s11] sm:$0x3] %vm9631, %v9628
    // Predicated region
    $region70: #{_lambda_.1} parent=1 // pred_check
      _
    $region71: #{_lambda_.1} parent=1 // pred_check_branch
      %9634 = sbr.rel (0) target = $region73
    $region72: #{_lambda_.1} parent=1 // pred_region
      _
    $region73: #{_lambda_.1} parent=1 // pred_fallthru
      _
    // Predicated region
    $region74: #{_lambda_.1} parent=1 // pred_check
      _
    $region75: #{_lambda_.1} parent=1 // pred_check_branch
      %9636 = sbr.rel (0) target = $region77
    $region76: #{_lambda_.1} parent=1 // pred_region
      _
    $region77: #{_lambda_.1} parent=1 // pred_fallthru
      _
    %9637 = vsyncpa [#allocation3], 1
    %9638 = vsyncpa [#allocation5], 1
    %9639 = vsyncpa [#allocation8], 1
    %9640 = vsyncpa [#allocation11], 1

</llo_original>
